<compile_context>
chip_gen: v7x
topology: tpu7x:2x2x1
jax: 0.10.0
libtpu: 0.0.40
codegen_flags: <defaults>
</compile_context>

<pallas_src>
import jax
import jax.numpy as jnp
import numpy as np
from jax.experimental import pallas as pl
from jax.experimental.pallas import tpu as pltpu


DEFAULT_ROW_TILE = 1024          # big tiles amortize per-step overhead; ~9 MiB VMEM at TN=1024
VMEM_LIMIT_BYTES = 48 * 1024 * 1024   # explicit, safe on v5e/v6e/v7x; headroom for larger TN


def _row_tile(n, target=DEFAULT_ROW_TILE):
    """Largest row tile <= target that divides n and is a multiple of 128 (lane-dense pf store)."""
    if n <= target:
        return n
    t = (target // 128) * 128
    while t >= 128:
        if n % t == 0:
            return t
        t -= 128
    # TODO(synk): masked remainder handling (cdiv grid + -inf row mask) for awkward N; one tile for now.
    return n


# ----------------------------------------------------------------------------- kernels

def _stn_kernel(x_ref,
                w1, b1, w2, b2, w3, b3,
                fw1, fb1, fw2, fb2, fw3, fb3,
                t_ref, acc_ref):
    """STN3d fully fused: conv1..conv3(+BN+ReLU) + max-over-points + fc1..fc3(+identity) epilogue."""
    n = pl.program_id(1)
    x = x_ref[...][0].astype(jnp.bfloat16)                                # (TN, D)

    h = jnp.dot(x, w1[...], preferred_element_type=jnp.float32) + b1[...]
    h = jnp.maximum(h, 0.0).astype(jnp.bfloat16)
    h = jnp.dot(h, w2[...], preferred_element_type=jnp.float32) + b2[...]
    h = jnp.maximum(h, 0.0).astype(jnp.bfloat16)
    h = jnp.dot(h, w3[...], preferred_element_type=jnp.float32) + b3[...]
    h = jnp.maximum(h, 0.0)                                               # (TN, 1024) f32

    @pl.when(n == 0)
    def _():
        acc_ref[...] = jnp.full(acc_ref.shape, -jnp.inf, jnp.float32)

    acc_ref[...] = jnp.maximum(acc_ref[...], jnp.max(h, axis=0, keepdims=True))

    @pl.when(n == pl.num_programs(1) - 1)
    def _():
        g = acc_ref[...].astype(jnp.bfloat16)                             # (1, 1024)
        f = jnp.dot(g, fw1[...], preferred_element_type=jnp.float32) + fb1[...]
        f = jnp.maximum(f, 0.0).astype(jnp.bfloat16)
        f = jnp.dot(f, fw2[...], preferred_element_type=jnp.float32) + fb2[...]
        f = jnp.maximum(f, 0.0).astype(jnp.bfloat16)
        f = jnp.dot(f, fw3[...], preferred_element_type=jnp.float32) + fb3[...]   # identity folded in
        t_ref[...] = f[None]                                              # (1, 1, 9)


def _encoder_kernel(x_ref, w1b_ref, b1,
                    w2, b2, w3, b3, w4, b4, w5, b5,
                    pf_ref, g_ref):
    """Encoder conv1..conv5 (+BN+ReLU) fused; 3x3 transform pre-folded into the per-batch conv1
    weight; pointfeat stored transposed (lane-dense); running max accumulator for the global feat."""
    n = pl.program_id(1)
    x = x_ref[...][0].astype(jnp.bfloat16)                                # (TN, D)
    w1b = w1b_ref[...][0]                                                 # (D, 64) bf16, trans folded

    h1 = jnp.dot(x, w1b, preferred_element_type=jnp.float32) + b1[...]
    h1 = jnp.maximum(h1, 0.0)                                             # (TN, 64) f32
    pf_ref[...] = jnp.transpose(h1)[None]                                 # (1, 64, TN) lane-dense store

    h = h1.astype(jnp.bfloat16)
    h = jnp.dot(h, w2[...], preferred_element_type=jnp.float32) + b2[...]
    h = jnp.maximum(h, 0.0).astype(jnp.bfloat16)
    h = jnp.dot(h, w3[...], preferred_element_type=jnp.float32) + b3[...]
    h = jnp.maximum(h, 0.0).astype(jnp.bfloat16)
    h = jnp.dot(h, w4[...], preferred_element_type=jnp.float32) + b4[...]
    h = jnp.maximum(h, 0.0).astype(jnp.bfloat16)
    h = jnp.dot(h, w5[...], preferred_element_type=jnp.float32) + b5[...]  # n5: no ReLU

    @pl.when(n == 0)
    def _():
        g_ref[...] = jnp.full(g_ref.shape, -jnp.inf, jnp.float32)

    g_ref[...] = jnp.maximum(g_ref[...], jnp.max(h, axis=0, keepdims=True)[None])


# ----------------------------------------------------------------------------- wrappers

def _stn_forward(x_bnc, p, tn):
    """x_bnc: (B, N, D) -> trans: (B, 3, 3), one fused pallas_call."""
    B, N, D = x_bnc.shape
    iden = jnp.eye(3, dtype=jnp.float32).reshape(1, 9)
    args = [p["conv1"]["wt"], p["conv1"]["b"],
            p["conv2"]["wt"], p["conv2"]["b"],
            p["conv3"]["wt"], p["conv3"]["b"],
            p["fc1"]["wt"], p["fc1"]["b"],
            p["fc2"]["wt"], p["fc2"]["b"],
            p["fc3"]["wt"], p["fc3"]["b"] + iden]          # fold identity add into fc3's bias
    const = lambda b, n: (0, 0)
    trans = pl.pallas_call(
        _stn_kernel,
        out_shape=jax.ShapeDtypeStruct((B, 1, 9), jnp.float32),
        grid=(B, N // tn),
        in_specs=[pl.BlockSpec((1, tn, D), lambda b, n: (b, n, 0))]
                 + [pl.BlockSpec(a.shape, const) for a in args],
        out_specs=pl.BlockSpec((1, 1, 9), lambda b, n: (b, 0, 0)),
        scratch_shapes=[pltpu.VMEM((1, 1024), jnp.float32)],
        compiler_params=pltpu.CompilerParams(
            dimension_semantics=("parallel", "arbitrary"),
            vmem_limit_bytes=VMEM_LIMIT_BYTES),
    )(x_bnc, *args)
    return trans.reshape(B, 3, 3)


def _encoder(x_bnc, w1_eff, p, tn, outchan):
    """x_bnc: (B, N, D), w1_eff: (B, D, 64) (trans folded) ->
    (pointfeat (B, 64, N) PyTorch layout, globfeat (B, outchan))."""
    B, N, D = x_bnc.shape
    layers = []
    for name in ("conv2", "conv3", "conv4", "conv5"):
        layers += [p[name]["wt"], p[name]["b"]]
    const = lambda b, n: (0, 0)
    pf, g = pl.pallas_call(
        _encoder_kernel,
        out_shape=(jax.ShapeDtypeStruct((B, 64, N), jnp.float32),
                   jax.ShapeDtypeStruct((B, 1, outchan), jnp.float32)),
        grid=(B, N // tn),
        in_specs=[pl.BlockSpec((1, tn, D), lambda b, n: (b, n, 0)),
                  pl.BlockSpec((1, D, 64), lambda b, n: (b, 0, 0)),
                  pl.BlockSpec(p["conv1"]["b"].shape, const)]
                 + [pl.BlockSpec(a.shape, const) for a in layers],
        out_specs=(pl.BlockSpec((1, 64, tn), lambda b, n: (b, 0, n)),
                   pl.BlockSpec((1, 1, outchan), lambda b, n: (b, 0, 0))),
        compiler_params=pltpu.CompilerParams(
            dimension_semantics=("parallel", "arbitrary"),
            vmem_limit_bytes=VMEM_LIMIT_BYTES),
    )(x_bnc, w1_eff, p["conv1"]["b"], *layers)
    return pf, g.reshape(B, outchan)


# ----------------------------------------------------------------------------- params

def _layer_params(key, cin, cout, bn=True, eps=1e-5):
    """Conv1d(k=1)/Linear weight with eval-mode BN fully folded: wt = W^T * scale (per-out-channel),
    b = fused bias.  bf16 copy for the kernels, f32 copy for the reference."""
    k_w, k_b, k_g, k_be, k_m, k_v = jax.random.split(key, 6)
    w = jax.random.normal(k_w, (cout, cin), jnp.float32) * (0.5 / np.sqrt(cin))
    b = jax.random.normal(k_b, (cout,), jnp.float32) * 0.05
    if bn:
        gamma = 1.0 + 0.1 * jax.random.normal(k_g, (cout,), jnp.float32)
        beta = 0.1 * jax.random.normal(k_be, (cout,), jnp.float32)
        r_mean = 0.1 * jax.random.normal(k_m, (cout,), jnp.float32)
        r_var = 1.0 + 0.2 * jax.random.uniform(k_v, (cout,), jnp.float32)
        s = gamma / jnp.sqrt(r_var + eps)
        fused_b = (b - r_mean) * s + beta
    else:
        s = jnp.ones((cout,), jnp.float32)
        fused_b = b
    wt = jnp.transpose(w) * s[None, :]                     # (cin, cout), BN scale folded in
    return {"wt": wt.astype(jnp.bfloat16),
            "wt_f32": wt,
            "b": fused_b.reshape(1, cout)}


def init_params(key, inchan=3, outchan=1024):
    keys = jax.random.split(key, 12)
    stn = {
        "conv1": _layer_params(keys[0], inchan, 64, bn=True),
        "conv2": _layer_params(keys[1], 64, 128, bn=True),
        "conv3": _layer_params(keys[2], 128, 1024, bn=True),
        "fc1": _layer_params(keys[3], 1024, 512, bn=True),
        "fc2": _layer_params(keys[4], 512, 256, bn=True),
        "fc3": _layer_params(keys[5], 256, 9, bn=False),
    }
    enc = {
        "conv1": _layer_params(keys[6], inchan, 64, bn=True),
        "conv2": _layer_params(keys[7], 64, 128, bn=True),
        "conv3": _layer_params(keys[8], 128, 128, bn=True),
        "conv4": _layer_params(keys[9], 128, 256, bn=True),
        "conv5": _layer_params(keys[10], 256, outchan, bn=True),
    }
    return {"stn": stn, "enc": enc, "outchan": outchan}


# ----------------------------------------------------------------------------- forward

def pointnet_encoder_sample(x, params, *, global_feat=True, row_tile=DEFAULT_ROW_TILE):
    """x: (B, D, N) float32 in PyTorch NCW layout.  Returns (globfeat, pointfeat)."""
    outchan = params["outchan"]
    B_o = x.shape[0]
    if B_o > 100:
        x = x[::10]                                        # self.sample(x, freq=10)
    B, D, N = x.shape

    x_bnc = jnp.transpose(x, (0, 2, 1)).astype(jnp.float32)       # (B, N, D) channels-last
    tn = _row_tile(N, row_tile)

    # STN3d fused (convs + max + fcs + identity) -> per-batch 3x3 transform.
    trans = _stn_forward(x_bnc, params["stn"], tn)                 # (B, 3, 3)

    # Fold the bmm into conv1's weight: x @ (trans @ W1[:3]) == (x @ trans) @ W1[:3]. Tiny XLA op.
    w1_f32 = params["enc"]["conv1"]["wt_f32"]                     # (D, 64)
    w1_xyz = jnp.einsum("bij,jc->bic", trans, w1_f32[:3])         # (B, 3, 64)
    if D > 3:
        w1_rest = jnp.broadcast_to(w1_f32[3:][None], (B, D - 3, 64))
        w1_eff = jnp.concatenate([w1_xyz, w1_rest], axis=1)
    else:
        w1_eff = w1_xyz
    w1_eff = w1_eff.astype(jnp.bfloat16)                          # (B, D, 64)

    # Encoder: conv1..conv5 fused with the global max; pointfeat emitted in (B, 64, N) layout.
    # TODO(synk): feature_transform=True (STNkd) branch not implemented (module default is False).
    pointfeat, globfeat = _encoder(x_bnc, w1_eff, params["enc"], tn, outchan)

    if B_o > 100:
        globfeat = jnp.repeat(globfeat[:, None, :], 10, axis=1).reshape(-1, outchan)[:B_o]
        pointfeat = jnp.repeat(pointfeat[:, None], 10, axis=1).reshape(-1, 64, N)[:B_o]

    # global_feat=True or False both return (globfeat, pointfeat) in the reference module.
    return globfeat, pointfeat


# ----------------------------------------------------------------------------- reference

def _ref_forward(x, params):
    """Pure-jnp f32 HIGHEST reference mirroring the PyTorch forward (same folded BN params)."""
    outchan = params["outchan"]
    B_o = x.shape[0]
    if B_o > 100:
        x = x[::10]
    B, D, N = x.shape
    xb = jnp.transpose(x, (0, 2, 1)).astype(jnp.float32)

    def lin(h, p, relu=True):
        y = jnp.dot(h, p["wt_f32"], precision=jax.lax.Precision.HIGHEST) + p["b"]
        return jnp.maximum(y, 0.0) if relu else y

    s = params["stn"]
    h = xb.reshape(B * N, D)
    h = lin(h, s["conv1"]); h = lin(h, s["conv2"]); h = lin(h, s["conv3"])
    g = jnp.max(h.reshape(B, N, 1024), axis=1)
    h = lin(g, s["fc1"]); h = lin(h, s["fc2"]); h = lin(h, s["fc3"], relu=False)
    trans = (h + jnp.eye(3, dtype=jnp.float32).reshape(1, 9)).reshape(B, 3, 3)

    if D > 3:
        xyz, feat = xb[:, :, :3], xb[:, :, 3:]
    else:
        xyz, feat = xb, None
    xyz = jnp.einsum("bnd,bde->bne", xyz, trans, precision=jax.lax.Precision.HIGHEST)
    xb2 = xyz if feat is None else jnp.concatenate([xyz, feat], axis=2)

    e = params["enc"]
    h = xb2.reshape(B * N, D)
    h = lin(h, e["conv1"])
    pf = jnp.transpose(h.reshape(B, N, 64), (0, 2, 1))
    h = lin(h, e["conv2"]); h = lin(h, e["conv3"]); h = lin(h, e["conv4"])
    h = lin(h, e["conv5"], relu=False)
    gf = jnp.max(h.reshape(B, N, outchan), axis=1)

    if B_o > 100:
        gf = jnp.repeat(gf[:, None, :], 10, axis=1).reshape(-1, outchan)[:B_o]
        pf = jnp.repeat(pf[:, None], 10, axis=1).reshape(-1, 64, N)[:B_o]
    return gf, pf


# ----------------------------------------------------------------------------- main

if __name__ == "__main__":
    key = jax.random.PRNGKey(0)
    k_param, k_x = jax.random.split(key)

    # N=2048 with TN=1024 -> 2 point tiles/batch, exercising the max-accumulator and fc epilogue.
    B, inchan, N, outchan = 2, 3, 2048, 1024
    params = init_params(k_param, inchan=inchan, outchan=outchan)
    x = jax.random.normal(k_x, (B, inchan, N), jnp.float32)   # PyTorch (B, C, N) layout

    globfeat, pointfeat = pointnet_encoder_sample(x, params)
    globfeat = jax.block_until_ready(globfeat)
    pointfeat = jax.block_until_ready(pointfeat)

    assert globfeat.shape == (B, outchan), globfeat.shape
    assert pointfeat.shape == (B, 64, N), pointfeat.shape
    assert bool(jnp.all(jnp.isfinite(globfeat))) and bool(jnp.all(jnp.isfinite(pointfeat)))

    # bf16 MXU kernels vs f32 HIGHEST reference -> 5e-2 tolerance (documented accuracy trade-off).
    gf_ref, pf_ref = _ref_forward(x, params)
    np.testing.assert_allclose(np.asarray(globfeat), np.asarray(gf_ref), rtol=5e-2, atol=5e-2)
    np.testing.assert_allclose(np.asarray(pointfeat), np.asarray(pf_ref), rtol=5e-2, atol=5e-2)

    print("KERNEL_OK")
</pallas_src>

<mosaic_0001>
module attributes {stable_mosaic.version = 11 : i64} {
  func.func @_stn_kernel(%arg0: i32, %arg1: i32, %arg2: memref<1x1024x3xf32, #tpu.memory_space<vmem>>, %arg3: memref<3x64xbf16, #tpu.memory_space<vmem>>, %arg4: memref<1x64xf32, #tpu.memory_space<vmem>>, %arg5: memref<64x128xbf16, #tpu.memory_space<vmem>>, %arg6: memref<1x128xf32, #tpu.memory_space<vmem>>, %arg7: memref<128x1024xbf16, #tpu.memory_space<vmem>>, %arg8: memref<1x1024xf32, #tpu.memory_space<vmem>>, %arg9: memref<1024x512xbf16, #tpu.memory_space<vmem>>, %arg10: memref<1x512xf32, #tpu.memory_space<vmem>>, %arg11: memref<512x256xbf16, #tpu.memory_space<vmem>>, %arg12: memref<1x256xf32, #tpu.memory_space<vmem>>, %arg13: memref<256x9xbf16, #tpu.memory_space<vmem>>, %arg14: memref<1x9xf32, #tpu.memory_space<vmem>>, %arg15: memref<1x1x9xf32, #tpu.memory_space<vmem>>, %arg16: memref<1x1024xf32, #tpu.memory_space<vmem>>) attributes {dimension_semantics = [#tpu.dimension_semantics<parallel>, #tpu.dimension_semantics<arbitrary>], iteration_bounds = array<i64: 2, 2>, scalar_prefetch = 0 : i64, scratch_operands = 1 : i64, tpu.core_type = #tpu.core_type<tc>, window_params = [{transform_indices = @transform_0, window_bounds = array<i64: 1, 1024, 3>}, {pipeline_mode = #tpu.pipeline_mode<synchronous>, transform_indices = @transform_1, window_bounds = array<i64: 3, 64>}, {pipeline_mode = #tpu.pipeline_mode<synchronous>, transform_indices = @transform_2, window_bounds = array<i64: 1, 64>}, {pipeline_mode = #tpu.pipeline_mode<synchronous>, transform_indices = @transform_3, window_bounds = array<i64: 64, 128>}, {pipeline_mode = #tpu.pipeline_mode<synchronous>, transform_indices = @transform_4, window_bounds = array<i64: 1, 128>}, {pipeline_mode = #tpu.pipeline_mode<synchronous>, transform_indices = @transform_5, window_bounds = array<i64: 128, 1024>}, {pipeline_mode = #tpu.pipeline_mode<synchronous>, transform_indices = @transform_6, window_bounds = array<i64: 1, 1024>}, {pipeline_mode = #tpu.pipeline_mode<synchronous>, transform_indices = @transform_7, window_bounds = array<i64: 1024, 512>}, {pipeline_mode = #tpu.pipeline_mode<synchronous>, transform_indices = @transform_8, window_bounds = array<i64: 1, 512>}, {pipeline_mode = #tpu.pipeline_mode<synchronous>, transform_indices = @transform_9, window_bounds = array<i64: 512, 256>}, {pipeline_mode = #tpu.pipeline_mode<synchronous>, transform_indices = @transform_10, window_bounds = array<i64: 1, 256>}, {pipeline_mode = #tpu.pipeline_mode<synchronous>, transform_indices = @transform_11, window_bounds = array<i64: 256, 9>}, {pipeline_mode = #tpu.pipeline_mode<synchronous>, transform_indices = @transform_12, window_bounds = array<i64: 1, 9>}, {transform_indices = @transform_13, window_bounds = array<i64: 1, 1, 9>}]} {
    %c0 = arith.constant 0 : index
    %c0_0 = arith.constant 0 : index
    %c0_1 = arith.constant 0 : index
    %0 = vector.load %arg2[%c0, %c0_0, %c0_1] : memref<1x1024x3xf32, #tpu.memory_space<vmem>>, vector<1x1024x3xf32>
    %1 = vector.shape_cast %0 : vector<1x1024x3xf32> to vector<1024x3xf32>
    %2 = arith.truncf %1 : vector<1024x3xf32> to vector<1024x3xbf16>
    %c0_2 = arith.constant 0 : index
    %c0_3 = arith.constant 0 : index
    %3 = vector.load %arg3[%c0_2, %c0_3] : memref<3x64xbf16, #tpu.memory_space<vmem>>, vector<3x64xbf16>
    %cst = arith.constant dense<0.000000e+00> : vector<1024x64xf32>
    %4 = tpu.matmul %2, %3, %cst {dimension_numbers = #tpu.dot_dimension_numbers<[1], [0], [0], [1], [0, 0, 1, 1], [], []>} : vector<1024x3xbf16>, vector<3x64xbf16>, vector<1024x64xf32> -> vector<1024x64xf32>
    %c0_4 = arith.constant 0 : index
    %c0_5 = arith.constant 0 : index
    %5 = vector.load %arg4[%c0_4, %c0_5] : memref<1x64xf32, #tpu.memory_space<vmem>>, vector<1x64xf32>
    %6 = vector.broadcast %5 : vector<1x64xf32> to vector<1024x64xf32>
    %7 = arith.addf %4, %6 : vector<1024x64xf32>
    %cst_6 = arith.constant 0.000000e+00 : f32
    %8 = vector.broadcast %cst_6 : f32 to vector<1024x64xf32>
    %9 = arith.maximumf %7, %8 : vector<1024x64xf32>
    %10 = arith.truncf %9 : vector<1024x64xf32> to vector<1024x64xbf16>
    %c0_7 = arith.constant 0 : index
    %c0_8 = arith.constant 0 : index
    %11 = vector.load %arg5[%c0_7, %c0_8] : memref<64x128xbf16, #tpu.memory_space<vmem>>, vector<64x128xbf16>
    %cst_9 = arith.constant dense<0.000000e+00> : vector<1024x128xf32>
    %12 = tpu.matmul %10, %11, %cst_9 {dimension_numbers = #tpu.dot_dimension_numbers<[1], [0], [0], [1], [0, 0, 1, 1], [], []>} : vector<1024x64xbf16>, vector<64x128xbf16>, vector<1024x128xf32> -> vector<1024x128xf32>
    %c0_10 = arith.constant 0 : index
    %c0_11 = arith.constant 0 : index
    %13 = vector.load %arg6[%c0_10, %c0_11] : memref<1x128xf32, #tpu.memory_space<vmem>>, vector<1x128xf32>
    %14 = vector.broadcast %13 : vector<1x128xf32> to vector<1024x128xf32>
    %15 = arith.addf %12, %14 : vector<1024x128xf32>
    %cst_12 = arith.constant 0.000000e+00 : f32
    %16 = vector.broadcast %cst_12 : f32 to vector<1024x128xf32>
    %17 = arith.maximumf %15, %16 : vector<1024x128xf32>
    %18 = arith.truncf %17 : vector<1024x128xf32> to vector<1024x128xbf16>
    %c0_13 = arith.constant 0 : index
    %c0_14 = arith.constant 0 : index
    %19 = vector.load %arg7[%c0_13, %c0_14] : memref<128x1024xbf16, #tpu.memory_space<vmem>>, vector<128x1024xbf16>
    %cst_15 = arith.constant dense<0.000000e+00> : vector<1024x1024xf32>
    %20 = tpu.matmul %18, %19, %cst_15 {dimension_numbers = #tpu.dot_dimension_numbers<[1], [0], [0], [1], [0, 0, 1, 1], [], []>} : vector<1024x128xbf16>, vector<128x1024xbf16>, vector<1024x1024xf32> -> vector<1024x1024xf32>
    %c0_16 = arith.constant 0 : index
    %c0_17 = arith.constant 0 : index
    %21 = vector.load %arg8[%c0_16, %c0_17] : memref<1x1024xf32, #tpu.memory_space<vmem>>, vector<1x1024xf32>
    %22 = vector.broadcast %21 : vector<1x1024xf32> to vector<1024x1024xf32>
    %23 = arith.addf %20, %22 : vector<1024x1024xf32>
    %cst_18 = arith.constant 0.000000e+00 : f32
    %24 = vector.broadcast %cst_18 : f32 to vector<1024x1024xf32>
    %25 = arith.maximumf %23, %24 : vector<1024x1024xf32>
    %c0_i32 = arith.constant 0 : i32
    %26 = arith.cmpi eq, %arg1, %c0_i32 : i32
    %27 = arith.extui %26 : i1 to i32
    %c0_i32_19 = arith.constant 0 : i32
    %28 = arith.cmpi ne, %27, %c0_i32_19 : i32
    scf.if %28 {
      %cst_26 = arith.constant 0xFF800000 : f32
      %37 = vector.broadcast %cst_26 : f32 to vector<1x1024xf32>
      %c0_27 = arith.constant 0 : index
      %c0_28 = arith.constant 0 : index
      %38 = vector.load %arg16[%c0_27, %c0_28] : memref<1x1024xf32, #tpu.memory_space<vmem>>, vector<1x1024xf32>
      tpu.vector_store %arg16[%c0_27, %c0_28], %37 {strides = array<i32>} : memref<1x1024xf32, #tpu.memory_space<vmem>>, vector<1x1024xf32>,
    } else {
    }
    %c0_20 = arith.constant 0 : index
    %c0_21 = arith.constant 0 : index
    %29 = vector.load %arg16[%c0_20, %c0_21] : memref<1x1024xf32, #tpu.memory_space<vmem>>, vector<1x1024xf32>
    %cst_22 = arith.constant dense<0xFF800000> : vector<1024xf32>
    %30 = vector.multi_reduction <maximumf>, %25, %cst_22 [0] : vector<1024x1024xf32> to vector<1024xf32>
    %31 = vector.shape_cast %30 : vector<1024xf32> to vector<1x1024xf32>
    %32 = arith.maximumf %29, %31 : vector<1x1024xf32>
    %c0_23 = arith.constant 0 : index
    %c0_24 = arith.constant 0 : index
    %33 = vector.load %arg16[%c0_23, %c0_24] : memref<1x1024xf32, #tpu.memory_space<vmem>>, vector<1x1024xf32>
    tpu.vector_store %arg16[%c0_23, %c0_24], %32 {strides = array<i32>} : memref<1x1024xf32, #tpu.memory_space<vmem>>, vector<1x1024xf32>,
    %c1_i32 = arith.constant 1 : i32
    %34 = arith.cmpi eq, %arg1, %c1_i32 : i32
    %35 = arith.extui %34 : i1 to i32
    %c0_i32_25 = arith.constant 0 : i32
    %36 = arith.cmpi ne, %35, %c0_i32_25 : i32
    scf.if %36 {
      %c0_26 = arith.constant 0 : index
      %c0_27 = arith.constant 0 : index
      %37 = vector.load %arg16[%c0_26, %c0_27] : memref<1x1024xf32, #tpu.memory_space<vmem>>, vector<1x1024xf32>
      %38 = arith.truncf %37 : vector<1x1024xf32> to vector<1x1024xbf16>
      %c0_28 = arith.constant 0 : index
      %c0_29 = arith.constant 0 : index
      %39 = vector.load %arg9[%c0_28, %c0_29] : memref<1024x512xbf16, #tpu.memory_space<vmem>>, vector<1024x512xbf16>
      %cst_30 = arith.constant dense<0.000000e+00> : vector<1x512xf32>
      %40 = tpu.matmul %38, %39, %cst_30 {dimension_numbers = #tpu.dot_dimension_numbers<[1], [0], [0], [1], [0, 0, 1, 1], [], []>} : vector<1x1024xbf16>, vector<1024x512xbf16>, vector<1x512xf32> -> vector<1x512xf32>
      %c0_31 = arith.constant 0 : index
      %c0_32 = arith.constant 0 : index
      %41 = vector.load %arg10[%c0_31, %c0_32] : memref<1x512xf32, #tpu.memory_space<vmem>>, vector<1x512xf32>
      %42 = arith.addf %40, %41 : vector<1x512xf32>
      %cst_33 = arith.constant 0.000000e+00 : f32
      %43 = vector.broadcast %cst_33 : f32 to vector<1x512xf32>
      %44 = arith.maximumf %42, %43 : vector<1x512xf32>
      %45 = arith.truncf %44 : vector<1x512xf32> to vector<1x512xbf16>
      %c0_34 = arith.constant 0 : index
      %c0_35 = arith.constant 0 : index
      %46 = vector.load %arg11[%c0_34, %c0_35] : memref<512x256xbf16, #tpu.memory_space<vmem>>, vector<512x256xbf16>
      %cst_36 = arith.constant dense<0.000000e+00> : vector<1x256xf32>
      %47 = tpu.matmul %45, %46, %cst_36 {dimension_numbers = #tpu.dot_dimension_numbers<[1], [0], [0], [1], [0, 0, 1, 1], [], []>} : vector<1x512xbf16>, vector<512x256xbf16>, vector<1x256xf32> -> vector<1x256xf32>
      %c0_37 = arith.constant 0 : index
      %c0_38 = arith.constant 0 : index
      %48 = vector.load %arg12[%c0_37, %c0_38] : memref<1x256xf32, #tpu.memory_space<vmem>>, vector<1x256xf32>
      %49 = arith.addf %47, %48 : vector<1x256xf32>
      %cst_39 = arith.constant 0.000000e+00 : f32
      %50 = vector.broadcast %cst_39 : f32 to vector<1x256xf32>
      %51 = arith.maximumf %49, %50 : vector<1x256xf32>
      %52 = arith.truncf %51 : vector<1x256xf32> to vector<1x256xbf16>
      %c0_40 = arith.constant 0 : index
      %c0_41 = arith.constant 0 : index
      %53 = vector.load %arg13[%c0_40, %c0_41] : memref<256x9xbf16, #tpu.memory_space<vmem>>, vector<256x9xbf16>
      %cst_42 = arith.constant dense<0.000000e+00> : vector<1x9xf32>
      %54 = tpu.matmul %52, %53, %cst_42 {dimension_numbers = #tpu.dot_dimension_numbers<[1], [0], [0], [1], [0, 0, 1, 1], [], []>} : vector<1x256xbf16>, vector<256x9xbf16>, vector<1x9xf32> -> vector<1x9xf32>
      %c0_43 = arith.constant 0 : index
      %c0_44 = arith.constant 0 : index
      %55 = vector.load %arg14[%c0_43, %c0_44] : memref<1x9xf32, #tpu.memory_space<vmem>>, vector<1x9xf32>
      %56 = arith.addf %54, %55 : vector<1x9xf32>
      %57 = vector.shape_cast %56 : vector<1x9xf32> to vector<1x1x9xf32>
      %c0_45 = arith.constant 0 : index
      %c0_46 = arith.constant 0 : index
      %c0_47 = arith.constant 0 : index
      %58 = vector.load %arg15[%c0_45, %c0_46, %c0_47] : memref<1x1x9xf32, #tpu.memory_space<vmem>>, vector<1x1x9xf32>
      tpu.vector_store %arg15[%c0_45, %c0_46, %c0_47], %57 {strides = array<i32>} : memref<1x1x9xf32, #tpu.memory_space<vmem>>, vector<1x1x9xf32>,
    } else {
    }
    return
  }
  func.func @transform_0(%arg0: i32, %arg1: i32) -> (i32, i32, i32) {
    %c0_i32 = arith.constant 0 : i32
    %c0_i32_0 = arith.constant 0 : i32
    return %arg0, %arg1, %c0_i32 : i32, i32, i32
  }
  func.func @transform_1(%arg0: i32, %arg1: i32) -> (i32, i32) {
    %c0_i32 = arith.constant 0 : i32
    %c0_i32_0 = arith.constant 0 : i32
    %c0_i32_1 = arith.constant 0 : i32
    return %c0_i32, %c0_i32_0 : i32, i32
  }
  func.func @transform_2(%arg0: i32, %arg1: i32) -> (i32, i32) {
    %c0_i32 = arith.constant 0 : i32
    %c0_i32_0 = arith.constant 0 : i32
    %c0_i32_1 = arith.constant 0 : i32
    return %c0_i32, %c0_i32_0 : i32, i32
  }
  func.func @transform_3(%arg0: i32, %arg1: i32) -> (i32, i32) {
    %c0_i32 = arith.constant 0 : i32
    %c0_i32_0 = arith.constant 0 : i32
    %c0_i32_1 = arith.constant 0 : i32
    return %c0_i32, %c0_i32_0 : i32, i32
  }
  func.func @transform_4(%arg0: i32, %arg1: i32) -> (i32, i32) {
    %c0_i32 = arith.constant 0 : i32
    %c0_i32_0 = arith.constant 0 : i32
    %c0_i32_1 = arith.constant 0 : i32
    return %c0_i32, %c0_i32_0 : i32, i32
  }
  func.func @transform_5(%arg0: i32, %arg1: i32) -> (i32, i32) {
    %c0_i32 = arith.constant 0 : i32
    %c0_i32_0 = arith.constant 0 : i32
    %c0_i32_1 = arith.constant 0 : i32
    return %c0_i32, %c0_i32_0 : i32, i32
  }
  func.func @transform_6(%arg0: i32, %arg1: i32) -> (i32, i32) {
    %c0_i32 = arith.constant 0 : i32
    %c0_i32_0 = arith.constant 0 : i32
    %c0_i32_1 = arith.constant 0 : i32
    return %c0_i32, %c0_i32_0 : i32, i32
  }
  func.func @transform_7(%arg0: i32, %arg1: i32) -> (i32, i32) {
    %c0_i32 = arith.constant 0 : i32
    %c0_i32_0 = arith.constant 0 : i32
    %c0_i32_1 = arith.constant 0 : i32
    return %c0_i32, %c0_i32_0 : i32, i32
  }
  func.func @transform_8(%arg0: i32, %arg1: i32) -> (i32, i32) {
    %c0_i32 = arith.constant 0 : i32
    %c0_i32_0 = arith.constant 0 : i32
    %c0_i32_1 = arith.constant 0 : i32
    return %c0_i32, %c0_i32_0 : i32, i32
  }
  func.func @transform_9(%arg0: i32, %arg1: i32) -> (i32, i32) {
    %c0_i32 = arith.constant 0 : i32
    %c0_i32_0 = arith.constant 0 : i32
    %c0_i32_1 = arith.constant 0 : i32
    return %c0_i32, %c0_i32_0 : i32, i32
  }
  func.func @transform_10(%arg0: i32, %arg1: i32) -> (i32, i32) {
    %c0_i32 = arith.constant 0 : i32
    %c0_i32_0 = arith.constant 0 : i32
    %c0_i32_1 = arith.constant 0 : i32
    return %c0_i32, %c0_i32_0 : i32, i32
  }
  func.func @transform_11(%arg0: i32, %arg1: i32) -> (i32, i32) {
    %c0_i32 = arith.constant 0 : i32
    %c0_i32_0 = arith.constant 0 : i32
    %c0_i32_1 = arith.constant 0 : i32
    return %c0_i32, %c0_i32_0 : i32, i32
  }
  func.func @transform_12(%arg0: i32, %arg1: i32) -> (i32, i32) {
    %c0_i32 = arith.constant 0 : i32
    %c0_i32_0 = arith.constant 0 : i32
    %c0_i32_1 = arith.constant 0 : i32
    return %c0_i32, %c0_i32_0 : i32, i32
  }
  func.func @transform_13(%arg0: i32, %arg1: i32) -> (i32, i32, i32) {
    %c0_i32 = arith.constant 0 : i32
    %c0_i32_0 = arith.constant 0 : i32
    %c0_i32_1 = arith.constant 0 : i32
    return %arg0, %c0_i32, %c0_i32_0 : i32, i32, i32
  }
}

</mosaic_0001>

<llo_original>
// kernel: tpu_custom_call.1
$region0: #{tpu_custom_call.1}
  #allocation0 [shape = 'u32[]', space=smem, size = 0x4, offset = 0x4, fixed_abs, tag = 'smem constant byte address 0x4 - core index']
  #allocation1 [shape = 'u32[144,128]{1,0:T(1,128)}', space=vmem, size = 0x12000, scoped, tag = 'internal scratch']
  #allocation2 [shape = 'f32[1,1024]{1,0:T(1,128)}', space=vmem, size = 0x1000, scoped, tag = 'scratch operand']
  %s0 = inlined_call_operand.vmem [shape: f32[2,2048,3], index: 0, kind: input, shape index: {}]
  %s1 = inlined_call_operand.vmem [shape: bf16[3,64], index: 1, kind: input, shape index: {}]
  %s2 = inlined_call_operand.vmem [shape: f32[1,64], index: 2, kind: input, shape index: {}]
  %s3 = inlined_call_operand.vmem [shape: bf16[64,128], index: 3, kind: input, shape index: {}]
  %s4 = inlined_call_operand.vmem [shape: f32[1,128], index: 4, kind: input, shape index: {}]
  %s5 = inlined_call_operand.vmem [shape: bf16[128,1024], index: 5, kind: input, shape index: {}]
  %s6 = inlined_call_operand.vmem [shape: f32[1,1024], index: 6, kind: input, shape index: {}]
  %s7 = inlined_call_operand.vmem [shape: bf16[1024,512], index: 7, kind: input, shape index: {}]
  %s8 = inlined_call_operand.vmem [shape: f32[1,512], index: 8, kind: input, shape index: {}]
  %s9 = inlined_call_operand.vmem [shape: bf16[512,256], index: 9, kind: input, shape index: {}]
  %s10 = inlined_call_operand.vmem [shape: f32[1,256], index: 10, kind: input, shape index: {}]
  %s11 = inlined_call_operand.vmem [shape: bf16[256,9], index: 11, kind: input, shape index: {}]
  %s12 = inlined_call_operand.vmem [shape: f32[1,9], index: 12, kind: input, shape index: {}]
  %s13 = inlined_call_operand.hbm [shape: f32[2,1,9], index: 13, kind: output, shape index: {}]
  %s14 = sld [smem:[#allocation0]]
  $region93: #{tpu_custom_call.1} parent=0
    _
  %s16 = ssub.s32 1, %s14
  %s17 = scalar_select 0, %s16, %s14
  $region1: #{tpu_custom_call.1} parent=0
    #allocation3 [shape = 'u8[1024]{0}', space=vmem, size = 0x400, scoped, tag = 'output window, operand 0']
    #allocation4 [shape = 's32[2]{0}', space=sflag, size = 0x8, scoped, tag = 'scoped memory for tpu_custom_call.1']
    %18 = vsyncpa [#allocation4], 0
    %s19 = scalar_lea.sflag [#allocation4], 1
    %20 = vsyncpa %s19, 0
    loop: start=0, step=1, limit=6
    $region2: #{tpu_custom_call.1} parent=1 // loop_pre_header
      _
    $region3: #{tpu_custom_call.1} parent=1 // loop_header
      %s22 = sphi 0, %s26
      %p23 = scmp.ge.s32.totalorder %s22, 6
      %s29 = sphi 0, %s41
      %s30 = sphi 0, %s37
      %s31 = sphi 0, %s29
      %s32 = sphi 0, %s30
      %s33 = sphi 0, %s31
      %s34 = sphi 0, %s32
      %s46 = sphi 0, %s48
      %s49 = sphi 0, %s46
      %s50 = sphi 0, %s49
      %s66 = sphi 0, %s50
      %s70 = sphi 0, %s70
      %s72 = sphi 0, %s70
      %s73 = sphi 0, %s72
      %s87 = sphi 0, %s73
      %s91 = sphi 0, %s91
      %s93 = sphi 0, %s91
      %s94 = sphi 0, %s93
      %s108 = sphi 0, %s94
      %s112 = sphi 0, %s112
      %s114 = sphi 0, %s112
      %s115 = sphi 0, %s114
      %s129 = sphi 0, %s115
      %s133 = sphi 0, %s133
      %s135 = sphi 0, %s133
      %s136 = sphi 0, %s135
      %s150 = sphi 0, %s136
      %s154 = sphi 0, %s154
      %s156 = sphi 0, %s154
      %s157 = sphi 0, %s156
      %s171 = sphi 0, %s157
      %s175 = sphi 0, %s175
      %s177 = sphi 0, %s175
      %s178 = sphi 0, %s177
      %s192 = sphi 0, %s178
      %s196 = sphi 0, %s196
      %s198 = sphi 0, %s196
      %s199 = sphi 0, %s198
      %s213 = sphi 0, %s199
      %s217 = sphi 0, %s217
      %s219 = sphi 0, %s217
      %s220 = sphi 0, %s219
      %s234 = sphi 0, %s220
      %s238 = sphi 0, %s238
      %s240 = sphi 0, %s238
      %s241 = sphi 0, %s240
      %s255 = sphi 0, %s241
      %s259 = sphi 0, %s259
      %s261 = sphi 0, %s259
      %s262 = sphi 0, %s261
      %s276 = sphi 0, %s262
      %s280 = sphi 0, %s280
      %s282 = sphi 0, %s280
      %s283 = sphi 0, %s282
      %s297 = sphi 0, %s283
      %s301 = sphi 0, %s301
      %s303 = sphi 0, %s301
      %s304 = sphi 0, %s303
      %s318 = sphi 0, %s304
      %s324 = sphi 0, %s326
      %s327 = sphi 0, %s324
      %s328 = sphi 0, %s327
      %s344 = sphi 0, %s328
    $region4: #{tpu_custom_call.1} parent=1 // loop_header_branch
      %25 = sbr.rel (%p23) target = $region8
    $region5: #{tpu_custom_call.1} parent=1 // loop_body
      %s27 = ssub.s32 %s22, 1
      %s28 = ssub.s32 %s22, 2
      %s35 = sadd.s32 1, %s30
      %p36 = scmp.ge.s32.totalorder %s35, 2
      %s37 = scalar_select %p36, 0, %s35
      %s38 = sadd.s32 1, %s29
      %s39 = scalar_select %p36, %s38, %s29
      %p40 = scmp.ge.s32.totalorder %s39, 2
      %s41 = scalar_select %p40, 0, %s39
      %s42 = ssub.s32 %s29, %s41
      %s43 = ssub.s32 %s30, %s37
      %s44 = sor.u32 %s42, %s43
      %p45 = scmp.eq.s32.totalorder %s44, 0
      %s47 = sadd.s32 %s46, 1
      %s48 = scalar_select %p45, %s46, %s47
      %p51 = pneg %p45
      %p52 = scmp.eq.s32.totalorder %s22, 3
      %p53 = por %p51, %p52
      %p54 = scmp.ne.s32.totalorder %s46, %s49
      %p55 = scmp.eq.s32.totalorder %s22, 0
      %p56 = por %p54, %p55
      %p57 = scmp.ne.s32.totalorder %s46, %s49
      %p58 = scmp.eq.s32.totalorder %s27, 3
      %p59 = por %p57, %p58
      %p60 = scmp.ne.s32.totalorder %s49, %s50
      %p61 = scmp.eq.s32.totalorder %s27, 0
      %p62 = por %p60, %p61
      %p63 = scmp.ne.s32.totalorder %s49, %s50
      %p64 = scmp.eq.s32.totalorder %s28, 3
      %p65 = por %p63, %p64
      %p67 = scmp.ne.s32.totalorder %s50, %s66
      %p68 = scmp.eq.s32.totalorder %s28, 0
      %p69 = por %p67, %p68
      %s71 = sadd.s32 %s70, 1
      %p74 = scmp.eq.s32.totalorder %s22, 3
      %p75 = scmp.ne.s32.totalorder %s70, %s72
      %p76 = scmp.eq.s32.totalorder %s22, 0
      %p77 = por %p75, %p76
      %p78 = scmp.ne.s32.totalorder %s70, %s72
      %p79 = scmp.eq.s32.totalorder %s27, 3
      %p80 = por %p78, %p79
      %p81 = scmp.ne.s32.totalorder %s72, %s73
      %p82 = scmp.eq.s32.totalorder %s27, 0
      %p83 = por %p81, %p82
      %p84 = scmp.ne.s32.totalorder %s72, %s73
      %p85 = scmp.eq.s32.totalorder %s28, 3
      %p86 = por %p84, %p85
      %p88 = scmp.ne.s32.totalorder %s73, %s87
      %p89 = scmp.eq.s32.totalorder %s28, 0
      %p90 = por %p88, %p89
      %s92 = sadd.s32 %s91, 1
      %p95 = scmp.eq.s32.totalorder %s22, 3
      %p96 = scmp.ne.s32.totalorder %s91, %s93
      %p97 = scmp.eq.s32.totalorder %s22, 0
      %p98 = por %p96, %p97
      %p99 = scmp.ne.s32.totalorder %s91, %s93
      %p100 = scmp.eq.s32.totalorder %s27, 3
      %p101 = por %p99, %p100
      %p102 = scmp.ne.s32.totalorder %s93, %s94
      %p103 = scmp.eq.s32.totalorder %s27, 0
      %p104 = por %p102, %p103
      %p105 = scmp.ne.s32.totalorder %s93, %s94
      %p106 = scmp.eq.s32.totalorder %s28, 3
      %p107 = por %p105, %p106
      %p109 = scmp.ne.s32.totalorder %s94, %s108
      %p110 = scmp.eq.s32.totalorder %s28, 0
      %p111 = por %p109, %p110
      %s113 = sadd.s32 %s112, 1
      %p116 = scmp.eq.s32.totalorder %s22, 3
      %p117 = scmp.ne.s32.totalorder %s112, %s114
      %p118 = scmp.eq.s32.totalorder %s22, 0
      %p119 = por %p117, %p118
      %p120 = scmp.ne.s32.totalorder %s112, %s114
      %p121 = scmp.eq.s32.totalorder %s27, 3
      %p122 = por %p120, %p121
      %p123 = scmp.ne.s32.totalorder %s114, %s115
      %p124 = scmp.eq.s32.totalorder %s27, 0
      %p125 = por %p123, %p124
      %p126 = scmp.ne.s32.totalorder %s114, %s115
      %p127 = scmp.eq.s32.totalorder %s28, 3
      %p128 = por %p126, %p127
      %p130 = scmp.ne.s32.totalorder %s115, %s129
      %p131 = scmp.eq.s32.totalorder %s28, 0
      %p132 = por %p130, %p131
      %s134 = sadd.s32 %s133, 1
      %p137 = scmp.eq.s32.totalorder %s22, 3
      %p138 = scmp.ne.s32.totalorder %s133, %s135
      %p139 = scmp.eq.s32.totalorder %s22, 0
      %p140 = por %p138, %p139
      %p141 = scmp.ne.s32.totalorder %s133, %s135
      %p142 = scmp.eq.s32.totalorder %s27, 3
      %p143 = por %p141, %p142
      %p144 = scmp.ne.s32.totalorder %s135, %s136
      %p145 = scmp.eq.s32.totalorder %s27, 0
      %p146 = por %p144, %p145
      %p147 = scmp.ne.s32.totalorder %s135, %s136
      %p148 = scmp.eq.s32.totalorder %s28, 3
      %p149 = por %p147, %p148
      %p151 = scmp.ne.s32.totalorder %s136, %s150
      %p152 = scmp.eq.s32.totalorder %s28, 0
      %p153 = por %p151, %p152
      %s155 = sadd.s32 %s154, 1
      %p158 = scmp.eq.s32.totalorder %s22, 3
      %p159 = scmp.ne.s32.totalorder %s154, %s156
      %p160 = scmp.eq.s32.totalorder %s22, 0
      %p161 = por %p159, %p160
      %p162 = scmp.ne.s32.totalorder %s154, %s156
      %p163 = scmp.eq.s32.totalorder %s27, 3
      %p164 = por %p162, %p163
      %p165 = scmp.ne.s32.totalorder %s156, %s157
      %p166 = scmp.eq.s32.totalorder %s27, 0
      %p167 = por %p165, %p166
      %p168 = scmp.ne.s32.totalorder %s156, %s157
      %p169 = scmp.eq.s32.totalorder %s28, 3
      %p170 = por %p168, %p169
      %p172 = scmp.ne.s32.totalorder %s157, %s171
      %p173 = scmp.eq.s32.totalorder %s28, 0
      %p174 = por %p172, %p173
      %s176 = sadd.s32 %s175, 1
      %p179 = scmp.eq.s32.totalorder %s22, 3
      %p180 = scmp.ne.s32.totalorder %s175, %s177
      %p181 = scmp.eq.s32.totalorder %s22, 0
      %p182 = por %p180, %p181
      %p183 = scmp.ne.s32.totalorder %s175, %s177
      %p184 = scmp.eq.s32.totalorder %s27, 3
      %p185 = por %p183, %p184
      %p186 = scmp.ne.s32.totalorder %s177, %s178
      %p187 = scmp.eq.s32.totalorder %s27, 0
      %p188 = por %p186, %p187
      %p189 = scmp.ne.s32.totalorder %s177, %s178
      %p190 = scmp.eq.s32.totalorder %s28, 3
      %p191 = por %p189, %p190
      %p193 = scmp.ne.s32.totalorder %s178, %s192
      %p194 = scmp.eq.s32.totalorder %s28, 0
      %p195 = por %p193, %p194
      %s197 = sadd.s32 %s196, 1
      %p200 = scmp.eq.s32.totalorder %s22, 3
      %p201 = scmp.ne.s32.totalorder %s196, %s198
      %p202 = scmp.eq.s32.totalorder %s22, 0
      %p203 = por %p201, %p202
      %p204 = scmp.ne.s32.totalorder %s196, %s198
      %p205 = scmp.eq.s32.totalorder %s27, 3
      %p206 = por %p204, %p205
      %p207 = scmp.ne.s32.totalorder %s198, %s199
      %p208 = scmp.eq.s32.totalorder %s27, 0
      %p209 = por %p207, %p208
      %p210 = scmp.ne.s32.totalorder %s198, %s199
      %p211 = scmp.eq.s32.totalorder %s28, 3
      %p212 = por %p210, %p211
      %p214 = scmp.ne.s32.totalorder %s199, %s213
      %p215 = scmp.eq.s32.totalorder %s28, 0
      %p216 = por %p214, %p215
      %s218 = sadd.s32 %s217, 1
      %p221 = scmp.eq.s32.totalorder %s22, 3
      %p222 = scmp.ne.s32.totalorder %s217, %s219
      %p223 = scmp.eq.s32.totalorder %s22, 0
      %p224 = por %p222, %p223
      %p225 = scmp.ne.s32.totalorder %s217, %s219
      %p226 = scmp.eq.s32.totalorder %s27, 3
      %p227 = por %p225, %p226
      %p228 = scmp.ne.s32.totalorder %s219, %s220
      %p229 = scmp.eq.s32.totalorder %s27, 0
      %p230 = por %p228, %p229
      %p231 = scmp.ne.s32.totalorder %s219, %s220
      %p232 = scmp.eq.s32.totalorder %s28, 3
      %p233 = por %p231, %p232
      %p235 = scmp.ne.s32.totalorder %s220, %s234
      %p236 = scmp.eq.s32.totalorder %s28, 0
      %p237 = por %p235, %p236
      %s239 = sadd.s32 %s238, 1
      %p242 = scmp.eq.s32.totalorder %s22, 3
      %p243 = scmp.ne.s32.totalorder %s238, %s240
      %p244 = scmp.eq.s32.totalorder %s22, 0
      %p245 = por %p243, %p244
      %p246 = scmp.ne.s32.totalorder %s238, %s240
      %p247 = scmp.eq.s32.totalorder %s27, 3
      %p248 = por %p246, %p247
      %p249 = scmp.ne.s32.totalorder %s240, %s241
      %p250 = scmp.eq.s32.totalorder %s27, 0
      %p251 = por %p249, %p250
      %p252 = scmp.ne.s32.totalorder %s240, %s241
      %p253 = scmp.eq.s32.totalorder %s28, 3
      %p254 = por %p252, %p253
      %p256 = scmp.ne.s32.totalorder %s241, %s255
      %p257 = scmp.eq.s32.totalorder %s28, 0
      %p258 = por %p256, %p257
      %s260 = sadd.s32 %s259, 1
      %p263 = scmp.eq.s32.totalorder %s22, 3
      %p264 = scmp.ne.s32.totalorder %s259, %s261
      %p265 = scmp.eq.s32.totalorder %s22, 0
      %p266 = por %p264, %p265
      %p267 = scmp.ne.s32.totalorder %s259, %s261
      %p268 = scmp.eq.s32.totalorder %s27, 3
      %p269 = por %p267, %p268
      %p270 = scmp.ne.s32.totalorder %s261, %s262
      %p271 = scmp.eq.s32.totalorder %s27, 0
      %p272 = por %p270, %p271
      %p273 = scmp.ne.s32.totalorder %s261, %s262
      %p274 = scmp.eq.s32.totalorder %s28, 3
      %p275 = por %p273, %p274
      %p277 = scmp.ne.s32.totalorder %s262, %s276
      %p278 = scmp.eq.s32.totalorder %s28, 0
      %p279 = por %p277, %p278
      %s281 = sadd.s32 %s280, 1
      %p284 = scmp.eq.s32.totalorder %s22, 3
      %p285 = scmp.ne.s32.totalorder %s280, %s282
      %p286 = scmp.eq.s32.totalorder %s22, 0
      %p287 = por %p285, %p286
      %p288 = scmp.ne.s32.totalorder %s280, %s282
      %p289 = scmp.eq.s32.totalorder %s27, 3
      %p290 = por %p288, %p289
      %p291 = scmp.ne.s32.totalorder %s282, %s283
      %p292 = scmp.eq.s32.totalorder %s27, 0
      %p293 = por %p291, %p292
      %p294 = scmp.ne.s32.totalorder %s282, %s283
      %p295 = scmp.eq.s32.totalorder %s28, 3
      %p296 = por %p294, %p295
      %p298 = scmp.ne.s32.totalorder %s283, %s297
      %p299 = scmp.eq.s32.totalorder %s28, 0
      %p300 = por %p298, %p299
      %s302 = sadd.s32 %s301, 1
      %p305 = scmp.eq.s32.totalorder %s22, 3
      %p306 = scmp.ne.s32.totalorder %s301, %s303
      %p307 = scmp.eq.s32.totalorder %s22, 0
      %p308 = por %p306, %p307
      %p309 = scmp.ne.s32.totalorder %s301, %s303
      %p310 = scmp.eq.s32.totalorder %s27, 3
      %p311 = por %p309, %p310
      %p312 = scmp.ne.s32.totalorder %s303, %s304
      %p313 = scmp.eq.s32.totalorder %s27, 0
      %p314 = por %p312, %p313
      %p315 = scmp.ne.s32.totalorder %s303, %s304
      %p316 = scmp.eq.s32.totalorder %s28, 3
      %p317 = por %p315, %p316
      %p319 = scmp.ne.s32.totalorder %s304, %s318
      %p320 = scmp.eq.s32.totalorder %s28, 0
      %p321 = por %p319, %p320
      %s322 = ssub.s32 %s29, %s41
      %p323 = scmp.eq.s32.totalorder %s322, 0
      %s325 = sadd.s32 %s324, 1
      %s326 = scalar_select %p323, %s324, %s325
      %p329 = pneg %p323
      %p330 = scmp.eq.s32.totalorder %s22, 3
      %p331 = por %p329, %p330
      %p332 = scmp.ne.s32.totalorder %s324, %s327
      %p333 = scmp.eq.s32.totalorder %s22, 0
      %p334 = por %p332, %p333
      %p335 = scmp.ne.s32.totalorder %s324, %s327
      %p336 = scmp.eq.s32.totalorder %s27, 3
      %p337 = por %p335, %p336
      %p338 = scmp.ne.s32.totalorder %s327, %s328
      %p339 = scmp.eq.s32.totalorder %s27, 0
      %p340 = por %p338, %p339
      %p341 = scmp.ne.s32.totalorder %s327, %s328
      %p342 = scmp.eq.s32.totalorder %s28, 3
      %p343 = por %p341, %p342
      %p345 = scmp.ne.s32.totalorder %s328, %s344
      %p346 = scmp.eq.s32.totalorder %s28, 0
      %p347 = por %p345, %p346
      %p348 = scmp.le.s32.totalorder 1, %s22
      %p349 = scmp.lt.s32.totalorder %s22, 5
      %p350 = pnand %p348, %p349
      %p351 = pneg %p350
      // Predicated region
      $region9: #{tpu_custom_call.1} parent=5 // pred_check
        _
      $region10: #{tpu_custom_call.1} parent=5 // pred_check_branch
        %353 = sbr.rel (%p350) target = $region12
      $region11: #{tpu_custom_call.1} parent=5 // pred_region
        %s354 = ssub.s32 %s22, 1
        // Predicated region
        $region13: #{tpu_custom_call.1} parent=11 // pred_check
          %p355 = pneg %p83
        $region14: #{tpu_custom_call.1} parent=11 // pred_check_branch
          %357 = sbr.rel (%p355) target = $region16
        $region15: #{tpu_custom_call.1} parent=11 // pred_region
          _
        $region16: #{tpu_custom_call.1} parent=11 // pred_fallthru
          _
        // Predicated region
        $region17: #{tpu_custom_call.1} parent=11 // pred_check
          %p358 = pneg %p104
        $region18: #{tpu_custom_call.1} parent=11 // pred_check_branch
          %360 = sbr.rel (%p358) target = $region20
        $region19: #{tpu_custom_call.1} parent=11 // pred_region
          _
        $region20: #{tpu_custom_call.1} parent=11 // pred_fallthru
          _
        // Predicated region
        $region21: #{tpu_custom_call.1} parent=11 // pred_check
          %p361 = pneg %p125
        $region22: #{tpu_custom_call.1} parent=11 // pred_check_branch
          %363 = sbr.rel (%p361) target = $region24
        $region23: #{tpu_custom_call.1} parent=11 // pred_region
          _
        $region24: #{tpu_custom_call.1} parent=11 // pred_fallthru
          _
        // Predicated region
        $region25: #{tpu_custom_call.1} parent=11 // pred_check
          %p364 = pneg %p146
        $region26: #{tpu_custom_call.1} parent=11 // pred_check_branch
          %366 = sbr.rel (%p364) target = $region28
        $region27: #{tpu_custom_call.1} parent=11 // pred_region
          _
        $region28: #{tpu_custom_call.1} parent=11 // pred_fallthru
          _
        // Predicated region
        $region29: #{tpu_custom_call.1} parent=11 // pred_check
          %p367 = pneg %p167
        $region30: #{tpu_custom_call.1} parent=11 // pred_check_branch
          %369 = sbr.rel (%p367) target = $region32
        $region31: #{tpu_custom_call.1} parent=11 // pred_region
          _
        $region32: #{tpu_custom_call.1} parent=11 // pred_fallthru
          _
        // Predicated region
        $region33: #{tpu_custom_call.1} parent=11 // pred_check
          %p370 = pneg %p188
        $region34: #{tpu_custom_call.1} parent=11 // pred_check_branch
          %372 = sbr.rel (%p370) target = $region36
        $region35: #{tpu_custom_call.1} parent=11 // pred_region
          _
        $region36: #{tpu_custom_call.1} parent=11 // pred_fallthru
          _
        // Predicated region
        $region37: #{tpu_custom_call.1} parent=11 // pred_check
          %p373 = pneg %p209
        $region38: #{tpu_custom_call.1} parent=11 // pred_check_branch
          %375 = sbr.rel (%p373) target = $region40
        $region39: #{tpu_custom_call.1} parent=11 // pred_region
          _
        $region40: #{tpu_custom_call.1} parent=11 // pred_fallthru
          _
        // Predicated region
        $region41: #{tpu_custom_call.1} parent=11 // pred_check
          %p376 = pneg %p230
        $region42: #{tpu_custom_call.1} parent=11 // pred_check_branch
          %378 = sbr.rel (%p376) target = $region44
        $region43: #{tpu_custom_call.1} parent=11 // pred_region
          _
        $region44: #{tpu_custom_call.1} parent=11 // pred_fallthru
          _
        // Predicated region
        $region45: #{tpu_custom_call.1} parent=11 // pred_check
          %p379 = pneg %p251
        $region46: #{tpu_custom_call.1} parent=11 // pred_check_branch
          %381 = sbr.rel (%p379) target = $region48
        $region47: #{tpu_custom_call.1} parent=11 // pred_region
          _
        $region48: #{tpu_custom_call.1} parent=11 // pred_fallthru
          _
        // Predicated region
        $region49: #{tpu_custom_call.1} parent=11 // pred_check
          %p382 = pneg %p272
        $region50: #{tpu_custom_call.1} parent=11 // pred_check_branch
          %384 = sbr.rel (%p382) target = $region52
        $region51: #{tpu_custom_call.1} parent=11 // pred_region
          _
        $region52: #{tpu_custom_call.1} parent=11 // pred_fallthru
          _
        // Predicated region
        $region53: #{tpu_custom_call.1} parent=11 // pred_check
          %p385 = pneg %p293
        $region54: #{tpu_custom_call.1} parent=11 // pred_check_branch
          %387 = sbr.rel (%p385) target = $region56
        $region55: #{tpu_custom_call.1} parent=11 // pred_region
          _
        $region56: #{tpu_custom_call.1} parent=11 // pred_fallthru
          _
        // Predicated region
        $region57: #{tpu_custom_call.1} parent=11 // pred_check
          %p388 = pneg %p314
        $region58: #{tpu_custom_call.1} parent=11 // pred_check_branch
          %390 = sbr.rel (%p388) target = $region60
        $region59: #{tpu_custom_call.1} parent=11 // pred_region
          _
        $region60: #{tpu_custom_call.1} parent=11 // pred_fallthru
          _
      $region12: #{tpu_custom_call.1} parent=5 // pred_fallthru
        _
      %p391 = scmp.lt.s32.totalorder %s22, 4
      // Predicated region
      $region61: #{tpu_custom_call.1} parent=5 // pred_check
        %p392 = pneg %p391
      $region62: #{tpu_custom_call.1} parent=5 // pred_check_branch
        %394 = sbr.rel (%p392) target = $region64
      $region63: #{tpu_custom_call.1} parent=5 // pred_region
        // Predicated region
        $region65: #{tpu_custom_call.1} parent=63 // pred_check
          %p395 = pneg %p56
        $region66: #{tpu_custom_call.1} parent=63 // pred_check_branch
          %397 = sbr.rel (%p395) target = $region68
        $region67: #{tpu_custom_call.1} parent=63 // pred_region
          %s398 = smul.u32 128, %s30
          %p399 = scmp.lt.s32.totalorder %s29, 1
          %s400 = scalar_select %p399, %s29, 1
          %p401 = scmp.lt.s32.totalorder %s398, 255
          %s402 = scalar_select %p401, %s398, 255
          %s403 = smul.addr %s400, 256
          %s404 = sadd.s32 %s402, %s403
          %s405 = smul.addr %s404, 8
          %s406 = scalar_lea.vmem %s0, %s405
          %s407 = smul.u32 128, %s30
        $region68: #{tpu_custom_call.1} parent=63 // pred_fallthru
          _
      $region64: #{tpu_custom_call.1} parent=5 // pred_fallthru
        _
      %p408 = scmp.le.s32.totalorder 1, %s22
      %p409 = scmp.lt.s32.totalorder %s22, 5
      %p410 = pnand %p408, %p409
      %p411 = pneg %p410
      // Predicated region
      $region69: #{tpu_custom_call.1} parent=5 // pred_check
        _
      $region70: #{tpu_custom_call.1} parent=5 // pred_check_branch
        %413 = sbr.rel (%p410) target = $region72
      $region71: #{tpu_custom_call.1} parent=5 // pred_region
        %s414 = ssub.s32 %s22, 1
        %s415 = smul.u32 128, %s32
        %p416 = scmp.lt.s32.totalorder %s31, 1
        %s417 = scalar_select %p416, %s31, 1
        %p418 = scmp.lt.s32.totalorder %s415, 255
        %s419 = scalar_select %p418, %s415, 255
        %s420 = smul.addr %s417, 256
        %s421 = sadd.s32 %s419, %s420
        %s422 = smul.addr %s421, 8
        %s423 = scalar_lea.vmem %s0, %s422
        %p424 = pneg %p62
        %p425 = pneg %p59
        %p426 = pneg %p83
        %p427 = pneg %p80
        %p428 = pneg %p104
        %p429 = pneg %p101
        %p430 = pneg %p125
        %p431 = pneg %p122
        %p432 = pneg %p146
        %p433 = pneg %p143
        %p434 = pneg %p167
        %p435 = pneg %p164
        %p436 = pneg %p188
        %p437 = pneg %p185
        %p438 = pneg %p209
        %p439 = pneg %p206
        %p440 = pneg %p230
        %p441 = pneg %p227
        %p442 = pneg %p251
        %p443 = pneg %p248
        %p444 = pneg %p272
        %p445 = pneg %p269
        %p446 = pneg %p293
        %p447 = pneg %p290
        %p448 = pneg %p314
        %p449 = pneg %p311
        %p450 = pneg %p340
        %p451 = pneg %p337
        %s452 = sand.u32 %s327, 1
        %s453 = scalar_lea.sflag [#allocation4], %s452
        %s454 = sand.u32 %s327, 1
        %s455 = scalar_lea.vmem [#allocation3], %s454
        %s456 = smul.u32 128, %s32
        %p457 = scmp.lt.s32.totalorder %s31, 1
        %s458 = scalar_select %p457, %s31, 1
        %p459 = scmp.lt.s32.totalorder %s456, 255
        %s460 = scalar_select %p459, %s456, 255
        %s461 = smul.addr %s458, 256
        %s462 = sadd.s32 %s460, %s461
        %s463 = smul.addr %s462, 8
        %s464 = scalar_lea.vmem %s0, %s463
        %s465 = smul.u32 128, %s32
        %v467 = vld [vmem:[%s464] sm:$0xff]
        %v468 = vld [vmem:[%s464 + $0x8] sm:$0xff]
        %v469 = vld [vmem:[%s464 + $0x10] sm:$0xff]
        %v470 = vld [vmem:[%s464 + $0x18] sm:$0xff]
        %v471 = vld [vmem:[%s464 + $0x20] sm:$0xff]
        %v472 = vld [vmem:[%s464 + $0x28] sm:$0xff]
        %v473 = vld [vmem:[%s464 + $0x30] sm:$0xff]
        %v474 = vld [vmem:[%s464 + $0x38] sm:$0xff]
        %v475 = vld [vmem:[%s464 + $0x40] sm:$0xff]
        %v476 = vld [vmem:[%s464 + $0x48] sm:$0xff]
        %v477 = vld [vmem:[%s464 + $0x50] sm:$0xff]
        %v478 = vld [vmem:[%s464 + $0x58] sm:$0xff]
        %v479 = vld [vmem:[%s464 + $0x60] sm:$0xff]
        %v480 = vld [vmem:[%s464 + $0x68] sm:$0xff]
        %v481 = vld [vmem:[%s464 + $0x70] sm:$0xff]
        %v482 = vld [vmem:[%s464 + $0x78] sm:$0xff]
        %v483 = vld [vmem:[%s464 + $0x80] sm:$0xff]
        %v484 = vld [vmem:[%s464 + $0x88] sm:$0xff]
        %v485 = vld [vmem:[%s464 + $0x90] sm:$0xff]
        %v486 = vld [vmem:[%s464 + $0x98] sm:$0xff]
        %v487 = vld [vmem:[%s464 + $0xa0] sm:$0xff]
        %v488 = vld [vmem:[%s464 + $0xa8] sm:$0xff]
        %v489 = vld [vmem:[%s464 + $0xb0] sm:$0xff]
        %v490 = vld [vmem:[%s464 + $0xb8] sm:$0xff]
        %v491 = vld [vmem:[%s464 + $0xc0] sm:$0xff]
        %v492 = vld [vmem:[%s464 + $0xc8] sm:$0xff]
        %v493 = vld [vmem:[%s464 + $0xd0] sm:$0xff]
        %v494 = vld [vmem:[%s464 + $0xd8] sm:$0xff]
        %v495 = vld [vmem:[%s464 + $0xe0] sm:$0xff]
        %v496 = vld [vmem:[%s464 + $0xe8] sm:$0xff]
        %v497 = vld [vmem:[%s464 + $0xf0] sm:$0xff]
        %v498 = vld [vmem:[%s464 + $0xf8] sm:$0xff]
        %v499 = vld [vmem:[%s464 + $0x100] sm:$0xff]
        %v500 = vld [vmem:[%s464 + $0x108] sm:$0xff]
        %v501 = vld [vmem:[%s464 + $0x110] sm:$0xff]
        %v502 = vld [vmem:[%s464 + $0x118] sm:$0xff]
        %v503 = vld [vmem:[%s464 + $0x120] sm:$0xff]
        %v504 = vld [vmem:[%s464 + $0x128] sm:$0xff]
        %v505 = vld [vmem:[%s464 + $0x130] sm:$0xff]
        %v506 = vld [vmem:[%s464 + $0x138] sm:$0xff]
        %v507 = vld [vmem:[%s464 + $0x140] sm:$0xff]
        %v508 = vld [vmem:[%s464 + $0x148] sm:$0xff]
        %v509 = vld [vmem:[%s464 + $0x150] sm:$0xff]
        %v510 = vld [vmem:[%s464 + $0x158] sm:$0xff]
        %v511 = vld [vmem:[%s464 + $0x160] sm:$0xff]
        %v512 = vld [vmem:[%s464 + $0x168] sm:$0xff]
        %v513 = vld [vmem:[%s464 + $0x170] sm:$0xff]
        %v514 = vld [vmem:[%s464 + $0x178] sm:$0xff]
        %v515 = vld [vmem:[%s464 + $0x180] sm:$0xff]
        %v516 = vld [vmem:[%s464 + $0x188] sm:$0xff]
        %v517 = vld [vmem:[%s464 + $0x190] sm:$0xff]
        %v518 = vld [vmem:[%s464 + $0x198] sm:$0xff]
        %v519 = vld [vmem:[%s464 + $0x1a0] sm:$0xff]
        %v520 = vld [vmem:[%s464 + $0x1a8] sm:$0xff]
        %v521 = vld [vmem:[%s464 + $0x1b0] sm:$0xff]
        %v522 = vld [vmem:[%s464 + $0x1b8] sm:$0xff]
        %v523 = vld [vmem:[%s464 + $0x1c0] sm:$0xff]
        %v524 = vld [vmem:[%s464 + $0x1c8] sm:$0xff]
        %v525 = vld [vmem:[%s464 + $0x1d0] sm:$0xff]
        %v526 = vld [vmem:[%s464 + $0x1d8] sm:$0xff]
        %v527 = vld [vmem:[%s464 + $0x1e0] sm:$0xff]
        %v528 = vld [vmem:[%s464 + $0x1e8] sm:$0xff]
        %v529 = vld [vmem:[%s464 + $0x1f0] sm:$0xff]
        %v530 = vld [vmem:[%s464 + $0x1f8] sm:$0xff]
        %v531 = vld [vmem:[%s464 + $0x200] sm:$0xff]
        %v532 = vld [vmem:[%s464 + $0x208] sm:$0xff]
        %v533 = vld [vmem:[%s464 + $0x210] sm:$0xff]
        %v534 = vld [vmem:[%s464 + $0x218] sm:$0xff]
        %v535 = vld [vmem:[%s464 + $0x220] sm:$0xff]
        %v536 = vld [vmem:[%s464 + $0x228] sm:$0xff]
        %v537 = vld [vmem:[%s464 + $0x230] sm:$0xff]
        %v538 = vld [vmem:[%s464 + $0x238] sm:$0xff]
        %v539 = vld [vmem:[%s464 + $0x240] sm:$0xff]
        %v540 = vld [vmem:[%s464 + $0x248] sm:$0xff]
        %v541 = vld [vmem:[%s464 + $0x250] sm:$0xff]
        %v542 = vld [vmem:[%s464 + $0x258] sm:$0xff]
        %v543 = vld [vmem:[%s464 + $0x260] sm:$0xff]
        %v544 = vld [vmem:[%s464 + $0x268] sm:$0xff]
        %v545 = vld [vmem:[%s464 + $0x270] sm:$0xff]
        %v546 = vld [vmem:[%s464 + $0x278] sm:$0xff]
        %v547 = vld [vmem:[%s464 + $0x280] sm:$0xff]
        %v548 = vld [vmem:[%s464 + $0x288] sm:$0xff]
        %v549 = vld [vmem:[%s464 + $0x290] sm:$0xff]
        %v550 = vld [vmem:[%s464 + $0x298] sm:$0xff]
        %v551 = vld [vmem:[%s464 + $0x2a0] sm:$0xff]
        %v552 = vld [vmem:[%s464 + $0x2a8] sm:$0xff]
        %v553 = vld [vmem:[%s464 + $0x2b0] sm:$0xff]
        %v554 = vld [vmem:[%s464 + $0x2b8] sm:$0xff]
        %v555 = vld [vmem:[%s464 + $0x2c0] sm:$0xff]
        %v556 = vld [vmem:[%s464 + $0x2c8] sm:$0xff]
        %v557 = vld [vmem:[%s464 + $0x2d0] sm:$0xff]
        %v558 = vld [vmem:[%s464 + $0x2d8] sm:$0xff]
        %v559 = vld [vmem:[%s464 + $0x2e0] sm:$0xff]
        %v560 = vld [vmem:[%s464 + $0x2e8] sm:$0xff]
        %v561 = vld [vmem:[%s464 + $0x2f0] sm:$0xff]
        %v562 = vld [vmem:[%s464 + $0x2f8] sm:$0xff]
        %v563 = vld [vmem:[%s464 + $0x300] sm:$0xff]
        %v564 = vld [vmem:[%s464 + $0x308] sm:$0xff]
        %v565 = vld [vmem:[%s464 + $0x310] sm:$0xff]
        %v566 = vld [vmem:[%s464 + $0x318] sm:$0xff]
        %v567 = vld [vmem:[%s464 + $0x320] sm:$0xff]
        %v568 = vld [vmem:[%s464 + $0x328] sm:$0xff]
        %v569 = vld [vmem:[%s464 + $0x330] sm:$0xff]
        %v570 = vld [vmem:[%s464 + $0x338] sm:$0xff]
        %v571 = vld [vmem:[%s464 + $0x340] sm:$0xff]
        %v572 = vld [vmem:[%s464 + $0x348] sm:$0xff]
        %v573 = vld [vmem:[%s464 + $0x350] sm:$0xff]
        %v574 = vld [vmem:[%s464 + $0x358] sm:$0xff]
        %v575 = vld [vmem:[%s464 + $0x360] sm:$0xff]
        %v576 = vld [vmem:[%s464 + $0x368] sm:$0xff]
        %v577 = vld [vmem:[%s464 + $0x370] sm:$0xff]
        %v578 = vld [vmem:[%s464 + $0x378] sm:$0xff]
        %v579 = vld [vmem:[%s464 + $0x380] sm:$0xff]
        %v580 = vld [vmem:[%s464 + $0x388] sm:$0xff]
        %v581 = vld [vmem:[%s464 + $0x390] sm:$0xff]
        %v582 = vld [vmem:[%s464 + $0x398] sm:$0xff]
        %v583 = vld [vmem:[%s464 + $0x3a0] sm:$0xff]
        %v584 = vld [vmem:[%s464 + $0x3a8] sm:$0xff]
        %v585 = vld [vmem:[%s464 + $0x3b0] sm:$0xff]
        %v586 = vld [vmem:[%s464 + $0x3b8] sm:$0xff]
        %v587 = vld [vmem:[%s464 + $0x3c0] sm:$0xff]
        %v588 = vld [vmem:[%s464 + $0x3c8] sm:$0xff]
        %v589 = vld [vmem:[%s464 + $0x3d0] sm:$0xff]
        %v590 = vld [vmem:[%s464 + $0x3d8] sm:$0xff]
        %v591 = vld [vmem:[%s464 + $0x3e0] sm:$0xff]
        %v592 = vld [vmem:[%s464 + $0x3e8] sm:$0xff]
        %v593 = vld [vmem:[%s464 + $0x3f0] sm:$0xff]
        %v594 = vld [vmem:[%s464 + $0x3f8] sm:$0xff]
        %v595 = vpack.c.bf16 %v468, %v467
        %v596 = vpack.c.bf16 %v470, %v469
        %v597 = vpack.c.bf16 %v472, %v471
        %v598 = vpack.c.bf16 %v474, %v473
        %v599 = vpack.c.bf16 %v476, %v475
        %v600 = vpack.c.bf16 %v478, %v477
        %v601 = vpack.c.bf16 %v480, %v479
        %v602 = vpack.c.bf16 %v482, %v481
        %v603 = vpack.c.bf16 %v484, %v483
        %v604 = vpack.c.bf16 %v486, %v485
        %v605 = vpack.c.bf16 %v488, %v487
        %v606 = vpack.c.bf16 %v490, %v489
        %v607 = vpack.c.bf16 %v492, %v491
        %v608 = vpack.c.bf16 %v494, %v493
        %v609 = vpack.c.bf16 %v496, %v495
        %v610 = vpack.c.bf16 %v498, %v497
        %v611 = vpack.c.bf16 %v500, %v499
        %v612 = vpack.c.bf16 %v502, %v501
        %v613 = vpack.c.bf16 %v504, %v503
        %v614 = vpack.c.bf16 %v506, %v505
        %v615 = vpack.c.bf16 %v508, %v507
        %v616 = vpack.c.bf16 %v510, %v509
        %v617 = vpack.c.bf16 %v512, %v511
        %v618 = vpack.c.bf16 %v514, %v513
        %v619 = vpack.c.bf16 %v516, %v515
        %v620 = vpack.c.bf16 %v518, %v517
        %v621 = vpack.c.bf16 %v520, %v519
        %v622 = vpack.c.bf16 %v522, %v521
        %v623 = vpack.c.bf16 %v524, %v523
        %v624 = vpack.c.bf16 %v526, %v525
        %v625 = vpack.c.bf16 %v528, %v527
        %v626 = vpack.c.bf16 %v530, %v529
        %v627 = vpack.c.bf16 %v532, %v531
        %v628 = vpack.c.bf16 %v534, %v533
        %v629 = vpack.c.bf16 %v536, %v535
        %v630 = vpack.c.bf16 %v538, %v537
        %v631 = vpack.c.bf16 %v540, %v539
        %v632 = vpack.c.bf16 %v542, %v541
        %v633 = vpack.c.bf16 %v544, %v543
        %v634 = vpack.c.bf16 %v546, %v545
        %v635 = vpack.c.bf16 %v548, %v547
        %v636 = vpack.c.bf16 %v550, %v549
        %v637 = vpack.c.bf16 %v552, %v551
        %v638 = vpack.c.bf16 %v554, %v553
        %v639 = vpack.c.bf16 %v556, %v555
        %v640 = vpack.c.bf16 %v558, %v557
        %v641 = vpack.c.bf16 %v560, %v559
        %v642 = vpack.c.bf16 %v562, %v561
        %v643 = vpack.c.bf16 %v564, %v563
        %v644 = vpack.c.bf16 %v566, %v565
        %v645 = vpack.c.bf16 %v568, %v567
        %v646 = vpack.c.bf16 %v570, %v569
        %v647 = vpack.c.bf16 %v572, %v571
        %v648 = vpack.c.bf16 %v574, %v573
        %v649 = vpack.c.bf16 %v576, %v575
        %v650 = vpack.c.bf16 %v578, %v577
        %v651 = vpack.c.bf16 %v580, %v579
        %v652 = vpack.c.bf16 %v582, %v581
        %v653 = vpack.c.bf16 %v584, %v583
        %v654 = vpack.c.bf16 %v586, %v585
        %v655 = vpack.c.bf16 %v588, %v587
        %v656 = vpack.c.bf16 %v590, %v589
        %v657 = vpack.c.bf16 %v592, %v591
        %v658 = vpack.c.bf16 %v594, %v593
        %v659 = vld [vmem:[%s1] sm:$0x3]
        %v660 = vld [vmem:[%s2] sm:$0x1]
        %v662 = vlaneseq
        %v663 = vshrl.u32 %v662, 7
        %v664 = vsub.s32 0, %v663
        %v665 = vrot.slane %v660, %v664
        %vm667 = vcmask 23552
        %v669 = vsel %vm667, %v595, 0
        %v672 = vsel %vm667, %v596, 0
        %v675 = vsel %vm667, %v597, 0
        %v678 = vsel %vm667, %v598, 0
        %v681 = vsel %vm667, %v599, 0
        %v684 = vsel %vm667, %v600, 0
        %v687 = vsel %vm667, %v601, 0
        %v690 = vsel %vm667, %v602, 0
        %v693 = vsel %vm667, %v603, 0
        %v696 = vsel %vm667, %v604, 0
        %v699 = vsel %vm667, %v605, 0
        %v702 = vsel %vm667, %v606, 0
        %v705 = vsel %vm667, %v607, 0
        %v708 = vsel %vm667, %v608, 0
        %v711 = vsel %vm667, %v609, 0
        %v714 = vsel %vm667, %v610, 0
        %v717 = vsel %vm667, %v611, 0
        %v720 = vsel %vm667, %v612, 0
        %v723 = vsel %vm667, %v613, 0
        %v726 = vsel %vm667, %v614, 0
        %v729 = vsel %vm667, %v615, 0
        %v732 = vsel %vm667, %v616, 0
        %v735 = vsel %vm667, %v617, 0
        %v738 = vsel %vm667, %v618, 0
        %v741 = vsel %vm667, %v619, 0
        %v744 = vsel %vm667, %v620, 0
        %v747 = vsel %vm667, %v621, 0
        %v750 = vsel %vm667, %v622, 0
        %v753 = vsel %vm667, %v623, 0
        %v756 = vsel %vm667, %v624, 0
        %v759 = vsel %vm667, %v625, 0
        %v762 = vsel %vm667, %v626, 0
        %v765 = vsel %vm667, %v627, 0
        %v768 = vsel %vm667, %v628, 0
        %v771 = vsel %vm667, %v629, 0
        %v774 = vsel %vm667, %v630, 0
        %v777 = vsel %vm667, %v631, 0
        %v780 = vsel %vm667, %v632, 0
        %v783 = vsel %vm667, %v633, 0
        %v786 = vsel %vm667, %v634, 0
        %v789 = vsel %vm667, %v635, 0
        %v792 = vsel %vm667, %v636, 0
        %v795 = vsel %vm667, %v637, 0
        %v798 = vsel %vm667, %v638, 0
        %v801 = vsel %vm667, %v639, 0
        %v804 = vsel %vm667, %v640, 0
        %v807 = vsel %vm667, %v641, 0
        %v810 = vsel %vm667, %v642, 0
        %v813 = vsel %vm667, %v643, 0
        %v816 = vsel %vm667, %v644, 0
        %v819 = vsel %vm667, %v645, 0
        %v822 = vsel %vm667, %v646, 0
        %v825 = vsel %vm667, %v647, 0
        %v828 = vsel %vm667, %v648, 0
        %v831 = vsel %vm667, %v649, 0
        %v834 = vsel %vm667, %v650, 0
        %v837 = vsel %vm667, %v651, 0
        %v840 = vsel %vm667, %v652, 0
        %v843 = vsel %vm667, %v653, 0
        %v846 = vsel %vm667, %v654, 0
        %v849 = vsel %vm667, %v655, 0
        %v852 = vsel %vm667, %v656, 0
        %v855 = vsel %vm667, %v657, 0
        %v858 = vsel %vm667, %v658, 0
        %vm860 = vcmask 1040384
        %vm861 = vcmask 1041408
        %v862 = vsel %vm860, 4294967295, 65535
        %v863 = vsel %vm861, %v862, 0
        %v865 = vand.u32 %v659, %v863
        %867 = vmatprep.subr.bf16.mxu0 0
        %868 = vmatpush1.bf16.msra.mxu0 %v865
        %869 = vmatprep.subr.bf16.mxu0 0
        %870 = vmatpush1.bf16.msra.mxu0 0
        %871 = vmatprep.subr.bf16.mxu0 0
        %872 = vmatpush1.bf16.msra.mxu0 0
        %873 = vmatprep.subr.bf16.mxu0 0
        %874 = vmatpush1.bf16.msra.mxu0 0
        %875 = vmatprep.subr.bf16.mxu0 0
        %876 = vmatpush1.bf16.msra.mxu0 0
        %877 = vmatprep.subr.bf16.mxu0 0
        %878 = vmatpush1.bf16.msra.mxu0 0
        %879 = vmatprep.subr.bf16.mxu0 0
        %880 = vmatpush1.bf16.msra.mxu0 0
        %881 = vmatprep.subr.bf16.mxu0 0
        %882 = vmatpush1.bf16.msra.mxu0 0
        %883 = vmatprep.subr.bf16.mxu0 0
        %884 = vmatpush1.bf16.msra.mxu0 0
        %885 = vmatprep.subr.bf16.mxu0 0
        %886 = vmatpush1.bf16.msra.mxu0 0
        %887 = vmatprep.subr.bf16.mxu0 0
        %888 = vmatpush1.bf16.msra.mxu0 0
        %889 = vmatprep.subr.bf16.mxu0 0
        %890 = vmatpush1.bf16.msra.mxu0 0
        %891 = vmatprep.subr.bf16.mxu0 0
        %892 = vmatpush1.bf16.msra.mxu0 0
        %893 = vmatprep.subr.bf16.mxu0 0
        %894 = vmatpush1.bf16.msra.mxu0 0
        %895 = vmatprep.subr.bf16.mxu0 0
        %896 = vmatpush1.bf16.msra.mxu0 0
        %897 = vmatprep.subr.bf16.mxu0 0
        %898 = vmatpush1.bf16.msra.mxu0 0
        %899 = vmatprep.mubr.bf16.mxu0 0
        %900 = vmatmul.mubr.bf16.gmra.mrb[0].mxu0 %v669
        %v901 = vpop.f32.mrb[0].mxu0
        %v902 = vadd.f32 %v665, %v901
        %v903 = vpop.f32.mrb[0].mxu0
        %v904 = vpop.f32.mrb[0].mxu0
        %v905 = vadd.f32 %v665, %v904
        %v906 = vpop.f32.mrb[0].mxu0
        %907 = vmatprep.mubr.bf16.mxu0 0
        %908 = vmatmul.mubr.bf16.gmra.mrb[0].mxu0 %v672
        %v909 = vpop.f32.mrb[0].mxu0
        %v910 = vadd.f32 %v665, %v909
        %v911 = vpop.f32.mrb[0].mxu0
        %v912 = vpop.f32.mrb[0].mxu0
        %v913 = vadd.f32 %v665, %v912
        %v914 = vpop.f32.mrb[0].mxu0
        %915 = vmatprep.mubr.bf16.mxu0 0
        %916 = vmatmul.mubr.bf16.gmra.mrb[0].mxu0 %v675
        %v917 = vpop.f32.mrb[0].mxu0
        %v918 = vadd.f32 %v665, %v917
        %v919 = vpop.f32.mrb[0].mxu0
        %v920 = vpop.f32.mrb[0].mxu0
        %v921 = vadd.f32 %v665, %v920
        %v922 = vpop.f32.mrb[0].mxu0
        %923 = vmatprep.mubr.bf16.mxu0 0
        %924 = vmatmul.mubr.bf16.gmra.mrb[0].mxu0 %v678
        %v925 = vpop.f32.mrb[0].mxu0
        %v926 = vadd.f32 %v665, %v925
        %v927 = vpop.f32.mrb[0].mxu0
        %v928 = vpop.f32.mrb[0].mxu0
        %v929 = vadd.f32 %v665, %v928
        %v930 = vpop.f32.mrb[0].mxu0
        %931 = vmatprep.mubr.bf16.mxu0 0
        %932 = vmatmul.mubr.bf16.gmra.mrb[0].mxu0 %v681
        %v933 = vpop.f32.mrb[0].mxu0
        %v934 = vadd.f32 %v665, %v933
        %v935 = vpop.f32.mrb[0].mxu0
        %v936 = vpop.f32.mrb[0].mxu0
        %v937 = vadd.f32 %v665, %v936
        %v938 = vpop.f32.mrb[0].mxu0
        %939 = vmatprep.mubr.bf16.mxu0 0
        %940 = vmatmul.mubr.bf16.gmra.mrb[0].mxu0 %v684
        %v941 = vpop.f32.mrb[0].mxu0
        %v942 = vadd.f32 %v665, %v941
        %v943 = vpop.f32.mrb[0].mxu0
        %v944 = vpop.f32.mrb[0].mxu0
        %v945 = vadd.f32 %v665, %v944
        %v946 = vpop.f32.mrb[0].mxu0
        %947 = vmatprep.mubr.bf16.mxu0 0
        %948 = vmatmul.mubr.bf16.gmra.mrb[0].mxu0 %v687
        %v949 = vpop.f32.mrb[0].mxu0
        %v950 = vadd.f32 %v665, %v949
        %v951 = vpop.f32.mrb[0].mxu0
        %v952 = vpop.f32.mrb[0].mxu0
        %v953 = vadd.f32 %v665, %v952
        %v954 = vpop.f32.mrb[0].mxu0
        %955 = vmatprep.mubr.bf16.mxu0 0
        %956 = vmatmul.mubr.bf16.gmra.mrb[0].mxu0 %v690
        %v957 = vpop.f32.mrb[0].mxu0
        %v958 = vadd.f32 %v665, %v957
        %v959 = vpop.f32.mrb[0].mxu0
        %v960 = vpop.f32.mrb[0].mxu0
        %v961 = vadd.f32 %v665, %v960
        %v962 = vpop.f32.mrb[0].mxu0
        %963 = vmatprep.mubr.bf16.mxu0 0
        %964 = vmatmul.mubr.bf16.gmra.mrb[0].mxu0 %v693
        %v965 = vpop.f32.mrb[0].mxu0
        %v966 = vadd.f32 %v665, %v965
        %v967 = vpop.f32.mrb[0].mxu0
        %v968 = vpop.f32.mrb[0].mxu0
        %v969 = vadd.f32 %v665, %v968
        %v970 = vpop.f32.mrb[0].mxu0
        %971 = vmatprep.mubr.bf16.mxu0 0
        %972 = vmatmul.mubr.bf16.gmra.mrb[0].mxu0 %v696
        %v973 = vpop.f32.mrb[0].mxu0
        %v974 = vadd.f32 %v665, %v973
        %v975 = vpop.f32.mrb[0].mxu0
        %v976 = vpop.f32.mrb[0].mxu0
        %v977 = vadd.f32 %v665, %v976
        %v978 = vpop.f32.mrb[0].mxu0
        %979 = vmatprep.mubr.bf16.mxu0 0
        %980 = vmatmul.mubr.bf16.gmra.mrb[0].mxu0 %v699
        %v981 = vpop.f32.mrb[0].mxu0
        %v982 = vadd.f32 %v665, %v981
        %v983 = vpop.f32.mrb[0].mxu0
        %v984 = vpop.f32.mrb[0].mxu0
        %v985 = vadd.f32 %v665, %v984
        %v986 = vpop.f32.mrb[0].mxu0
        %987 = vmatprep.mubr.bf16.mxu0 0
        %988 = vmatmul.mubr.bf16.gmra.mrb[0].mxu0 %v702
        %v989 = vpop.f32.mrb[0].mxu0
        %v990 = vadd.f32 %v665, %v989
        %v991 = vpop.f32.mrb[0].mxu0
        %v992 = vpop.f32.mrb[0].mxu0
        %v993 = vadd.f32 %v665, %v992
        %v994 = vpop.f32.mrb[0].mxu0
        %995 = vmatprep.mubr.bf16.mxu0 0
        %996 = vmatmul.mubr.bf16.gmra.mrb[0].mxu0 %v705
        %v997 = vpop.f32.mrb[0].mxu0
        %v998 = vadd.f32 %v665, %v997
        %v999 = vpop.f32.mrb[0].mxu0
        %v1000 = vpop.f32.mrb[0].mxu0
        %v1001 = vadd.f32 %v665, %v1000
        %v1002 = vpop.f32.mrb[0].mxu0
        %1003 = vmatprep.mubr.bf16.mxu0 0
        %1004 = vmatmul.mubr.bf16.gmra.mrb[0].mxu0 %v708
        %v1005 = vpop.f32.mrb[0].mxu0
        %v1006 = vadd.f32 %v665, %v1005
        %v1007 = vpop.f32.mrb[0].mxu0
        %v1008 = vpop.f32.mrb[0].mxu0
        %v1009 = vadd.f32 %v665, %v1008
        %v1010 = vpop.f32.mrb[0].mxu0
        %1011 = vmatprep.mubr.bf16.mxu0 0
        %1012 = vmatmul.mubr.bf16.gmra.mrb[0].mxu0 %v711
        %v1013 = vpop.f32.mrb[0].mxu0
        %v1014 = vadd.f32 %v665, %v1013
        %v1015 = vpop.f32.mrb[0].mxu0
        %v1016 = vpop.f32.mrb[0].mxu0
        %v1017 = vadd.f32 %v665, %v1016
        %v1018 = vpop.f32.mrb[0].mxu0
        %1019 = vmatprep.mubr.bf16.mxu0 0
        %1020 = vmatmul.mubr.bf16.gmra.mrb[0].mxu0 %v714
        %v1021 = vpop.f32.mrb[0].mxu0
        %v1022 = vadd.f32 %v665, %v1021
        %v1023 = vpop.f32.mrb[0].mxu0
        %v1024 = vpop.f32.mrb[0].mxu0
        %v1025 = vadd.f32 %v665, %v1024
        %v1026 = vpop.f32.mrb[0].mxu0
        %1027 = vmatprep.mubr.bf16.mxu0 0
        %1028 = vmatmul.mubr.bf16.gmra.mrb[0].mxu0 %v717
        %v1029 = vpop.f32.mrb[0].mxu0
        %v1030 = vadd.f32 %v665, %v1029
        %v1031 = vpop.f32.mrb[0].mxu0
        %v1032 = vpop.f32.mrb[0].mxu0
        %v1033 = vadd.f32 %v665, %v1032
        %v1034 = vpop.f32.mrb[0].mxu0
        %1035 = vmatprep.mubr.bf16.mxu0 0
        %1036 = vmatmul.mubr.bf16.gmra.mrb[0].mxu0 %v720
        %v1037 = vpop.f32.mrb[0].mxu0
        %v1038 = vadd.f32 %v665, %v1037
        %v1039 = vpop.f32.mrb[0].mxu0
        %v1040 = vpop.f32.mrb[0].mxu0
        %v1041 = vadd.f32 %v665, %v1040
        %v1042 = vpop.f32.mrb[0].mxu0
        %1043 = vmatprep.mubr.bf16.mxu0 0
        %1044 = vmatmul.mubr.bf16.gmra.mrb[0].mxu0 %v723
        %v1045 = vpop.f32.mrb[0].mxu0
        %v1046 = vadd.f32 %v665, %v1045
        %v1047 = vpop.f32.mrb[0].mxu0
        %v1048 = vpop.f32.mrb[0].mxu0
        %v1049 = vadd.f32 %v665, %v1048
        %v1050 = vpop.f32.mrb[0].mxu0
        %1051 = vmatprep.mubr.bf16.mxu0 0
        %1052 = vmatmul.mubr.bf16.gmra.mrb[0].mxu0 %v726
        %v1053 = vpop.f32.mrb[0].mxu0
        %v1054 = vadd.f32 %v665, %v1053
        %v1055 = vpop.f32.mrb[0].mxu0
        %v1056 = vpop.f32.mrb[0].mxu0
        %v1057 = vadd.f32 %v665, %v1056
        %v1058 = vpop.f32.mrb[0].mxu0
        %1059 = vmatprep.mubr.bf16.mxu0 0
        %1060 = vmatmul.mubr.bf16.gmra.mrb[0].mxu0 %v729
        %v1061 = vpop.f32.mrb[0].mxu0
        %v1062 = vadd.f32 %v665, %v1061
        %v1063 = vpop.f32.mrb[0].mxu0
        %v1064 = vpop.f32.mrb[0].mxu0
        %v1065 = vadd.f32 %v665, %v1064
        %v1066 = vpop.f32.mrb[0].mxu0
        %1067 = vmatprep.mubr.bf16.mxu0 0
        %1068 = vmatmul.mubr.bf16.gmra.mrb[0].mxu0 %v732
        %v1069 = vpop.f32.mrb[0].mxu0
        %v1070 = vadd.f32 %v665, %v1069
        %v1071 = vpop.f32.mrb[0].mxu0
        %v1072 = vpop.f32.mrb[0].mxu0
        %v1073 = vadd.f32 %v665, %v1072
        %v1074 = vpop.f32.mrb[0].mxu0
        %1075 = vmatprep.mubr.bf16.mxu0 0
        %1076 = vmatmul.mubr.bf16.gmra.mrb[0].mxu0 %v735
        %v1077 = vpop.f32.mrb[0].mxu0
        %v1078 = vadd.f32 %v665, %v1077
        %v1079 = vpop.f32.mrb[0].mxu0
        %v1080 = vpop.f32.mrb[0].mxu0
        %v1081 = vadd.f32 %v665, %v1080
        %v1082 = vpop.f32.mrb[0].mxu0
        %1083 = vmatprep.mubr.bf16.mxu0 0
        %1084 = vmatmul.mubr.bf16.gmra.mrb[0].mxu0 %v738
        %v1085 = vpop.f32.mrb[0].mxu0
        %v1086 = vadd.f32 %v665, %v1085
        %v1087 = vpop.f32.mrb[0].mxu0
        %v1088 = vpop.f32.mrb[0].mxu0
        %v1089 = vadd.f32 %v665, %v1088
        %v1090 = vpop.f32.mrb[0].mxu0
        %1091 = vmatprep.mubr.bf16.mxu0 0
        %1092 = vmatmul.mubr.bf16.gmra.mrb[0].mxu0 %v741
        %v1093 = vpop.f32.mrb[0].mxu0
        %v1094 = vadd.f32 %v665, %v1093
        %v1095 = vpop.f32.mrb[0].mxu0
        %v1096 = vpop.f32.mrb[0].mxu0
        %v1097 = vadd.f32 %v665, %v1096
        %v1098 = vpop.f32.mrb[0].mxu0
        %1099 = vmatprep.mubr.bf16.mxu0 0
        %1100 = vmatmul.mubr.bf16.gmra.mrb[0].mxu0 %v744
        %v1101 = vpop.f32.mrb[0].mxu0
        %v1102 = vadd.f32 %v665, %v1101
        %v1103 = vpop.f32.mrb[0].mxu0
        %v1104 = vpop.f32.mrb[0].mxu0
        %v1105 = vadd.f32 %v665, %v1104
        %v1106 = vpop.f32.mrb[0].mxu0
        %1107 = vmatprep.mubr.bf16.mxu0 0
        %1108 = vmatmul.mubr.bf16.gmra.mrb[0].mxu0 %v747
        %v1109 = vpop.f32.mrb[0].mxu0
        %v1110 = vadd.f32 %v665, %v1109
        %v1111 = vpop.f32.mrb[0].mxu0
        %v1112 = vpop.f32.mrb[0].mxu0
        %v1113 = vadd.f32 %v665, %v1112
        %v1114 = vpop.f32.mrb[0].mxu0
        %1115 = vmatprep.mubr.bf16.mxu0 0
        %1116 = vmatmul.mubr.bf16.gmra.mrb[0].mxu0 %v750
        %v1117 = vpop.f32.mrb[0].mxu0
        %v1118 = vadd.f32 %v665, %v1117
        %v1119 = vpop.f32.mrb[0].mxu0
        %v1120 = vpop.f32.mrb[0].mxu0
        %v1121 = vadd.f32 %v665, %v1120
        %v1122 = vpop.f32.mrb[0].mxu0
        %1123 = vmatprep.mubr.bf16.mxu0 0
        %1124 = vmatmul.mubr.bf16.gmra.mrb[0].mxu0 %v753
        %v1125 = vpop.f32.mrb[0].mxu0
        %v1126 = vadd.f32 %v665, %v1125
        %v1127 = vpop.f32.mrb[0].mxu0
        %v1128 = vpop.f32.mrb[0].mxu0
        %v1129 = vadd.f32 %v665, %v1128
        %v1130 = vpop.f32.mrb[0].mxu0
        %1131 = vmatprep.mubr.bf16.mxu0 0
        %1132 = vmatmul.mubr.bf16.gmra.mrb[0].mxu0 %v756
        %v1133 = vpop.f32.mrb[0].mxu0
        %v1134 = vadd.f32 %v665, %v1133
        %v1135 = vpop.f32.mrb[0].mxu0
        %v1136 = vpop.f32.mrb[0].mxu0
        %v1137 = vadd.f32 %v665, %v1136
        %v1138 = vpop.f32.mrb[0].mxu0
        %1139 = vmatprep.mubr.bf16.mxu0 0
        %1140 = vmatmul.mubr.bf16.gmra.mrb[0].mxu0 %v759
        %v1141 = vpop.f32.mrb[0].mxu0
        %v1142 = vadd.f32 %v665, %v1141
        %v1143 = vpop.f32.mrb[0].mxu0
        %v1144 = vpop.f32.mrb[0].mxu0
        %v1145 = vadd.f32 %v665, %v1144
        %v1146 = vpop.f32.mrb[0].mxu0
        %1147 = vmatprep.mubr.bf16.mxu0 0
        %1148 = vmatmul.mubr.bf16.gmra.mrb[0].mxu0 %v762
        %v1149 = vpop.f32.mrb[0].mxu0
        %v1150 = vadd.f32 %v665, %v1149
        %v1151 = vpop.f32.mrb[0].mxu0
        %v1152 = vpop.f32.mrb[0].mxu0
        %v1153 = vadd.f32 %v665, %v1152
        %v1154 = vpop.f32.mrb[0].mxu0
        %1155 = vmatprep.mubr.bf16.mxu0 0
        %1156 = vmatmul.mubr.bf16.gmra.mrb[0].mxu0 %v765
        %v1157 = vpop.f32.mrb[0].mxu0
        %v1158 = vadd.f32 %v665, %v1157
        %v1159 = vpop.f32.mrb[0].mxu0
        %v1160 = vpop.f32.mrb[0].mxu0
        %v1161 = vadd.f32 %v665, %v1160
        %v1162 = vpop.f32.mrb[0].mxu0
        %1163 = vmatprep.mubr.bf16.mxu0 0
        %1164 = vmatmul.mubr.bf16.gmra.mrb[0].mxu0 %v768
        %v1165 = vpop.f32.mrb[0].mxu0
        %v1166 = vadd.f32 %v665, %v1165
        %v1167 = vpop.f32.mrb[0].mxu0
        %v1168 = vpop.f32.mrb[0].mxu0
        %v1169 = vadd.f32 %v665, %v1168
        %v1170 = vpop.f32.mrb[0].mxu0
        %1171 = vmatprep.mubr.bf16.mxu0 0
        %1172 = vmatmul.mubr.bf16.gmra.mrb[0].mxu0 %v771
        %v1173 = vpop.f32.mrb[0].mxu0
        %v1174 = vadd.f32 %v665, %v1173
        %v1175 = vpop.f32.mrb[0].mxu0
        %v1176 = vpop.f32.mrb[0].mxu0
        %v1177 = vadd.f32 %v665, %v1176
        %v1178 = vpop.f32.mrb[0].mxu0
        %1179 = vmatprep.mubr.bf16.mxu0 0
        %1180 = vmatmul.mubr.bf16.gmra.mrb[0].mxu0 %v774
        %v1181 = vpop.f32.mrb[0].mxu0
        %v1182 = vadd.f32 %v665, %v1181
        %v1183 = vpop.f32.mrb[0].mxu0
        %v1184 = vpop.f32.mrb[0].mxu0
        %v1185 = vadd.f32 %v665, %v1184
        %v1186 = vpop.f32.mrb[0].mxu0
        %1187 = vmatprep.mubr.bf16.mxu0 0
        %1188 = vmatmul.mubr.bf16.gmra.mrb[0].mxu0 %v777
        %v1189 = vpop.f32.mrb[0].mxu0
        %v1190 = vadd.f32 %v665, %v1189
        %v1191 = vpop.f32.mrb[0].mxu0
        %v1192 = vpop.f32.mrb[0].mxu0
        %v1193 = vadd.f32 %v665, %v1192
        %v1194 = vpop.f32.mrb[0].mxu0
        %1195 = vmatprep.mubr.bf16.mxu0 0
        %1196 = vmatmul.mubr.bf16.gmra.mrb[0].mxu0 %v780
        %v1197 = vpop.f32.mrb[0].mxu0
        %v1198 = vadd.f32 %v665, %v1197
        %v1199 = vpop.f32.mrb[0].mxu0
        %v1200 = vpop.f32.mrb[0].mxu0
        %v1201 = vadd.f32 %v665, %v1200
        %v1202 = vpop.f32.mrb[0].mxu0
        %1203 = vmatprep.mubr.bf16.mxu0 0
        %1204 = vmatmul.mubr.bf16.gmra.mrb[0].mxu0 %v783
        %v1205 = vpop.f32.mrb[0].mxu0
        %v1206 = vadd.f32 %v665, %v1205
        %v1207 = vpop.f32.mrb[0].mxu0
        %v1208 = vpop.f32.mrb[0].mxu0
        %v1209 = vadd.f32 %v665, %v1208
        %v1210 = vpop.f32.mrb[0].mxu0
        %1211 = vmatprep.mubr.bf16.mxu0 0
        %1212 = vmatmul.mubr.bf16.gmra.mrb[0].mxu0 %v786
        %v1213 = vpop.f32.mrb[0].mxu0
        %v1214 = vadd.f32 %v665, %v1213
        %v1215 = vpop.f32.mrb[0].mxu0
        %v1216 = vpop.f32.mrb[0].mxu0
        %v1217 = vadd.f32 %v665, %v1216
        %v1218 = vpop.f32.mrb[0].mxu0
        %1219 = vmatprep.mubr.bf16.mxu0 0
        %1220 = vmatmul.mubr.bf16.gmra.mrb[0].mxu0 %v789
        %v1221 = vpop.f32.mrb[0].mxu0
        %v1222 = vadd.f32 %v665, %v1221
        %v1223 = vpop.f32.mrb[0].mxu0
        %v1224 = vpop.f32.mrb[0].mxu0
        %v1225 = vadd.f32 %v665, %v1224
        %v1226 = vpop.f32.mrb[0].mxu0
        %1227 = vmatprep.mubr.bf16.mxu0 0
        %1228 = vmatmul.mubr.bf16.gmra.mrb[0].mxu0 %v792
        %v1229 = vpop.f32.mrb[0].mxu0
        %v1230 = vadd.f32 %v665, %v1229
        %v1231 = vpop.f32.mrb[0].mxu0
        %v1232 = vpop.f32.mrb[0].mxu0
        %v1233 = vadd.f32 %v665, %v1232
        %v1234 = vpop.f32.mrb[0].mxu0
        %1235 = vmatprep.mubr.bf16.mxu0 0
        %1236 = vmatmul.mubr.bf16.gmra.mrb[0].mxu0 %v795
        %v1237 = vpop.f32.mrb[0].mxu0
        %v1238 = vadd.f32 %v665, %v1237
        %v1239 = vpop.f32.mrb[0].mxu0
        %v1240 = vpop.f32.mrb[0].mxu0
        %v1241 = vadd.f32 %v665, %v1240
        %v1242 = vpop.f32.mrb[0].mxu0
        %1243 = vmatprep.mubr.bf16.mxu0 0
        %1244 = vmatmul.mubr.bf16.gmra.mrb[0].mxu0 %v798
        %v1245 = vpop.f32.mrb[0].mxu0
        %v1246 = vadd.f32 %v665, %v1245
        %v1247 = vpop.f32.mrb[0].mxu0
        %v1248 = vpop.f32.mrb[0].mxu0
        %v1249 = vadd.f32 %v665, %v1248
        %v1250 = vpop.f32.mrb[0].mxu0
        %1251 = vmatprep.mubr.bf16.mxu0 0
        %1252 = vmatmul.mubr.bf16.gmra.mrb[0].mxu0 %v801
        %v1253 = vpop.f32.mrb[0].mxu0
        %v1254 = vadd.f32 %v665, %v1253
        %v1255 = vpop.f32.mrb[0].mxu0
        %v1256 = vpop.f32.mrb[0].mxu0
        %v1257 = vadd.f32 %v665, %v1256
        %v1258 = vpop.f32.mrb[0].mxu0
        %1259 = vmatprep.mubr.bf16.mxu0 0
        %1260 = vmatmul.mubr.bf16.gmra.mrb[0].mxu0 %v804
        %v1261 = vpop.f32.mrb[0].mxu0
        %v1262 = vadd.f32 %v665, %v1261
        %v1263 = vpop.f32.mrb[0].mxu0
        %v1264 = vpop.f32.mrb[0].mxu0
        %v1265 = vadd.f32 %v665, %v1264
        %v1266 = vpop.f32.mrb[0].mxu0
        %1267 = vmatprep.mubr.bf16.mxu0 0
        %1268 = vmatmul.mubr.bf16.gmra.mrb[0].mxu0 %v807
        %v1269 = vpop.f32.mrb[0].mxu0
        %v1270 = vadd.f32 %v665, %v1269
        %v1271 = vpop.f32.mrb[0].mxu0
        %v1272 = vpop.f32.mrb[0].mxu0
        %v1273 = vadd.f32 %v665, %v1272
        %v1274 = vpop.f32.mrb[0].mxu0
        %1275 = vmatprep.mubr.bf16.mxu0 0
        %1276 = vmatmul.mubr.bf16.gmra.mrb[0].mxu0 %v810
        %v1277 = vpop.f32.mrb[0].mxu0
        %v1278 = vadd.f32 %v665, %v1277
        %v1279 = vpop.f32.mrb[0].mxu0
        %v1280 = vpop.f32.mrb[0].mxu0
        %v1281 = vadd.f32 %v665, %v1280
        %v1282 = vpop.f32.mrb[0].mxu0
        %1283 = vmatprep.mubr.bf16.mxu0 0
        %1284 = vmatmul.mubr.bf16.gmra.mrb[0].mxu0 %v813
        %v1285 = vpop.f32.mrb[0].mxu0
        %v1286 = vadd.f32 %v665, %v1285
        %v1287 = vpop.f32.mrb[0].mxu0
        %v1288 = vpop.f32.mrb[0].mxu0
        %v1289 = vadd.f32 %v665, %v1288
        %v1290 = vpop.f32.mrb[0].mxu0
        %1291 = vmatprep.mubr.bf16.mxu0 0
        %1292 = vmatmul.mubr.bf16.gmra.mrb[0].mxu0 %v816
        %v1293 = vpop.f32.mrb[0].mxu0
        %v1294 = vadd.f32 %v665, %v1293
        %v1295 = vpop.f32.mrb[0].mxu0
        %v1296 = vpop.f32.mrb[0].mxu0
        %v1297 = vadd.f32 %v665, %v1296
        %v1298 = vpop.f32.mrb[0].mxu0
        %1299 = vmatprep.mubr.bf16.mxu0 0
        %1300 = vmatmul.mubr.bf16.gmra.mrb[0].mxu0 %v819
        %v1301 = vpop.f32.mrb[0].mxu0
        %v1302 = vadd.f32 %v665, %v1301
        %v1303 = vpop.f32.mrb[0].mxu0
        %v1304 = vpop.f32.mrb[0].mxu0
        %v1305 = vadd.f32 %v665, %v1304
        %v1306 = vpop.f32.mrb[0].mxu0
        %1307 = vmatprep.mubr.bf16.mxu0 0
        %1308 = vmatmul.mubr.bf16.gmra.mrb[0].mxu0 %v822
        %v1309 = vpop.f32.mrb[0].mxu0
        %v1310 = vadd.f32 %v665, %v1309
        %v1311 = vpop.f32.mrb[0].mxu0
        %v1312 = vpop.f32.mrb[0].mxu0
        %v1313 = vadd.f32 %v665, %v1312
        %v1314 = vpop.f32.mrb[0].mxu0
        %1315 = vmatprep.mubr.bf16.mxu0 0
        %1316 = vmatmul.mubr.bf16.gmra.mrb[0].mxu0 %v825
        %v1317 = vpop.f32.mrb[0].mxu0
        %v1318 = vadd.f32 %v665, %v1317
        %v1319 = vpop.f32.mrb[0].mxu0
        %v1320 = vpop.f32.mrb[0].mxu0
        %v1321 = vadd.f32 %v665, %v1320
        %v1322 = vpop.f32.mrb[0].mxu0
        %1323 = vmatprep.mubr.bf16.mxu0 0
        %1324 = vmatmul.mubr.bf16.gmra.mrb[0].mxu0 %v828
        %v1325 = vpop.f32.mrb[0].mxu0
        %v1326 = vadd.f32 %v665, %v1325
        %v1327 = vpop.f32.mrb[0].mxu0
        %v1328 = vpop.f32.mrb[0].mxu0
        %v1329 = vadd.f32 %v665, %v1328
        %v1330 = vpop.f32.mrb[0].mxu0
        %1331 = vmatprep.mubr.bf16.mxu0 0
        %1332 = vmatmul.mubr.bf16.gmra.mrb[0].mxu0 %v831
        %v1333 = vpop.f32.mrb[0].mxu0
        %v1334 = vadd.f32 %v665, %v1333
        %v1335 = vpop.f32.mrb[0].mxu0
        %v1336 = vpop.f32.mrb[0].mxu0
        %v1337 = vadd.f32 %v665, %v1336
        %v1338 = vpop.f32.mrb[0].mxu0
        %1339 = vmatprep.mubr.bf16.mxu0 0
        %1340 = vmatmul.mubr.bf16.gmra.mrb[0].mxu0 %v834
        %v1341 = vpop.f32.mrb[0].mxu0
        %v1342 = vadd.f32 %v665, %v1341
        %v1343 = vpop.f32.mrb[0].mxu0
        %v1344 = vpop.f32.mrb[0].mxu0
        %v1345 = vadd.f32 %v665, %v1344
        %v1346 = vpop.f32.mrb[0].mxu0
        %1347 = vmatprep.mubr.bf16.mxu0 0
        %1348 = vmatmul.mubr.bf16.gmra.mrb[0].mxu0 %v837
        %v1349 = vpop.f32.mrb[0].mxu0
        %v1350 = vadd.f32 %v665, %v1349
        %v1351 = vpop.f32.mrb[0].mxu0
        %v1352 = vpop.f32.mrb[0].mxu0
        %v1353 = vadd.f32 %v665, %v1352
        %v1354 = vpop.f32.mrb[0].mxu0
        %1355 = vmatprep.mubr.bf16.mxu0 0
        %1356 = vmatmul.mubr.bf16.gmra.mrb[0].mxu0 %v840
        %v1357 = vpop.f32.mrb[0].mxu0
        %v1358 = vadd.f32 %v665, %v1357
        %v1359 = vpop.f32.mrb[0].mxu0
        %v1360 = vpop.f32.mrb[0].mxu0
        %v1361 = vadd.f32 %v665, %v1360
        %v1362 = vpop.f32.mrb[0].mxu0
        %1363 = vmatprep.mubr.bf16.mxu0 0
        %1364 = vmatmul.mubr.bf16.gmra.mrb[0].mxu0 %v843
        %v1365 = vpop.f32.mrb[0].mxu0
        %v1366 = vadd.f32 %v665, %v1365
        %v1367 = vpop.f32.mrb[0].mxu0
        %v1368 = vpop.f32.mrb[0].mxu0
        %v1369 = vadd.f32 %v665, %v1368
        %v1370 = vpop.f32.mrb[0].mxu0
        %1371 = vmatprep.mubr.bf16.mxu0 0
        %1372 = vmatmul.mubr.bf16.gmra.mrb[0].mxu0 %v846
        %v1373 = vpop.f32.mrb[0].mxu0
        %v1374 = vadd.f32 %v665, %v1373
        %v1375 = vpop.f32.mrb[0].mxu0
        %v1376 = vpop.f32.mrb[0].mxu0
        %v1377 = vadd.f32 %v665, %v1376
        %v1378 = vpop.f32.mrb[0].mxu0
        %1379 = vmatprep.mubr.bf16.mxu0 0
        %1380 = vmatmul.mubr.bf16.gmra.mrb[0].mxu0 %v849
        %v1381 = vpop.f32.mrb[0].mxu0
        %v1382 = vadd.f32 %v665, %v1381
        %v1383 = vpop.f32.mrb[0].mxu0
        %v1384 = vpop.f32.mrb[0].mxu0
        %v1385 = vadd.f32 %v665, %v1384
        %v1386 = vpop.f32.mrb[0].mxu0
        %1387 = vmatprep.mubr.bf16.mxu0 0
        %1388 = vmatmul.mubr.bf16.gmra.mrb[0].mxu0 %v852
        %v1389 = vpop.f32.mrb[0].mxu0
        %v1390 = vadd.f32 %v665, %v1389
        %v1391 = vpop.f32.mrb[0].mxu0
        %v1392 = vpop.f32.mrb[0].mxu0
        %v1393 = vadd.f32 %v665, %v1392
        %v1394 = vpop.f32.mrb[0].mxu0
        %1395 = vmatprep.mubr.bf16.mxu0 0
        %1396 = vmatmul.mubr.bf16.gmra.mrb[0].mxu0 %v855
        %v1397 = vpop.f32.mrb[0].mxu0
        %v1398 = vadd.f32 %v665, %v1397
        %v1399 = vpop.f32.mrb[0].mxu0
        %v1400 = vpop.f32.mrb[0].mxu0
        %v1401 = vadd.f32 %v665, %v1400
        %v1402 = vpop.f32.mrb[0].mxu0
        %1403 = vmatprep.mubr.bf16.mxu0 0
        %1404 = vmatmul.mubr.bf16.gmra.mrb[0].mxu0 %v858
        %v1405 = vpop.f32.mrb[0].mxu0
        %v1406 = vadd.f32 %v665, %v1405
        %v1407 = vpop.f32.mrb[0].mxu0
        %v1408 = vpop.f32.mrb[0].mxu0
        %v1409 = vadd.f32 %v665, %v1408
        %v1410 = vpop.f32.mrb[0].mxu0
        %1411 = vdwg.mxu0
        %v1412 = vmax.f32 %v902, 0.0
        %v1413 = vmax.f32 %v905, 0.0
        %v1414 = vmax.f32 %v910, 0.0
        %v1415 = vmax.f32 %v913, 0.0
        %v1416 = vmax.f32 %v918, 0.0
        %v1417 = vmax.f32 %v921, 0.0
        %v1418 = vmax.f32 %v926, 0.0
        %v1419 = vmax.f32 %v929, 0.0
        %v1420 = vmax.f32 %v934, 0.0
        %v1421 = vmax.f32 %v937, 0.0
        %v1422 = vmax.f32 %v942, 0.0
        %v1423 = vmax.f32 %v945, 0.0
        %v1424 = vmax.f32 %v950, 0.0
        %v1425 = vmax.f32 %v953, 0.0
        %v1426 = vmax.f32 %v958, 0.0
        %v1427 = vmax.f32 %v961, 0.0
        %v1428 = vmax.f32 %v966, 0.0
        %v1429 = vmax.f32 %v969, 0.0
        %v1430 = vmax.f32 %v974, 0.0
        %v1431 = vmax.f32 %v977, 0.0
        %v1432 = vmax.f32 %v982, 0.0
        %v1433 = vmax.f32 %v985, 0.0
        %v1434 = vmax.f32 %v990, 0.0
        %v1435 = vmax.f32 %v993, 0.0
        %v1436 = vmax.f32 %v998, 0.0
        %v1437 = vmax.f32 %v1001, 0.0
        %v1438 = vmax.f32 %v1006, 0.0
        %v1439 = vmax.f32 %v1009, 0.0
        %v1440 = vmax.f32 %v1014, 0.0
        %v1441 = vmax.f32 %v1017, 0.0
        %v1442 = vmax.f32 %v1022, 0.0
        %v1443 = vmax.f32 %v1025, 0.0
        %v1444 = vmax.f32 %v1030, 0.0
        %v1445 = vmax.f32 %v1033, 0.0
        %v1446 = vmax.f32 %v1038, 0.0
        %v1447 = vmax.f32 %v1041, 0.0
        %v1448 = vmax.f32 %v1046, 0.0
        %v1449 = vmax.f32 %v1049, 0.0
        %v1450 = vmax.f32 %v1054, 0.0
        %v1451 = vmax.f32 %v1057, 0.0
        %v1452 = vmax.f32 %v1062, 0.0
        %v1453 = vmax.f32 %v1065, 0.0
        %v1454 = vmax.f32 %v1070, 0.0
        %v1455 = vmax.f32 %v1073, 0.0
        %v1456 = vmax.f32 %v1078, 0.0
        %v1457 = vmax.f32 %v1081, 0.0
        %v1458 = vmax.f32 %v1086, 0.0
        %v1459 = vmax.f32 %v1089, 0.0
        %v1460 = vmax.f32 %v1094, 0.0
        %v1461 = vmax.f32 %v1097, 0.0
        %v1462 = vmax.f32 %v1102, 0.0
        %v1463 = vmax.f32 %v1105, 0.0
        %v1464 = vmax.f32 %v1110, 0.0
        %v1465 = vmax.f32 %v1113, 0.0
        %v1466 = vmax.f32 %v1118, 0.0
        %v1467 = vmax.f32 %v1121, 0.0
        %v1468 = vmax.f32 %v1126, 0.0
        %v1469 = vmax.f32 %v1129, 0.0
        %v1470 = vmax.f32 %v1134, 0.0
        %v1471 = vmax.f32 %v1137, 0.0
        %v1472 = vmax.f32 %v1142, 0.0
        %v1473 = vmax.f32 %v1145, 0.0
        %v1474 = vmax.f32 %v1150, 0.0
        %v1475 = vmax.f32 %v1153, 0.0
        %v1476 = vmax.f32 %v1158, 0.0
        %v1477 = vmax.f32 %v1161, 0.0
        %v1478 = vmax.f32 %v1166, 0.0
        %v1479 = vmax.f32 %v1169, 0.0
        %v1480 = vmax.f32 %v1174, 0.0
        %v1481 = vmax.f32 %v1177, 0.0
        %v1482 = vmax.f32 %v1182, 0.0
        %v1483 = vmax.f32 %v1185, 0.0
        %v1484 = vmax.f32 %v1190, 0.0
        %v1485 = vmax.f32 %v1193, 0.0
        %v1486 = vmax.f32 %v1198, 0.0
        %v1487 = vmax.f32 %v1201, 0.0
        %v1488 = vmax.f32 %v1206, 0.0
        %v1489 = vmax.f32 %v1209, 0.0
        %v1490 = vmax.f32 %v1214, 0.0
        %v1491 = vmax.f32 %v1217, 0.0
        %v1492 = vmax.f32 %v1222, 0.0
        %v1493 = vmax.f32 %v1225, 0.0
        %v1494 = vmax.f32 %v1230, 0.0
        %v1495 = vmax.f32 %v1233, 0.0
        %v1496 = vmax.f32 %v1238, 0.0
        %v1497 = vmax.f32 %v1241, 0.0
        %v1498 = vmax.f32 %v1246, 0.0
        %v1499 = vmax.f32 %v1249, 0.0
        %v1500 = vmax.f32 %v1254, 0.0
        %v1501 = vmax.f32 %v1257, 0.0
        %v1502 = vmax.f32 %v1262, 0.0
        %v1503 = vmax.f32 %v1265, 0.0
        %v1504 = vmax.f32 %v1270, 0.0
        %v1505 = vmax.f32 %v1273, 0.0
        %v1506 = vmax.f32 %v1278, 0.0
        %v1507 = vmax.f32 %v1281, 0.0
        %v1508 = vmax.f32 %v1286, 0.0
        %v1509 = vmax.f32 %v1289, 0.0
        %v1510 = vmax.f32 %v1294, 0.0
        %v1511 = vmax.f32 %v1297, 0.0
        %v1512 = vmax.f32 %v1302, 0.0
        %v1513 = vmax.f32 %v1305, 0.0
        %v1514 = vmax.f32 %v1310, 0.0
        %v1515 = vmax.f32 %v1313, 0.0
        %v1516 = vmax.f32 %v1318, 0.0
        %v1517 = vmax.f32 %v1321, 0.0
        %v1518 = vmax.f32 %v1326, 0.0
        %v1519 = vmax.f32 %v1329, 0.0
        %v1520 = vmax.f32 %v1334, 0.0
        %v1521 = vmax.f32 %v1337, 0.0
        %v1522 = vmax.f32 %v1342, 0.0
        %v1523 = vmax.f32 %v1345, 0.0
        %v1524 = vmax.f32 %v1350, 0.0
        %v1525 = vmax.f32 %v1353, 0.0
        %v1526 = vmax.f32 %v1358, 0.0
        %v1527 = vmax.f32 %v1361, 0.0
        %v1528 = vmax.f32 %v1366, 0.0
        %v1529 = vmax.f32 %v1369, 0.0
        %v1530 = vmax.f32 %v1374, 0.0
        %v1531 = vmax.f32 %v1377, 0.0
        %v1532 = vmax.f32 %v1382, 0.0
        %v1533 = vmax.f32 %v1385, 0.0
        %v1534 = vmax.f32 %v1390, 0.0
        %v1535 = vmax.f32 %v1393, 0.0
        %v1536 = vmax.f32 %v1398, 0.0
        %v1537 = vmax.f32 %v1401, 0.0
        %v1538 = vmax.f32 %v1406, 0.0
        %v1539 = vmax.f32 %v1409, 0.0
        %v1540 = vpack.c.bf16 %v1413, %v1412
        %v1541 = vpack.c.bf16 %v1415, %v1414
        %v1542 = vpack.c.bf16 %v1417, %v1416
        %v1543 = vpack.c.bf16 %v1419, %v1418
        %v1544 = vpack.c.bf16 %v1421, %v1420
        %v1545 = vpack.c.bf16 %v1423, %v1422
        %v1546 = vpack.c.bf16 %v1425, %v1424
        %v1547 = vpack.c.bf16 %v1427, %v1426
        %v1548 = vpack.c.bf16 %v1429, %v1428
        %v1549 = vpack.c.bf16 %v1431, %v1430
        %v1550 = vpack.c.bf16 %v1433, %v1432
        %v1551 = vpack.c.bf16 %v1435, %v1434
        %v1552 = vpack.c.bf16 %v1437, %v1436
        %v1553 = vpack.c.bf16 %v1439, %v1438
        %v1554 = vpack.c.bf16 %v1441, %v1440
        %v1555 = vpack.c.bf16 %v1443, %v1442
        %v1556 = vpack.c.bf16 %v1445, %v1444
        %v1557 = vpack.c.bf16 %v1447, %v1446
        %v1558 = vpack.c.bf16 %v1449, %v1448
        %v1559 = vpack.c.bf16 %v1451, %v1450
        %v1560 = vpack.c.bf16 %v1453, %v1452
        %v1561 = vpack.c.bf16 %v1455, %v1454
        %v1562 = vpack.c.bf16 %v1457, %v1456
        %v1563 = vpack.c.bf16 %v1459, %v1458
        %v1564 = vpack.c.bf16 %v1461, %v1460
        %v1565 = vpack.c.bf16 %v1463, %v1462
        %v1566 = vpack.c.bf16 %v1465, %v1464
        %v1567 = vpack.c.bf16 %v1467, %v1466
        %v1568 = vpack.c.bf16 %v1469, %v1468
        %v1569 = vpack.c.bf16 %v1471, %v1470
        %v1570 = vpack.c.bf16 %v1473, %v1472
        %v1571 = vpack.c.bf16 %v1475, %v1474
        %v1572 = vpack.c.bf16 %v1477, %v1476
        %v1573 = vpack.c.bf16 %v1479, %v1478
        %v1574 = vpack.c.bf16 %v1481, %v1480
        %v1575 = vpack.c.bf16 %v1483, %v1482
        %v1576 = vpack.c.bf16 %v1485, %v1484
        %v1577 = vpack.c.bf16 %v1487, %v1486
        %v1578 = vpack.c.bf16 %v1489, %v1488
        %v1579 = vpack.c.bf16 %v1491, %v1490
        %v1580 = vpack.c.bf16 %v1493, %v1492
        %v1581 = vpack.c.bf16 %v1495, %v1494
        %v1582 = vpack.c.bf16 %v1497, %v1496
        %v1583 = vpack.c.bf16 %v1499, %v1498
        %v1584 = vpack.c.bf16 %v1501, %v1500
        %v1585 = vpack.c.bf16 %v1503, %v1502
        %v1586 = vpack.c.bf16 %v1505, %v1504
        %v1587 = vpack.c.bf16 %v1507, %v1506
        %v1588 = vpack.c.bf16 %v1509, %v1508
        %v1589 = vpack.c.bf16 %v1511, %v1510
        %v1590 = vpack.c.bf16 %v1513, %v1512
        %v1591 = vpack.c.bf16 %v1515, %v1514
        %v1592 = vpack.c.bf16 %v1517, %v1516
        %v1593 = vpack.c.bf16 %v1519, %v1518
        %v1594 = vpack.c.bf16 %v1521, %v1520
        %v1595 = vpack.c.bf16 %v1523, %v1522
        %v1596 = vpack.c.bf16 %v1525, %v1524
        %v1597 = vpack.c.bf16 %v1527, %v1526
        %v1598 = vpack.c.bf16 %v1529, %v1528
        %v1599 = vpack.c.bf16 %v1531, %v1530
        %v1600 = vpack.c.bf16 %v1533, %v1532
        %v1601 = vpack.c.bf16 %v1535, %v1534
        %v1602 = vpack.c.bf16 %v1537, %v1536
        %v1603 = vpack.c.bf16 %v1539, %v1538
        %v1604 = vld [vmem:[%s3] sm:$0xf]
        %v1605 = vld [vmem:[%s3 + $0x4] sm:$0xf]
        %v1606 = vld [vmem:[%s3 + $0x8] sm:$0xf]
        %v1607 = vld [vmem:[%s3 + $0xc] sm:$0xf]
        %v1608 = vld [vmem:[%s3 + $0x10] sm:$0xf]
        %v1609 = vld [vmem:[%s3 + $0x14] sm:$0xf]
        %v1610 = vld [vmem:[%s3 + $0x18] sm:$0xf]
        %v1611 = vld [vmem:[%s3 + $0x1c] sm:$0xf]
        %v1612 = vld [vmem:[%s4] sm:$0x1]
        %v1614 = vlaneseq
        %v1615 = vshrl.u32 %v1614, 7
        %v1616 = vsub.s32 0, %v1615
        %v1617 = vrot.slane %v1612, %v1616
        %v1627 = vunpack.c.l.b16 %v1604
        %v1628 = vunpack.c.l.b16 %v1605
        %v1629 = vunpack.c.l.b16 %v1606
        %v1630 = vunpack.c.l.b16 %v1607
        %v1631 = vunpack.c.l.b16 %v1608
        %v1632 = vunpack.c.l.b16 %v1609
        %v1633 = vunpack.c.l.b16 %v1610
        %v1634 = vunpack.c.l.b16 %v1611
        %v1635 = vpack.c.b16 %v1628, %v1627
        %v1636 = vpack.c.b16 %v1630, %v1629
        %v1637 = vpack.c.b16 %v1632, %v1631
        %v1638 = vpack.c.b16 %v1634, %v1633
        %vm1643 = vcmask 523264
        %v1645 = vsel %vm1643, %v1540, 0
        %v1648 = vsel %vm1643, %v1541, 0
        %v1651 = vsel %vm1643, %v1542, 0
        %v1654 = vsel %vm1643, %v1543, 0
        %v1657 = vsel %vm1643, %v1544, 0
        %v1660 = vsel %vm1643, %v1545, 0
        %v1663 = vsel %vm1643, %v1546, 0
        %v1666 = vsel %vm1643, %v1547, 0
        %v1669 = vsel %vm1643, %v1548, 0
        %v1672 = vsel %vm1643, %v1549, 0
        %v1675 = vsel %vm1643, %v1550, 0
        %v1678 = vsel %vm1643, %v1551, 0
        %v1681 = vsel %vm1643, %v1552, 0
        %v1684 = vsel %vm1643, %v1553, 0
        %v1687 = vsel %vm1643, %v1554, 0
        %v1690 = vsel %vm1643, %v1555, 0
        %v1693 = vsel %vm1643, %v1556, 0
        %v1696 = vsel %vm1643, %v1557, 0
        %v1699 = vsel %vm1643, %v1558, 0
        %v1702 = vsel %vm1643, %v1559, 0
        %v1705 = vsel %vm1643, %v1560, 0
        %v1708 = vsel %vm1643, %v1561, 0
        %v1711 = vsel %vm1643, %v1562, 0
        %v1714 = vsel %vm1643, %v1563, 0
        %v1717 = vsel %vm1643, %v1564, 0
        %v1720 = vsel %vm1643, %v1565, 0
        %v1723 = vsel %vm1643, %v1566, 0
        %v1726 = vsel %vm1643, %v1567, 0
        %v1729 = vsel %vm1643, %v1568, 0
        %v1732 = vsel %vm1643, %v1569, 0
        %v1735 = vsel %vm1643, %v1570, 0
        %v1738 = vsel %vm1643, %v1571, 0
        %v1741 = vsel %vm1643, %v1572, 0
        %v1744 = vsel %vm1643, %v1573, 0
        %v1747 = vsel %vm1643, %v1574, 0
        %v1750 = vsel %vm1643, %v1575, 0
        %v1753 = vsel %vm1643, %v1576, 0
        %v1756 = vsel %vm1643, %v1577, 0
        %v1759 = vsel %vm1643, %v1578, 0
        %v1762 = vsel %vm1643, %v1579, 0
        %v1765 = vsel %vm1643, %v1580, 0
        %v1768 = vsel %vm1643, %v1581, 0
        %v1771 = vsel %vm1643, %v1582, 0
        %v1774 = vsel %vm1643, %v1583, 0
        %v1777 = vsel %vm1643, %v1584, 0
        %v1780 = vsel %vm1643, %v1585, 0
        %v1783 = vsel %vm1643, %v1586, 0
        %v1786 = vsel %vm1643, %v1587, 0
        %v1789 = vsel %vm1643, %v1588, 0
        %v1792 = vsel %vm1643, %v1589, 0
        %v1795 = vsel %vm1643, %v1590, 0
        %v1798 = vsel %vm1643, %v1591, 0
        %v1801 = vsel %vm1643, %v1592, 0
        %v1804 = vsel %vm1643, %v1593, 0
        %v1807 = vsel %vm1643, %v1594, 0
        %v1810 = vsel %vm1643, %v1595, 0
        %v1813 = vsel %vm1643, %v1596, 0
        %v1816 = vsel %vm1643, %v1597, 0
        %v1819 = vsel %vm1643, %v1598, 0
        %v1822 = vsel %vm1643, %v1599, 0
        %v1825 = vsel %vm1643, %v1600, 0
        %v1828 = vsel %vm1643, %v1601, 0
        %v1831 = vsel %vm1643, %v1602, 0
        %v1834 = vsel %vm1643, %v1603, 0
        %1836 = vmatprep.subr.bf16.mxu0 0
        %1837 = vmatpush1.bf16.msra.mxu0 %v1635
        %1838 = vmatprep.subr.bf16.mxu0 0
        %1839 = vmatpush1.bf16.msra.mxu0 %v1636
        %1840 = vmatprep.subr.bf16.mxu0 0
        %1841 = vmatpush1.bf16.msra.mxu0 %v1637
        %1842 = vmatprep.subr.bf16.mxu0 0
        %1843 = vmatpush1.bf16.msra.mxu0 %v1638
        %1844 = vmatprep.subr.bf16.mxu0 0
        %1845 = vmatpush1.bf16.msra.mxu0 0
        %1846 = vmatprep.subr.bf16.mxu0 0
        %1847 = vmatpush1.bf16.msra.mxu0 0
        %1848 = vmatprep.subr.bf16.mxu0 0
        %1849 = vmatpush1.bf16.msra.mxu0 0
        %1850 = vmatprep.subr.bf16.mxu0 0
        %1851 = vmatpush1.bf16.msra.mxu0 0
        %1852 = vmatprep.subr.bf16.mxu0 0
        %1853 = vmatpush1.bf16.msra.mxu0 0
        %1854 = vmatprep.subr.bf16.mxu0 0
        %1855 = vmatpush1.bf16.msra.mxu0 0
        %1856 = vmatprep.subr.bf16.mxu0 0
        %1857 = vmatpush1.bf16.msra.mxu0 0
        %1858 = vmatprep.subr.bf16.mxu0 0
        %1859 = vmatpush1.bf16.msra.mxu0 0
        %1860 = vmatprep.subr.bf16.mxu0 0
        %1861 = vmatpush1.bf16.msra.mxu0 0
        %1862 = vmatprep.subr.bf16.mxu0 0
        %1863 = vmatpush1.bf16.msra.mxu0 0
        %1864 = vmatprep.subr.bf16.mxu0 0
        %1865 = vmatpush1.bf16.msra.mxu0 0
        %1866 = vmatprep.subr.bf16.mxu0 0
        %1867 = vmatpush1.bf16.msra.mxu0 0
        %1868 = vmatprep.mubr.bf16.mxu0 0
        %1869 = vmatmul.mubr.bf16.gmra.mrb[0].mxu0 %v1645
        %v1870 = vpop.f32.mrb[0].mxu0
        %v1871 = vadd.f32 %v1617, %v1870
        %v1872 = vpop.f32.mrb[0].mxu0
        %v1873 = vpop.f32.mrb[0].mxu0
        %v1874 = vadd.f32 %v1617, %v1873
        %v1875 = vpop.f32.mrb[0].mxu0
        %1876 = vmatprep.mubr.bf16.mxu0 0
        %1877 = vmatmul.mubr.bf16.gmra.mrb[0].mxu0 %v1648
        %v1878 = vpop.f32.mrb[0].mxu0
        %v1879 = vadd.f32 %v1617, %v1878
        %v1880 = vpop.f32.mrb[0].mxu0
        %v1881 = vpop.f32.mrb[0].mxu0
        %v1882 = vadd.f32 %v1617, %v1881
        %v1883 = vpop.f32.mrb[0].mxu0
        %1884 = vmatprep.mubr.bf16.mxu0 0
        %1885 = vmatmul.mubr.bf16.gmra.mrb[0].mxu0 %v1651
        %v1886 = vpop.f32.mrb[0].mxu0
        %v1887 = vadd.f32 %v1617, %v1886
        %v1888 = vpop.f32.mrb[0].mxu0
        %v1889 = vpop.f32.mrb[0].mxu0
        %v1890 = vadd.f32 %v1617, %v1889
        %v1891 = vpop.f32.mrb[0].mxu0
        %1892 = vmatprep.mubr.bf16.mxu0 0
        %1893 = vmatmul.mubr.bf16.gmra.mrb[0].mxu0 %v1654
        %v1894 = vpop.f32.mrb[0].mxu0
        %v1895 = vadd.f32 %v1617, %v1894
        %v1896 = vpop.f32.mrb[0].mxu0
        %v1897 = vpop.f32.mrb[0].mxu0
        %v1898 = vadd.f32 %v1617, %v1897
        %v1899 = vpop.f32.mrb[0].mxu0
        %1900 = vmatprep.mubr.bf16.mxu0 0
        %1901 = vmatmul.mubr.bf16.gmra.mrb[0].mxu0 %v1657
        %v1902 = vpop.f32.mrb[0].mxu0
        %v1903 = vadd.f32 %v1617, %v1902
        %v1904 = vpop.f32.mrb[0].mxu0
        %v1905 = vpop.f32.mrb[0].mxu0
        %v1906 = vadd.f32 %v1617, %v1905
        %v1907 = vpop.f32.mrb[0].mxu0
        %1908 = vmatprep.mubr.bf16.mxu0 0
        %1909 = vmatmul.mubr.bf16.gmra.mrb[0].mxu0 %v1660
        %v1910 = vpop.f32.mrb[0].mxu0
        %v1911 = vadd.f32 %v1617, %v1910
        %v1912 = vpop.f32.mrb[0].mxu0
        %v1913 = vpop.f32.mrb[0].mxu0
        %v1914 = vadd.f32 %v1617, %v1913
        %v1915 = vpop.f32.mrb[0].mxu0
        %1916 = vmatprep.mubr.bf16.mxu0 0
        %1917 = vmatmul.mubr.bf16.gmra.mrb[0].mxu0 %v1663
        %v1918 = vpop.f32.mrb[0].mxu0
        %v1919 = vadd.f32 %v1617, %v1918
        %v1920 = vpop.f32.mrb[0].mxu0
        %v1921 = vpop.f32.mrb[0].mxu0
        %v1922 = vadd.f32 %v1617, %v1921
        %v1923 = vpop.f32.mrb[0].mxu0
        %1924 = vmatprep.mubr.bf16.mxu0 0
        %1925 = vmatmul.mubr.bf16.gmra.mrb[0].mxu0 %v1666
        %v1926 = vpop.f32.mrb[0].mxu0
        %v1927 = vadd.f32 %v1617, %v1926
        %v1928 = vpop.f32.mrb[0].mxu0
        %v1929 = vpop.f32.mrb[0].mxu0
        %v1930 = vadd.f32 %v1617, %v1929
        %v1931 = vpop.f32.mrb[0].mxu0
        %1932 = vmatprep.mubr.bf16.mxu0 0
        %1933 = vmatmul.mubr.bf16.gmra.mrb[0].mxu0 %v1669
        %v1934 = vpop.f32.mrb[0].mxu0
        %v1935 = vadd.f32 %v1617, %v1934
        %v1936 = vpop.f32.mrb[0].mxu0
        %v1937 = vpop.f32.mrb[0].mxu0
        %v1938 = vadd.f32 %v1617, %v1937
        %v1939 = vpop.f32.mrb[0].mxu0
        %1940 = vmatprep.mubr.bf16.mxu0 0
        %1941 = vmatmul.mubr.bf16.gmra.mrb[0].mxu0 %v1672
        %v1942 = vpop.f32.mrb[0].mxu0
        %v1943 = vadd.f32 %v1617, %v1942
        %v1944 = vpop.f32.mrb[0].mxu0
        %v1945 = vpop.f32.mrb[0].mxu0
        %v1946 = vadd.f32 %v1617, %v1945
        %v1947 = vpop.f32.mrb[0].mxu0
        %1948 = vmatprep.mubr.bf16.mxu0 0
        %1949 = vmatmul.mubr.bf16.gmra.mrb[0].mxu0 %v1675
        %v1950 = vpop.f32.mrb[0].mxu0
        %v1951 = vadd.f32 %v1617, %v1950
        %v1952 = vpop.f32.mrb[0].mxu0
        %v1953 = vpop.f32.mrb[0].mxu0
        %v1954 = vadd.f32 %v1617, %v1953
        %v1955 = vpop.f32.mrb[0].mxu0
        %1956 = vmatprep.mubr.bf16.mxu0 0
        %1957 = vmatmul.mubr.bf16.gmra.mrb[0].mxu0 %v1678
        %v1958 = vpop.f32.mrb[0].mxu0
        %v1959 = vadd.f32 %v1617, %v1958
        %v1960 = vpop.f32.mrb[0].mxu0
        %v1961 = vpop.f32.mrb[0].mxu0
        %v1962 = vadd.f32 %v1617, %v1961
        %v1963 = vpop.f32.mrb[0].mxu0
        %1964 = vmatprep.mubr.bf16.mxu0 0
        %1965 = vmatmul.mubr.bf16.gmra.mrb[0].mxu0 %v1681
        %v1966 = vpop.f32.mrb[0].mxu0
        %v1967 = vadd.f32 %v1617, %v1966
        %v1968 = vpop.f32.mrb[0].mxu0
        %v1969 = vpop.f32.mrb[0].mxu0
        %v1970 = vadd.f32 %v1617, %v1969
        %v1971 = vpop.f32.mrb[0].mxu0
        %1972 = vmatprep.mubr.bf16.mxu0 0
        %1973 = vmatmul.mubr.bf16.gmra.mrb[0].mxu0 %v1684
        %v1974 = vpop.f32.mrb[0].mxu0
        %v1975 = vadd.f32 %v1617, %v1974
        %v1976 = vpop.f32.mrb[0].mxu0
        %v1977 = vpop.f32.mrb[0].mxu0
        %v1978 = vadd.f32 %v1617, %v1977
        %v1979 = vpop.f32.mrb[0].mxu0
        %1980 = vmatprep.mubr.bf16.mxu0 0
        %1981 = vmatmul.mubr.bf16.gmra.mrb[0].mxu0 %v1687
        %v1982 = vpop.f32.mrb[0].mxu0
        %v1983 = vadd.f32 %v1617, %v1982
        %v1984 = vpop.f32.mrb[0].mxu0
        %v1985 = vpop.f32.mrb[0].mxu0
        %v1986 = vadd.f32 %v1617, %v1985
        %v1987 = vpop.f32.mrb[0].mxu0
        %1988 = vmatprep.mubr.bf16.mxu0 0
        %1989 = vmatmul.mubr.bf16.gmra.mrb[0].mxu0 %v1690
        %v1990 = vpop.f32.mrb[0].mxu0
        %v1991 = vadd.f32 %v1617, %v1990
        %v1992 = vpop.f32.mrb[0].mxu0
        %v1993 = vpop.f32.mrb[0].mxu0
        %v1994 = vadd.f32 %v1617, %v1993
        %v1995 = vpop.f32.mrb[0].mxu0
        %1996 = vmatprep.mubr.bf16.mxu0 0
        %1997 = vmatmul.mubr.bf16.gmra.mrb[0].mxu0 %v1693
        %v1998 = vpop.f32.mrb[0].mxu0
        %v1999 = vadd.f32 %v1617, %v1998
        %v2000 = vpop.f32.mrb[0].mxu0
        %v2001 = vpop.f32.mrb[0].mxu0
        %v2002 = vadd.f32 %v1617, %v2001
        %v2003 = vpop.f32.mrb[0].mxu0
        %2004 = vmatprep.mubr.bf16.mxu0 0
        %2005 = vmatmul.mubr.bf16.gmra.mrb[0].mxu0 %v1696
        %v2006 = vpop.f32.mrb[0].mxu0
        %v2007 = vadd.f32 %v1617, %v2006
        %v2008 = vpop.f32.mrb[0].mxu0
        %v2009 = vpop.f32.mrb[0].mxu0
        %v2010 = vadd.f32 %v1617, %v2009
        %v2011 = vpop.f32.mrb[0].mxu0
        %2012 = vmatprep.mubr.bf16.mxu0 0
        %2013 = vmatmul.mubr.bf16.gmra.mrb[0].mxu0 %v1699
        %v2014 = vpop.f32.mrb[0].mxu0
        %v2015 = vadd.f32 %v1617, %v2014
        %v2016 = vpop.f32.mrb[0].mxu0
        %v2017 = vpop.f32.mrb[0].mxu0
        %v2018 = vadd.f32 %v1617, %v2017
        %v2019 = vpop.f32.mrb[0].mxu0
        %2020 = vmatprep.mubr.bf16.mxu0 0
        %2021 = vmatmul.mubr.bf16.gmra.mrb[0].mxu0 %v1702
        %v2022 = vpop.f32.mrb[0].mxu0
        %v2023 = vadd.f32 %v1617, %v2022
        %v2024 = vpop.f32.mrb[0].mxu0
        %v2025 = vpop.f32.mrb[0].mxu0
        %v2026 = vadd.f32 %v1617, %v2025
        %v2027 = vpop.f32.mrb[0].mxu0
        %2028 = vmatprep.mubr.bf16.mxu0 0
        %2029 = vmatmul.mubr.bf16.gmra.mrb[0].mxu0 %v1705
        %v2030 = vpop.f32.mrb[0].mxu0
        %v2031 = vadd.f32 %v1617, %v2030
        %v2032 = vpop.f32.mrb[0].mxu0
        %v2033 = vpop.f32.mrb[0].mxu0
        %v2034 = vadd.f32 %v1617, %v2033
        %v2035 = vpop.f32.mrb[0].mxu0
        %2036 = vmatprep.mubr.bf16.mxu0 0
        %2037 = vmatmul.mubr.bf16.gmra.mrb[0].mxu0 %v1708
        %v2038 = vpop.f32.mrb[0].mxu0
        %v2039 = vadd.f32 %v1617, %v2038
        %v2040 = vpop.f32.mrb[0].mxu0
        %v2041 = vpop.f32.mrb[0].mxu0
        %v2042 = vadd.f32 %v1617, %v2041
        %v2043 = vpop.f32.mrb[0].mxu0
        %2044 = vmatprep.mubr.bf16.mxu0 0
        %2045 = vmatmul.mubr.bf16.gmra.mrb[0].mxu0 %v1711
        %v2046 = vpop.f32.mrb[0].mxu0
        %v2047 = vadd.f32 %v1617, %v2046
        %v2048 = vpop.f32.mrb[0].mxu0
        %v2049 = vpop.f32.mrb[0].mxu0
        %v2050 = vadd.f32 %v1617, %v2049
        %v2051 = vpop.f32.mrb[0].mxu0
        %2052 = vmatprep.mubr.bf16.mxu0 0
        %2053 = vmatmul.mubr.bf16.gmra.mrb[0].mxu0 %v1714
        %v2054 = vpop.f32.mrb[0].mxu0
        %v2055 = vadd.f32 %v1617, %v2054
        %v2056 = vpop.f32.mrb[0].mxu0
        %v2057 = vpop.f32.mrb[0].mxu0
        %v2058 = vadd.f32 %v1617, %v2057
        %v2059 = vpop.f32.mrb[0].mxu0
        %2060 = vmatprep.mubr.bf16.mxu0 0
        %2061 = vmatmul.mubr.bf16.gmra.mrb[0].mxu0 %v1717
        %v2062 = vpop.f32.mrb[0].mxu0
        %v2063 = vadd.f32 %v1617, %v2062
        %v2064 = vpop.f32.mrb[0].mxu0
        %v2065 = vpop.f32.mrb[0].mxu0
        %v2066 = vadd.f32 %v1617, %v2065
        %v2067 = vpop.f32.mrb[0].mxu0
        %2068 = vmatprep.mubr.bf16.mxu0 0
        %2069 = vmatmul.mubr.bf16.gmra.mrb[0].mxu0 %v1720
        %v2070 = vpop.f32.mrb[0].mxu0
        %v2071 = vadd.f32 %v1617, %v2070
        %v2072 = vpop.f32.mrb[0].mxu0
        %v2073 = vpop.f32.mrb[0].mxu0
        %v2074 = vadd.f32 %v1617, %v2073
        %v2075 = vpop.f32.mrb[0].mxu0
        %2076 = vmatprep.mubr.bf16.mxu0 0
        %2077 = vmatmul.mubr.bf16.gmra.mrb[0].mxu0 %v1723
        %v2078 = vpop.f32.mrb[0].mxu0
        %v2079 = vadd.f32 %v1617, %v2078
        %v2080 = vpop.f32.mrb[0].mxu0
        %v2081 = vpop.f32.mrb[0].mxu0
        %v2082 = vadd.f32 %v1617, %v2081
        %v2083 = vpop.f32.mrb[0].mxu0
        %2084 = vmatprep.mubr.bf16.mxu0 0
        %2085 = vmatmul.mubr.bf16.gmra.mrb[0].mxu0 %v1726
        %v2086 = vpop.f32.mrb[0].mxu0
        %v2087 = vadd.f32 %v1617, %v2086
        %v2088 = vpop.f32.mrb[0].mxu0
        %v2089 = vpop.f32.mrb[0].mxu0
        %v2090 = vadd.f32 %v1617, %v2089
        %v2091 = vpop.f32.mrb[0].mxu0
        %2092 = vmatprep.mubr.bf16.mxu0 0
        %2093 = vmatmul.mubr.bf16.gmra.mrb[0].mxu0 %v1729
        %v2094 = vpop.f32.mrb[0].mxu0
        %v2095 = vadd.f32 %v1617, %v2094
        %v2096 = vpop.f32.mrb[0].mxu0
        %v2097 = vpop.f32.mrb[0].mxu0
        %v2098 = vadd.f32 %v1617, %v2097
        %v2099 = vpop.f32.mrb[0].mxu0
        %2100 = vmatprep.mubr.bf16.mxu0 0
        %2101 = vmatmul.mubr.bf16.gmra.mrb[0].mxu0 %v1732
        %v2102 = vpop.f32.mrb[0].mxu0
        %v2103 = vadd.f32 %v1617, %v2102
        %v2104 = vpop.f32.mrb[0].mxu0
        %v2105 = vpop.f32.mrb[0].mxu0
        %v2106 = vadd.f32 %v1617, %v2105
        %v2107 = vpop.f32.mrb[0].mxu0
        %2108 = vmatprep.mubr.bf16.mxu0 0
        %2109 = vmatmul.mubr.bf16.gmra.mrb[0].mxu0 %v1735
        %v2110 = vpop.f32.mrb[0].mxu0
        %v2111 = vadd.f32 %v1617, %v2110
        %v2112 = vpop.f32.mrb[0].mxu0
        %v2113 = vpop.f32.mrb[0].mxu0
        %v2114 = vadd.f32 %v1617, %v2113
        %v2115 = vpop.f32.mrb[0].mxu0
        %2116 = vmatprep.mubr.bf16.mxu0 0
        %2117 = vmatmul.mubr.bf16.gmra.mrb[0].mxu0 %v1738
        %v2118 = vpop.f32.mrb[0].mxu0
        %v2119 = vadd.f32 %v1617, %v2118
        %v2120 = vpop.f32.mrb[0].mxu0
        %v2121 = vpop.f32.mrb[0].mxu0
        %v2122 = vadd.f32 %v1617, %v2121
        %v2123 = vpop.f32.mrb[0].mxu0
        %2124 = vmatprep.mubr.bf16.mxu0 0
        %2125 = vmatmul.mubr.bf16.gmra.mrb[0].mxu0 %v1741
        %v2126 = vpop.f32.mrb[0].mxu0
        %v2127 = vadd.f32 %v1617, %v2126
        %v2128 = vpop.f32.mrb[0].mxu0
        %v2129 = vpop.f32.mrb[0].mxu0
        %v2130 = vadd.f32 %v1617, %v2129
        %v2131 = vpop.f32.mrb[0].mxu0
        %2132 = vmatprep.mubr.bf16.mxu0 0
        %2133 = vmatmul.mubr.bf16.gmra.mrb[0].mxu0 %v1744
        %v2134 = vpop.f32.mrb[0].mxu0
        %v2135 = vadd.f32 %v1617, %v2134
        %v2136 = vpop.f32.mrb[0].mxu0
        %v2137 = vpop.f32.mrb[0].mxu0
        %v2138 = vadd.f32 %v1617, %v2137
        %v2139 = vpop.f32.mrb[0].mxu0
        %2140 = vmatprep.mubr.bf16.mxu0 0
        %2141 = vmatmul.mubr.bf16.gmra.mrb[0].mxu0 %v1747
        %v2142 = vpop.f32.mrb[0].mxu0
        %v2143 = vadd.f32 %v1617, %v2142
        %v2144 = vpop.f32.mrb[0].mxu0
        %v2145 = vpop.f32.mrb[0].mxu0
        %v2146 = vadd.f32 %v1617, %v2145
        %v2147 = vpop.f32.mrb[0].mxu0
        %2148 = vmatprep.mubr.bf16.mxu0 0
        %2149 = vmatmul.mubr.bf16.gmra.mrb[0].mxu0 %v1750
        %v2150 = vpop.f32.mrb[0].mxu0
        %v2151 = vadd.f32 %v1617, %v2150
        %v2152 = vpop.f32.mrb[0].mxu0
        %v2153 = vpop.f32.mrb[0].mxu0
        %v2154 = vadd.f32 %v1617, %v2153
        %v2155 = vpop.f32.mrb[0].mxu0
        %2156 = vmatprep.mubr.bf16.mxu0 0
        %2157 = vmatmul.mubr.bf16.gmra.mrb[0].mxu0 %v1753
        %v2158 = vpop.f32.mrb[0].mxu0
        %v2159 = vadd.f32 %v1617, %v2158
        %v2160 = vpop.f32.mrb[0].mxu0
        %v2161 = vpop.f32.mrb[0].mxu0
        %v2162 = vadd.f32 %v1617, %v2161
        %v2163 = vpop.f32.mrb[0].mxu0
        %2164 = vmatprep.mubr.bf16.mxu0 0
        %2165 = vmatmul.mubr.bf16.gmra.mrb[0].mxu0 %v1756
        %v2166 = vpop.f32.mrb[0].mxu0
        %v2167 = vadd.f32 %v1617, %v2166
        %v2168 = vpop.f32.mrb[0].mxu0
        %v2169 = vpop.f32.mrb[0].mxu0
        %v2170 = vadd.f32 %v1617, %v2169
        %v2171 = vpop.f32.mrb[0].mxu0
        %2172 = vmatprep.mubr.bf16.mxu0 0
        %2173 = vmatmul.mubr.bf16.gmra.mrb[0].mxu0 %v1759
        %v2174 = vpop.f32.mrb[0].mxu0
        %v2175 = vadd.f32 %v1617, %v2174
        %v2176 = vpop.f32.mrb[0].mxu0
        %v2177 = vpop.f32.mrb[0].mxu0
        %v2178 = vadd.f32 %v1617, %v2177
        %v2179 = vpop.f32.mrb[0].mxu0
        %2180 = vmatprep.mubr.bf16.mxu0 0
        %2181 = vmatmul.mubr.bf16.gmra.mrb[0].mxu0 %v1762
        %v2182 = vpop.f32.mrb[0].mxu0
        %v2183 = vadd.f32 %v1617, %v2182
        %v2184 = vpop.f32.mrb[0].mxu0
        %v2185 = vpop.f32.mrb[0].mxu0
        %v2186 = vadd.f32 %v1617, %v2185
        %v2187 = vpop.f32.mrb[0].mxu0
        %2188 = vmatprep.mubr.bf16.mxu0 0
        %2189 = vmatmul.mubr.bf16.gmra.mrb[0].mxu0 %v1765
        %v2190 = vpop.f32.mrb[0].mxu0
        %v2191 = vadd.f32 %v1617, %v2190
        %v2192 = vpop.f32.mrb[0].mxu0
        %v2193 = vpop.f32.mrb[0].mxu0
        %v2194 = vadd.f32 %v1617, %v2193
        %v2195 = vpop.f32.mrb[0].mxu0
        %2196 = vmatprep.mubr.bf16.mxu0 0
        %2197 = vmatmul.mubr.bf16.gmra.mrb[0].mxu0 %v1768
        %v2198 = vpop.f32.mrb[0].mxu0
        %v2199 = vadd.f32 %v1617, %v2198
        %v2200 = vpop.f32.mrb[0].mxu0
        %v2201 = vpop.f32.mrb[0].mxu0
        %v2202 = vadd.f32 %v1617, %v2201
        %v2203 = vpop.f32.mrb[0].mxu0
        %2204 = vmatprep.mubr.bf16.mxu0 0
        %2205 = vmatmul.mubr.bf16.gmra.mrb[0].mxu0 %v1771
        %v2206 = vpop.f32.mrb[0].mxu0
        %v2207 = vadd.f32 %v1617, %v2206
        %v2208 = vpop.f32.mrb[0].mxu0
        %v2209 = vpop.f32.mrb[0].mxu0
        %v2210 = vadd.f32 %v1617, %v2209
        %v2211 = vpop.f32.mrb[0].mxu0
        %2212 = vmatprep.mubr.bf16.mxu0 0
        %2213 = vmatmul.mubr.bf16.gmra.mrb[0].mxu0 %v1774
        %v2214 = vpop.f32.mrb[0].mxu0
        %v2215 = vadd.f32 %v1617, %v2214
        %v2216 = vpop.f32.mrb[0].mxu0
        %v2217 = vpop.f32.mrb[0].mxu0
        %v2218 = vadd.f32 %v1617, %v2217
        %v2219 = vpop.f32.mrb[0].mxu0
        %2220 = vmatprep.mubr.bf16.mxu0 0
        %2221 = vmatmul.mubr.bf16.gmra.mrb[0].mxu0 %v1777
        %v2222 = vpop.f32.mrb[0].mxu0
        %v2223 = vadd.f32 %v1617, %v2222
        %v2224 = vpop.f32.mrb[0].mxu0
        %v2225 = vpop.f32.mrb[0].mxu0
        %v2226 = vadd.f32 %v1617, %v2225
        %v2227 = vpop.f32.mrb[0].mxu0
        %2228 = vmatprep.mubr.bf16.mxu0 0
        %2229 = vmatmul.mubr.bf16.gmra.mrb[0].mxu0 %v1780
        %v2230 = vpop.f32.mrb[0].mxu0
        %v2231 = vadd.f32 %v1617, %v2230
        %v2232 = vpop.f32.mrb[0].mxu0
        %v2233 = vpop.f32.mrb[0].mxu0
        %v2234 = vadd.f32 %v1617, %v2233
        %v2235 = vpop.f32.mrb[0].mxu0
        %2236 = vmatprep.mubr.bf16.mxu0 0
        %2237 = vmatmul.mubr.bf16.gmra.mrb[0].mxu0 %v1783
        %v2238 = vpop.f32.mrb[0].mxu0
        %v2239 = vadd.f32 %v1617, %v2238
        %v2240 = vpop.f32.mrb[0].mxu0
        %v2241 = vpop.f32.mrb[0].mxu0
        %v2242 = vadd.f32 %v1617, %v2241
        %v2243 = vpop.f32.mrb[0].mxu0
        %2244 = vmatprep.mubr.bf16.mxu0 0
        %2245 = vmatmul.mubr.bf16.gmra.mrb[0].mxu0 %v1786
        %v2246 = vpop.f32.mrb[0].mxu0
        %v2247 = vadd.f32 %v1617, %v2246
        %v2248 = vpop.f32.mrb[0].mxu0
        %v2249 = vpop.f32.mrb[0].mxu0
        %v2250 = vadd.f32 %v1617, %v2249
        %v2251 = vpop.f32.mrb[0].mxu0
        %2252 = vmatprep.mubr.bf16.mxu0 0
        %2253 = vmatmul.mubr.bf16.gmra.mrb[0].mxu0 %v1789
        %v2254 = vpop.f32.mrb[0].mxu0
        %v2255 = vadd.f32 %v1617, %v2254
        %v2256 = vpop.f32.mrb[0].mxu0
        %v2257 = vpop.f32.mrb[0].mxu0
        %v2258 = vadd.f32 %v1617, %v2257
        %v2259 = vpop.f32.mrb[0].mxu0
        %2260 = vmatprep.mubr.bf16.mxu0 0
        %2261 = vmatmul.mubr.bf16.gmra.mrb[0].mxu0 %v1792
        %v2262 = vpop.f32.mrb[0].mxu0
        %v2263 = vadd.f32 %v1617, %v2262
        %v2264 = vpop.f32.mrb[0].mxu0
        %v2265 = vpop.f32.mrb[0].mxu0
        %v2266 = vadd.f32 %v1617, %v2265
        %v2267 = vpop.f32.mrb[0].mxu0
        %2268 = vmatprep.mubr.bf16.mxu0 0
        %2269 = vmatmul.mubr.bf16.gmra.mrb[0].mxu0 %v1795
        %v2270 = vpop.f32.mrb[0].mxu0
        %v2271 = vadd.f32 %v1617, %v2270
        %v2272 = vpop.f32.mrb[0].mxu0
        %v2273 = vpop.f32.mrb[0].mxu0
        %v2274 = vadd.f32 %v1617, %v2273
        %v2275 = vpop.f32.mrb[0].mxu0
        %2276 = vmatprep.mubr.bf16.mxu0 0
        %2277 = vmatmul.mubr.bf16.gmra.mrb[0].mxu0 %v1798
        %v2278 = vpop.f32.mrb[0].mxu0
        %v2279 = vadd.f32 %v1617, %v2278
        %v2280 = vpop.f32.mrb[0].mxu0
        %v2281 = vpop.f32.mrb[0].mxu0
        %v2282 = vadd.f32 %v1617, %v2281
        %v2283 = vpop.f32.mrb[0].mxu0
        %2284 = vmatprep.mubr.bf16.mxu0 0
        %2285 = vmatmul.mubr.bf16.gmra.mrb[0].mxu0 %v1801
        %v2286 = vpop.f32.mrb[0].mxu0
        %v2287 = vadd.f32 %v1617, %v2286
        %v2288 = vpop.f32.mrb[0].mxu0
        %v2289 = vpop.f32.mrb[0].mxu0
        %v2290 = vadd.f32 %v1617, %v2289
        %v2291 = vpop.f32.mrb[0].mxu0
        %2292 = vmatprep.mubr.bf16.mxu0 0
        %2293 = vmatmul.mubr.bf16.gmra.mrb[0].mxu0 %v1804
        %v2294 = vpop.f32.mrb[0].mxu0
        %v2295 = vadd.f32 %v1617, %v2294
        %v2296 = vpop.f32.mrb[0].mxu0
        %v2297 = vpop.f32.mrb[0].mxu0
        %v2298 = vadd.f32 %v1617, %v2297
        %v2299 = vpop.f32.mrb[0].mxu0
        %2300 = vmatprep.mubr.bf16.mxu0 0
        %2301 = vmatmul.mubr.bf16.gmra.mrb[0].mxu0 %v1807
        %v2302 = vpop.f32.mrb[0].mxu0
        %v2303 = vadd.f32 %v1617, %v2302
        %v2304 = vpop.f32.mrb[0].mxu0
        %v2305 = vpop.f32.mrb[0].mxu0
        %v2306 = vadd.f32 %v1617, %v2305
        %v2307 = vpop.f32.mrb[0].mxu0
        %2308 = vmatprep.mubr.bf16.mxu0 0
        %2309 = vmatmul.mubr.bf16.gmra.mrb[0].mxu0 %v1810
        %v2310 = vpop.f32.mrb[0].mxu0
        %v2311 = vadd.f32 %v1617, %v2310
        %v2312 = vpop.f32.mrb[0].mxu0
        %v2313 = vpop.f32.mrb[0].mxu0
        %v2314 = vadd.f32 %v1617, %v2313
        %v2315 = vpop.f32.mrb[0].mxu0
        %2316 = vmatprep.mubr.bf16.mxu0 0
        %2317 = vmatmul.mubr.bf16.gmra.mrb[0].mxu0 %v1813
        %v2318 = vpop.f32.mrb[0].mxu0
        %v2319 = vadd.f32 %v1617, %v2318
        %v2320 = vpop.f32.mrb[0].mxu0
        %v2321 = vpop.f32.mrb[0].mxu0
        %v2322 = vadd.f32 %v1617, %v2321
        %v2323 = vpop.f32.mrb[0].mxu0
        %2324 = vmatprep.mubr.bf16.mxu0 0
        %2325 = vmatmul.mubr.bf16.gmra.mrb[0].mxu0 %v1816
        %v2326 = vpop.f32.mrb[0].mxu0
        %v2327 = vadd.f32 %v1617, %v2326
        %v2328 = vpop.f32.mrb[0].mxu0
        %v2329 = vpop.f32.mrb[0].mxu0
        %v2330 = vadd.f32 %v1617, %v2329
        %v2331 = vpop.f32.mrb[0].mxu0
        %2332 = vmatprep.mubr.bf16.mxu0 0
        %2333 = vmatmul.mubr.bf16.gmra.mrb[0].mxu0 %v1819
        %v2334 = vpop.f32.mrb[0].mxu0
        %v2335 = vadd.f32 %v1617, %v2334
        %v2336 = vpop.f32.mrb[0].mxu0
        %v2337 = vpop.f32.mrb[0].mxu0
        %v2338 = vadd.f32 %v1617, %v2337
        %v2339 = vpop.f32.mrb[0].mxu0
        %2340 = vmatprep.mubr.bf16.mxu0 0
        %2341 = vmatmul.mubr.bf16.gmra.mrb[0].mxu0 %v1822
        %v2342 = vpop.f32.mrb[0].mxu0
        %v2343 = vadd.f32 %v1617, %v2342
        %v2344 = vpop.f32.mrb[0].mxu0
        %v2345 = vpop.f32.mrb[0].mxu0
        %v2346 = vadd.f32 %v1617, %v2345
        %v2347 = vpop.f32.mrb[0].mxu0
        %2348 = vmatprep.mubr.bf16.mxu0 0
        %2349 = vmatmul.mubr.bf16.gmra.mrb[0].mxu0 %v1825
        %v2350 = vpop.f32.mrb[0].mxu0
        %v2351 = vadd.f32 %v1617, %v2350
        %v2352 = vpop.f32.mrb[0].mxu0
        %v2353 = vpop.f32.mrb[0].mxu0
        %v2354 = vadd.f32 %v1617, %v2353
        %v2355 = vpop.f32.mrb[0].mxu0
        %2356 = vmatprep.mubr.bf16.mxu0 0
        %2357 = vmatmul.mubr.bf16.gmra.mrb[0].mxu0 %v1828
        %v2358 = vpop.f32.mrb[0].mxu0
        %v2359 = vadd.f32 %v1617, %v2358
        %v2360 = vpop.f32.mrb[0].mxu0
        %v2361 = vpop.f32.mrb[0].mxu0
        %v2362 = vadd.f32 %v1617, %v2361
        %v2363 = vpop.f32.mrb[0].mxu0
        %2364 = vmatprep.mubr.bf16.mxu0 0
        %2365 = vmatmul.mubr.bf16.gmra.mrb[0].mxu0 %v1831
        %v2366 = vpop.f32.mrb[0].mxu0
        %v2367 = vadd.f32 %v1617, %v2366
        %v2368 = vpop.f32.mrb[0].mxu0
        %v2369 = vpop.f32.mrb[0].mxu0
        %v2370 = vadd.f32 %v1617, %v2369
        %v2371 = vpop.f32.mrb[0].mxu0
        %2372 = vmatprep.mubr.bf16.mxu0 0
        %2373 = vmatmul.mubr.bf16.gmra.mrb[0].mxu0 %v1834
        %v2374 = vpop.f32.mrb[0].mxu0
        %v2375 = vadd.f32 %v1617, %v2374
        %v2376 = vpop.f32.mrb[0].mxu0
        %v2377 = vpop.f32.mrb[0].mxu0
        %v2378 = vadd.f32 %v1617, %v2377
        %v2379 = vpop.f32.mrb[0].mxu0
        %2380 = vdwg.mxu0
        %v2381 = vmax.f32 %v1871, 0.0
        %v2382 = vmax.f32 %v1874, 0.0
        %v2383 = vmax.f32 %v1879, 0.0
        %v2384 = vmax.f32 %v1882, 0.0
        %v2385 = vmax.f32 %v1887, 0.0
        %v2386 = vmax.f32 %v1890, 0.0
        %v2387 = vmax.f32 %v1895, 0.0
        %v2388 = vmax.f32 %v1898, 0.0
        %v2389 = vmax.f32 %v1903, 0.0
        %v2390 = vmax.f32 %v1906, 0.0
        %v2391 = vmax.f32 %v1911, 0.0
        %v2392 = vmax.f32 %v1914, 0.0
        %v2393 = vmax.f32 %v1919, 0.0
        %v2394 = vmax.f32 %v1922, 0.0
        %v2395 = vmax.f32 %v1927, 0.0
        %v2396 = vmax.f32 %v1930, 0.0
        %v2397 = vmax.f32 %v1935, 0.0
        %v2398 = vmax.f32 %v1938, 0.0
        %v2399 = vmax.f32 %v1943, 0.0
        %v2400 = vmax.f32 %v1946, 0.0
        %v2401 = vmax.f32 %v1951, 0.0
        %v2402 = vmax.f32 %v1954, 0.0
        %v2403 = vmax.f32 %v1959, 0.0
        %v2404 = vmax.f32 %v1962, 0.0
        %v2405 = vmax.f32 %v1967, 0.0
        %v2406 = vmax.f32 %v1970, 0.0
        %v2407 = vmax.f32 %v1975, 0.0
        %v2408 = vmax.f32 %v1978, 0.0
        %v2409 = vmax.f32 %v1983, 0.0
        %v2410 = vmax.f32 %v1986, 0.0
        %v2411 = vmax.f32 %v1991, 0.0
        %v2412 = vmax.f32 %v1994, 0.0
        %v2413 = vmax.f32 %v1999, 0.0
        %v2414 = vmax.f32 %v2002, 0.0
        %v2415 = vmax.f32 %v2007, 0.0
        %v2416 = vmax.f32 %v2010, 0.0
        %v2417 = vmax.f32 %v2015, 0.0
        %v2418 = vmax.f32 %v2018, 0.0
        %v2419 = vmax.f32 %v2023, 0.0
        %v2420 = vmax.f32 %v2026, 0.0
        %v2421 = vmax.f32 %v2031, 0.0
        %v2422 = vmax.f32 %v2034, 0.0
        %v2423 = vmax.f32 %v2039, 0.0
        %v2424 = vmax.f32 %v2042, 0.0
        %v2425 = vmax.f32 %v2047, 0.0
        %v2426 = vmax.f32 %v2050, 0.0
        %v2427 = vmax.f32 %v2055, 0.0
        %v2428 = vmax.f32 %v2058, 0.0
        %v2429 = vmax.f32 %v2063, 0.0
        %v2430 = vmax.f32 %v2066, 0.0
        %v2431 = vmax.f32 %v2071, 0.0
        %v2432 = vmax.f32 %v2074, 0.0
        %v2433 = vmax.f32 %v2079, 0.0
        %v2434 = vmax.f32 %v2082, 0.0
        %v2435 = vmax.f32 %v2087, 0.0
        %v2436 = vmax.f32 %v2090, 0.0
        %v2437 = vmax.f32 %v2095, 0.0
        %v2438 = vmax.f32 %v2098, 0.0
        %v2439 = vmax.f32 %v2103, 0.0
        %v2440 = vmax.f32 %v2106, 0.0
        %v2441 = vmax.f32 %v2111, 0.0
        %v2442 = vmax.f32 %v2114, 0.0
        %v2443 = vmax.f32 %v2119, 0.0
        %v2444 = vmax.f32 %v2122, 0.0
        %v2445 = vmax.f32 %v2127, 0.0
        %v2446 = vmax.f32 %v2130, 0.0
        %v2447 = vmax.f32 %v2135, 0.0
        %v2448 = vmax.f32 %v2138, 0.0
        %v2449 = vmax.f32 %v2143, 0.0
        %v2450 = vmax.f32 %v2146, 0.0
        %v2451 = vmax.f32 %v2151, 0.0
        %v2452 = vmax.f32 %v2154, 0.0
        %v2453 = vmax.f32 %v2159, 0.0
        %v2454 = vmax.f32 %v2162, 0.0
        %v2455 = vmax.f32 %v2167, 0.0
        %v2456 = vmax.f32 %v2170, 0.0
        %v2457 = vmax.f32 %v2175, 0.0
        %v2458 = vmax.f32 %v2178, 0.0
        %v2459 = vmax.f32 %v2183, 0.0
        %v2460 = vmax.f32 %v2186, 0.0
        %v2461 = vmax.f32 %v2191, 0.0
        %v2462 = vmax.f32 %v2194, 0.0
        %v2463 = vmax.f32 %v2199, 0.0
        %v2464 = vmax.f32 %v2202, 0.0
        %v2465 = vmax.f32 %v2207, 0.0
        %v2466 = vmax.f32 %v2210, 0.0
        %v2467 = vmax.f32 %v2215, 0.0
        %v2468 = vmax.f32 %v2218, 0.0
        %v2469 = vmax.f32 %v2223, 0.0
        %v2470 = vmax.f32 %v2226, 0.0
        %v2471 = vmax.f32 %v2231, 0.0
        %v2472 = vmax.f32 %v2234, 0.0
        %v2473 = vmax.f32 %v2239, 0.0
        %v2474 = vmax.f32 %v2242, 0.0
        %v2475 = vmax.f32 %v2247, 0.0
        %v2476 = vmax.f32 %v2250, 0.0
        %v2477 = vmax.f32 %v2255, 0.0
        %v2478 = vmax.f32 %v2258, 0.0
        %v2479 = vmax.f32 %v2263, 0.0
        %v2480 = vmax.f32 %v2266, 0.0
        %v2481 = vmax.f32 %v2271, 0.0
        %v2482 = vmax.f32 %v2274, 0.0
        %v2483 = vmax.f32 %v2279, 0.0
        %v2484 = vmax.f32 %v2282, 0.0
        %v2485 = vmax.f32 %v2287, 0.0
        %v2486 = vmax.f32 %v2290, 0.0
        %v2487 = vmax.f32 %v2295, 0.0
        %v2488 = vmax.f32 %v2298, 0.0
        %v2489 = vmax.f32 %v2303, 0.0
        %v2490 = vmax.f32 %v2306, 0.0
        %v2491 = vmax.f32 %v2311, 0.0
        %v2492 = vmax.f32 %v2314, 0.0
        %v2493 = vmax.f32 %v2319, 0.0
        %v2494 = vmax.f32 %v2322, 0.0
        %v2495 = vmax.f32 %v2327, 0.0
        %v2496 = vmax.f32 %v2330, 0.0
        %v2497 = vmax.f32 %v2335, 0.0
        %v2498 = vmax.f32 %v2338, 0.0
        %v2499 = vmax.f32 %v2343, 0.0
        %v2500 = vmax.f32 %v2346, 0.0
        %v2501 = vmax.f32 %v2351, 0.0
        %v2502 = vmax.f32 %v2354, 0.0
        %v2503 = vmax.f32 %v2359, 0.0
        %v2504 = vmax.f32 %v2362, 0.0
        %v2505 = vmax.f32 %v2367, 0.0
        %v2506 = vmax.f32 %v2370, 0.0
        %v2507 = vmax.f32 %v2375, 0.0
        %v2508 = vmax.f32 %v2378, 0.0
        %v2509 = vpack.c.bf16 %v2382, %v2381
        %v2510 = vpack.c.bf16 %v2384, %v2383
        %v2511 = vpack.c.bf16 %v2386, %v2385
        %v2512 = vpack.c.bf16 %v2388, %v2387
        %v2513 = vpack.c.bf16 %v2390, %v2389
        %v2514 = vpack.c.bf16 %v2392, %v2391
        %v2515 = vpack.c.bf16 %v2394, %v2393
        %v2516 = vpack.c.bf16 %v2396, %v2395
        %v2517 = vpack.c.bf16 %v2398, %v2397
        %v2518 = vpack.c.bf16 %v2400, %v2399
        %v2519 = vpack.c.bf16 %v2402, %v2401
        %v2520 = vpack.c.bf16 %v2404, %v2403
        %v2521 = vpack.c.bf16 %v2406, %v2405
        %v2522 = vpack.c.bf16 %v2408, %v2407
        %v2523 = vpack.c.bf16 %v2410, %v2409
        %v2524 = vpack.c.bf16 %v2412, %v2411
        %v2525 = vpack.c.bf16 %v2414, %v2413
        %v2526 = vpack.c.bf16 %v2416, %v2415
        %v2527 = vpack.c.bf16 %v2418, %v2417
        %v2528 = vpack.c.bf16 %v2420, %v2419
        %v2529 = vpack.c.bf16 %v2422, %v2421
        %v2530 = vpack.c.bf16 %v2424, %v2423
        %v2531 = vpack.c.bf16 %v2426, %v2425
        %v2532 = vpack.c.bf16 %v2428, %v2427
        %v2533 = vpack.c.bf16 %v2430, %v2429
        %v2534 = vpack.c.bf16 %v2432, %v2431
        %v2535 = vpack.c.bf16 %v2434, %v2433
        %v2536 = vpack.c.bf16 %v2436, %v2435
        %v2537 = vpack.c.bf16 %v2438, %v2437
        %v2538 = vpack.c.bf16 %v2440, %v2439
        %v2539 = vpack.c.bf16 %v2442, %v2441
        %v2540 = vpack.c.bf16 %v2444, %v2443
        %v2541 = vpack.c.bf16 %v2446, %v2445
        %v2542 = vpack.c.bf16 %v2448, %v2447
        %v2543 = vpack.c.bf16 %v2450, %v2449
        %v2544 = vpack.c.bf16 %v2452, %v2451
        %v2545 = vpack.c.bf16 %v2454, %v2453
        %v2546 = vpack.c.bf16 %v2456, %v2455
        %v2547 = vpack.c.bf16 %v2458, %v2457
        %v2548 = vpack.c.bf16 %v2460, %v2459
        %v2549 = vpack.c.bf16 %v2462, %v2461
        %v2550 = vpack.c.bf16 %v2464, %v2463
        %v2551 = vpack.c.bf16 %v2466, %v2465
        %v2552 = vpack.c.bf16 %v2468, %v2467
        %v2553 = vpack.c.bf16 %v2470, %v2469
        %v2554 = vpack.c.bf16 %v2472, %v2471
        %v2555 = vpack.c.bf16 %v2474, %v2473
        %v2556 = vpack.c.bf16 %v2476, %v2475
        %v2557 = vpack.c.bf16 %v2478, %v2477
        %v2558 = vpack.c.bf16 %v2480, %v2479
        %v2559 = vpack.c.bf16 %v2482, %v2481
        %v2560 = vpack.c.bf16 %v2484, %v2483
        %v2561 = vpack.c.bf16 %v2486, %v2485
        %v2562 = vpack.c.bf16 %v2488, %v2487
        %v2563 = vpack.c.bf16 %v2490, %v2489
        %v2564 = vpack.c.bf16 %v2492, %v2491
        %v2565 = vpack.c.bf16 %v2494, %v2493
        %v2566 = vpack.c.bf16 %v2496, %v2495
        %v2567 = vpack.c.bf16 %v2498, %v2497
        %v2568 = vpack.c.bf16 %v2500, %v2499
        %v2569 = vpack.c.bf16 %v2502, %v2501
        %v2570 = vpack.c.bf16 %v2504, %v2503
        %v2571 = vpack.c.bf16 %v2506, %v2505
        %v2572 = vpack.c.bf16 %v2508, %v2507
        %v2573 = vld [vmem:[%s5] sm:$0xff]
        %v2574 = vld [vmem:[%s5 + $0x8] sm:$0xff]
        %v2575 = vld [vmem:[%s5 + $0x10] sm:$0xff]
        %v2576 = vld [vmem:[%s5 + $0x18] sm:$0xff]
        %v2577 = vld [vmem:[%s5 + $0x20] sm:$0xff]
        %v2578 = vld [vmem:[%s5 + $0x28] sm:$0xff]
        %v2579 = vld [vmem:[%s5 + $0x30] sm:$0xff]
        %v2580 = vld [vmem:[%s5 + $0x38] sm:$0xff]
        %v2581 = vld [vmem:[%s5 + $0x40] sm:$0xff]
        %v2582 = vld [vmem:[%s5 + $0x48] sm:$0xff]
        %v2583 = vld [vmem:[%s5 + $0x50] sm:$0xff]
        %v2584 = vld [vmem:[%s5 + $0x58] sm:$0xff]
        %v2585 = vld [vmem:[%s5 + $0x60] sm:$0xff]
        %v2586 = vld [vmem:[%s5 + $0x68] sm:$0xff]
        %v2587 = vld [vmem:[%s5 + $0x70] sm:$0xff]
        %v2588 = vld [vmem:[%s5 + $0x78] sm:$0xff]
        %v2589 = vld [vmem:[%s5 + $0x80] sm:$0xff]
        %v2590 = vld [vmem:[%s5 + $0x88] sm:$0xff]
        %v2591 = vld [vmem:[%s5 + $0x90] sm:$0xff]
        %v2592 = vld [vmem:[%s5 + $0x98] sm:$0xff]
        %v2593 = vld [vmem:[%s5 + $0xa0] sm:$0xff]
        %v2594 = vld [vmem:[%s5 + $0xa8] sm:$0xff]
        %v2595 = vld [vmem:[%s5 + $0xb0] sm:$0xff]
        %v2596 = vld [vmem:[%s5 + $0xb8] sm:$0xff]
        %v2597 = vld [vmem:[%s5 + $0xc0] sm:$0xff]
        %v2598 = vld [vmem:[%s5 + $0xc8] sm:$0xff]
        %v2599 = vld [vmem:[%s5 + $0xd0] sm:$0xff]
        %v2600 = vld [vmem:[%s5 + $0xd8] sm:$0xff]
        %v2601 = vld [vmem:[%s5 + $0xe0] sm:$0xff]
        %v2602 = vld [vmem:[%s5 + $0xe8] sm:$0xff]
        %v2603 = vld [vmem:[%s5 + $0xf0] sm:$0xff]
        %v2604 = vld [vmem:[%s5 + $0xf8] sm:$0xff]
        %v2605 = vld [vmem:[%s5 + $0x100] sm:$0xff]
        %v2606 = vld [vmem:[%s5 + $0x108] sm:$0xff]
        %v2607 = vld [vmem:[%s5 + $0x110] sm:$0xff]
        %v2608 = vld [vmem:[%s5 + $0x118] sm:$0xff]
        %v2609 = vld [vmem:[%s5 + $0x120] sm:$0xff]
        %v2610 = vld [vmem:[%s5 + $0x128] sm:$0xff]
        %v2611 = vld [vmem:[%s5 + $0x130] sm:$0xff]
        %v2612 = vld [vmem:[%s5 + $0x138] sm:$0xff]
        %v2613 = vld [vmem:[%s5 + $0x140] sm:$0xff]
        %v2614 = vld [vmem:[%s5 + $0x148] sm:$0xff]
        %v2615 = vld [vmem:[%s5 + $0x150] sm:$0xff]
        %v2616 = vld [vmem:[%s5 + $0x158] sm:$0xff]
        %v2617 = vld [vmem:[%s5 + $0x160] sm:$0xff]
        %v2618 = vld [vmem:[%s5 + $0x168] sm:$0xff]
        %v2619 = vld [vmem:[%s5 + $0x170] sm:$0xff]
        %v2620 = vld [vmem:[%s5 + $0x178] sm:$0xff]
        %v2621 = vld [vmem:[%s5 + $0x180] sm:$0xff]
        %v2622 = vld [vmem:[%s5 + $0x188] sm:$0xff]
        %v2623 = vld [vmem:[%s5 + $0x190] sm:$0xff]
        %v2624 = vld [vmem:[%s5 + $0x198] sm:$0xff]
        %v2625 = vld [vmem:[%s5 + $0x1a0] sm:$0xff]
        %v2626 = vld [vmem:[%s5 + $0x1a8] sm:$0xff]
        %v2627 = vld [vmem:[%s5 + $0x1b0] sm:$0xff]
        %v2628 = vld [vmem:[%s5 + $0x1b8] sm:$0xff]
        %v2629 = vld [vmem:[%s5 + $0x1c0] sm:$0xff]
        %v2630 = vld [vmem:[%s5 + $0x1c8] sm:$0xff]
        %v2631 = vld [vmem:[%s5 + $0x1d0] sm:$0xff]
        %v2632 = vld [vmem:[%s5 + $0x1d8] sm:$0xff]
        %v2633 = vld [vmem:[%s5 + $0x1e0] sm:$0xff]
        %v2634 = vld [vmem:[%s5 + $0x1e8] sm:$0xff]
        %v2635 = vld [vmem:[%s5 + $0x1f0] sm:$0xff]
        %v2636 = vld [vmem:[%s5 + $0x1f8] sm:$0xff]
        %v2637 = vld [vmem:[%s6] sm:$0xff]
        %v2639 = vlaneseq
        %v2640 = vshrl.u32 %v2639, 7
        %v2641 = vsub.s32 0, %v2640
        %v2642 = vrot.slane %v2637, %v2641
        %v2643 = vlaneseq
        %v2644 = vshrl.u32 %v2643, 7
        %v2645 = vsub.s32 1, %v2644
        %v2646 = vrot.slane %v2637, %v2645
        %v2647 = vlaneseq
        %v2648 = vshrl.u32 %v2647, 7
        %v2649 = vsub.s32 2, %v2648
        %v2650 = vrot.slane %v2637, %v2649
        %v2651 = vlaneseq
        %v2652 = vshrl.u32 %v2651, 7
        %v2653 = vsub.s32 3, %v2652
        %v2654 = vrot.slane %v2637, %v2653
        %v2655 = vlaneseq
        %v2656 = vshrl.u32 %v2655, 7
        %v2657 = vsub.s32 4, %v2656
        %v2658 = vrot.slane %v2637, %v2657
        %v2659 = vlaneseq
        %v2660 = vshrl.u32 %v2659, 7
        %v2661 = vsub.s32 5, %v2660
        %v2662 = vrot.slane %v2637, %v2661
        %v2663 = vlaneseq
        %v2664 = vshrl.u32 %v2663, 7
        %v2665 = vsub.s32 6, %v2664
        %v2666 = vrot.slane %v2637, %v2665
        %v2667 = vlaneseq
        %v2668 = vshrl.u32 %v2667, 7
        %v2669 = vsub.s32 7, %v2668
        %v2670 = vrot.slane %v2637, %v2669
        %v2743 = vunpack.c.l.b16 %v2573
        %v2744 = vunpack.c.h.b16 %v2573
        %v2745 = vunpack.c.l.b16 %v2574
        %v2746 = vunpack.c.h.b16 %v2574
        %v2747 = vunpack.c.l.b16 %v2575
        %v2748 = vunpack.c.h.b16 %v2575
        %v2749 = vunpack.c.l.b16 %v2576
        %v2750 = vunpack.c.h.b16 %v2576
        %v2751 = vunpack.c.l.b16 %v2577
        %v2752 = vunpack.c.h.b16 %v2577
        %v2753 = vunpack.c.l.b16 %v2578
        %v2754 = vunpack.c.h.b16 %v2578
        %v2755 = vunpack.c.l.b16 %v2579
        %v2756 = vunpack.c.h.b16 %v2579
        %v2757 = vunpack.c.l.b16 %v2580
        %v2758 = vunpack.c.h.b16 %v2580
        %v2759 = vunpack.c.l.b16 %v2581
        %v2760 = vunpack.c.h.b16 %v2581
        %v2761 = vunpack.c.l.b16 %v2582
        %v2762 = vunpack.c.h.b16 %v2582
        %v2763 = vunpack.c.l.b16 %v2583
        %v2764 = vunpack.c.h.b16 %v2583
        %v2765 = vunpack.c.l.b16 %v2584
        %v2766 = vunpack.c.h.b16 %v2584
        %v2767 = vunpack.c.l.b16 %v2585
        %v2768 = vunpack.c.h.b16 %v2585
        %v2769 = vunpack.c.l.b16 %v2586
        %v2770 = vunpack.c.h.b16 %v2586
        %v2771 = vunpack.c.l.b16 %v2587
        %v2772 = vunpack.c.h.b16 %v2587
        %v2773 = vunpack.c.l.b16 %v2588
        %v2774 = vunpack.c.h.b16 %v2588
        %v2775 = vunpack.c.l.b16 %v2589
        %v2776 = vunpack.c.h.b16 %v2589
        %v2777 = vunpack.c.l.b16 %v2590
        %v2778 = vunpack.c.h.b16 %v2590
        %v2779 = vunpack.c.l.b16 %v2591
        %v2780 = vunpack.c.h.b16 %v2591
        %v2781 = vunpack.c.l.b16 %v2592
        %v2782 = vunpack.c.h.b16 %v2592
        %v2783 = vunpack.c.l.b16 %v2593
        %v2784 = vunpack.c.h.b16 %v2593
        %v2785 = vunpack.c.l.b16 %v2594
        %v2786 = vunpack.c.h.b16 %v2594
        %v2787 = vunpack.c.l.b16 %v2595
        %v2788 = vunpack.c.h.b16 %v2595
        %v2789 = vunpack.c.l.b16 %v2596
        %v2790 = vunpack.c.h.b16 %v2596
        %v2791 = vunpack.c.l.b16 %v2597
        %v2792 = vunpack.c.h.b16 %v2597
        %v2793 = vunpack.c.l.b16 %v2598
        %v2794 = vunpack.c.h.b16 %v2598
        %v2795 = vunpack.c.l.b16 %v2599
        %v2796 = vunpack.c.h.b16 %v2599
        %v2797 = vunpack.c.l.b16 %v2600
        %v2798 = vunpack.c.h.b16 %v2600
        %v2799 = vunpack.c.l.b16 %v2601
        %v2800 = vunpack.c.h.b16 %v2601
        %v2801 = vunpack.c.l.b16 %v2602
        %v2802 = vunpack.c.h.b16 %v2602
        %v2803 = vunpack.c.l.b16 %v2603
        %v2804 = vunpack.c.h.b16 %v2603
        %v2805 = vunpack.c.l.b16 %v2604
        %v2806 = vunpack.c.h.b16 %v2604
        %v2807 = vunpack.c.l.b16 %v2605
        %v2808 = vunpack.c.h.b16 %v2605
        %v2809 = vunpack.c.l.b16 %v2606
        %v2810 = vunpack.c.h.b16 %v2606
        %v2811 = vunpack.c.l.b16 %v2607
        %v2812 = vunpack.c.h.b16 %v2607
        %v2813 = vunpack.c.l.b16 %v2608
        %v2814 = vunpack.c.h.b16 %v2608
        %v2815 = vunpack.c.l.b16 %v2609
        %v2816 = vunpack.c.h.b16 %v2609
        %v2817 = vunpack.c.l.b16 %v2610
        %v2818 = vunpack.c.h.b16 %v2610
        %v2819 = vunpack.c.l.b16 %v2611
        %v2820 = vunpack.c.h.b16 %v2611
        %v2821 = vunpack.c.l.b16 %v2612
        %v2822 = vunpack.c.h.b16 %v2612
        %v2823 = vunpack.c.l.b16 %v2613
        %v2824 = vunpack.c.h.b16 %v2613
        %v2825 = vunpack.c.l.b16 %v2614
        %v2826 = vunpack.c.h.b16 %v2614
        %v2827 = vunpack.c.l.b16 %v2615
        %v2828 = vunpack.c.h.b16 %v2615
        %v2829 = vunpack.c.l.b16 %v2616
        %v2830 = vunpack.c.h.b16 %v2616
        %v2831 = vunpack.c.l.b16 %v2617
        %v2832 = vunpack.c.h.b16 %v2617
        %v2833 = vunpack.c.l.b16 %v2618
        %v2834 = vunpack.c.h.b16 %v2618
        %v2835 = vunpack.c.l.b16 %v2619
        %v2836 = vunpack.c.h.b16 %v2619
        %v2837 = vunpack.c.l.b16 %v2620
        %v2838 = vunpack.c.h.b16 %v2620
        %v2839 = vunpack.c.l.b16 %v2621
        %v2840 = vunpack.c.h.b16 %v2621
        %v2841 = vunpack.c.l.b16 %v2622
        %v2842 = vunpack.c.h.b16 %v2622
        %v2843 = vunpack.c.l.b16 %v2623
        %v2844 = vunpack.c.h.b16 %v2623
        %v2845 = vunpack.c.l.b16 %v2624
        %v2846 = vunpack.c.h.b16 %v2624
        %v2847 = vunpack.c.l.b16 %v2625
        %v2848 = vunpack.c.h.b16 %v2625
        %v2849 = vunpack.c.l.b16 %v2626
        %v2850 = vunpack.c.h.b16 %v2626
        %v2851 = vunpack.c.l.b16 %v2627
        %v2852 = vunpack.c.h.b16 %v2627
        %v2853 = vunpack.c.l.b16 %v2628
        %v2854 = vunpack.c.h.b16 %v2628
        %v2855 = vunpack.c.l.b16 %v2629
        %v2856 = vunpack.c.h.b16 %v2629
        %v2857 = vunpack.c.l.b16 %v2630
        %v2858 = vunpack.c.h.b16 %v2630
        %v2859 = vunpack.c.l.b16 %v2631
        %v2860 = vunpack.c.h.b16 %v2631
        %v2861 = vunpack.c.l.b16 %v2632
        %v2862 = vunpack.c.h.b16 %v2632
        %v2863 = vunpack.c.l.b16 %v2633
        %v2864 = vunpack.c.h.b16 %v2633
        %v2865 = vunpack.c.l.b16 %v2634
        %v2866 = vunpack.c.h.b16 %v2634
        %v2867 = vunpack.c.l.b16 %v2635
        %v2868 = vunpack.c.h.b16 %v2635
        %v2869 = vunpack.c.l.b16 %v2636
        %v2870 = vunpack.c.h.b16 %v2636
        %v2871 = vpack.c.b16 %v2751, %v2743
        %v2872 = vpack.c.b16 %v2752, %v2744
        %v2873 = vpack.c.b16 %v2753, %v2745
        %v2874 = vpack.c.b16 %v2754, %v2746
        %v2875 = vpack.c.b16 %v2755, %v2747
        %v2876 = vpack.c.b16 %v2756, %v2748
        %v2877 = vpack.c.b16 %v2757, %v2749
        %v2878 = vpack.c.b16 %v2758, %v2750
        %v2879 = vpack.c.b16 %v2767, %v2759
        %v2880 = vpack.c.b16 %v2768, %v2760
        %v2881 = vpack.c.b16 %v2769, %v2761
        %v2882 = vpack.c.b16 %v2770, %v2762
        %v2883 = vpack.c.b16 %v2771, %v2763
        %v2884 = vpack.c.b16 %v2772, %v2764
        %v2885 = vpack.c.b16 %v2773, %v2765
        %v2886 = vpack.c.b16 %v2774, %v2766
        %v2887 = vpack.c.b16 %v2783, %v2775
        %v2888 = vpack.c.b16 %v2784, %v2776
        %v2889 = vpack.c.b16 %v2785, %v2777
        %v2890 = vpack.c.b16 %v2786, %v2778
        %v2891 = vpack.c.b16 %v2787, %v2779
        %v2892 = vpack.c.b16 %v2788, %v2780
        %v2893 = vpack.c.b16 %v2789, %v2781
        %v2894 = vpack.c.b16 %v2790, %v2782
        %v2895 = vpack.c.b16 %v2799, %v2791
        %v2896 = vpack.c.b16 %v2800, %v2792
        %v2897 = vpack.c.b16 %v2801, %v2793
        %v2898 = vpack.c.b16 %v2802, %v2794
        %v2899 = vpack.c.b16 %v2803, %v2795
        %v2900 = vpack.c.b16 %v2804, %v2796
        %v2901 = vpack.c.b16 %v2805, %v2797
        %v2902 = vpack.c.b16 %v2806, %v2798
        %v2903 = vpack.c.b16 %v2815, %v2807
        %v2904 = vpack.c.b16 %v2816, %v2808
        %v2905 = vpack.c.b16 %v2817, %v2809
        %v2906 = vpack.c.b16 %v2818, %v2810
        %v2907 = vpack.c.b16 %v2819, %v2811
        %v2908 = vpack.c.b16 %v2820, %v2812
        %v2909 = vpack.c.b16 %v2821, %v2813
        %v2910 = vpack.c.b16 %v2822, %v2814
        %v2911 = vpack.c.b16 %v2831, %v2823
        %v2912 = vpack.c.b16 %v2832, %v2824
        %v2913 = vpack.c.b16 %v2833, %v2825
        %v2914 = vpack.c.b16 %v2834, %v2826
        %v2915 = vpack.c.b16 %v2835, %v2827
        %v2916 = vpack.c.b16 %v2836, %v2828
        %v2917 = vpack.c.b16 %v2837, %v2829
        %v2918 = vpack.c.b16 %v2838, %v2830
        %v2919 = vpack.c.b16 %v2847, %v2839
        %v2920 = vpack.c.b16 %v2848, %v2840
        %v2921 = vpack.c.b16 %v2849, %v2841
        %v2922 = vpack.c.b16 %v2850, %v2842
        %v2923 = vpack.c.b16 %v2851, %v2843
        %v2924 = vpack.c.b16 %v2852, %v2844
        %v2925 = vpack.c.b16 %v2853, %v2845
        %v2926 = vpack.c.b16 %v2854, %v2846
        %v2927 = vpack.c.b16 %v2863, %v2855
        %v2928 = vpack.c.b16 %v2864, %v2856
        %v2929 = vpack.c.b16 %v2865, %v2857
        %v2930 = vpack.c.b16 %v2866, %v2858
        %v2931 = vpack.c.b16 %v2867, %v2859
        %v2932 = vpack.c.b16 %v2868, %v2860
        %v2933 = vpack.c.b16 %v2869, %v2861
        %v2934 = vpack.c.b16 %v2870, %v2862
        %2999 = vmatprep.subr.bf16.mxu0 %v2872
        %3000 = vmatpush1.bf16.msra.mxu0 %v2871
        %3001 = vmatprep.subr.bf16.mxu0 %v2880
        %3002 = vmatpush1.bf16.msra.mxu0 %v2879
        %3003 = vmatprep.subr.bf16.mxu0 %v2888
        %3004 = vmatpush1.bf16.msra.mxu0 %v2887
        %3005 = vmatprep.subr.bf16.mxu0 %v2896
        %3006 = vmatpush1.bf16.msra.mxu0 %v2895
        %3007 = vmatprep.subr.bf16.mxu0 %v2904
        %3008 = vmatpush1.bf16.msra.mxu0 %v2903
        %3009 = vmatprep.subr.bf16.mxu0 %v2912
        %3010 = vmatpush1.bf16.msra.mxu0 %v2911
        %3011 = vmatprep.subr.bf16.mxu0 %v2920
        %3012 = vmatpush1.bf16.msra.mxu0 %v2919
        %3013 = vmatprep.subr.bf16.mxu0 %v2928
        %3014 = vmatpush1.bf16.msra.mxu0 %v2927
        %3015 = vmatprep.subr.bf16.mxu0 0
        %3016 = vmatpush1.bf16.msra.mxu0 0
        %3017 = vmatprep.subr.bf16.mxu0 0
        %3018 = vmatpush1.bf16.msra.mxu0 0
        %3019 = vmatprep.subr.bf16.mxu0 0
        %3020 = vmatpush1.bf16.msra.mxu0 0
        %3021 = vmatprep.subr.bf16.mxu0 0
        %3022 = vmatpush1.bf16.msra.mxu0 0
        %3023 = vmatprep.subr.bf16.mxu0 0
        %3024 = vmatpush1.bf16.msra.mxu0 0
        %3025 = vmatprep.subr.bf16.mxu0 0
        %3026 = vmatpush1.bf16.msra.mxu0 0
        %3027 = vmatprep.subr.bf16.mxu0 0
        %3028 = vmatpush1.bf16.msra.mxu0 0
        %3029 = vmatprep.subr.bf16.mxu0 0
        %3030 = vmatpush1.bf16.msra.mxu0 0
        %3031 = vmatprep.mubr.bf16.mxu0 0
        %3032 = vmatmul.mubr.bf16.gmra.mrb[0].mxu0 %v2509
        %v3033 = vpop.f32.mrb[0].mxu0
        %v3034 = vadd.f32 %v2642, %v3033
        %v3035 = vpop.f32.mrb[0].mxu0
        %v3036 = vadd.f32 %v2646, %v3035
        %v3037 = vpop.f32.mrb[0].mxu0
        %v3038 = vadd.f32 %v2642, %v3037
        %v3039 = vpop.f32.mrb[0].mxu0
        %v3040 = vadd.f32 %v2646, %v3039
        %3041 = vmatprep.mubr.bf16.mxu0 0
        %3042 = vmatmul.mubr.bf16.gmra.mrb[0].mxu0 %v2510
        %v3043 = vpop.f32.mrb[0].mxu0
        %v3044 = vadd.f32 %v2642, %v3043
        %v3045 = vpop.f32.mrb[0].mxu0
        %v3046 = vadd.f32 %v2646, %v3045
        %v3047 = vpop.f32.mrb[0].mxu0
        %v3048 = vadd.f32 %v2642, %v3047
        %v3049 = vpop.f32.mrb[0].mxu0
        %v3050 = vadd.f32 %v2646, %v3049
        %3051 = vmatprep.mubr.bf16.mxu0 0
        %3052 = vmatmul.mubr.bf16.gmra.mrb[0].mxu0 %v2511
        %v3053 = vpop.f32.mrb[0].mxu0
        %v3054 = vadd.f32 %v2642, %v3053
        %v3055 = vpop.f32.mrb[0].mxu0
        %v3056 = vadd.f32 %v2646, %v3055
        %v3057 = vpop.f32.mrb[0].mxu0
        %v3058 = vadd.f32 %v2642, %v3057
        %v3059 = vpop.f32.mrb[0].mxu0
        %v3060 = vadd.f32 %v2646, %v3059
        %3061 = vmatprep.mubr.bf16.mxu0 0
        %3062 = vmatmul.mubr.bf16.gmra.mrb[0].mxu0 %v2512
        %v3063 = vpop.f32.mrb[0].mxu0
        %v3064 = vadd.f32 %v2642, %v3063
        %v3065 = vpop.f32.mrb[0].mxu0
        %v3066 = vadd.f32 %v2646, %v3065
        %v3067 = vpop.f32.mrb[0].mxu0
        %v3068 = vadd.f32 %v2642, %v3067
        %v3069 = vpop.f32.mrb[0].mxu0
        %v3070 = vadd.f32 %v2646, %v3069
        %3071 = vmatprep.mubr.bf16.mxu0 0
        %3072 = vmatmul.mubr.bf16.gmra.mrb[0].mxu0 %v2513
        %v3073 = vpop.f32.mrb[0].mxu0
        %v3074 = vadd.f32 %v2642, %v3073
        %v3075 = vpop.f32.mrb[0].mxu0
        %v3076 = vadd.f32 %v2646, %v3075
        %v3077 = vpop.f32.mrb[0].mxu0
        %v3078 = vadd.f32 %v2642, %v3077
        %v3079 = vpop.f32.mrb[0].mxu0
        %v3080 = vadd.f32 %v2646, %v3079
        %3081 = vmatprep.mubr.bf16.mxu0 0
        %3082 = vmatmul.mubr.bf16.gmra.mrb[0].mxu0 %v2514
        %v3083 = vpop.f32.mrb[0].mxu0
        %v3084 = vadd.f32 %v2642, %v3083
        %v3085 = vpop.f32.mrb[0].mxu0
        %v3086 = vadd.f32 %v2646, %v3085
        %v3087 = vpop.f32.mrb[0].mxu0
        %v3088 = vadd.f32 %v2642, %v3087
        %v3089 = vpop.f32.mrb[0].mxu0
        %v3090 = vadd.f32 %v2646, %v3089
        %3091 = vmatprep.mubr.bf16.mxu0 0
        %3092 = vmatmul.mubr.bf16.gmra.mrb[0].mxu0 %v2515
        %v3093 = vpop.f32.mrb[0].mxu0
        %v3094 = vadd.f32 %v2642, %v3093
        %v3095 = vpop.f32.mrb[0].mxu0
        %v3096 = vadd.f32 %v2646, %v3095
        %v3097 = vpop.f32.mrb[0].mxu0
        %v3098 = vadd.f32 %v2642, %v3097
        %v3099 = vpop.f32.mrb[0].mxu0
        %v3100 = vadd.f32 %v2646, %v3099
        %3101 = vmatprep.mubr.bf16.mxu0 0
        %3102 = vmatmul.mubr.bf16.gmra.mrb[0].mxu0 %v2516
        %v3103 = vpop.f32.mrb[0].mxu0
        %v3104 = vadd.f32 %v2642, %v3103
        %v3105 = vpop.f32.mrb[0].mxu0
        %v3106 = vadd.f32 %v2646, %v3105
        %v3107 = vpop.f32.mrb[0].mxu0
        %v3108 = vadd.f32 %v2642, %v3107
        %v3109 = vpop.f32.mrb[0].mxu0
        %v3110 = vadd.f32 %v2646, %v3109
        %3111 = vmatprep.mubr.bf16.mxu0 0
        %3112 = vmatmul.mubr.bf16.gmra.mrb[0].mxu0 %v2517
        %v3113 = vpop.f32.mrb[0].mxu0
        %v3114 = vadd.f32 %v2642, %v3113
        %v3115 = vpop.f32.mrb[0].mxu0
        %v3116 = vadd.f32 %v2646, %v3115
        %v3117 = vpop.f32.mrb[0].mxu0
        %v3118 = vadd.f32 %v2642, %v3117
        %v3119 = vpop.f32.mrb[0].mxu0
        %v3120 = vadd.f32 %v2646, %v3119
        %3121 = vmatprep.mubr.bf16.mxu0 0
        %3122 = vmatmul.mubr.bf16.gmra.mrb[0].mxu0 %v2518
        %v3123 = vpop.f32.mrb[0].mxu0
        %v3124 = vadd.f32 %v2642, %v3123
        %v3125 = vpop.f32.mrb[0].mxu0
        %v3126 = vadd.f32 %v2646, %v3125
        %v3127 = vpop.f32.mrb[0].mxu0
        %v3128 = vadd.f32 %v2642, %v3127
        %v3129 = vpop.f32.mrb[0].mxu0
        %v3130 = vadd.f32 %v2646, %v3129
        %3131 = vmatprep.mubr.bf16.mxu0 0
        %3132 = vmatmul.mubr.bf16.gmra.mrb[0].mxu0 %v2519
        %v3133 = vpop.f32.mrb[0].mxu0
        %v3134 = vadd.f32 %v2642, %v3133
        %v3135 = vpop.f32.mrb[0].mxu0
        %v3136 = vadd.f32 %v2646, %v3135
        %v3137 = vpop.f32.mrb[0].mxu0
        %v3138 = vadd.f32 %v2642, %v3137
        %v3139 = vpop.f32.mrb[0].mxu0
        %v3140 = vadd.f32 %v2646, %v3139
        %3141 = vmatprep.mubr.bf16.mxu0 0
        %3142 = vmatmul.mubr.bf16.gmra.mrb[0].mxu0 %v2520
        %v3143 = vpop.f32.mrb[0].mxu0
        %v3144 = vadd.f32 %v2642, %v3143
        %v3145 = vpop.f32.mrb[0].mxu0
        %v3146 = vadd.f32 %v2646, %v3145
        %v3147 = vpop.f32.mrb[0].mxu0
        %v3148 = vadd.f32 %v2642, %v3147
        %v3149 = vpop.f32.mrb[0].mxu0
        %v3150 = vadd.f32 %v2646, %v3149
        %3151 = vmatprep.mubr.bf16.mxu0 0
        %3152 = vmatmul.mubr.bf16.gmra.mrb[0].mxu0 %v2521
        %v3153 = vpop.f32.mrb[0].mxu0
        %v3154 = vadd.f32 %v2642, %v3153
        %v3155 = vpop.f32.mrb[0].mxu0
        %v3156 = vadd.f32 %v2646, %v3155
        %v3157 = vpop.f32.mrb[0].mxu0
        %v3158 = vadd.f32 %v2642, %v3157
        %v3159 = vpop.f32.mrb[0].mxu0
        %v3160 = vadd.f32 %v2646, %v3159
        %3161 = vmatprep.mubr.bf16.mxu0 0
        %3162 = vmatmul.mubr.bf16.gmra.mrb[0].mxu0 %v2522
        %v3163 = vpop.f32.mrb[0].mxu0
        %v3164 = vadd.f32 %v2642, %v3163
        %v3165 = vpop.f32.mrb[0].mxu0
        %v3166 = vadd.f32 %v2646, %v3165
        %v3167 = vpop.f32.mrb[0].mxu0
        %v3168 = vadd.f32 %v2642, %v3167
        %v3169 = vpop.f32.mrb[0].mxu0
        %v3170 = vadd.f32 %v2646, %v3169
        %3171 = vmatprep.mubr.bf16.mxu0 0
        %3172 = vmatmul.mubr.bf16.gmra.mrb[0].mxu0 %v2523
        %v3173 = vpop.f32.mrb[0].mxu0
        %v3174 = vadd.f32 %v2642, %v3173
        %v3175 = vpop.f32.mrb[0].mxu0
        %v3176 = vadd.f32 %v2646, %v3175
        %v3177 = vpop.f32.mrb[0].mxu0
        %v3178 = vadd.f32 %v2642, %v3177
        %v3179 = vpop.f32.mrb[0].mxu0
        %v3180 = vadd.f32 %v2646, %v3179
        %3181 = vmatprep.mubr.bf16.mxu0 0
        %3182 = vmatmul.mubr.bf16.gmra.mrb[0].mxu0 %v2524
        %v3183 = vpop.f32.mrb[0].mxu0
        %v3184 = vadd.f32 %v2642, %v3183
        %v3185 = vpop.f32.mrb[0].mxu0
        %v3186 = vadd.f32 %v2646, %v3185
        %v3187 = vpop.f32.mrb[0].mxu0
        %v3188 = vadd.f32 %v2642, %v3187
        %v3189 = vpop.f32.mrb[0].mxu0
        %v3190 = vadd.f32 %v2646, %v3189
        %3191 = vmatprep.mubr.bf16.mxu0 0
        %3192 = vmatmul.mubr.bf16.gmra.mrb[0].mxu0 %v2525
        %v3193 = vpop.f32.mrb[0].mxu0
        %v3194 = vadd.f32 %v2642, %v3193
        %v3195 = vpop.f32.mrb[0].mxu0
        %v3196 = vadd.f32 %v2646, %v3195
        %v3197 = vpop.f32.mrb[0].mxu0
        %v3198 = vadd.f32 %v2642, %v3197
        %v3199 = vpop.f32.mrb[0].mxu0
        %v3200 = vadd.f32 %v2646, %v3199
        %3201 = vmatprep.mubr.bf16.mxu0 0
        %3202 = vmatmul.mubr.bf16.gmra.mrb[0].mxu0 %v2526
        %v3203 = vpop.f32.mrb[0].mxu0
        %v3204 = vadd.f32 %v2642, %v3203
        %v3205 = vpop.f32.mrb[0].mxu0
        %v3206 = vadd.f32 %v2646, %v3205
        %v3207 = vpop.f32.mrb[0].mxu0
        %v3208 = vadd.f32 %v2642, %v3207
        %v3209 = vpop.f32.mrb[0].mxu0
        %v3210 = vadd.f32 %v2646, %v3209
        %3211 = vmatprep.mubr.bf16.mxu0 0
        %3212 = vmatmul.mubr.bf16.gmra.mrb[0].mxu0 %v2527
        %v3213 = vpop.f32.mrb[0].mxu0
        %v3214 = vadd.f32 %v2642, %v3213
        %v3215 = vpop.f32.mrb[0].mxu0
        %v3216 = vadd.f32 %v2646, %v3215
        %v3217 = vpop.f32.mrb[0].mxu0
        %v3218 = vadd.f32 %v2642, %v3217
        %v3219 = vpop.f32.mrb[0].mxu0
        %v3220 = vadd.f32 %v2646, %v3219
        %3221 = vmatprep.mubr.bf16.mxu0 0
        %3222 = vmatmul.mubr.bf16.gmra.mrb[0].mxu0 %v2528
        %v3223 = vpop.f32.mrb[0].mxu0
        %v3224 = vadd.f32 %v2642, %v3223
        %v3225 = vpop.f32.mrb[0].mxu0
        %v3226 = vadd.f32 %v2646, %v3225
        %v3227 = vpop.f32.mrb[0].mxu0
        %v3228 = vadd.f32 %v2642, %v3227
        %v3229 = vpop.f32.mrb[0].mxu0
        %v3230 = vadd.f32 %v2646, %v3229
        %3231 = vmatprep.mubr.bf16.mxu0 0
        %3232 = vmatmul.mubr.bf16.gmra.mrb[0].mxu0 %v2529
        %v3233 = vpop.f32.mrb[0].mxu0
        %v3234 = vadd.f32 %v2642, %v3233
        %v3235 = vpop.f32.mrb[0].mxu0
        %v3236 = vadd.f32 %v2646, %v3235
        %v3237 = vpop.f32.mrb[0].mxu0
        %v3238 = vadd.f32 %v2642, %v3237
        %v3239 = vpop.f32.mrb[0].mxu0
        %v3240 = vadd.f32 %v2646, %v3239
        %3241 = vmatprep.mubr.bf16.mxu0 0
        %3242 = vmatmul.mubr.bf16.gmra.mrb[0].mxu0 %v2530
        %v3243 = vpop.f32.mrb[0].mxu0
        %v3244 = vadd.f32 %v2642, %v3243
        %v3245 = vpop.f32.mrb[0].mxu0
        %v3246 = vadd.f32 %v2646, %v3245
        %v3247 = vpop.f32.mrb[0].mxu0
        %v3248 = vadd.f32 %v2642, %v3247
        %v3249 = vpop.f32.mrb[0].mxu0
        %v3250 = vadd.f32 %v2646, %v3249
        %3251 = vmatprep.mubr.bf16.mxu0 0
        %3252 = vmatmul.mubr.bf16.gmra.mrb[0].mxu0 %v2531
        %v3253 = vpop.f32.mrb[0].mxu0
        %v3254 = vadd.f32 %v2642, %v3253
        %v3255 = vpop.f32.mrb[0].mxu0
        %v3256 = vadd.f32 %v2646, %v3255
        %v3257 = vpop.f32.mrb[0].mxu0
        %v3258 = vadd.f32 %v2642, %v3257
        %v3259 = vpop.f32.mrb[0].mxu0
        %v3260 = vadd.f32 %v2646, %v3259
        %3261 = vmatprep.mubr.bf16.mxu0 0
        %3262 = vmatmul.mubr.bf16.gmra.mrb[0].mxu0 %v2532
        %v3263 = vpop.f32.mrb[0].mxu0
        %v3264 = vadd.f32 %v2642, %v3263
        %v3265 = vpop.f32.mrb[0].mxu0
        %v3266 = vadd.f32 %v2646, %v3265
        %v3267 = vpop.f32.mrb[0].mxu0
        %v3268 = vadd.f32 %v2642, %v3267
        %v3269 = vpop.f32.mrb[0].mxu0
        %v3270 = vadd.f32 %v2646, %v3269
        %3271 = vmatprep.mubr.bf16.mxu0 0
        %3272 = vmatmul.mubr.bf16.gmra.mrb[0].mxu0 %v2533
        %v3273 = vpop.f32.mrb[0].mxu0
        %v3274 = vadd.f32 %v2642, %v3273
        %v3275 = vpop.f32.mrb[0].mxu0
        %v3276 = vadd.f32 %v2646, %v3275
        %v3277 = vpop.f32.mrb[0].mxu0
        %v3278 = vadd.f32 %v2642, %v3277
        %v3279 = vpop.f32.mrb[0].mxu0
        %v3280 = vadd.f32 %v2646, %v3279
        %3281 = vmatprep.mubr.bf16.mxu0 0
        %3282 = vmatmul.mubr.bf16.gmra.mrb[0].mxu0 %v2534
        %v3283 = vpop.f32.mrb[0].mxu0
        %v3284 = vadd.f32 %v2642, %v3283
        %v3285 = vpop.f32.mrb[0].mxu0
        %v3286 = vadd.f32 %v2646, %v3285
        %v3287 = vpop.f32.mrb[0].mxu0
        %v3288 = vadd.f32 %v2642, %v3287
        %v3289 = vpop.f32.mrb[0].mxu0
        %v3290 = vadd.f32 %v2646, %v3289
        %3291 = vmatprep.mubr.bf16.mxu0 0
        %3292 = vmatmul.mubr.bf16.gmra.mrb[0].mxu0 %v2535
        %v3293 = vpop.f32.mrb[0].mxu0
        %v3294 = vadd.f32 %v2642, %v3293
        %v3295 = vpop.f32.mrb[0].mxu0
        %v3296 = vadd.f32 %v2646, %v3295
        %v3297 = vpop.f32.mrb[0].mxu0
        %v3298 = vadd.f32 %v2642, %v3297
        %v3299 = vpop.f32.mrb[0].mxu0
        %v3300 = vadd.f32 %v2646, %v3299
        %3301 = vmatprep.mubr.bf16.mxu0 0
        %3302 = vmatmul.mubr.bf16.gmra.mrb[0].mxu0 %v2536
        %v3303 = vpop.f32.mrb[0].mxu0
        %v3304 = vadd.f32 %v2642, %v3303
        %v3305 = vpop.f32.mrb[0].mxu0
        %v3306 = vadd.f32 %v2646, %v3305
        %v3307 = vpop.f32.mrb[0].mxu0
        %v3308 = vadd.f32 %v2642, %v3307
        %v3309 = vpop.f32.mrb[0].mxu0
        %v3310 = vadd.f32 %v2646, %v3309
        %3311 = vmatprep.mubr.bf16.mxu0 0
        %3312 = vmatmul.mubr.bf16.gmra.mrb[0].mxu0 %v2537
        %v3313 = vpop.f32.mrb[0].mxu0
        %v3314 = vadd.f32 %v2642, %v3313
        %v3315 = vpop.f32.mrb[0].mxu0
        %v3316 = vadd.f32 %v2646, %v3315
        %v3317 = vpop.f32.mrb[0].mxu0
        %v3318 = vadd.f32 %v2642, %v3317
        %v3319 = vpop.f32.mrb[0].mxu0
        %v3320 = vadd.f32 %v2646, %v3319
        %3321 = vmatprep.mubr.bf16.mxu0 0
        %3322 = vmatmul.mubr.bf16.gmra.mrb[0].mxu0 %v2538
        %v3323 = vpop.f32.mrb[0].mxu0
        %v3324 = vadd.f32 %v2642, %v3323
        %v3325 = vpop.f32.mrb[0].mxu0
        %v3326 = vadd.f32 %v2646, %v3325
        %v3327 = vpop.f32.mrb[0].mxu0
        %v3328 = vadd.f32 %v2642, %v3327
        %v3329 = vpop.f32.mrb[0].mxu0
        %v3330 = vadd.f32 %v2646, %v3329
        %3331 = vmatprep.mubr.bf16.mxu0 0
        %3332 = vmatmul.mubr.bf16.gmra.mrb[0].mxu0 %v2539
        %v3333 = vpop.f32.mrb[0].mxu0
        %v3334 = vadd.f32 %v2642, %v3333
        %v3335 = vpop.f32.mrb[0].mxu0
        %v3336 = vadd.f32 %v2646, %v3335
        %v3337 = vpop.f32.mrb[0].mxu0
        %v3338 = vadd.f32 %v2642, %v3337
        %v3339 = vpop.f32.mrb[0].mxu0
        %v3340 = vadd.f32 %v2646, %v3339
        %3341 = vmatprep.mubr.bf16.mxu0 0
        %3342 = vmatmul.mubr.bf16.gmra.mrb[0].mxu0 %v2540
        %v3343 = vpop.f32.mrb[0].mxu0
        %v3344 = vadd.f32 %v2642, %v3343
        %v3345 = vpop.f32.mrb[0].mxu0
        %v3346 = vadd.f32 %v2646, %v3345
        %v3347 = vpop.f32.mrb[0].mxu0
        %v3348 = vadd.f32 %v2642, %v3347
        %v3349 = vpop.f32.mrb[0].mxu0
        %v3350 = vadd.f32 %v2646, %v3349
        %3351 = vmatprep.mubr.bf16.mxu0 0
        %3352 = vmatmul.mubr.bf16.gmra.mrb[0].mxu0 %v2541
        %v3353 = vpop.f32.mrb[0].mxu0
        %v3354 = vadd.f32 %v2642, %v3353
        %v3355 = vpop.f32.mrb[0].mxu0
        %v3356 = vadd.f32 %v2646, %v3355
        %v3357 = vpop.f32.mrb[0].mxu0
        %v3358 = vadd.f32 %v2642, %v3357
        %v3359 = vpop.f32.mrb[0].mxu0
        %v3360 = vadd.f32 %v2646, %v3359
        %3361 = vmatprep.mubr.bf16.mxu0 0
        %3362 = vmatmul.mubr.bf16.gmra.mrb[0].mxu0 %v2542
        %v3363 = vpop.f32.mrb[0].mxu0
        %v3364 = vadd.f32 %v2642, %v3363
        %v3365 = vpop.f32.mrb[0].mxu0
        %v3366 = vadd.f32 %v2646, %v3365
        %v3367 = vpop.f32.mrb[0].mxu0
        %v3368 = vadd.f32 %v2642, %v3367
        %v3369 = vpop.f32.mrb[0].mxu0
        %v3370 = vadd.f32 %v2646, %v3369
        %3371 = vmatprep.mubr.bf16.mxu0 0
        %3372 = vmatmul.mubr.bf16.gmra.mrb[0].mxu0 %v2543
        %v3373 = vpop.f32.mrb[0].mxu0
        %v3374 = vadd.f32 %v2642, %v3373
        %v3375 = vpop.f32.mrb[0].mxu0
        %v3376 = vadd.f32 %v2646, %v3375
        %v3377 = vpop.f32.mrb[0].mxu0
        %v3378 = vadd.f32 %v2642, %v3377
        %v3379 = vpop.f32.mrb[0].mxu0
        %v3380 = vadd.f32 %v2646, %v3379
        %3381 = vmatprep.mubr.bf16.mxu0 0
        %3382 = vmatmul.mubr.bf16.gmra.mrb[0].mxu0 %v2544
        %v3383 = vpop.f32.mrb[0].mxu0
        %v3384 = vadd.f32 %v2642, %v3383
        %v3385 = vpop.f32.mrb[0].mxu0
        %v3386 = vadd.f32 %v2646, %v3385
        %v3387 = vpop.f32.mrb[0].mxu0
        %v3388 = vadd.f32 %v2642, %v3387
        %v3389 = vpop.f32.mrb[0].mxu0
        %v3390 = vadd.f32 %v2646, %v3389
        %3391 = vmatprep.mubr.bf16.mxu0 0
        %3392 = vmatmul.mubr.bf16.gmra.mrb[0].mxu0 %v2545
        %v3393 = vpop.f32.mrb[0].mxu0
        %v3394 = vadd.f32 %v2642, %v3393
        %v3395 = vpop.f32.mrb[0].mxu0
        %v3396 = vadd.f32 %v2646, %v3395
        %v3397 = vpop.f32.mrb[0].mxu0
        %v3398 = vadd.f32 %v2642, %v3397
        %v3399 = vpop.f32.mrb[0].mxu0
        %v3400 = vadd.f32 %v2646, %v3399
        %3401 = vmatprep.mubr.bf16.mxu0 0
        %3402 = vmatmul.mubr.bf16.gmra.mrb[0].mxu0 %v2546
        %v3403 = vpop.f32.mrb[0].mxu0
        %v3404 = vadd.f32 %v2642, %v3403
        %v3405 = vpop.f32.mrb[0].mxu0
        %v3406 = vadd.f32 %v2646, %v3405
        %v3407 = vpop.f32.mrb[0].mxu0
        %v3408 = vadd.f32 %v2642, %v3407
        %v3409 = vpop.f32.mrb[0].mxu0
        %v3410 = vadd.f32 %v2646, %v3409
        %3411 = vmatprep.mubr.bf16.mxu0 0
        %3412 = vmatmul.mubr.bf16.gmra.mrb[0].mxu0 %v2547
        %v3413 = vpop.f32.mrb[0].mxu0
        %v3414 = vadd.f32 %v2642, %v3413
        %v3415 = vpop.f32.mrb[0].mxu0
        %v3416 = vadd.f32 %v2646, %v3415
        %v3417 = vpop.f32.mrb[0].mxu0
        %v3418 = vadd.f32 %v2642, %v3417
        %v3419 = vpop.f32.mrb[0].mxu0
        %v3420 = vadd.f32 %v2646, %v3419
        %3421 = vmatprep.mubr.bf16.mxu0 0
        %3422 = vmatmul.mubr.bf16.gmra.mrb[0].mxu0 %v2548
        %v3423 = vpop.f32.mrb[0].mxu0
        %v3424 = vadd.f32 %v2642, %v3423
        %v3425 = vpop.f32.mrb[0].mxu0
        %v3426 = vadd.f32 %v2646, %v3425
        %v3427 = vpop.f32.mrb[0].mxu0
        %v3428 = vadd.f32 %v2642, %v3427
        %v3429 = vpop.f32.mrb[0].mxu0
        %v3430 = vadd.f32 %v2646, %v3429
        %3431 = vmatprep.mubr.bf16.mxu0 0
        %3432 = vmatmul.mubr.bf16.gmra.mrb[0].mxu0 %v2549
        %v3433 = vpop.f32.mrb[0].mxu0
        %v3434 = vadd.f32 %v2642, %v3433
        %v3435 = vpop.f32.mrb[0].mxu0
        %v3436 = vadd.f32 %v2646, %v3435
        %v3437 = vpop.f32.mrb[0].mxu0
        %v3438 = vadd.f32 %v2642, %v3437
        %v3439 = vpop.f32.mrb[0].mxu0
        %v3440 = vadd.f32 %v2646, %v3439
        %3441 = vmatprep.mubr.bf16.mxu0 0
        %3442 = vmatmul.mubr.bf16.gmra.mrb[0].mxu0 %v2550
        %v3443 = vpop.f32.mrb[0].mxu0
        %v3444 = vadd.f32 %v2642, %v3443
        %v3445 = vpop.f32.mrb[0].mxu0
        %v3446 = vadd.f32 %v2646, %v3445
        %v3447 = vpop.f32.mrb[0].mxu0
        %v3448 = vadd.f32 %v2642, %v3447
        %v3449 = vpop.f32.mrb[0].mxu0
        %v3450 = vadd.f32 %v2646, %v3449
        %3451 = vmatprep.mubr.bf16.mxu0 0
        %3452 = vmatmul.mubr.bf16.gmra.mrb[0].mxu0 %v2551
        %v3453 = vpop.f32.mrb[0].mxu0
        %v3454 = vadd.f32 %v2642, %v3453
        %v3455 = vpop.f32.mrb[0].mxu0
        %v3456 = vadd.f32 %v2646, %v3455
        %v3457 = vpop.f32.mrb[0].mxu0
        %v3458 = vadd.f32 %v2642, %v3457
        %v3459 = vpop.f32.mrb[0].mxu0
        %v3460 = vadd.f32 %v2646, %v3459
        %3461 = vmatprep.mubr.bf16.mxu0 0
        %3462 = vmatmul.mubr.bf16.gmra.mrb[0].mxu0 %v2552
        %v3463 = vpop.f32.mrb[0].mxu0
        %v3464 = vadd.f32 %v2642, %v3463
        %v3465 = vpop.f32.mrb[0].mxu0
        %v3466 = vadd.f32 %v2646, %v3465
        %v3467 = vpop.f32.mrb[0].mxu0
        %v3468 = vadd.f32 %v2642, %v3467
        %v3469 = vpop.f32.mrb[0].mxu0
        %v3470 = vadd.f32 %v2646, %v3469
        %3471 = vmatprep.mubr.bf16.mxu0 0
        %3472 = vmatmul.mubr.bf16.gmra.mrb[0].mxu0 %v2553
        %v3473 = vpop.f32.mrb[0].mxu0
        %v3474 = vadd.f32 %v2642, %v3473
        %v3475 = vpop.f32.mrb[0].mxu0
        %v3476 = vadd.f32 %v2646, %v3475
        %v3477 = vpop.f32.mrb[0].mxu0
        %v3478 = vadd.f32 %v2642, %v3477
        %v3479 = vpop.f32.mrb[0].mxu0
        %v3480 = vadd.f32 %v2646, %v3479
        %3481 = vmatprep.mubr.bf16.mxu0 0
        %3482 = vmatmul.mubr.bf16.gmra.mrb[0].mxu0 %v2554
        %v3483 = vpop.f32.mrb[0].mxu0
        %v3484 = vadd.f32 %v2642, %v3483
        %v3485 = vpop.f32.mrb[0].mxu0
        %v3486 = vadd.f32 %v2646, %v3485
        %v3487 = vpop.f32.mrb[0].mxu0
        %v3488 = vadd.f32 %v2642, %v3487
        %v3489 = vpop.f32.mrb[0].mxu0
        %v3490 = vadd.f32 %v2646, %v3489
        %3491 = vmatprep.mubr.bf16.mxu0 0
        %3492 = vmatmul.mubr.bf16.gmra.mrb[0].mxu0 %v2555
        %v3493 = vpop.f32.mrb[0].mxu0
        %v3494 = vadd.f32 %v2642, %v3493
        %v3495 = vpop.f32.mrb[0].mxu0
        %v3496 = vadd.f32 %v2646, %v3495
        %v3497 = vpop.f32.mrb[0].mxu0
        %v3498 = vadd.f32 %v2642, %v3497
        %v3499 = vpop.f32.mrb[0].mxu0
        %v3500 = vadd.f32 %v2646, %v3499
        %3501 = vmatprep.mubr.bf16.mxu0 0
        %3502 = vmatmul.mubr.bf16.gmra.mrb[0].mxu0 %v2556
        %v3503 = vpop.f32.mrb[0].mxu0
        %v3504 = vadd.f32 %v2642, %v3503
        %v3505 = vpop.f32.mrb[0].mxu0
        %v3506 = vadd.f32 %v2646, %v3505
        %v3507 = vpop.f32.mrb[0].mxu0
        %v3508 = vadd.f32 %v2642, %v3507
        %v3509 = vpop.f32.mrb[0].mxu0
        %v3510 = vadd.f32 %v2646, %v3509
        %3511 = vmatprep.mubr.bf16.mxu0 0
        %3512 = vmatmul.mubr.bf16.gmra.mrb[0].mxu0 %v2557
        %v3513 = vpop.f32.mrb[0].mxu0
        %v3514 = vadd.f32 %v2642, %v3513
        %v3515 = vpop.f32.mrb[0].mxu0
        %v3516 = vadd.f32 %v2646, %v3515
        %v3517 = vpop.f32.mrb[0].mxu0
        %v3518 = vadd.f32 %v2642, %v3517
        %v3519 = vpop.f32.mrb[0].mxu0
        %v3520 = vadd.f32 %v2646, %v3519
        %3521 = vmatprep.mubr.bf16.mxu0 0
        %3522 = vmatmul.mubr.bf16.gmra.mrb[0].mxu0 %v2558
        %v3523 = vpop.f32.mrb[0].mxu0
        %v3524 = vadd.f32 %v2642, %v3523
        %v3525 = vpop.f32.mrb[0].mxu0
        %v3526 = vadd.f32 %v2646, %v3525
        %v3527 = vpop.f32.mrb[0].mxu0
        %v3528 = vadd.f32 %v2642, %v3527
        %v3529 = vpop.f32.mrb[0].mxu0
        %v3530 = vadd.f32 %v2646, %v3529
        %3531 = vmatprep.mubr.bf16.mxu0 0
        %3532 = vmatmul.mubr.bf16.gmra.mrb[0].mxu0 %v2559
        %v3533 = vpop.f32.mrb[0].mxu0
        %v3534 = vadd.f32 %v2642, %v3533
        %v3535 = vpop.f32.mrb[0].mxu0
        %v3536 = vadd.f32 %v2646, %v3535
        %v3537 = vpop.f32.mrb[0].mxu0
        %v3538 = vadd.f32 %v2642, %v3537
        %v3539 = vpop.f32.mrb[0].mxu0
        %v3540 = vadd.f32 %v2646, %v3539
        %3541 = vmatprep.mubr.bf16.mxu0 0
        %3542 = vmatmul.mubr.bf16.gmra.mrb[0].mxu0 %v2560
        %v3543 = vpop.f32.mrb[0].mxu0
        %v3544 = vadd.f32 %v2642, %v3543
        %v3545 = vpop.f32.mrb[0].mxu0
        %v3546 = vadd.f32 %v2646, %v3545
        %v3547 = vpop.f32.mrb[0].mxu0
        %v3548 = vadd.f32 %v2642, %v3547
        %v3549 = vpop.f32.mrb[0].mxu0
        %v3550 = vadd.f32 %v2646, %v3549
        %3551 = vmatprep.mubr.bf16.mxu0 0
        %3552 = vmatmul.mubr.bf16.gmra.mrb[0].mxu0 %v2561
        %v3553 = vpop.f32.mrb[0].mxu0
        %v3554 = vadd.f32 %v2642, %v3553
        %v3555 = vpop.f32.mrb[0].mxu0
        %v3556 = vadd.f32 %v2646, %v3555
        %v3557 = vpop.f32.mrb[0].mxu0
        %v3558 = vadd.f32 %v2642, %v3557
        %v3559 = vpop.f32.mrb[0].mxu0
        %v3560 = vadd.f32 %v2646, %v3559
        %3561 = vmatprep.mubr.bf16.mxu0 0
        %3562 = vmatmul.mubr.bf16.gmra.mrb[0].mxu0 %v2562
        %v3563 = vpop.f32.mrb[0].mxu0
        %v3564 = vadd.f32 %v2642, %v3563
        %v3565 = vpop.f32.mrb[0].mxu0
        %v3566 = vadd.f32 %v2646, %v3565
        %v3567 = vpop.f32.mrb[0].mxu0
        %v3568 = vadd.f32 %v2642, %v3567
        %v3569 = vpop.f32.mrb[0].mxu0
        %v3570 = vadd.f32 %v2646, %v3569
        %3571 = vmatprep.mubr.bf16.mxu0 0
        %3572 = vmatmul.mubr.bf16.gmra.mrb[0].mxu0 %v2563
        %v3573 = vpop.f32.mrb[0].mxu0
        %v3574 = vadd.f32 %v2642, %v3573
        %v3575 = vpop.f32.mrb[0].mxu0
        %v3576 = vadd.f32 %v2646, %v3575
        %v3577 = vpop.f32.mrb[0].mxu0
        %v3578 = vadd.f32 %v2642, %v3577
        %v3579 = vpop.f32.mrb[0].mxu0
        %v3580 = vadd.f32 %v2646, %v3579
        %3581 = vmatprep.mubr.bf16.mxu0 0
        %3582 = vmatmul.mubr.bf16.gmra.mrb[0].mxu0 %v2564
        %v3583 = vpop.f32.mrb[0].mxu0
        %v3584 = vadd.f32 %v2642, %v3583
        %v3585 = vpop.f32.mrb[0].mxu0
        %v3586 = vadd.f32 %v2646, %v3585
        %v3587 = vpop.f32.mrb[0].mxu0
        %v3588 = vadd.f32 %v2642, %v3587
        %v3589 = vpop.f32.mrb[0].mxu0
        %v3590 = vadd.f32 %v2646, %v3589
        %3591 = vmatprep.mubr.bf16.mxu0 0
        %3592 = vmatmul.mubr.bf16.gmra.mrb[0].mxu0 %v2565
        %v3593 = vpop.f32.mrb[0].mxu0
        %v3594 = vadd.f32 %v2642, %v3593
        %v3595 = vpop.f32.mrb[0].mxu0
        %v3596 = vadd.f32 %v2646, %v3595
        %v3597 = vpop.f32.mrb[0].mxu0
        %v3598 = vadd.f32 %v2642, %v3597
        %v3599 = vpop.f32.mrb[0].mxu0
        %v3600 = vadd.f32 %v2646, %v3599
        %3601 = vmatprep.mubr.bf16.mxu0 0
        %3602 = vmatmul.mubr.bf16.gmra.mrb[0].mxu0 %v2566
        %v3603 = vpop.f32.mrb[0].mxu0
        %v3604 = vadd.f32 %v2642, %v3603
        %v3605 = vpop.f32.mrb[0].mxu0
        %v3606 = vadd.f32 %v2646, %v3605
        %v3607 = vpop.f32.mrb[0].mxu0
        %v3608 = vadd.f32 %v2642, %v3607
        %v3609 = vpop.f32.mrb[0].mxu0
        %v3610 = vadd.f32 %v2646, %v3609
        %3611 = vmatprep.mubr.bf16.mxu0 0
        %3612 = vmatmul.mubr.bf16.gmra.mrb[0].mxu0 %v2567
        %v3613 = vpop.f32.mrb[0].mxu0
        %v3614 = vadd.f32 %v2642, %v3613
        %v3615 = vpop.f32.mrb[0].mxu0
        %v3616 = vadd.f32 %v2646, %v3615
        %v3617 = vpop.f32.mrb[0].mxu0
        %v3618 = vadd.f32 %v2642, %v3617
        %v3619 = vpop.f32.mrb[0].mxu0
        %v3620 = vadd.f32 %v2646, %v3619
        %3621 = vmatprep.mubr.bf16.mxu0 0
        %3622 = vmatmul.mubr.bf16.gmra.mrb[0].mxu0 %v2568
        %v3623 = vpop.f32.mrb[0].mxu0
        %v3624 = vadd.f32 %v2642, %v3623
        %v3625 = vpop.f32.mrb[0].mxu0
        %v3626 = vadd.f32 %v2646, %v3625
        %v3627 = vpop.f32.mrb[0].mxu0
        %v3628 = vadd.f32 %v2642, %v3627
        %v3629 = vpop.f32.mrb[0].mxu0
        %v3630 = vadd.f32 %v2646, %v3629
        %3631 = vmatprep.mubr.bf16.mxu0 0
        %3632 = vmatmul.mubr.bf16.gmra.mrb[0].mxu0 %v2569
        %v3633 = vpop.f32.mrb[0].mxu0
        %v3634 = vadd.f32 %v2642, %v3633
        %v3635 = vpop.f32.mrb[0].mxu0
        %v3636 = vadd.f32 %v2646, %v3635
        %v3637 = vpop.f32.mrb[0].mxu0
        %v3638 = vadd.f32 %v2642, %v3637
        %v3639 = vpop.f32.mrb[0].mxu0
        %v3640 = vadd.f32 %v2646, %v3639
        %3641 = vmatprep.mubr.bf16.mxu0 0
        %3642 = vmatmul.mubr.bf16.gmra.mrb[0].mxu0 %v2570
        %v3643 = vpop.f32.mrb[0].mxu0
        %v3644 = vadd.f32 %v2642, %v3643
        %v3645 = vpop.f32.mrb[0].mxu0
        %v3646 = vadd.f32 %v2646, %v3645
        %v3647 = vpop.f32.mrb[0].mxu0
        %v3648 = vadd.f32 %v2642, %v3647
        %v3649 = vpop.f32.mrb[0].mxu0
        %v3650 = vadd.f32 %v2646, %v3649
        %3651 = vmatprep.mubr.bf16.mxu0 0
        %3652 = vmatmul.mubr.bf16.gmra.mrb[0].mxu0 %v2571
        %v3653 = vpop.f32.mrb[0].mxu0
        %v3654 = vadd.f32 %v2642, %v3653
        %v3655 = vpop.f32.mrb[0].mxu0
        %v3656 = vadd.f32 %v2646, %v3655
        %v3657 = vpop.f32.mrb[0].mxu0
        %v3658 = vadd.f32 %v2642, %v3657
        %v3659 = vpop.f32.mrb[0].mxu0
        %v3660 = vadd.f32 %v2646, %v3659
        %3661 = vmatprep.mubr.bf16.mxu0 0
        %3662 = vmatmul.mubr.bf16.gmra.mrb[0].mxu0 %v2572
        %v3663 = vpop.f32.mrb[0].mxu0
        %v3664 = vadd.f32 %v2642, %v3663
        %v3665 = vpop.f32.mrb[0].mxu0
        %v3666 = vadd.f32 %v2646, %v3665
        %v3667 = vpop.f32.mrb[0].mxu0
        %v3668 = vadd.f32 %v2642, %v3667
        %v3669 = vpop.f32.mrb[0].mxu0
        %v3670 = vadd.f32 %v2646, %v3669
        %3671 = vdwg.mxu0
        %3672 = vmatprep.subr.bf16.mxu0 %v2874
        %3673 = vmatpush1.bf16.msra.mxu0 %v2873
        %3674 = vmatprep.subr.bf16.mxu0 %v2882
        %3675 = vmatpush1.bf16.msra.mxu0 %v2881
        %3676 = vmatprep.subr.bf16.mxu0 %v2890
        %3677 = vmatpush1.bf16.msra.mxu0 %v2889
        %3678 = vmatprep.subr.bf16.mxu0 %v2898
        %3679 = vmatpush1.bf16.msra.mxu0 %v2897
        %3680 = vmatprep.subr.bf16.mxu0 %v2906
        %3681 = vmatpush1.bf16.msra.mxu0 %v2905
        %3682 = vmatprep.subr.bf16.mxu0 %v2914
        %3683 = vmatpush1.bf16.msra.mxu0 %v2913
        %3684 = vmatprep.subr.bf16.mxu0 %v2922
        %3685 = vmatpush1.bf16.msra.mxu0 %v2921
        %3686 = vmatprep.subr.bf16.mxu0 %v2930
        %3687 = vmatpush1.bf16.msra.mxu0 %v2929
        %3688 = vmatprep.subr.bf16.mxu0 0
        %3689 = vmatpush1.bf16.msra.mxu0 0
        %3690 = vmatprep.subr.bf16.mxu0 0
        %3691 = vmatpush1.bf16.msra.mxu0 0
        %3692 = vmatprep.subr.bf16.mxu0 0
        %3693 = vmatpush1.bf16.msra.mxu0 0
        %3694 = vmatprep.subr.bf16.mxu0 0
        %3695 = vmatpush1.bf16.msra.mxu0 0
        %3696 = vmatprep.subr.bf16.mxu0 0
        %3697 = vmatpush1.bf16.msra.mxu0 0
        %3698 = vmatprep.subr.bf16.mxu0 0
        %3699 = vmatpush1.bf16.msra.mxu0 0
        %3700 = vmatprep.subr.bf16.mxu0 0
        %3701 = vmatpush1.bf16.msra.mxu0 0
        %3702 = vmatprep.subr.bf16.mxu0 0
        %3703 = vmatpush1.bf16.msra.mxu0 0
        %3704 = vmatprep.mubr.bf16.mxu0 0
        %3705 = vmatmul.mubr.bf16.gmra.mrb[0].mxu0 %v2509
        %v3706 = vpop.f32.mrb[0].mxu0
        %v3707 = vadd.f32 %v2650, %v3706
        %v3708 = vpop.f32.mrb[0].mxu0
        %v3709 = vadd.f32 %v2654, %v3708
        %v3710 = vpop.f32.mrb[0].mxu0
        %v3711 = vadd.f32 %v2650, %v3710
        %v3712 = vpop.f32.mrb[0].mxu0
        %v3713 = vadd.f32 %v2654, %v3712
        %3714 = vmatprep.mubr.bf16.mxu0 0
        %3715 = vmatmul.mubr.bf16.gmra.mrb[0].mxu0 %v2510
        %v3716 = vpop.f32.mrb[0].mxu0
        %v3717 = vadd.f32 %v2650, %v3716
        %v3718 = vpop.f32.mrb[0].mxu0
        %v3719 = vadd.f32 %v2654, %v3718
        %v3720 = vpop.f32.mrb[0].mxu0
        %v3721 = vadd.f32 %v2650, %v3720
        %v3722 = vpop.f32.mrb[0].mxu0
        %v3723 = vadd.f32 %v2654, %v3722
        %3724 = vmatprep.mubr.bf16.mxu0 0
        %3725 = vmatmul.mubr.bf16.gmra.mrb[0].mxu0 %v2511
        %v3726 = vpop.f32.mrb[0].mxu0
        %v3727 = vadd.f32 %v2650, %v3726
        %v3728 = vpop.f32.mrb[0].mxu0
        %v3729 = vadd.f32 %v2654, %v3728
        %v3730 = vpop.f32.mrb[0].mxu0
        %v3731 = vadd.f32 %v2650, %v3730
        %v3732 = vpop.f32.mrb[0].mxu0
        %v3733 = vadd.f32 %v2654, %v3732
        %3734 = vmatprep.mubr.bf16.mxu0 0
        %3735 = vmatmul.mubr.bf16.gmra.mrb[0].mxu0 %v2512
        %v3736 = vpop.f32.mrb[0].mxu0
        %v3737 = vadd.f32 %v2650, %v3736
        %v3738 = vpop.f32.mrb[0].mxu0
        %v3739 = vadd.f32 %v2654, %v3738
        %v3740 = vpop.f32.mrb[0].mxu0
        %v3741 = vadd.f32 %v2650, %v3740
        %v3742 = vpop.f32.mrb[0].mxu0
        %v3743 = vadd.f32 %v2654, %v3742
        %3744 = vmatprep.mubr.bf16.mxu0 0
        %3745 = vmatmul.mubr.bf16.gmra.mrb[0].mxu0 %v2513
        %v3746 = vpop.f32.mrb[0].mxu0
        %v3747 = vadd.f32 %v2650, %v3746
        %v3748 = vpop.f32.mrb[0].mxu0
        %v3749 = vadd.f32 %v2654, %v3748
        %v3750 = vpop.f32.mrb[0].mxu0
        %v3751 = vadd.f32 %v2650, %v3750
        %v3752 = vpop.f32.mrb[0].mxu0
        %v3753 = vadd.f32 %v2654, %v3752
        %3754 = vmatprep.mubr.bf16.mxu0 0
        %3755 = vmatmul.mubr.bf16.gmra.mrb[0].mxu0 %v2514
        %v3756 = vpop.f32.mrb[0].mxu0
        %v3757 = vadd.f32 %v2650, %v3756
        %v3758 = vpop.f32.mrb[0].mxu0
        %v3759 = vadd.f32 %v2654, %v3758
        %v3760 = vpop.f32.mrb[0].mxu0
        %v3761 = vadd.f32 %v2650, %v3760
        %v3762 = vpop.f32.mrb[0].mxu0
        %v3763 = vadd.f32 %v2654, %v3762
        %3764 = vmatprep.mubr.bf16.mxu0 0
        %3765 = vmatmul.mubr.bf16.gmra.mrb[0].mxu0 %v2515
        %v3766 = vpop.f32.mrb[0].mxu0
        %v3767 = vadd.f32 %v2650, %v3766
        %v3768 = vpop.f32.mrb[0].mxu0
        %v3769 = vadd.f32 %v2654, %v3768
        %v3770 = vpop.f32.mrb[0].mxu0
        %v3771 = vadd.f32 %v2650, %v3770
        %v3772 = vpop.f32.mrb[0].mxu0
        %v3773 = vadd.f32 %v2654, %v3772
        %3774 = vmatprep.mubr.bf16.mxu0 0
        %3775 = vmatmul.mubr.bf16.gmra.mrb[0].mxu0 %v2516
        %v3776 = vpop.f32.mrb[0].mxu0
        %v3777 = vadd.f32 %v2650, %v3776
        %v3778 = vpop.f32.mrb[0].mxu0
        %v3779 = vadd.f32 %v2654, %v3778
        %v3780 = vpop.f32.mrb[0].mxu0
        %v3781 = vadd.f32 %v2650, %v3780
        %v3782 = vpop.f32.mrb[0].mxu0
        %v3783 = vadd.f32 %v2654, %v3782
        %3784 = vmatprep.mubr.bf16.mxu0 0
        %3785 = vmatmul.mubr.bf16.gmra.mrb[0].mxu0 %v2517
        %v3786 = vpop.f32.mrb[0].mxu0
        %v3787 = vadd.f32 %v2650, %v3786
        %v3788 = vpop.f32.mrb[0].mxu0
        %v3789 = vadd.f32 %v2654, %v3788
        %v3790 = vpop.f32.mrb[0].mxu0
        %v3791 = vadd.f32 %v2650, %v3790
        %v3792 = vpop.f32.mrb[0].mxu0
        %v3793 = vadd.f32 %v2654, %v3792
        %3794 = vmatprep.mubr.bf16.mxu0 0
        %3795 = vmatmul.mubr.bf16.gmra.mrb[0].mxu0 %v2518
        %v3796 = vpop.f32.mrb[0].mxu0
        %v3797 = vadd.f32 %v2650, %v3796
        %v3798 = vpop.f32.mrb[0].mxu0
        %v3799 = vadd.f32 %v2654, %v3798
        %v3800 = vpop.f32.mrb[0].mxu0
        %v3801 = vadd.f32 %v2650, %v3800
        %v3802 = vpop.f32.mrb[0].mxu0
        %v3803 = vadd.f32 %v2654, %v3802
        %3804 = vmatprep.mubr.bf16.mxu0 0
        %3805 = vmatmul.mubr.bf16.gmra.mrb[0].mxu0 %v2519
        %v3806 = vpop.f32.mrb[0].mxu0
        %v3807 = vadd.f32 %v2650, %v3806
        %v3808 = vpop.f32.mrb[0].mxu0
        %v3809 = vadd.f32 %v2654, %v3808
        %v3810 = vpop.f32.mrb[0].mxu0
        %v3811 = vadd.f32 %v2650, %v3810
        %v3812 = vpop.f32.mrb[0].mxu0
        %v3813 = vadd.f32 %v2654, %v3812
        %3814 = vmatprep.mubr.bf16.mxu0 0
        %3815 = vmatmul.mubr.bf16.gmra.mrb[0].mxu0 %v2520
        %v3816 = vpop.f32.mrb[0].mxu0
        %v3817 = vadd.f32 %v2650, %v3816
        %v3818 = vpop.f32.mrb[0].mxu0
        %v3819 = vadd.f32 %v2654, %v3818
        %v3820 = vpop.f32.mrb[0].mxu0
        %v3821 = vadd.f32 %v2650, %v3820
        %v3822 = vpop.f32.mrb[0].mxu0
        %v3823 = vadd.f32 %v2654, %v3822
        %3824 = vmatprep.mubr.bf16.mxu0 0
        %3825 = vmatmul.mubr.bf16.gmra.mrb[0].mxu0 %v2521
        %v3826 = vpop.f32.mrb[0].mxu0
        %v3827 = vadd.f32 %v2650, %v3826
        %v3828 = vpop.f32.mrb[0].mxu0
        %v3829 = vadd.f32 %v2654, %v3828
        %v3830 = vpop.f32.mrb[0].mxu0
        %v3831 = vadd.f32 %v2650, %v3830
        %v3832 = vpop.f32.mrb[0].mxu0
        %v3833 = vadd.f32 %v2654, %v3832
        %3834 = vmatprep.mubr.bf16.mxu0 0
        %3835 = vmatmul.mubr.bf16.gmra.mrb[0].mxu0 %v2522
        %v3836 = vpop.f32.mrb[0].mxu0
        %v3837 = vadd.f32 %v2650, %v3836
        %v3838 = vpop.f32.mrb[0].mxu0
        %v3839 = vadd.f32 %v2654, %v3838
        %v3840 = vpop.f32.mrb[0].mxu0
        %v3841 = vadd.f32 %v2650, %v3840
        %v3842 = vpop.f32.mrb[0].mxu0
        %v3843 = vadd.f32 %v2654, %v3842
        %3844 = vmatprep.mubr.bf16.mxu0 0
        %3845 = vmatmul.mubr.bf16.gmra.mrb[0].mxu0 %v2523
        %v3846 = vpop.f32.mrb[0].mxu0
        %v3847 = vadd.f32 %v2650, %v3846
        %v3848 = vpop.f32.mrb[0].mxu0
        %v3849 = vadd.f32 %v2654, %v3848
        %v3850 = vpop.f32.mrb[0].mxu0
        %v3851 = vadd.f32 %v2650, %v3850
        %v3852 = vpop.f32.mrb[0].mxu0
        %v3853 = vadd.f32 %v2654, %v3852
        %3854 = vmatprep.mubr.bf16.mxu0 0
        %3855 = vmatmul.mubr.bf16.gmra.mrb[0].mxu0 %v2524
        %v3856 = vpop.f32.mrb[0].mxu0
        %v3857 = vadd.f32 %v2650, %v3856
        %v3858 = vpop.f32.mrb[0].mxu0
        %v3859 = vadd.f32 %v2654, %v3858
        %v3860 = vpop.f32.mrb[0].mxu0
        %v3861 = vadd.f32 %v2650, %v3860
        %v3862 = vpop.f32.mrb[0].mxu0
        %v3863 = vadd.f32 %v2654, %v3862
        %3864 = vmatprep.mubr.bf16.mxu0 0
        %3865 = vmatmul.mubr.bf16.gmra.mrb[0].mxu0 %v2525
        %v3866 = vpop.f32.mrb[0].mxu0
        %v3867 = vadd.f32 %v2650, %v3866
        %v3868 = vpop.f32.mrb[0].mxu0
        %v3869 = vadd.f32 %v2654, %v3868
        %v3870 = vpop.f32.mrb[0].mxu0
        %v3871 = vadd.f32 %v2650, %v3870
        %v3872 = vpop.f32.mrb[0].mxu0
        %v3873 = vadd.f32 %v2654, %v3872
        %3874 = vmatprep.mubr.bf16.mxu0 0
        %3875 = vmatmul.mubr.bf16.gmra.mrb[0].mxu0 %v2526
        %v3876 = vpop.f32.mrb[0].mxu0
        %v3877 = vadd.f32 %v2650, %v3876
        %v3878 = vpop.f32.mrb[0].mxu0
        %v3879 = vadd.f32 %v2654, %v3878
        %v3880 = vpop.f32.mrb[0].mxu0
        %v3881 = vadd.f32 %v2650, %v3880
        %v3882 = vpop.f32.mrb[0].mxu0
        %v3883 = vadd.f32 %v2654, %v3882
        %3884 = vmatprep.mubr.bf16.mxu0 0
        %3885 = vmatmul.mubr.bf16.gmra.mrb[0].mxu0 %v2527
        %v3886 = vpop.f32.mrb[0].mxu0
        %v3887 = vadd.f32 %v2650, %v3886
        %v3888 = vpop.f32.mrb[0].mxu0
        %v3889 = vadd.f32 %v2654, %v3888
        %v3890 = vpop.f32.mrb[0].mxu0
        %v3891 = vadd.f32 %v2650, %v3890
        %v3892 = vpop.f32.mrb[0].mxu0
        %v3893 = vadd.f32 %v2654, %v3892
        %3894 = vmatprep.mubr.bf16.mxu0 0
        %3895 = vmatmul.mubr.bf16.gmra.mrb[0].mxu0 %v2528
        %v3896 = vpop.f32.mrb[0].mxu0
        %v3897 = vadd.f32 %v2650, %v3896
        %v3898 = vpop.f32.mrb[0].mxu0
        %v3899 = vadd.f32 %v2654, %v3898
        %v3900 = vpop.f32.mrb[0].mxu0
        %v3901 = vadd.f32 %v2650, %v3900
        %v3902 = vpop.f32.mrb[0].mxu0
        %v3903 = vadd.f32 %v2654, %v3902
        %3904 = vmatprep.mubr.bf16.mxu0 0
        %3905 = vmatmul.mubr.bf16.gmra.mrb[0].mxu0 %v2529
        %v3906 = vpop.f32.mrb[0].mxu0
        %v3907 = vadd.f32 %v2650, %v3906
        %v3908 = vpop.f32.mrb[0].mxu0
        %v3909 = vadd.f32 %v2654, %v3908
        %v3910 = vpop.f32.mrb[0].mxu0
        %v3911 = vadd.f32 %v2650, %v3910
        %v3912 = vpop.f32.mrb[0].mxu0
        %v3913 = vadd.f32 %v2654, %v3912
        %3914 = vmatprep.mubr.bf16.mxu0 0
        %3915 = vmatmul.mubr.bf16.gmra.mrb[0].mxu0 %v2530
        %v3916 = vpop.f32.mrb[0].mxu0
        %v3917 = vadd.f32 %v2650, %v3916
        %v3918 = vpop.f32.mrb[0].mxu0
        %v3919 = vadd.f32 %v2654, %v3918
        %v3920 = vpop.f32.mrb[0].mxu0
        %v3921 = vadd.f32 %v2650, %v3920
        %v3922 = vpop.f32.mrb[0].mxu0
        %v3923 = vadd.f32 %v2654, %v3922
        %3924 = vmatprep.mubr.bf16.mxu0 0
        %3925 = vmatmul.mubr.bf16.gmra.mrb[0].mxu0 %v2531
        %v3926 = vpop.f32.mrb[0].mxu0
        %v3927 = vadd.f32 %v2650, %v3926
        %v3928 = vpop.f32.mrb[0].mxu0
        %v3929 = vadd.f32 %v2654, %v3928
        %v3930 = vpop.f32.mrb[0].mxu0
        %v3931 = vadd.f32 %v2650, %v3930
        %v3932 = vpop.f32.mrb[0].mxu0
        %v3933 = vadd.f32 %v2654, %v3932
        %3934 = vmatprep.mubr.bf16.mxu0 0
        %3935 = vmatmul.mubr.bf16.gmra.mrb[0].mxu0 %v2532
        %v3936 = vpop.f32.mrb[0].mxu0
        %v3937 = vadd.f32 %v2650, %v3936
        %v3938 = vpop.f32.mrb[0].mxu0
        %v3939 = vadd.f32 %v2654, %v3938
        %v3940 = vpop.f32.mrb[0].mxu0
        %v3941 = vadd.f32 %v2650, %v3940
        %v3942 = vpop.f32.mrb[0].mxu0
        %v3943 = vadd.f32 %v2654, %v3942
        %3944 = vmatprep.mubr.bf16.mxu0 0
        %3945 = vmatmul.mubr.bf16.gmra.mrb[0].mxu0 %v2533
        %v3946 = vpop.f32.mrb[0].mxu0
        %v3947 = vadd.f32 %v2650, %v3946
        %v3948 = vpop.f32.mrb[0].mxu0
        %v3949 = vadd.f32 %v2654, %v3948
        %v3950 = vpop.f32.mrb[0].mxu0
        %v3951 = vadd.f32 %v2650, %v3950
        %v3952 = vpop.f32.mrb[0].mxu0
        %v3953 = vadd.f32 %v2654, %v3952
        %3954 = vmatprep.mubr.bf16.mxu0 0
        %3955 = vmatmul.mubr.bf16.gmra.mrb[0].mxu0 %v2534
        %v3956 = vpop.f32.mrb[0].mxu0
        %v3957 = vadd.f32 %v2650, %v3956
        %v3958 = vpop.f32.mrb[0].mxu0
        %v3959 = vadd.f32 %v2654, %v3958
        %v3960 = vpop.f32.mrb[0].mxu0
        %v3961 = vadd.f32 %v2650, %v3960
        %v3962 = vpop.f32.mrb[0].mxu0
        %v3963 = vadd.f32 %v2654, %v3962
        %3964 = vmatprep.mubr.bf16.mxu0 0
        %3965 = vmatmul.mubr.bf16.gmra.mrb[0].mxu0 %v2535
        %v3966 = vpop.f32.mrb[0].mxu0
        %v3967 = vadd.f32 %v2650, %v3966
        %v3968 = vpop.f32.mrb[0].mxu0
        %v3969 = vadd.f32 %v2654, %v3968
        %v3970 = vpop.f32.mrb[0].mxu0
        %v3971 = vadd.f32 %v2650, %v3970
        %v3972 = vpop.f32.mrb[0].mxu0
        %v3973 = vadd.f32 %v2654, %v3972
        %3974 = vmatprep.mubr.bf16.mxu0 0
        %3975 = vmatmul.mubr.bf16.gmra.mrb[0].mxu0 %v2536
        %v3976 = vpop.f32.mrb[0].mxu0
        %v3977 = vadd.f32 %v2650, %v3976
        %v3978 = vpop.f32.mrb[0].mxu0
        %v3979 = vadd.f32 %v2654, %v3978
        %v3980 = vpop.f32.mrb[0].mxu0
        %v3981 = vadd.f32 %v2650, %v3980
        %v3982 = vpop.f32.mrb[0].mxu0
        %v3983 = vadd.f32 %v2654, %v3982
        %3984 = vmatprep.mubr.bf16.mxu0 0
        %3985 = vmatmul.mubr.bf16.gmra.mrb[0].mxu0 %v2537
        %v3986 = vpop.f32.mrb[0].mxu0
        %v3987 = vadd.f32 %v2650, %v3986
        %v3988 = vpop.f32.mrb[0].mxu0
        %v3989 = vadd.f32 %v2654, %v3988
        %v3990 = vpop.f32.mrb[0].mxu0
        %v3991 = vadd.f32 %v2650, %v3990
        %v3992 = vpop.f32.mrb[0].mxu0
        %v3993 = vadd.f32 %v2654, %v3992
        %3994 = vmatprep.mubr.bf16.mxu0 0
        %3995 = vmatmul.mubr.bf16.gmra.mrb[0].mxu0 %v2538
        %v3996 = vpop.f32.mrb[0].mxu0
        %v3997 = vadd.f32 %v2650, %v3996
        %v3998 = vpop.f32.mrb[0].mxu0
        %v3999 = vadd.f32 %v2654, %v3998
        %v4000 = vpop.f32.mrb[0].mxu0
        %v4001 = vadd.f32 %v2650, %v4000
        %v4002 = vpop.f32.mrb[0].mxu0
        %v4003 = vadd.f32 %v2654, %v4002
        %4004 = vmatprep.mubr.bf16.mxu0 0
        %4005 = vmatmul.mubr.bf16.gmra.mrb[0].mxu0 %v2539
        %v4006 = vpop.f32.mrb[0].mxu0
        %v4007 = vadd.f32 %v2650, %v4006
        %v4008 = vpop.f32.mrb[0].mxu0
        %v4009 = vadd.f32 %v2654, %v4008
        %v4010 = vpop.f32.mrb[0].mxu0
        %v4011 = vadd.f32 %v2650, %v4010
        %v4012 = vpop.f32.mrb[0].mxu0
        %v4013 = vadd.f32 %v2654, %v4012
        %4014 = vmatprep.mubr.bf16.mxu0 0
        %4015 = vmatmul.mubr.bf16.gmra.mrb[0].mxu0 %v2540
        %v4016 = vpop.f32.mrb[0].mxu0
        %v4017 = vadd.f32 %v2650, %v4016
        %v4018 = vpop.f32.mrb[0].mxu0
        %v4019 = vadd.f32 %v2654, %v4018
        %v4020 = vpop.f32.mrb[0].mxu0
        %v4021 = vadd.f32 %v2650, %v4020
        %v4022 = vpop.f32.mrb[0].mxu0
        %v4023 = vadd.f32 %v2654, %v4022
        %4024 = vmatprep.mubr.bf16.mxu0 0
        %4025 = vmatmul.mubr.bf16.gmra.mrb[0].mxu0 %v2541
        %v4026 = vpop.f32.mrb[0].mxu0
        %v4027 = vadd.f32 %v2650, %v4026
        %v4028 = vpop.f32.mrb[0].mxu0
        %v4029 = vadd.f32 %v2654, %v4028
        %v4030 = vpop.f32.mrb[0].mxu0
        %v4031 = vadd.f32 %v2650, %v4030
        %v4032 = vpop.f32.mrb[0].mxu0
        %v4033 = vadd.f32 %v2654, %v4032
        %4034 = vmatprep.mubr.bf16.mxu0 0
        %4035 = vmatmul.mubr.bf16.gmra.mrb[0].mxu0 %v2542
        %v4036 = vpop.f32.mrb[0].mxu0
        %v4037 = vadd.f32 %v2650, %v4036
        %v4038 = vpop.f32.mrb[0].mxu0
        %v4039 = vadd.f32 %v2654, %v4038
        %v4040 = vpop.f32.mrb[0].mxu0
        %v4041 = vadd.f32 %v2650, %v4040
        %v4042 = vpop.f32.mrb[0].mxu0
        %v4043 = vadd.f32 %v2654, %v4042
        %4044 = vmatprep.mubr.bf16.mxu0 0
        %4045 = vmatmul.mubr.bf16.gmra.mrb[0].mxu0 %v2543
        %v4046 = vpop.f32.mrb[0].mxu0
        %v4047 = vadd.f32 %v2650, %v4046
        %v4048 = vpop.f32.mrb[0].mxu0
        %v4049 = vadd.f32 %v2654, %v4048
        %v4050 = vpop.f32.mrb[0].mxu0
        %v4051 = vadd.f32 %v2650, %v4050
        %v4052 = vpop.f32.mrb[0].mxu0
        %v4053 = vadd.f32 %v2654, %v4052
        %4054 = vmatprep.mubr.bf16.mxu0 0
        %4055 = vmatmul.mubr.bf16.gmra.mrb[0].mxu0 %v2544
        %v4056 = vpop.f32.mrb[0].mxu0
        %v4057 = vadd.f32 %v2650, %v4056
        %v4058 = vpop.f32.mrb[0].mxu0
        %v4059 = vadd.f32 %v2654, %v4058
        %v4060 = vpop.f32.mrb[0].mxu0
        %v4061 = vadd.f32 %v2650, %v4060
        %v4062 = vpop.f32.mrb[0].mxu0
        %v4063 = vadd.f32 %v2654, %v4062
        %4064 = vmatprep.mubr.bf16.mxu0 0
        %4065 = vmatmul.mubr.bf16.gmra.mrb[0].mxu0 %v2545
        %v4066 = vpop.f32.mrb[0].mxu0
        %v4067 = vadd.f32 %v2650, %v4066
        %v4068 = vpop.f32.mrb[0].mxu0
        %v4069 = vadd.f32 %v2654, %v4068
        %v4070 = vpop.f32.mrb[0].mxu0
        %v4071 = vadd.f32 %v2650, %v4070
        %v4072 = vpop.f32.mrb[0].mxu0
        %v4073 = vadd.f32 %v2654, %v4072
        %4074 = vmatprep.mubr.bf16.mxu0 0
        %4075 = vmatmul.mubr.bf16.gmra.mrb[0].mxu0 %v2546
        %v4076 = vpop.f32.mrb[0].mxu0
        %v4077 = vadd.f32 %v2650, %v4076
        %v4078 = vpop.f32.mrb[0].mxu0
        %v4079 = vadd.f32 %v2654, %v4078
        %v4080 = vpop.f32.mrb[0].mxu0
        %v4081 = vadd.f32 %v2650, %v4080
        %v4082 = vpop.f32.mrb[0].mxu0
        %v4083 = vadd.f32 %v2654, %v4082
        %4084 = vmatprep.mubr.bf16.mxu0 0
        %4085 = vmatmul.mubr.bf16.gmra.mrb[0].mxu0 %v2547
        %v4086 = vpop.f32.mrb[0].mxu0
        %v4087 = vadd.f32 %v2650, %v4086
        %v4088 = vpop.f32.mrb[0].mxu0
        %v4089 = vadd.f32 %v2654, %v4088
        %v4090 = vpop.f32.mrb[0].mxu0
        %v4091 = vadd.f32 %v2650, %v4090
        %v4092 = vpop.f32.mrb[0].mxu0
        %v4093 = vadd.f32 %v2654, %v4092
        %4094 = vmatprep.mubr.bf16.mxu0 0
        %4095 = vmatmul.mubr.bf16.gmra.mrb[0].mxu0 %v2548
        %v4096 = vpop.f32.mrb[0].mxu0
        %v4097 = vadd.f32 %v2650, %v4096
        %v4098 = vpop.f32.mrb[0].mxu0
        %v4099 = vadd.f32 %v2654, %v4098
        %v4100 = vpop.f32.mrb[0].mxu0
        %v4101 = vadd.f32 %v2650, %v4100
        %v4102 = vpop.f32.mrb[0].mxu0
        %v4103 = vadd.f32 %v2654, %v4102
        %4104 = vmatprep.mubr.bf16.mxu0 0
        %4105 = vmatmul.mubr.bf16.gmra.mrb[0].mxu0 %v2549
        %v4106 = vpop.f32.mrb[0].mxu0
        %v4107 = vadd.f32 %v2650, %v4106
        %v4108 = vpop.f32.mrb[0].mxu0
        %v4109 = vadd.f32 %v2654, %v4108
        %v4110 = vpop.f32.mrb[0].mxu0
        %v4111 = vadd.f32 %v2650, %v4110
        %v4112 = vpop.f32.mrb[0].mxu0
        %v4113 = vadd.f32 %v2654, %v4112
        %4114 = vmatprep.mubr.bf16.mxu0 0
        %4115 = vmatmul.mubr.bf16.gmra.mrb[0].mxu0 %v2550
        %v4116 = vpop.f32.mrb[0].mxu0
        %v4117 = vadd.f32 %v2650, %v4116
        %v4118 = vpop.f32.mrb[0].mxu0
        %v4119 = vadd.f32 %v2654, %v4118
        %v4120 = vpop.f32.mrb[0].mxu0
        %v4121 = vadd.f32 %v2650, %v4120
        %v4122 = vpop.f32.mrb[0].mxu0
        %v4123 = vadd.f32 %v2654, %v4122
        %4124 = vmatprep.mubr.bf16.mxu0 0
        %4125 = vmatmul.mubr.bf16.gmra.mrb[0].mxu0 %v2551
        %v4126 = vpop.f32.mrb[0].mxu0
        %v4127 = vadd.f32 %v2650, %v4126
        %v4128 = vpop.f32.mrb[0].mxu0
        %v4129 = vadd.f32 %v2654, %v4128
        %v4130 = vpop.f32.mrb[0].mxu0
        %v4131 = vadd.f32 %v2650, %v4130
        %v4132 = vpop.f32.mrb[0].mxu0
        %v4133 = vadd.f32 %v2654, %v4132
        %4134 = vmatprep.mubr.bf16.mxu0 0
        %4135 = vmatmul.mubr.bf16.gmra.mrb[0].mxu0 %v2552
        %v4136 = vpop.f32.mrb[0].mxu0
        %v4137 = vadd.f32 %v2650, %v4136
        %v4138 = vpop.f32.mrb[0].mxu0
        %v4139 = vadd.f32 %v2654, %v4138
        %v4140 = vpop.f32.mrb[0].mxu0
        %v4141 = vadd.f32 %v2650, %v4140
        %v4142 = vpop.f32.mrb[0].mxu0
        %v4143 = vadd.f32 %v2654, %v4142
        %4144 = vmatprep.mubr.bf16.mxu0 0
        %4145 = vmatmul.mubr.bf16.gmra.mrb[0].mxu0 %v2553
        %v4146 = vpop.f32.mrb[0].mxu0
        %v4147 = vadd.f32 %v2650, %v4146
        %v4148 = vpop.f32.mrb[0].mxu0
        %v4149 = vadd.f32 %v2654, %v4148
        %v4150 = vpop.f32.mrb[0].mxu0
        %v4151 = vadd.f32 %v2650, %v4150
        %v4152 = vpop.f32.mrb[0].mxu0
        %v4153 = vadd.f32 %v2654, %v4152
        %4154 = vmatprep.mubr.bf16.mxu0 0
        %4155 = vmatmul.mubr.bf16.gmra.mrb[0].mxu0 %v2554
        %v4156 = vpop.f32.mrb[0].mxu0
        %v4157 = vadd.f32 %v2650, %v4156
        %v4158 = vpop.f32.mrb[0].mxu0
        %v4159 = vadd.f32 %v2654, %v4158
        %v4160 = vpop.f32.mrb[0].mxu0
        %v4161 = vadd.f32 %v2650, %v4160
        %v4162 = vpop.f32.mrb[0].mxu0
        %v4163 = vadd.f32 %v2654, %v4162
        %4164 = vmatprep.mubr.bf16.mxu0 0
        %4165 = vmatmul.mubr.bf16.gmra.mrb[0].mxu0 %v2555
        %v4166 = vpop.f32.mrb[0].mxu0
        %v4167 = vadd.f32 %v2650, %v4166
        %v4168 = vpop.f32.mrb[0].mxu0
        %v4169 = vadd.f32 %v2654, %v4168
        %v4170 = vpop.f32.mrb[0].mxu0
        %v4171 = vadd.f32 %v2650, %v4170
        %v4172 = vpop.f32.mrb[0].mxu0
        %v4173 = vadd.f32 %v2654, %v4172
        %4174 = vmatprep.mubr.bf16.mxu0 0
        %4175 = vmatmul.mubr.bf16.gmra.mrb[0].mxu0 %v2556
        %v4176 = vpop.f32.mrb[0].mxu0
        %v4177 = vadd.f32 %v2650, %v4176
        %v4178 = vpop.f32.mrb[0].mxu0
        %v4179 = vadd.f32 %v2654, %v4178
        %v4180 = vpop.f32.mrb[0].mxu0
        %v4181 = vadd.f32 %v2650, %v4180
        %v4182 = vpop.f32.mrb[0].mxu0
        %v4183 = vadd.f32 %v2654, %v4182
        %4184 = vmatprep.mubr.bf16.mxu0 0
        %4185 = vmatmul.mubr.bf16.gmra.mrb[0].mxu0 %v2557
        %v4186 = vpop.f32.mrb[0].mxu0
        %v4187 = vadd.f32 %v2650, %v4186
        %v4188 = vpop.f32.mrb[0].mxu0
        %v4189 = vadd.f32 %v2654, %v4188
        %v4190 = vpop.f32.mrb[0].mxu0
        %v4191 = vadd.f32 %v2650, %v4190
        %v4192 = vpop.f32.mrb[0].mxu0
        %v4193 = vadd.f32 %v2654, %v4192
        %4194 = vmatprep.mubr.bf16.mxu0 0
        %4195 = vmatmul.mubr.bf16.gmra.mrb[0].mxu0 %v2558
        %v4196 = vpop.f32.mrb[0].mxu0
        %v4197 = vadd.f32 %v2650, %v4196
        %v4198 = vpop.f32.mrb[0].mxu0
        %v4199 = vadd.f32 %v2654, %v4198
        %v4200 = vpop.f32.mrb[0].mxu0
        %v4201 = vadd.f32 %v2650, %v4200
        %v4202 = vpop.f32.mrb[0].mxu0
        %v4203 = vadd.f32 %v2654, %v4202
        %4204 = vmatprep.mubr.bf16.mxu0 0
        %4205 = vmatmul.mubr.bf16.gmra.mrb[0].mxu0 %v2559
        %v4206 = vpop.f32.mrb[0].mxu0
        %v4207 = vadd.f32 %v2650, %v4206
        %v4208 = vpop.f32.mrb[0].mxu0
        %v4209 = vadd.f32 %v2654, %v4208
        %v4210 = vpop.f32.mrb[0].mxu0
        %v4211 = vadd.f32 %v2650, %v4210
        %v4212 = vpop.f32.mrb[0].mxu0
        %v4213 = vadd.f32 %v2654, %v4212
        %4214 = vmatprep.mubr.bf16.mxu0 0
        %4215 = vmatmul.mubr.bf16.gmra.mrb[0].mxu0 %v2560
        %v4216 = vpop.f32.mrb[0].mxu0
        %v4217 = vadd.f32 %v2650, %v4216
        %v4218 = vpop.f32.mrb[0].mxu0
        %v4219 = vadd.f32 %v2654, %v4218
        %v4220 = vpop.f32.mrb[0].mxu0
        %v4221 = vadd.f32 %v2650, %v4220
        %v4222 = vpop.f32.mrb[0].mxu0
        %v4223 = vadd.f32 %v2654, %v4222
        %4224 = vmatprep.mubr.bf16.mxu0 0
        %4225 = vmatmul.mubr.bf16.gmra.mrb[0].mxu0 %v2561
        %v4226 = vpop.f32.mrb[0].mxu0
        %v4227 = vadd.f32 %v2650, %v4226
        %v4228 = vpop.f32.mrb[0].mxu0
        %v4229 = vadd.f32 %v2654, %v4228
        %v4230 = vpop.f32.mrb[0].mxu0
        %v4231 = vadd.f32 %v2650, %v4230
        %v4232 = vpop.f32.mrb[0].mxu0
        %v4233 = vadd.f32 %v2654, %v4232
        %4234 = vmatprep.mubr.bf16.mxu0 0
        %4235 = vmatmul.mubr.bf16.gmra.mrb[0].mxu0 %v2562
        %v4236 = vpop.f32.mrb[0].mxu0
        %v4237 = vadd.f32 %v2650, %v4236
        %v4238 = vpop.f32.mrb[0].mxu0
        %v4239 = vadd.f32 %v2654, %v4238
        %v4240 = vpop.f32.mrb[0].mxu0
        %v4241 = vadd.f32 %v2650, %v4240
        %v4242 = vpop.f32.mrb[0].mxu0
        %v4243 = vadd.f32 %v2654, %v4242
        %4244 = vmatprep.mubr.bf16.mxu0 0
        %4245 = vmatmul.mubr.bf16.gmra.mrb[0].mxu0 %v2563
        %v4246 = vpop.f32.mrb[0].mxu0
        %v4247 = vadd.f32 %v2650, %v4246
        %v4248 = vpop.f32.mrb[0].mxu0
        %v4249 = vadd.f32 %v2654, %v4248
        %v4250 = vpop.f32.mrb[0].mxu0
        %v4251 = vadd.f32 %v2650, %v4250
        %v4252 = vpop.f32.mrb[0].mxu0
        %v4253 = vadd.f32 %v2654, %v4252
        %4254 = vmatprep.mubr.bf16.mxu0 0
        %4255 = vmatmul.mubr.bf16.gmra.mrb[0].mxu0 %v2564
        %v4256 = vpop.f32.mrb[0].mxu0
        %v4257 = vadd.f32 %v2650, %v4256
        %v4258 = vpop.f32.mrb[0].mxu0
        %v4259 = vadd.f32 %v2654, %v4258
        %v4260 = vpop.f32.mrb[0].mxu0
        %v4261 = vadd.f32 %v2650, %v4260
        %v4262 = vpop.f32.mrb[0].mxu0
        %v4263 = vadd.f32 %v2654, %v4262
        %4264 = vmatprep.mubr.bf16.mxu0 0
        %4265 = vmatmul.mubr.bf16.gmra.mrb[0].mxu0 %v2565
        %v4266 = vpop.f32.mrb[0].mxu0
        %v4267 = vadd.f32 %v2650, %v4266
        %v4268 = vpop.f32.mrb[0].mxu0
        %v4269 = vadd.f32 %v2654, %v4268
        %v4270 = vpop.f32.mrb[0].mxu0
        %v4271 = vadd.f32 %v2650, %v4270
        %v4272 = vpop.f32.mrb[0].mxu0
        %v4273 = vadd.f32 %v2654, %v4272
        %4274 = vmatprep.mubr.bf16.mxu0 0
        %4275 = vmatmul.mubr.bf16.gmra.mrb[0].mxu0 %v2566
        %v4276 = vpop.f32.mrb[0].mxu0
        %v4277 = vadd.f32 %v2650, %v4276
        %v4278 = vpop.f32.mrb[0].mxu0
        %v4279 = vadd.f32 %v2654, %v4278
        %v4280 = vpop.f32.mrb[0].mxu0
        %v4281 = vadd.f32 %v2650, %v4280
        %v4282 = vpop.f32.mrb[0].mxu0
        %v4283 = vadd.f32 %v2654, %v4282
        %4284 = vmatprep.mubr.bf16.mxu0 0
        %4285 = vmatmul.mubr.bf16.gmra.mrb[0].mxu0 %v2567
        %v4286 = vpop.f32.mrb[0].mxu0
        %v4287 = vadd.f32 %v2650, %v4286
        %v4288 = vpop.f32.mrb[0].mxu0
        %v4289 = vadd.f32 %v2654, %v4288
        %v4290 = vpop.f32.mrb[0].mxu0
        %v4291 = vadd.f32 %v2650, %v4290
        %v4292 = vpop.f32.mrb[0].mxu0
        %v4293 = vadd.f32 %v2654, %v4292
        %4294 = vmatprep.mubr.bf16.mxu0 0
        %4295 = vmatmul.mubr.bf16.gmra.mrb[0].mxu0 %v2568
        %v4296 = vpop.f32.mrb[0].mxu0
        %v4297 = vadd.f32 %v2650, %v4296
        %v4298 = vpop.f32.mrb[0].mxu0
        %v4299 = vadd.f32 %v2654, %v4298
        %v4300 = vpop.f32.mrb[0].mxu0
        %v4301 = vadd.f32 %v2650, %v4300
        %v4302 = vpop.f32.mrb[0].mxu0
        %v4303 = vadd.f32 %v2654, %v4302
        %4304 = vmatprep.mubr.bf16.mxu0 0
        %4305 = vmatmul.mubr.bf16.gmra.mrb[0].mxu0 %v2569
        %v4306 = vpop.f32.mrb[0].mxu0
        %v4307 = vadd.f32 %v2650, %v4306
        %v4308 = vpop.f32.mrb[0].mxu0
        %v4309 = vadd.f32 %v2654, %v4308
        %v4310 = vpop.f32.mrb[0].mxu0
        %v4311 = vadd.f32 %v2650, %v4310
        %v4312 = vpop.f32.mrb[0].mxu0
        %v4313 = vadd.f32 %v2654, %v4312
        %4314 = vmatprep.mubr.bf16.mxu0 0
        %4315 = vmatmul.mubr.bf16.gmra.mrb[0].mxu0 %v2570
        %v4316 = vpop.f32.mrb[0].mxu0
        %v4317 = vadd.f32 %v2650, %v4316
        %v4318 = vpop.f32.mrb[0].mxu0
        %v4319 = vadd.f32 %v2654, %v4318
        %v4320 = vpop.f32.mrb[0].mxu0
        %v4321 = vadd.f32 %v2650, %v4320
        %v4322 = vpop.f32.mrb[0].mxu0
        %v4323 = vadd.f32 %v2654, %v4322
        %4324 = vmatprep.mubr.bf16.mxu0 0
        %4325 = vmatmul.mubr.bf16.gmra.mrb[0].mxu0 %v2571
        %v4326 = vpop.f32.mrb[0].mxu0
        %v4327 = vadd.f32 %v2650, %v4326
        %v4328 = vpop.f32.mrb[0].mxu0
        %v4329 = vadd.f32 %v2654, %v4328
        %v4330 = vpop.f32.mrb[0].mxu0
        %v4331 = vadd.f32 %v2650, %v4330
        %v4332 = vpop.f32.mrb[0].mxu0
        %v4333 = vadd.f32 %v2654, %v4332
        %4334 = vmatprep.mubr.bf16.mxu0 0
        %4335 = vmatmul.mubr.bf16.gmra.mrb[0].mxu0 %v2572
        %v4336 = vpop.f32.mrb[0].mxu0
        %v4337 = vadd.f32 %v2650, %v4336
        %v4338 = vpop.f32.mrb[0].mxu0
        %v4339 = vadd.f32 %v2654, %v4338
        %v4340 = vpop.f32.mrb[0].mxu0
        %v4341 = vadd.f32 %v2650, %v4340
        %v4342 = vpop.f32.mrb[0].mxu0
        %v4343 = vadd.f32 %v2654, %v4342
        %4344 = vdwg.mxu0
        %4345 = vmatprep.subr.bf16.mxu0 %v2876
        %4346 = vmatpush1.bf16.msra.mxu0 %v2875
        %4347 = vmatprep.subr.bf16.mxu0 %v2884
        %4348 = vmatpush1.bf16.msra.mxu0 %v2883
        %4349 = vmatprep.subr.bf16.mxu0 %v2892
        %4350 = vmatpush1.bf16.msra.mxu0 %v2891
        %4351 = vmatprep.subr.bf16.mxu0 %v2900
        %4352 = vmatpush1.bf16.msra.mxu0 %v2899
        %4353 = vmatprep.subr.bf16.mxu0 %v2908
        %4354 = vmatpush1.bf16.msra.mxu0 %v2907
        %4355 = vmatprep.subr.bf16.mxu0 %v2916
        %4356 = vmatpush1.bf16.msra.mxu0 %v2915
        %4357 = vmatprep.subr.bf16.mxu0 %v2924
        %4358 = vmatpush1.bf16.msra.mxu0 %v2923
        %4359 = vmatprep.subr.bf16.mxu0 %v2932
        %4360 = vmatpush1.bf16.msra.mxu0 %v2931
        %4361 = vmatprep.subr.bf16.mxu0 0
        %4362 = vmatpush1.bf16.msra.mxu0 0
        %4363 = vmatprep.subr.bf16.mxu0 0
        %4364 = vmatpush1.bf16.msra.mxu0 0
        %4365 = vmatprep.subr.bf16.mxu0 0
        %4366 = vmatpush1.bf16.msra.mxu0 0
        %4367 = vmatprep.subr.bf16.mxu0 0
        %4368 = vmatpush1.bf16.msra.mxu0 0
        %4369 = vmatprep.subr.bf16.mxu0 0
        %4370 = vmatpush1.bf16.msra.mxu0 0
        %4371 = vmatprep.subr.bf16.mxu0 0
        %4372 = vmatpush1.bf16.msra.mxu0 0
        %4373 = vmatprep.subr.bf16.mxu0 0
        %4374 = vmatpush1.bf16.msra.mxu0 0
        %4375 = vmatprep.subr.bf16.mxu0 0
        %4376 = vmatpush1.bf16.msra.mxu0 0
        %4377 = vmatprep.mubr.bf16.mxu0 0
        %4378 = vmatmul.mubr.bf16.gmra.mrb[0].mxu0 %v2509
        %v4379 = vpop.f32.mrb[0].mxu0
        %v4380 = vadd.f32 %v2658, %v4379
        %v4381 = vpop.f32.mrb[0].mxu0
        %v4382 = vadd.f32 %v2662, %v4381
        %v4383 = vpop.f32.mrb[0].mxu0
        %v4384 = vadd.f32 %v2658, %v4383
        %v4385 = vpop.f32.mrb[0].mxu0
        %v4386 = vadd.f32 %v2662, %v4385
        %4387 = vmatprep.mubr.bf16.mxu0 0
        %4388 = vmatmul.mubr.bf16.gmra.mrb[0].mxu0 %v2510
        %v4389 = vpop.f32.mrb[0].mxu0
        %v4390 = vadd.f32 %v2658, %v4389
        %v4391 = vpop.f32.mrb[0].mxu0
        %v4392 = vadd.f32 %v2662, %v4391
        %v4393 = vpop.f32.mrb[0].mxu0
        %v4394 = vadd.f32 %v2658, %v4393
        %v4395 = vpop.f32.mrb[0].mxu0
        %v4396 = vadd.f32 %v2662, %v4395
        %4397 = vmatprep.mubr.bf16.mxu0 0
        %4398 = vmatmul.mubr.bf16.gmra.mrb[0].mxu0 %v2511
        %v4399 = vpop.f32.mrb[0].mxu0
        %v4400 = vadd.f32 %v2658, %v4399
        %v4401 = vpop.f32.mrb[0].mxu0
        %v4402 = vadd.f32 %v2662, %v4401
        %v4403 = vpop.f32.mrb[0].mxu0
        %v4404 = vadd.f32 %v2658, %v4403
        %v4405 = vpop.f32.mrb[0].mxu0
        %v4406 = vadd.f32 %v2662, %v4405
        %4407 = vmatprep.mubr.bf16.mxu0 0
        %4408 = vmatmul.mubr.bf16.gmra.mrb[0].mxu0 %v2512
        %v4409 = vpop.f32.mrb[0].mxu0
        %v4410 = vadd.f32 %v2658, %v4409
        %v4411 = vpop.f32.mrb[0].mxu0
        %v4412 = vadd.f32 %v2662, %v4411
        %v4413 = vpop.f32.mrb[0].mxu0
        %v4414 = vadd.f32 %v2658, %v4413
        %v4415 = vpop.f32.mrb[0].mxu0
        %v4416 = vadd.f32 %v2662, %v4415
        %4417 = vmatprep.mubr.bf16.mxu0 0
        %4418 = vmatmul.mubr.bf16.gmra.mrb[0].mxu0 %v2513
        %v4419 = vpop.f32.mrb[0].mxu0
        %v4420 = vadd.f32 %v2658, %v4419
        %v4421 = vpop.f32.mrb[0].mxu0
        %v4422 = vadd.f32 %v2662, %v4421
        %v4423 = vpop.f32.mrb[0].mxu0
        %v4424 = vadd.f32 %v2658, %v4423
        %v4425 = vpop.f32.mrb[0].mxu0
        %v4426 = vadd.f32 %v2662, %v4425
        %4427 = vmatprep.mubr.bf16.mxu0 0
        %4428 = vmatmul.mubr.bf16.gmra.mrb[0].mxu0 %v2514
        %v4429 = vpop.f32.mrb[0].mxu0
        %v4430 = vadd.f32 %v2658, %v4429
        %v4431 = vpop.f32.mrb[0].mxu0
        %v4432 = vadd.f32 %v2662, %v4431
        %v4433 = vpop.f32.mrb[0].mxu0
        %v4434 = vadd.f32 %v2658, %v4433
        %v4435 = vpop.f32.mrb[0].mxu0
        %v4436 = vadd.f32 %v2662, %v4435
        %4437 = vmatprep.mubr.bf16.mxu0 0
        %4438 = vmatmul.mubr.bf16.gmra.mrb[0].mxu0 %v2515
        %v4439 = vpop.f32.mrb[0].mxu0
        %v4440 = vadd.f32 %v2658, %v4439
        %v4441 = vpop.f32.mrb[0].mxu0
        %v4442 = vadd.f32 %v2662, %v4441
        %v4443 = vpop.f32.mrb[0].mxu0
        %v4444 = vadd.f32 %v2658, %v4443
        %v4445 = vpop.f32.mrb[0].mxu0
        %v4446 = vadd.f32 %v2662, %v4445
        %4447 = vmatprep.mubr.bf16.mxu0 0
        %4448 = vmatmul.mubr.bf16.gmra.mrb[0].mxu0 %v2516
        %v4449 = vpop.f32.mrb[0].mxu0
        %v4450 = vadd.f32 %v2658, %v4449
        %v4451 = vpop.f32.mrb[0].mxu0
        %v4452 = vadd.f32 %v2662, %v4451
        %v4453 = vpop.f32.mrb[0].mxu0
        %v4454 = vadd.f32 %v2658, %v4453
        %v4455 = vpop.f32.mrb[0].mxu0
        %v4456 = vadd.f32 %v2662, %v4455
        %4457 = vmatprep.mubr.bf16.mxu0 0
        %4458 = vmatmul.mubr.bf16.gmra.mrb[0].mxu0 %v2517
        %v4459 = vpop.f32.mrb[0].mxu0
        %v4460 = vadd.f32 %v2658, %v4459
        %v4461 = vpop.f32.mrb[0].mxu0
        %v4462 = vadd.f32 %v2662, %v4461
        %v4463 = vpop.f32.mrb[0].mxu0
        %v4464 = vadd.f32 %v2658, %v4463
        %v4465 = vpop.f32.mrb[0].mxu0
        %v4466 = vadd.f32 %v2662, %v4465
        %4467 = vmatprep.mubr.bf16.mxu0 0
        %4468 = vmatmul.mubr.bf16.gmra.mrb[0].mxu0 %v2518
        %v4469 = vpop.f32.mrb[0].mxu0
        %v4470 = vadd.f32 %v2658, %v4469
        %v4471 = vpop.f32.mrb[0].mxu0
        %v4472 = vadd.f32 %v2662, %v4471
        %v4473 = vpop.f32.mrb[0].mxu0
        %v4474 = vadd.f32 %v2658, %v4473
        %v4475 = vpop.f32.mrb[0].mxu0
        %v4476 = vadd.f32 %v2662, %v4475
        %4477 = vmatprep.mubr.bf16.mxu0 0
        %4478 = vmatmul.mubr.bf16.gmra.mrb[0].mxu0 %v2519
        %v4479 = vpop.f32.mrb[0].mxu0
        %v4480 = vadd.f32 %v2658, %v4479
        %v4481 = vpop.f32.mrb[0].mxu0
        %v4482 = vadd.f32 %v2662, %v4481
        %v4483 = vpop.f32.mrb[0].mxu0
        %v4484 = vadd.f32 %v2658, %v4483
        %v4485 = vpop.f32.mrb[0].mxu0
        %v4486 = vadd.f32 %v2662, %v4485
        %4487 = vmatprep.mubr.bf16.mxu0 0
        %4488 = vmatmul.mubr.bf16.gmra.mrb[0].mxu0 %v2520
        %v4489 = vpop.f32.mrb[0].mxu0
        %v4490 = vadd.f32 %v2658, %v4489
        %v4491 = vpop.f32.mrb[0].mxu0
        %v4492 = vadd.f32 %v2662, %v4491
        %v4493 = vpop.f32.mrb[0].mxu0
        %v4494 = vadd.f32 %v2658, %v4493
        %v4495 = vpop.f32.mrb[0].mxu0
        %v4496 = vadd.f32 %v2662, %v4495
        %4497 = vmatprep.mubr.bf16.mxu0 0
        %4498 = vmatmul.mubr.bf16.gmra.mrb[0].mxu0 %v2521
        %v4499 = vpop.f32.mrb[0].mxu0
        %v4500 = vadd.f32 %v2658, %v4499
        %v4501 = vpop.f32.mrb[0].mxu0
        %v4502 = vadd.f32 %v2662, %v4501
        %v4503 = vpop.f32.mrb[0].mxu0
        %v4504 = vadd.f32 %v2658, %v4503
        %v4505 = vpop.f32.mrb[0].mxu0
        %v4506 = vadd.f32 %v2662, %v4505
        %4507 = vmatprep.mubr.bf16.mxu0 0
        %4508 = vmatmul.mubr.bf16.gmra.mrb[0].mxu0 %v2522
        %v4509 = vpop.f32.mrb[0].mxu0
        %v4510 = vadd.f32 %v2658, %v4509
        %v4511 = vpop.f32.mrb[0].mxu0
        %v4512 = vadd.f32 %v2662, %v4511
        %v4513 = vpop.f32.mrb[0].mxu0
        %v4514 = vadd.f32 %v2658, %v4513
        %v4515 = vpop.f32.mrb[0].mxu0
        %v4516 = vadd.f32 %v2662, %v4515
        %4517 = vmatprep.mubr.bf16.mxu0 0
        %4518 = vmatmul.mubr.bf16.gmra.mrb[0].mxu0 %v2523
        %v4519 = vpop.f32.mrb[0].mxu0
        %v4520 = vadd.f32 %v2658, %v4519
        %v4521 = vpop.f32.mrb[0].mxu0
        %v4522 = vadd.f32 %v2662, %v4521
        %v4523 = vpop.f32.mrb[0].mxu0
        %v4524 = vadd.f32 %v2658, %v4523
        %v4525 = vpop.f32.mrb[0].mxu0
        %v4526 = vadd.f32 %v2662, %v4525
        %4527 = vmatprep.mubr.bf16.mxu0 0
        %4528 = vmatmul.mubr.bf16.gmra.mrb[0].mxu0 %v2524
        %v4529 = vpop.f32.mrb[0].mxu0
        %v4530 = vadd.f32 %v2658, %v4529
        %v4531 = vpop.f32.mrb[0].mxu0
        %v4532 = vadd.f32 %v2662, %v4531
        %v4533 = vpop.f32.mrb[0].mxu0
        %v4534 = vadd.f32 %v2658, %v4533
        %v4535 = vpop.f32.mrb[0].mxu0
        %v4536 = vadd.f32 %v2662, %v4535
        %4537 = vmatprep.mubr.bf16.mxu0 0
        %4538 = vmatmul.mubr.bf16.gmra.mrb[0].mxu0 %v2525
        %v4539 = vpop.f32.mrb[0].mxu0
        %v4540 = vadd.f32 %v2658, %v4539
        %v4541 = vpop.f32.mrb[0].mxu0
        %v4542 = vadd.f32 %v2662, %v4541
        %v4543 = vpop.f32.mrb[0].mxu0
        %v4544 = vadd.f32 %v2658, %v4543
        %v4545 = vpop.f32.mrb[0].mxu0
        %v4546 = vadd.f32 %v2662, %v4545
        %4547 = vmatprep.mubr.bf16.mxu0 0
        %4548 = vmatmul.mubr.bf16.gmra.mrb[0].mxu0 %v2526
        %v4549 = vpop.f32.mrb[0].mxu0
        %v4550 = vadd.f32 %v2658, %v4549
        %v4551 = vpop.f32.mrb[0].mxu0
        %v4552 = vadd.f32 %v2662, %v4551
        %v4553 = vpop.f32.mrb[0].mxu0
        %v4554 = vadd.f32 %v2658, %v4553
        %v4555 = vpop.f32.mrb[0].mxu0
        %v4556 = vadd.f32 %v2662, %v4555
        %4557 = vmatprep.mubr.bf16.mxu0 0
        %4558 = vmatmul.mubr.bf16.gmra.mrb[0].mxu0 %v2527
        %v4559 = vpop.f32.mrb[0].mxu0
        %v4560 = vadd.f32 %v2658, %v4559
        %v4561 = vpop.f32.mrb[0].mxu0
        %v4562 = vadd.f32 %v2662, %v4561
        %v4563 = vpop.f32.mrb[0].mxu0
        %v4564 = vadd.f32 %v2658, %v4563
        %v4565 = vpop.f32.mrb[0].mxu0
        %v4566 = vadd.f32 %v2662, %v4565
        %4567 = vmatprep.mubr.bf16.mxu0 0
        %4568 = vmatmul.mubr.bf16.gmra.mrb[0].mxu0 %v2528
        %v4569 = vpop.f32.mrb[0].mxu0
        %v4570 = vadd.f32 %v2658, %v4569
        %v4571 = vpop.f32.mrb[0].mxu0
        %v4572 = vadd.f32 %v2662, %v4571
        %v4573 = vpop.f32.mrb[0].mxu0
        %v4574 = vadd.f32 %v2658, %v4573
        %v4575 = vpop.f32.mrb[0].mxu0
        %v4576 = vadd.f32 %v2662, %v4575
        %4577 = vmatprep.mubr.bf16.mxu0 0
        %4578 = vmatmul.mubr.bf16.gmra.mrb[0].mxu0 %v2529
        %v4579 = vpop.f32.mrb[0].mxu0
        %v4580 = vadd.f32 %v2658, %v4579
        %v4581 = vpop.f32.mrb[0].mxu0
        %v4582 = vadd.f32 %v2662, %v4581
        %v4583 = vpop.f32.mrb[0].mxu0
        %v4584 = vadd.f32 %v2658, %v4583
        %v4585 = vpop.f32.mrb[0].mxu0
        %v4586 = vadd.f32 %v2662, %v4585
        %4587 = vmatprep.mubr.bf16.mxu0 0
        %4588 = vmatmul.mubr.bf16.gmra.mrb[0].mxu0 %v2530
        %v4589 = vpop.f32.mrb[0].mxu0
        %v4590 = vadd.f32 %v2658, %v4589
        %v4591 = vpop.f32.mrb[0].mxu0
        %v4592 = vadd.f32 %v2662, %v4591
        %v4593 = vpop.f32.mrb[0].mxu0
        %v4594 = vadd.f32 %v2658, %v4593
        %v4595 = vpop.f32.mrb[0].mxu0
        %v4596 = vadd.f32 %v2662, %v4595
        %4597 = vmatprep.mubr.bf16.mxu0 0
        %4598 = vmatmul.mubr.bf16.gmra.mrb[0].mxu0 %v2531
        %v4599 = vpop.f32.mrb[0].mxu0
        %v4600 = vadd.f32 %v2658, %v4599
        %v4601 = vpop.f32.mrb[0].mxu0
        %v4602 = vadd.f32 %v2662, %v4601
        %v4603 = vpop.f32.mrb[0].mxu0
        %v4604 = vadd.f32 %v2658, %v4603
        %v4605 = vpop.f32.mrb[0].mxu0
        %v4606 = vadd.f32 %v2662, %v4605
        %4607 = vmatprep.mubr.bf16.mxu0 0
        %4608 = vmatmul.mubr.bf16.gmra.mrb[0].mxu0 %v2532
        %v4609 = vpop.f32.mrb[0].mxu0
        %v4610 = vadd.f32 %v2658, %v4609
        %v4611 = vpop.f32.mrb[0].mxu0
        %v4612 = vadd.f32 %v2662, %v4611
        %v4613 = vpop.f32.mrb[0].mxu0
        %v4614 = vadd.f32 %v2658, %v4613
        %v4615 = vpop.f32.mrb[0].mxu0
        %v4616 = vadd.f32 %v2662, %v4615
        %4617 = vmatprep.mubr.bf16.mxu0 0
        %4618 = vmatmul.mubr.bf16.gmra.mrb[0].mxu0 %v2533
        %v4619 = vpop.f32.mrb[0].mxu0
        %v4620 = vadd.f32 %v2658, %v4619
        %v4621 = vpop.f32.mrb[0].mxu0
        %v4622 = vadd.f32 %v2662, %v4621
        %v4623 = vpop.f32.mrb[0].mxu0
        %v4624 = vadd.f32 %v2658, %v4623
        %v4625 = vpop.f32.mrb[0].mxu0
        %v4626 = vadd.f32 %v2662, %v4625
        %4627 = vmatprep.mubr.bf16.mxu0 0
        %4628 = vmatmul.mubr.bf16.gmra.mrb[0].mxu0 %v2534
        %v4629 = vpop.f32.mrb[0].mxu0
        %v4630 = vadd.f32 %v2658, %v4629
        %v4631 = vpop.f32.mrb[0].mxu0
        %v4632 = vadd.f32 %v2662, %v4631
        %v4633 = vpop.f32.mrb[0].mxu0
        %v4634 = vadd.f32 %v2658, %v4633
        %v4635 = vpop.f32.mrb[0].mxu0
        %v4636 = vadd.f32 %v2662, %v4635
        %4637 = vmatprep.mubr.bf16.mxu0 0
        %4638 = vmatmul.mubr.bf16.gmra.mrb[0].mxu0 %v2535
        %v4639 = vpop.f32.mrb[0].mxu0
        %v4640 = vadd.f32 %v2658, %v4639
        %v4641 = vpop.f32.mrb[0].mxu0
        %v4642 = vadd.f32 %v2662, %v4641
        %v4643 = vpop.f32.mrb[0].mxu0
        %v4644 = vadd.f32 %v2658, %v4643
        %v4645 = vpop.f32.mrb[0].mxu0
        %v4646 = vadd.f32 %v2662, %v4645
        %4647 = vmatprep.mubr.bf16.mxu0 0
        %4648 = vmatmul.mubr.bf16.gmra.mrb[0].mxu0 %v2536
        %v4649 = vpop.f32.mrb[0].mxu0
        %v4650 = vadd.f32 %v2658, %v4649
        %v4651 = vpop.f32.mrb[0].mxu0
        %v4652 = vadd.f32 %v2662, %v4651
        %v4653 = vpop.f32.mrb[0].mxu0
        %v4654 = vadd.f32 %v2658, %v4653
        %v4655 = vpop.f32.mrb[0].mxu0
        %v4656 = vadd.f32 %v2662, %v4655
        %4657 = vmatprep.mubr.bf16.mxu0 0
        %4658 = vmatmul.mubr.bf16.gmra.mrb[0].mxu0 %v2537
        %v4659 = vpop.f32.mrb[0].mxu0
        %v4660 = vadd.f32 %v2658, %v4659
        %v4661 = vpop.f32.mrb[0].mxu0
        %v4662 = vadd.f32 %v2662, %v4661
        %v4663 = vpop.f32.mrb[0].mxu0
        %v4664 = vadd.f32 %v2658, %v4663
        %v4665 = vpop.f32.mrb[0].mxu0
        %v4666 = vadd.f32 %v2662, %v4665
        %4667 = vmatprep.mubr.bf16.mxu0 0
        %4668 = vmatmul.mubr.bf16.gmra.mrb[0].mxu0 %v2538
        %v4669 = vpop.f32.mrb[0].mxu0
        %v4670 = vadd.f32 %v2658, %v4669
        %v4671 = vpop.f32.mrb[0].mxu0
        %v4672 = vadd.f32 %v2662, %v4671
        %v4673 = vpop.f32.mrb[0].mxu0
        %v4674 = vadd.f32 %v2658, %v4673
        %v4675 = vpop.f32.mrb[0].mxu0
        %v4676 = vadd.f32 %v2662, %v4675
        %4677 = vmatprep.mubr.bf16.mxu0 0
        %4678 = vmatmul.mubr.bf16.gmra.mrb[0].mxu0 %v2539
        %v4679 = vpop.f32.mrb[0].mxu0
        %v4680 = vadd.f32 %v2658, %v4679
        %v4681 = vpop.f32.mrb[0].mxu0
        %v4682 = vadd.f32 %v2662, %v4681
        %v4683 = vpop.f32.mrb[0].mxu0
        %v4684 = vadd.f32 %v2658, %v4683
        %v4685 = vpop.f32.mrb[0].mxu0
        %v4686 = vadd.f32 %v2662, %v4685
        %4687 = vmatprep.mubr.bf16.mxu0 0
        %4688 = vmatmul.mubr.bf16.gmra.mrb[0].mxu0 %v2540
        %v4689 = vpop.f32.mrb[0].mxu0
        %v4690 = vadd.f32 %v2658, %v4689
        %v4691 = vpop.f32.mrb[0].mxu0
        %v4692 = vadd.f32 %v2662, %v4691
        %v4693 = vpop.f32.mrb[0].mxu0
        %v4694 = vadd.f32 %v2658, %v4693
        %v4695 = vpop.f32.mrb[0].mxu0
        %v4696 = vadd.f32 %v2662, %v4695
        %4697 = vmatprep.mubr.bf16.mxu0 0
        %4698 = vmatmul.mubr.bf16.gmra.mrb[0].mxu0 %v2541
        %v4699 = vpop.f32.mrb[0].mxu0
        %v4700 = vadd.f32 %v2658, %v4699
        %v4701 = vpop.f32.mrb[0].mxu0
        %v4702 = vadd.f32 %v2662, %v4701
        %v4703 = vpop.f32.mrb[0].mxu0
        %v4704 = vadd.f32 %v2658, %v4703
        %v4705 = vpop.f32.mrb[0].mxu0
        %v4706 = vadd.f32 %v2662, %v4705
        %4707 = vmatprep.mubr.bf16.mxu0 0
        %4708 = vmatmul.mubr.bf16.gmra.mrb[0].mxu0 %v2542
        %v4709 = vpop.f32.mrb[0].mxu0
        %v4710 = vadd.f32 %v2658, %v4709
        %v4711 = vpop.f32.mrb[0].mxu0
        %v4712 = vadd.f32 %v2662, %v4711
        %v4713 = vpop.f32.mrb[0].mxu0
        %v4714 = vadd.f32 %v2658, %v4713
        %v4715 = vpop.f32.mrb[0].mxu0
        %v4716 = vadd.f32 %v2662, %v4715
        %4717 = vmatprep.mubr.bf16.mxu0 0
        %4718 = vmatmul.mubr.bf16.gmra.mrb[0].mxu0 %v2543
        %v4719 = vpop.f32.mrb[0].mxu0
        %v4720 = vadd.f32 %v2658, %v4719
        %v4721 = vpop.f32.mrb[0].mxu0
        %v4722 = vadd.f32 %v2662, %v4721
        %v4723 = vpop.f32.mrb[0].mxu0
        %v4724 = vadd.f32 %v2658, %v4723
        %v4725 = vpop.f32.mrb[0].mxu0
        %v4726 = vadd.f32 %v2662, %v4725
        %4727 = vmatprep.mubr.bf16.mxu0 0
        %4728 = vmatmul.mubr.bf16.gmra.mrb[0].mxu0 %v2544
        %v4729 = vpop.f32.mrb[0].mxu0
        %v4730 = vadd.f32 %v2658, %v4729
        %v4731 = vpop.f32.mrb[0].mxu0
        %v4732 = vadd.f32 %v2662, %v4731
        %v4733 = vpop.f32.mrb[0].mxu0
        %v4734 = vadd.f32 %v2658, %v4733
        %v4735 = vpop.f32.mrb[0].mxu0
        %v4736 = vadd.f32 %v2662, %v4735
        %4737 = vmatprep.mubr.bf16.mxu0 0
        %4738 = vmatmul.mubr.bf16.gmra.mrb[0].mxu0 %v2545
        %v4739 = vpop.f32.mrb[0].mxu0
        %v4740 = vadd.f32 %v2658, %v4739
        %v4741 = vpop.f32.mrb[0].mxu0
        %v4742 = vadd.f32 %v2662, %v4741
        %v4743 = vpop.f32.mrb[0].mxu0
        %v4744 = vadd.f32 %v2658, %v4743
        %v4745 = vpop.f32.mrb[0].mxu0
        %v4746 = vadd.f32 %v2662, %v4745
        %4747 = vmatprep.mubr.bf16.mxu0 0
        %4748 = vmatmul.mubr.bf16.gmra.mrb[0].mxu0 %v2546
        %v4749 = vpop.f32.mrb[0].mxu0
        %v4750 = vadd.f32 %v2658, %v4749
        %v4751 = vpop.f32.mrb[0].mxu0
        %v4752 = vadd.f32 %v2662, %v4751
        %v4753 = vpop.f32.mrb[0].mxu0
        %v4754 = vadd.f32 %v2658, %v4753
        %v4755 = vpop.f32.mrb[0].mxu0
        %v4756 = vadd.f32 %v2662, %v4755
        %4757 = vmatprep.mubr.bf16.mxu0 0
        %4758 = vmatmul.mubr.bf16.gmra.mrb[0].mxu0 %v2547
        %v4759 = vpop.f32.mrb[0].mxu0
        %v4760 = vadd.f32 %v2658, %v4759
        %v4761 = vpop.f32.mrb[0].mxu0
        %v4762 = vadd.f32 %v2662, %v4761
        %v4763 = vpop.f32.mrb[0].mxu0
        %v4764 = vadd.f32 %v2658, %v4763
        %v4765 = vpop.f32.mrb[0].mxu0
        %v4766 = vadd.f32 %v2662, %v4765
        %4767 = vmatprep.mubr.bf16.mxu0 0
        %4768 = vmatmul.mubr.bf16.gmra.mrb[0].mxu0 %v2548
        %v4769 = vpop.f32.mrb[0].mxu0
        %v4770 = vadd.f32 %v2658, %v4769
        %v4771 = vpop.f32.mrb[0].mxu0
        %v4772 = vadd.f32 %v2662, %v4771
        %v4773 = vpop.f32.mrb[0].mxu0
        %v4774 = vadd.f32 %v2658, %v4773
        %v4775 = vpop.f32.mrb[0].mxu0
        %v4776 = vadd.f32 %v2662, %v4775
        %4777 = vmatprep.mubr.bf16.mxu0 0
        %4778 = vmatmul.mubr.bf16.gmra.mrb[0].mxu0 %v2549
        %v4779 = vpop.f32.mrb[0].mxu0
        %v4780 = vadd.f32 %v2658, %v4779
        %v4781 = vpop.f32.mrb[0].mxu0
        %v4782 = vadd.f32 %v2662, %v4781
        %v4783 = vpop.f32.mrb[0].mxu0
        %v4784 = vadd.f32 %v2658, %v4783
        %v4785 = vpop.f32.mrb[0].mxu0
        %v4786 = vadd.f32 %v2662, %v4785
        %4787 = vmatprep.mubr.bf16.mxu0 0
        %4788 = vmatmul.mubr.bf16.gmra.mrb[0].mxu0 %v2550
        %v4789 = vpop.f32.mrb[0].mxu0
        %v4790 = vadd.f32 %v2658, %v4789
        %v4791 = vpop.f32.mrb[0].mxu0
        %v4792 = vadd.f32 %v2662, %v4791
        %v4793 = vpop.f32.mrb[0].mxu0
        %v4794 = vadd.f32 %v2658, %v4793
        %v4795 = vpop.f32.mrb[0].mxu0
        %v4796 = vadd.f32 %v2662, %v4795
        %4797 = vmatprep.mubr.bf16.mxu0 0
        %4798 = vmatmul.mubr.bf16.gmra.mrb[0].mxu0 %v2551
        %v4799 = vpop.f32.mrb[0].mxu0
        %v4800 = vadd.f32 %v2658, %v4799
        %v4801 = vpop.f32.mrb[0].mxu0
        %v4802 = vadd.f32 %v2662, %v4801
        %v4803 = vpop.f32.mrb[0].mxu0
        %v4804 = vadd.f32 %v2658, %v4803
        %v4805 = vpop.f32.mrb[0].mxu0
        %v4806 = vadd.f32 %v2662, %v4805
        %4807 = vmatprep.mubr.bf16.mxu0 0
        %4808 = vmatmul.mubr.bf16.gmra.mrb[0].mxu0 %v2552
        %v4809 = vpop.f32.mrb[0].mxu0
        %v4810 = vadd.f32 %v2658, %v4809
        %v4811 = vpop.f32.mrb[0].mxu0
        %v4812 = vadd.f32 %v2662, %v4811
        %v4813 = vpop.f32.mrb[0].mxu0
        %v4814 = vadd.f32 %v2658, %v4813
        %v4815 = vpop.f32.mrb[0].mxu0
        %v4816 = vadd.f32 %v2662, %v4815
        %4817 = vmatprep.mubr.bf16.mxu0 0
        %4818 = vmatmul.mubr.bf16.gmra.mrb[0].mxu0 %v2553
        %v4819 = vpop.f32.mrb[0].mxu0
        %v4820 = vadd.f32 %v2658, %v4819
        %v4821 = vpop.f32.mrb[0].mxu0
        %v4822 = vadd.f32 %v2662, %v4821
        %v4823 = vpop.f32.mrb[0].mxu0
        %v4824 = vadd.f32 %v2658, %v4823
        %v4825 = vpop.f32.mrb[0].mxu0
        %v4826 = vadd.f32 %v2662, %v4825
        %4827 = vmatprep.mubr.bf16.mxu0 0
        %4828 = vmatmul.mubr.bf16.gmra.mrb[0].mxu0 %v2554
        %v4829 = vpop.f32.mrb[0].mxu0
        %v4830 = vadd.f32 %v2658, %v4829
        %v4831 = vpop.f32.mrb[0].mxu0
        %v4832 = vadd.f32 %v2662, %v4831
        %v4833 = vpop.f32.mrb[0].mxu0
        %v4834 = vadd.f32 %v2658, %v4833
        %v4835 = vpop.f32.mrb[0].mxu0
        %v4836 = vadd.f32 %v2662, %v4835
        %4837 = vmatprep.mubr.bf16.mxu0 0
        %4838 = vmatmul.mubr.bf16.gmra.mrb[0].mxu0 %v2555
        %v4839 = vpop.f32.mrb[0].mxu0
        %v4840 = vadd.f32 %v2658, %v4839
        %v4841 = vpop.f32.mrb[0].mxu0
        %v4842 = vadd.f32 %v2662, %v4841
        %v4843 = vpop.f32.mrb[0].mxu0
        %v4844 = vadd.f32 %v2658, %v4843
        %v4845 = vpop.f32.mrb[0].mxu0
        %v4846 = vadd.f32 %v2662, %v4845
        %4847 = vmatprep.mubr.bf16.mxu0 0
        %4848 = vmatmul.mubr.bf16.gmra.mrb[0].mxu0 %v2556
        %v4849 = vpop.f32.mrb[0].mxu0
        %v4850 = vadd.f32 %v2658, %v4849
        %v4851 = vpop.f32.mrb[0].mxu0
        %v4852 = vadd.f32 %v2662, %v4851
        %v4853 = vpop.f32.mrb[0].mxu0
        %v4854 = vadd.f32 %v2658, %v4853
        %v4855 = vpop.f32.mrb[0].mxu0
        %v4856 = vadd.f32 %v2662, %v4855
        %4857 = vmatprep.mubr.bf16.mxu0 0
        %4858 = vmatmul.mubr.bf16.gmra.mrb[0].mxu0 %v2557
        %v4859 = vpop.f32.mrb[0].mxu0
        %v4860 = vadd.f32 %v2658, %v4859
        %v4861 = vpop.f32.mrb[0].mxu0
        %v4862 = vadd.f32 %v2662, %v4861
        %v4863 = vpop.f32.mrb[0].mxu0
        %v4864 = vadd.f32 %v2658, %v4863
        %v4865 = vpop.f32.mrb[0].mxu0
        %v4866 = vadd.f32 %v2662, %v4865
        %4867 = vmatprep.mubr.bf16.mxu0 0
        %4868 = vmatmul.mubr.bf16.gmra.mrb[0].mxu0 %v2558
        %v4869 = vpop.f32.mrb[0].mxu0
        %v4870 = vadd.f32 %v2658, %v4869
        %v4871 = vpop.f32.mrb[0].mxu0
        %v4872 = vadd.f32 %v2662, %v4871
        %v4873 = vpop.f32.mrb[0].mxu0
        %v4874 = vadd.f32 %v2658, %v4873
        %v4875 = vpop.f32.mrb[0].mxu0
        %v4876 = vadd.f32 %v2662, %v4875
        %4877 = vmatprep.mubr.bf16.mxu0 0
        %4878 = vmatmul.mubr.bf16.gmra.mrb[0].mxu0 %v2559
        %v4879 = vpop.f32.mrb[0].mxu0
        %v4880 = vadd.f32 %v2658, %v4879
        %v4881 = vpop.f32.mrb[0].mxu0
        %v4882 = vadd.f32 %v2662, %v4881
        %v4883 = vpop.f32.mrb[0].mxu0
        %v4884 = vadd.f32 %v2658, %v4883
        %v4885 = vpop.f32.mrb[0].mxu0
        %v4886 = vadd.f32 %v2662, %v4885
        %4887 = vmatprep.mubr.bf16.mxu0 0
        %4888 = vmatmul.mubr.bf16.gmra.mrb[0].mxu0 %v2560
        %v4889 = vpop.f32.mrb[0].mxu0
        %v4890 = vadd.f32 %v2658, %v4889
        %v4891 = vpop.f32.mrb[0].mxu0
        %v4892 = vadd.f32 %v2662, %v4891
        %v4893 = vpop.f32.mrb[0].mxu0
        %v4894 = vadd.f32 %v2658, %v4893
        %v4895 = vpop.f32.mrb[0].mxu0
        %v4896 = vadd.f32 %v2662, %v4895
        %4897 = vmatprep.mubr.bf16.mxu0 0
        %4898 = vmatmul.mubr.bf16.gmra.mrb[0].mxu0 %v2561
        %v4899 = vpop.f32.mrb[0].mxu0
        %v4900 = vadd.f32 %v2658, %v4899
        %v4901 = vpop.f32.mrb[0].mxu0
        %v4902 = vadd.f32 %v2662, %v4901
        %v4903 = vpop.f32.mrb[0].mxu0
        %v4904 = vadd.f32 %v2658, %v4903
        %v4905 = vpop.f32.mrb[0].mxu0
        %v4906 = vadd.f32 %v2662, %v4905
        %4907 = vmatprep.mubr.bf16.mxu0 0
        %4908 = vmatmul.mubr.bf16.gmra.mrb[0].mxu0 %v2562
        %v4909 = vpop.f32.mrb[0].mxu0
        %v4910 = vadd.f32 %v2658, %v4909
        %v4911 = vpop.f32.mrb[0].mxu0
        %v4912 = vadd.f32 %v2662, %v4911
        %v4913 = vpop.f32.mrb[0].mxu0
        %v4914 = vadd.f32 %v2658, %v4913
        %v4915 = vpop.f32.mrb[0].mxu0
        %v4916 = vadd.f32 %v2662, %v4915
        %4917 = vmatprep.mubr.bf16.mxu0 0
        %4918 = vmatmul.mubr.bf16.gmra.mrb[0].mxu0 %v2563
        %v4919 = vpop.f32.mrb[0].mxu0
        %v4920 = vadd.f32 %v2658, %v4919
        %v4921 = vpop.f32.mrb[0].mxu0
        %v4922 = vadd.f32 %v2662, %v4921
        %v4923 = vpop.f32.mrb[0].mxu0
        %v4924 = vadd.f32 %v2658, %v4923
        %v4925 = vpop.f32.mrb[0].mxu0
        %v4926 = vadd.f32 %v2662, %v4925
        %4927 = vmatprep.mubr.bf16.mxu0 0
        %4928 = vmatmul.mubr.bf16.gmra.mrb[0].mxu0 %v2564
        %v4929 = vpop.f32.mrb[0].mxu0
        %v4930 = vadd.f32 %v2658, %v4929
        %v4931 = vpop.f32.mrb[0].mxu0
        %v4932 = vadd.f32 %v2662, %v4931
        %v4933 = vpop.f32.mrb[0].mxu0
        %v4934 = vadd.f32 %v2658, %v4933
        %v4935 = vpop.f32.mrb[0].mxu0
        %v4936 = vadd.f32 %v2662, %v4935
        %4937 = vmatprep.mubr.bf16.mxu0 0
        %4938 = vmatmul.mubr.bf16.gmra.mrb[0].mxu0 %v2565
        %v4939 = vpop.f32.mrb[0].mxu0
        %v4940 = vadd.f32 %v2658, %v4939
        %v4941 = vpop.f32.mrb[0].mxu0
        %v4942 = vadd.f32 %v2662, %v4941
        %v4943 = vpop.f32.mrb[0].mxu0
        %v4944 = vadd.f32 %v2658, %v4943
        %v4945 = vpop.f32.mrb[0].mxu0
        %v4946 = vadd.f32 %v2662, %v4945
        %4947 = vmatprep.mubr.bf16.mxu0 0
        %4948 = vmatmul.mubr.bf16.gmra.mrb[0].mxu0 %v2566
        %v4949 = vpop.f32.mrb[0].mxu0
        %v4950 = vadd.f32 %v2658, %v4949
        %v4951 = vpop.f32.mrb[0].mxu0
        %v4952 = vadd.f32 %v2662, %v4951
        %v4953 = vpop.f32.mrb[0].mxu0
        %v4954 = vadd.f32 %v2658, %v4953
        %v4955 = vpop.f32.mrb[0].mxu0
        %v4956 = vadd.f32 %v2662, %v4955
        %4957 = vmatprep.mubr.bf16.mxu0 0
        %4958 = vmatmul.mubr.bf16.gmra.mrb[0].mxu0 %v2567
        %v4959 = vpop.f32.mrb[0].mxu0
        %v4960 = vadd.f32 %v2658, %v4959
        %v4961 = vpop.f32.mrb[0].mxu0
        %v4962 = vadd.f32 %v2662, %v4961
        %v4963 = vpop.f32.mrb[0].mxu0
        %v4964 = vadd.f32 %v2658, %v4963
        %v4965 = vpop.f32.mrb[0].mxu0
        %v4966 = vadd.f32 %v2662, %v4965
        %4967 = vmatprep.mubr.bf16.mxu0 0
        %4968 = vmatmul.mubr.bf16.gmra.mrb[0].mxu0 %v2568
        %v4969 = vpop.f32.mrb[0].mxu0
        %v4970 = vadd.f32 %v2658, %v4969
        %v4971 = vpop.f32.mrb[0].mxu0
        %v4972 = vadd.f32 %v2662, %v4971
        %v4973 = vpop.f32.mrb[0].mxu0
        %v4974 = vadd.f32 %v2658, %v4973
        %v4975 = vpop.f32.mrb[0].mxu0
        %v4976 = vadd.f32 %v2662, %v4975
        %4977 = vmatprep.mubr.bf16.mxu0 0
        %4978 = vmatmul.mubr.bf16.gmra.mrb[0].mxu0 %v2569
        %v4979 = vpop.f32.mrb[0].mxu0
        %v4980 = vadd.f32 %v2658, %v4979
        %v4981 = vpop.f32.mrb[0].mxu0
        %v4982 = vadd.f32 %v2662, %v4981
        %v4983 = vpop.f32.mrb[0].mxu0
        %v4984 = vadd.f32 %v2658, %v4983
        %v4985 = vpop.f32.mrb[0].mxu0
        %v4986 = vadd.f32 %v2662, %v4985
        %4987 = vmatprep.mubr.bf16.mxu0 0
        %4988 = vmatmul.mubr.bf16.gmra.mrb[0].mxu0 %v2570
        %v4989 = vpop.f32.mrb[0].mxu0
        %v4990 = vadd.f32 %v2658, %v4989
        %v4991 = vpop.f32.mrb[0].mxu0
        %v4992 = vadd.f32 %v2662, %v4991
        %v4993 = vpop.f32.mrb[0].mxu0
        %v4994 = vadd.f32 %v2658, %v4993
        %v4995 = vpop.f32.mrb[0].mxu0
        %v4996 = vadd.f32 %v2662, %v4995
        %4997 = vmatprep.mubr.bf16.mxu0 0
        %4998 = vmatmul.mubr.bf16.gmra.mrb[0].mxu0 %v2571
        %v4999 = vpop.f32.mrb[0].mxu0
        %v5000 = vadd.f32 %v2658, %v4999
        %v5001 = vpop.f32.mrb[0].mxu0
        %v5002 = vadd.f32 %v2662, %v5001
        %v5003 = vpop.f32.mrb[0].mxu0
        %v5004 = vadd.f32 %v2658, %v5003
        %v5005 = vpop.f32.mrb[0].mxu0
        %v5006 = vadd.f32 %v2662, %v5005
        %5007 = vmatprep.mubr.bf16.mxu0 0
        %5008 = vmatmul.mubr.bf16.gmra.mrb[0].mxu0 %v2572
        %v5009 = vpop.f32.mrb[0].mxu0
        %v5010 = vadd.f32 %v2658, %v5009
        %v5011 = vpop.f32.mrb[0].mxu0
        %v5012 = vadd.f32 %v2662, %v5011
        %v5013 = vpop.f32.mrb[0].mxu0
        %v5014 = vadd.f32 %v2658, %v5013
        %v5015 = vpop.f32.mrb[0].mxu0
        %v5016 = vadd.f32 %v2662, %v5015
        %5017 = vdwg.mxu0
        %5018 = vmatprep.subr.bf16.mxu0 %v2878
        %5019 = vmatpush1.bf16.msra.mxu0 %v2877
        %5020 = vmatprep.subr.bf16.mxu0 %v2886
        %5021 = vmatpush1.bf16.msra.mxu0 %v2885
        %5022 = vmatprep.subr.bf16.mxu0 %v2894
        %5023 = vmatpush1.bf16.msra.mxu0 %v2893
        %5024 = vmatprep.subr.bf16.mxu0 %v2902
        %5025 = vmatpush1.bf16.msra.mxu0 %v2901
        %5026 = vmatprep.subr.bf16.mxu0 %v2910
        %5027 = vmatpush1.bf16.msra.mxu0 %v2909
        %5028 = vmatprep.subr.bf16.mxu0 %v2918
        %5029 = vmatpush1.bf16.msra.mxu0 %v2917
        %5030 = vmatprep.subr.bf16.mxu0 %v2926
        %5031 = vmatpush1.bf16.msra.mxu0 %v2925
        %5032 = vmatprep.subr.bf16.mxu0 %v2934
        %5033 = vmatpush1.bf16.msra.mxu0 %v2933
        %5034 = vmatprep.subr.bf16.mxu0 0
        %5035 = vmatpush1.bf16.msra.mxu0 0
        %5036 = vmatprep.subr.bf16.mxu0 0
        %5037 = vmatpush1.bf16.msra.mxu0 0
        %5038 = vmatprep.subr.bf16.mxu0 0
        %5039 = vmatpush1.bf16.msra.mxu0 0
        %5040 = vmatprep.subr.bf16.mxu0 0
        %5041 = vmatpush1.bf16.msra.mxu0 0
        %5042 = vmatprep.subr.bf16.mxu0 0
        %5043 = vmatpush1.bf16.msra.mxu0 0
        %5044 = vmatprep.subr.bf16.mxu0 0
        %5045 = vmatpush1.bf16.msra.mxu0 0
        %5046 = vmatprep.subr.bf16.mxu0 0
        %5047 = vmatpush1.bf16.msra.mxu0 0
        %5048 = vmatprep.subr.bf16.mxu0 0
        %5049 = vmatpush1.bf16.msra.mxu0 0
        %5050 = vmatprep.mubr.bf16.mxu0 0
        %5051 = vmatmul.mubr.bf16.gmra.mrb[0].mxu0 %v2509
        %v5052 = vpop.f32.mrb[0].mxu0
        %v5053 = vadd.f32 %v2666, %v5052
        %v5054 = vpop.f32.mrb[0].mxu0
        %v5055 = vadd.f32 %v2670, %v5054
        %v5056 = vpop.f32.mrb[0].mxu0
        %v5057 = vadd.f32 %v2666, %v5056
        %v5058 = vpop.f32.mrb[0].mxu0
        %v5059 = vadd.f32 %v2670, %v5058
        %5060 = vmatprep.mubr.bf16.mxu0 0
        %5061 = vmatmul.mubr.bf16.gmra.mrb[0].mxu0 %v2510
        %v5062 = vpop.f32.mrb[0].mxu0
        %v5063 = vadd.f32 %v2666, %v5062
        %v5064 = vpop.f32.mrb[0].mxu0
        %v5065 = vadd.f32 %v2670, %v5064
        %v5066 = vpop.f32.mrb[0].mxu0
        %v5067 = vadd.f32 %v2666, %v5066
        %v5068 = vpop.f32.mrb[0].mxu0
        %v5069 = vadd.f32 %v2670, %v5068
        %5070 = vmatprep.mubr.bf16.mxu0 0
        %5071 = vmatmul.mubr.bf16.gmra.mrb[0].mxu0 %v2511
        %v5072 = vpop.f32.mrb[0].mxu0
        %v5073 = vadd.f32 %v2666, %v5072
        %v5074 = vpop.f32.mrb[0].mxu0
        %v5075 = vadd.f32 %v2670, %v5074
        %v5076 = vpop.f32.mrb[0].mxu0
        %v5077 = vadd.f32 %v2666, %v5076
        %v5078 = vpop.f32.mrb[0].mxu0
        %v5079 = vadd.f32 %v2670, %v5078
        %5080 = vmatprep.mubr.bf16.mxu0 0
        %5081 = vmatmul.mubr.bf16.gmra.mrb[0].mxu0 %v2512
        %v5082 = vpop.f32.mrb[0].mxu0
        %v5083 = vadd.f32 %v2666, %v5082
        %v5084 = vpop.f32.mrb[0].mxu0
        %v5085 = vadd.f32 %v2670, %v5084
        %v5086 = vpop.f32.mrb[0].mxu0
        %v5087 = vadd.f32 %v2666, %v5086
        %v5088 = vpop.f32.mrb[0].mxu0
        %v5089 = vadd.f32 %v2670, %v5088
        %5090 = vmatprep.mubr.bf16.mxu0 0
        %5091 = vmatmul.mubr.bf16.gmra.mrb[0].mxu0 %v2513
        %v5092 = vpop.f32.mrb[0].mxu0
        %v5093 = vadd.f32 %v2666, %v5092
        %v5094 = vpop.f32.mrb[0].mxu0
        %v5095 = vadd.f32 %v2670, %v5094
        %v5096 = vpop.f32.mrb[0].mxu0
        %v5097 = vadd.f32 %v2666, %v5096
        %v5098 = vpop.f32.mrb[0].mxu0
        %v5099 = vadd.f32 %v2670, %v5098
        %5100 = vmatprep.mubr.bf16.mxu0 0
        %5101 = vmatmul.mubr.bf16.gmra.mrb[0].mxu0 %v2514
        %v5102 = vpop.f32.mrb[0].mxu0
        %v5103 = vadd.f32 %v2666, %v5102
        %v5104 = vpop.f32.mrb[0].mxu0
        %v5105 = vadd.f32 %v2670, %v5104
        %v5106 = vpop.f32.mrb[0].mxu0
        %v5107 = vadd.f32 %v2666, %v5106
        %v5108 = vpop.f32.mrb[0].mxu0
        %v5109 = vadd.f32 %v2670, %v5108
        %5110 = vmatprep.mubr.bf16.mxu0 0
        %5111 = vmatmul.mubr.bf16.gmra.mrb[0].mxu0 %v2515
        %v5112 = vpop.f32.mrb[0].mxu0
        %v5113 = vadd.f32 %v2666, %v5112
        %v5114 = vpop.f32.mrb[0].mxu0
        %v5115 = vadd.f32 %v2670, %v5114
        %v5116 = vpop.f32.mrb[0].mxu0
        %v5117 = vadd.f32 %v2666, %v5116
        %v5118 = vpop.f32.mrb[0].mxu0
        %v5119 = vadd.f32 %v2670, %v5118
        %5120 = vmatprep.mubr.bf16.mxu0 0
        %5121 = vmatmul.mubr.bf16.gmra.mrb[0].mxu0 %v2516
        %v5122 = vpop.f32.mrb[0].mxu0
        %v5123 = vadd.f32 %v2666, %v5122
        %v5124 = vpop.f32.mrb[0].mxu0
        %v5125 = vadd.f32 %v2670, %v5124
        %v5126 = vpop.f32.mrb[0].mxu0
        %v5127 = vadd.f32 %v2666, %v5126
        %v5128 = vpop.f32.mrb[0].mxu0
        %v5129 = vadd.f32 %v2670, %v5128
        %5130 = vmatprep.mubr.bf16.mxu0 0
        %5131 = vmatmul.mubr.bf16.gmra.mrb[0].mxu0 %v2517
        %v5132 = vpop.f32.mrb[0].mxu0
        %v5133 = vadd.f32 %v2666, %v5132
        %v5134 = vpop.f32.mrb[0].mxu0
        %v5135 = vadd.f32 %v2670, %v5134
        %v5136 = vpop.f32.mrb[0].mxu0
        %v5137 = vadd.f32 %v2666, %v5136
        %v5138 = vpop.f32.mrb[0].mxu0
        %v5139 = vadd.f32 %v2670, %v5138
        %5140 = vmatprep.mubr.bf16.mxu0 0
        %5141 = vmatmul.mubr.bf16.gmra.mrb[0].mxu0 %v2518
        %v5142 = vpop.f32.mrb[0].mxu0
        %v5143 = vadd.f32 %v2666, %v5142
        %v5144 = vpop.f32.mrb[0].mxu0
        %v5145 = vadd.f32 %v2670, %v5144
        %v5146 = vpop.f32.mrb[0].mxu0
        %v5147 = vadd.f32 %v2666, %v5146
        %v5148 = vpop.f32.mrb[0].mxu0
        %v5149 = vadd.f32 %v2670, %v5148
        %5150 = vmatprep.mubr.bf16.mxu0 0
        %5151 = vmatmul.mubr.bf16.gmra.mrb[0].mxu0 %v2519
        %v5152 = vpop.f32.mrb[0].mxu0
        %v5153 = vadd.f32 %v2666, %v5152
        %v5154 = vpop.f32.mrb[0].mxu0
        %v5155 = vadd.f32 %v2670, %v5154
        %v5156 = vpop.f32.mrb[0].mxu0
        %v5157 = vadd.f32 %v2666, %v5156
        %v5158 = vpop.f32.mrb[0].mxu0
        %v5159 = vadd.f32 %v2670, %v5158
        %5160 = vmatprep.mubr.bf16.mxu0 0
        %5161 = vmatmul.mubr.bf16.gmra.mrb[0].mxu0 %v2520
        %v5162 = vpop.f32.mrb[0].mxu0
        %v5163 = vadd.f32 %v2666, %v5162
        %v5164 = vpop.f32.mrb[0].mxu0
        %v5165 = vadd.f32 %v2670, %v5164
        %v5166 = vpop.f32.mrb[0].mxu0
        %v5167 = vadd.f32 %v2666, %v5166
        %v5168 = vpop.f32.mrb[0].mxu0
        %v5169 = vadd.f32 %v2670, %v5168
        %5170 = vmatprep.mubr.bf16.mxu0 0
        %5171 = vmatmul.mubr.bf16.gmra.mrb[0].mxu0 %v2521
        %v5172 = vpop.f32.mrb[0].mxu0
        %v5173 = vadd.f32 %v2666, %v5172
        %v5174 = vpop.f32.mrb[0].mxu0
        %v5175 = vadd.f32 %v2670, %v5174
        %v5176 = vpop.f32.mrb[0].mxu0
        %v5177 = vadd.f32 %v2666, %v5176
        %v5178 = vpop.f32.mrb[0].mxu0
        %v5179 = vadd.f32 %v2670, %v5178
        %5180 = vmatprep.mubr.bf16.mxu0 0
        %5181 = vmatmul.mubr.bf16.gmra.mrb[0].mxu0 %v2522
        %v5182 = vpop.f32.mrb[0].mxu0
        %v5183 = vadd.f32 %v2666, %v5182
        %v5184 = vpop.f32.mrb[0].mxu0
        %v5185 = vadd.f32 %v2670, %v5184
        %v5186 = vpop.f32.mrb[0].mxu0
        %v5187 = vadd.f32 %v2666, %v5186
        %v5188 = vpop.f32.mrb[0].mxu0
        %v5189 = vadd.f32 %v2670, %v5188
        %5190 = vmatprep.mubr.bf16.mxu0 0
        %5191 = vmatmul.mubr.bf16.gmra.mrb[0].mxu0 %v2523
        %v5192 = vpop.f32.mrb[0].mxu0
        %v5193 = vadd.f32 %v2666, %v5192
        %v5194 = vpop.f32.mrb[0].mxu0
        %v5195 = vadd.f32 %v2670, %v5194
        %v5196 = vpop.f32.mrb[0].mxu0
        %v5197 = vadd.f32 %v2666, %v5196
        %v5198 = vpop.f32.mrb[0].mxu0
        %v5199 = vadd.f32 %v2670, %v5198
        %5200 = vmatprep.mubr.bf16.mxu0 0
        %5201 = vmatmul.mubr.bf16.gmra.mrb[0].mxu0 %v2524
        %v5202 = vpop.f32.mrb[0].mxu0
        %v5203 = vadd.f32 %v2666, %v5202
        %v5204 = vpop.f32.mrb[0].mxu0
        %v5205 = vadd.f32 %v2670, %v5204
        %v5206 = vpop.f32.mrb[0].mxu0
        %v5207 = vadd.f32 %v2666, %v5206
        %v5208 = vpop.f32.mrb[0].mxu0
        %v5209 = vadd.f32 %v2670, %v5208
        %5210 = vmatprep.mubr.bf16.mxu0 0
        %5211 = vmatmul.mubr.bf16.gmra.mrb[0].mxu0 %v2525
        %v5212 = vpop.f32.mrb[0].mxu0
        %v5213 = vadd.f32 %v2666, %v5212
        %v5214 = vpop.f32.mrb[0].mxu0
        %v5215 = vadd.f32 %v2670, %v5214
        %v5216 = vpop.f32.mrb[0].mxu0
        %v5217 = vadd.f32 %v2666, %v5216
        %v5218 = vpop.f32.mrb[0].mxu0
        %v5219 = vadd.f32 %v2670, %v5218
        %5220 = vmatprep.mubr.bf16.mxu0 0
        %5221 = vmatmul.mubr.bf16.gmra.mrb[0].mxu0 %v2526
        %v5222 = vpop.f32.mrb[0].mxu0
        %v5223 = vadd.f32 %v2666, %v5222
        %v5224 = vpop.f32.mrb[0].mxu0
        %v5225 = vadd.f32 %v2670, %v5224
        %v5226 = vpop.f32.mrb[0].mxu0
        %v5227 = vadd.f32 %v2666, %v5226
        %v5228 = vpop.f32.mrb[0].mxu0
        %v5229 = vadd.f32 %v2670, %v5228
        %5230 = vmatprep.mubr.bf16.mxu0 0
        %5231 = vmatmul.mubr.bf16.gmra.mrb[0].mxu0 %v2527
        %v5232 = vpop.f32.mrb[0].mxu0
        %v5233 = vadd.f32 %v2666, %v5232
        %v5234 = vpop.f32.mrb[0].mxu0
        %v5235 = vadd.f32 %v2670, %v5234
        %v5236 = vpop.f32.mrb[0].mxu0
        %v5237 = vadd.f32 %v2666, %v5236
        %v5238 = vpop.f32.mrb[0].mxu0
        %v5239 = vadd.f32 %v2670, %v5238
        %5240 = vmatprep.mubr.bf16.mxu0 0
        %5241 = vmatmul.mubr.bf16.gmra.mrb[0].mxu0 %v2528
        %v5242 = vpop.f32.mrb[0].mxu0
        %v5243 = vadd.f32 %v2666, %v5242
        %v5244 = vpop.f32.mrb[0].mxu0
        %v5245 = vadd.f32 %v2670, %v5244
        %v5246 = vpop.f32.mrb[0].mxu0
        %v5247 = vadd.f32 %v2666, %v5246
        %v5248 = vpop.f32.mrb[0].mxu0
        %v5249 = vadd.f32 %v2670, %v5248
        %5250 = vmatprep.mubr.bf16.mxu0 0
        %5251 = vmatmul.mubr.bf16.gmra.mrb[0].mxu0 %v2529
        %v5252 = vpop.f32.mrb[0].mxu0
        %v5253 = vadd.f32 %v2666, %v5252
        %v5254 = vpop.f32.mrb[0].mxu0
        %v5255 = vadd.f32 %v2670, %v5254
        %v5256 = vpop.f32.mrb[0].mxu0
        %v5257 = vadd.f32 %v2666, %v5256
        %v5258 = vpop.f32.mrb[0].mxu0
        %v5259 = vadd.f32 %v2670, %v5258
        %5260 = vmatprep.mubr.bf16.mxu0 0
        %5261 = vmatmul.mubr.bf16.gmra.mrb[0].mxu0 %v2530
        %v5262 = vpop.f32.mrb[0].mxu0
        %v5263 = vadd.f32 %v2666, %v5262
        %v5264 = vpop.f32.mrb[0].mxu0
        %v5265 = vadd.f32 %v2670, %v5264
        %v5266 = vpop.f32.mrb[0].mxu0
        %v5267 = vadd.f32 %v2666, %v5266
        %v5268 = vpop.f32.mrb[0].mxu0
        %v5269 = vadd.f32 %v2670, %v5268
        %5270 = vmatprep.mubr.bf16.mxu0 0
        %5271 = vmatmul.mubr.bf16.gmra.mrb[0].mxu0 %v2531
        %v5272 = vpop.f32.mrb[0].mxu0
        %v5273 = vadd.f32 %v2666, %v5272
        %v5274 = vpop.f32.mrb[0].mxu0
        %v5275 = vadd.f32 %v2670, %v5274
        %v5276 = vpop.f32.mrb[0].mxu0
        %v5277 = vadd.f32 %v2666, %v5276
        %v5278 = vpop.f32.mrb[0].mxu0
        %v5279 = vadd.f32 %v2670, %v5278
        %5280 = vmatprep.mubr.bf16.mxu0 0
        %5281 = vmatmul.mubr.bf16.gmra.mrb[0].mxu0 %v2532
        %v5282 = vpop.f32.mrb[0].mxu0
        %v5283 = vadd.f32 %v2666, %v5282
        %v5284 = vpop.f32.mrb[0].mxu0
        %v5285 = vadd.f32 %v2670, %v5284
        %v5286 = vpop.f32.mrb[0].mxu0
        %v5287 = vadd.f32 %v2666, %v5286
        %v5288 = vpop.f32.mrb[0].mxu0
        %v5289 = vadd.f32 %v2670, %v5288
        %5290 = vmatprep.mubr.bf16.mxu0 0
        %5291 = vmatmul.mubr.bf16.gmra.mrb[0].mxu0 %v2533
        %v5292 = vpop.f32.mrb[0].mxu0
        %v5293 = vadd.f32 %v2666, %v5292
        %v5294 = vpop.f32.mrb[0].mxu0
        %v5295 = vadd.f32 %v2670, %v5294
        %v5296 = vpop.f32.mrb[0].mxu0
        %v5297 = vadd.f32 %v2666, %v5296
        %v5298 = vpop.f32.mrb[0].mxu0
        %v5299 = vadd.f32 %v2670, %v5298
        %5300 = vmatprep.mubr.bf16.mxu0 0
        %5301 = vmatmul.mubr.bf16.gmra.mrb[0].mxu0 %v2534
        %v5302 = vpop.f32.mrb[0].mxu0
        %v5303 = vadd.f32 %v2666, %v5302
        %v5304 = vpop.f32.mrb[0].mxu0
        %v5305 = vadd.f32 %v2670, %v5304
        %v5306 = vpop.f32.mrb[0].mxu0
        %v5307 = vadd.f32 %v2666, %v5306
        %v5308 = vpop.f32.mrb[0].mxu0
        %v5309 = vadd.f32 %v2670, %v5308
        %5310 = vmatprep.mubr.bf16.mxu0 0
        %5311 = vmatmul.mubr.bf16.gmra.mrb[0].mxu0 %v2535
        %v5312 = vpop.f32.mrb[0].mxu0
        %v5313 = vadd.f32 %v2666, %v5312
        %v5314 = vpop.f32.mrb[0].mxu0
        %v5315 = vadd.f32 %v2670, %v5314
        %v5316 = vpop.f32.mrb[0].mxu0
        %v5317 = vadd.f32 %v2666, %v5316
        %v5318 = vpop.f32.mrb[0].mxu0
        %v5319 = vadd.f32 %v2670, %v5318
        %5320 = vmatprep.mubr.bf16.mxu0 0
        %5321 = vmatmul.mubr.bf16.gmra.mrb[0].mxu0 %v2536
        %v5322 = vpop.f32.mrb[0].mxu0
        %v5323 = vadd.f32 %v2666, %v5322
        %v5324 = vpop.f32.mrb[0].mxu0
        %v5325 = vadd.f32 %v2670, %v5324
        %v5326 = vpop.f32.mrb[0].mxu0
        %v5327 = vadd.f32 %v2666, %v5326
        %v5328 = vpop.f32.mrb[0].mxu0
        %v5329 = vadd.f32 %v2670, %v5328
        %5330 = vmatprep.mubr.bf16.mxu0 0
        %5331 = vmatmul.mubr.bf16.gmra.mrb[0].mxu0 %v2537
        %v5332 = vpop.f32.mrb[0].mxu0
        %v5333 = vadd.f32 %v2666, %v5332
        %v5334 = vpop.f32.mrb[0].mxu0
        %v5335 = vadd.f32 %v2670, %v5334
        %v5336 = vpop.f32.mrb[0].mxu0
        %v5337 = vadd.f32 %v2666, %v5336
        %v5338 = vpop.f32.mrb[0].mxu0
        %v5339 = vadd.f32 %v2670, %v5338
        %5340 = vmatprep.mubr.bf16.mxu0 0
        %5341 = vmatmul.mubr.bf16.gmra.mrb[0].mxu0 %v2538
        %v5342 = vpop.f32.mrb[0].mxu0
        %v5343 = vadd.f32 %v2666, %v5342
        %v5344 = vpop.f32.mrb[0].mxu0
        %v5345 = vadd.f32 %v2670, %v5344
        %v5346 = vpop.f32.mrb[0].mxu0
        %v5347 = vadd.f32 %v2666, %v5346
        %v5348 = vpop.f32.mrb[0].mxu0
        %v5349 = vadd.f32 %v2670, %v5348
        %5350 = vmatprep.mubr.bf16.mxu0 0
        %5351 = vmatmul.mubr.bf16.gmra.mrb[0].mxu0 %v2539
        %v5352 = vpop.f32.mrb[0].mxu0
        %v5353 = vadd.f32 %v2666, %v5352
        %v5354 = vpop.f32.mrb[0].mxu0
        %v5355 = vadd.f32 %v2670, %v5354
        %v5356 = vpop.f32.mrb[0].mxu0
        %v5357 = vadd.f32 %v2666, %v5356
        %v5358 = vpop.f32.mrb[0].mxu0
        %v5359 = vadd.f32 %v2670, %v5358
        %5360 = vmatprep.mubr.bf16.mxu0 0
        %5361 = vmatmul.mubr.bf16.gmra.mrb[0].mxu0 %v2540
        %v5362 = vpop.f32.mrb[0].mxu0
        %v5363 = vadd.f32 %v2666, %v5362
        %v5364 = vpop.f32.mrb[0].mxu0
        %v5365 = vadd.f32 %v2670, %v5364
        %v5366 = vpop.f32.mrb[0].mxu0
        %v5367 = vadd.f32 %v2666, %v5366
        %v5368 = vpop.f32.mrb[0].mxu0
        %v5369 = vadd.f32 %v2670, %v5368
        %5370 = vmatprep.mubr.bf16.mxu0 0
        %5371 = vmatmul.mubr.bf16.gmra.mrb[0].mxu0 %v2541
        %v5372 = vpop.f32.mrb[0].mxu0
        %v5373 = vadd.f32 %v2666, %v5372
        %v5374 = vpop.f32.mrb[0].mxu0
        %v5375 = vadd.f32 %v2670, %v5374
        %v5376 = vpop.f32.mrb[0].mxu0
        %v5377 = vadd.f32 %v2666, %v5376
        %v5378 = vpop.f32.mrb[0].mxu0
        %v5379 = vadd.f32 %v2670, %v5378
        %5380 = vmatprep.mubr.bf16.mxu0 0
        %5381 = vmatmul.mubr.bf16.gmra.mrb[0].mxu0 %v2542
        %v5382 = vpop.f32.mrb[0].mxu0
        %v5383 = vadd.f32 %v2666, %v5382
        %v5384 = vpop.f32.mrb[0].mxu0
        %v5385 = vadd.f32 %v2670, %v5384
        %v5386 = vpop.f32.mrb[0].mxu0
        %v5387 = vadd.f32 %v2666, %v5386
        %v5388 = vpop.f32.mrb[0].mxu0
        %v5389 = vadd.f32 %v2670, %v5388
        %5390 = vmatprep.mubr.bf16.mxu0 0
        %5391 = vmatmul.mubr.bf16.gmra.mrb[0].mxu0 %v2543
        %v5392 = vpop.f32.mrb[0].mxu0
        %v5393 = vadd.f32 %v2666, %v5392
        %v5394 = vpop.f32.mrb[0].mxu0
        %v5395 = vadd.f32 %v2670, %v5394
        %v5396 = vpop.f32.mrb[0].mxu0
        %v5397 = vadd.f32 %v2666, %v5396
        %v5398 = vpop.f32.mrb[0].mxu0
        %v5399 = vadd.f32 %v2670, %v5398
        %5400 = vmatprep.mubr.bf16.mxu0 0
        %5401 = vmatmul.mubr.bf16.gmra.mrb[0].mxu0 %v2544
        %v5402 = vpop.f32.mrb[0].mxu0
        %v5403 = vadd.f32 %v2666, %v5402
        %v5404 = vpop.f32.mrb[0].mxu0
        %v5405 = vadd.f32 %v2670, %v5404
        %v5406 = vpop.f32.mrb[0].mxu0
        %v5407 = vadd.f32 %v2666, %v5406
        %v5408 = vpop.f32.mrb[0].mxu0
        %v5409 = vadd.f32 %v2670, %v5408
        %5410 = vmatprep.mubr.bf16.mxu0 0
        %5411 = vmatmul.mubr.bf16.gmra.mrb[0].mxu0 %v2545
        %v5412 = vpop.f32.mrb[0].mxu0
        %v5413 = vadd.f32 %v2666, %v5412
        %v5414 = vpop.f32.mrb[0].mxu0
        %v5415 = vadd.f32 %v2670, %v5414
        %v5416 = vpop.f32.mrb[0].mxu0
        %v5417 = vadd.f32 %v2666, %v5416
        %v5418 = vpop.f32.mrb[0].mxu0
        %v5419 = vadd.f32 %v2670, %v5418
        %5420 = vmatprep.mubr.bf16.mxu0 0
        %5421 = vmatmul.mubr.bf16.gmra.mrb[0].mxu0 %v2546
        %v5422 = vpop.f32.mrb[0].mxu0
        %v5423 = vadd.f32 %v2666, %v5422
        %v5424 = vpop.f32.mrb[0].mxu0
        %v5425 = vadd.f32 %v2670, %v5424
        %v5426 = vpop.f32.mrb[0].mxu0
        %v5427 = vadd.f32 %v2666, %v5426
        %v5428 = vpop.f32.mrb[0].mxu0
        %v5429 = vadd.f32 %v2670, %v5428
        %5430 = vmatprep.mubr.bf16.mxu0 0
        %5431 = vmatmul.mubr.bf16.gmra.mrb[0].mxu0 %v2547
        %v5432 = vpop.f32.mrb[0].mxu0
        %v5433 = vadd.f32 %v2666, %v5432
        %v5434 = vpop.f32.mrb[0].mxu0
        %v5435 = vadd.f32 %v2670, %v5434
        %v5436 = vpop.f32.mrb[0].mxu0
        %v5437 = vadd.f32 %v2666, %v5436
        %v5438 = vpop.f32.mrb[0].mxu0
        %v5439 = vadd.f32 %v2670, %v5438
        %5440 = vmatprep.mubr.bf16.mxu0 0
        %5441 = vmatmul.mubr.bf16.gmra.mrb[0].mxu0 %v2548
        %v5442 = vpop.f32.mrb[0].mxu0
        %v5443 = vadd.f32 %v2666, %v5442
        %v5444 = vpop.f32.mrb[0].mxu0
        %v5445 = vadd.f32 %v2670, %v5444
        %v5446 = vpop.f32.mrb[0].mxu0
        %v5447 = vadd.f32 %v2666, %v5446
        %v5448 = vpop.f32.mrb[0].mxu0
        %v5449 = vadd.f32 %v2670, %v5448
        %5450 = vmatprep.mubr.bf16.mxu0 0
        %5451 = vmatmul.mubr.bf16.gmra.mrb[0].mxu0 %v2549
        %v5452 = vpop.f32.mrb[0].mxu0
        %v5453 = vadd.f32 %v2666, %v5452
        %v5454 = vpop.f32.mrb[0].mxu0
        %v5455 = vadd.f32 %v2670, %v5454
        %v5456 = vpop.f32.mrb[0].mxu0
        %v5457 = vadd.f32 %v2666, %v5456
        %v5458 = vpop.f32.mrb[0].mxu0
        %v5459 = vadd.f32 %v2670, %v5458
        %5460 = vmatprep.mubr.bf16.mxu0 0
        %5461 = vmatmul.mubr.bf16.gmra.mrb[0].mxu0 %v2550
        %v5462 = vpop.f32.mrb[0].mxu0
        %v5463 = vadd.f32 %v2666, %v5462
        %v5464 = vpop.f32.mrb[0].mxu0
        %v5465 = vadd.f32 %v2670, %v5464
        %v5466 = vpop.f32.mrb[0].mxu0
        %v5467 = vadd.f32 %v2666, %v5466
        %v5468 = vpop.f32.mrb[0].mxu0
        %v5469 = vadd.f32 %v2670, %v5468
        %5470 = vmatprep.mubr.bf16.mxu0 0
        %5471 = vmatmul.mubr.bf16.gmra.mrb[0].mxu0 %v2551
        %v5472 = vpop.f32.mrb[0].mxu0
        %v5473 = vadd.f32 %v2666, %v5472
        %v5474 = vpop.f32.mrb[0].mxu0
        %v5475 = vadd.f32 %v2670, %v5474
        %v5476 = vpop.f32.mrb[0].mxu0
        %v5477 = vadd.f32 %v2666, %v5476
        %v5478 = vpop.f32.mrb[0].mxu0
        %v5479 = vadd.f32 %v2670, %v5478
        %5480 = vmatprep.mubr.bf16.mxu0 0
        %5481 = vmatmul.mubr.bf16.gmra.mrb[0].mxu0 %v2552
        %v5482 = vpop.f32.mrb[0].mxu0
        %v5483 = vadd.f32 %v2666, %v5482
        %v5484 = vpop.f32.mrb[0].mxu0
        %v5485 = vadd.f32 %v2670, %v5484
        %v5486 = vpop.f32.mrb[0].mxu0
        %v5487 = vadd.f32 %v2666, %v5486
        %v5488 = vpop.f32.mrb[0].mxu0
        %v5489 = vadd.f32 %v2670, %v5488
        %5490 = vmatprep.mubr.bf16.mxu0 0
        %5491 = vmatmul.mubr.bf16.gmra.mrb[0].mxu0 %v2553
        %v5492 = vpop.f32.mrb[0].mxu0
        %v5493 = vadd.f32 %v2666, %v5492
        %v5494 = vpop.f32.mrb[0].mxu0
        %v5495 = vadd.f32 %v2670, %v5494
        %v5496 = vpop.f32.mrb[0].mxu0
        %v5497 = vadd.f32 %v2666, %v5496
        %v5498 = vpop.f32.mrb[0].mxu0
        %v5499 = vadd.f32 %v2670, %v5498
        %5500 = vmatprep.mubr.bf16.mxu0 0
        %5501 = vmatmul.mubr.bf16.gmra.mrb[0].mxu0 %v2554
        %v5502 = vpop.f32.mrb[0].mxu0
        %v5503 = vadd.f32 %v2666, %v5502
        %v5504 = vpop.f32.mrb[0].mxu0
        %v5505 = vadd.f32 %v2670, %v5504
        %v5506 = vpop.f32.mrb[0].mxu0
        %v5507 = vadd.f32 %v2666, %v5506
        %v5508 = vpop.f32.mrb[0].mxu0
        %v5509 = vadd.f32 %v2670, %v5508
        %5510 = vmatprep.mubr.bf16.mxu0 0
        %5511 = vmatmul.mubr.bf16.gmra.mrb[0].mxu0 %v2555
        %v5512 = vpop.f32.mrb[0].mxu0
        %v5513 = vadd.f32 %v2666, %v5512
        %v5514 = vpop.f32.mrb[0].mxu0
        %v5515 = vadd.f32 %v2670, %v5514
        %v5516 = vpop.f32.mrb[0].mxu0
        %v5517 = vadd.f32 %v2666, %v5516
        %v5518 = vpop.f32.mrb[0].mxu0
        %v5519 = vadd.f32 %v2670, %v5518
        %5520 = vmatprep.mubr.bf16.mxu0 0
        %5521 = vmatmul.mubr.bf16.gmra.mrb[0].mxu0 %v2556
        %v5522 = vpop.f32.mrb[0].mxu0
        %v5523 = vadd.f32 %v2666, %v5522
        %v5524 = vpop.f32.mrb[0].mxu0
        %v5525 = vadd.f32 %v2670, %v5524
        %v5526 = vpop.f32.mrb[0].mxu0
        %v5527 = vadd.f32 %v2666, %v5526
        %v5528 = vpop.f32.mrb[0].mxu0
        %v5529 = vadd.f32 %v2670, %v5528
        %5530 = vmatprep.mubr.bf16.mxu0 0
        %5531 = vmatmul.mubr.bf16.gmra.mrb[0].mxu0 %v2557
        %v5532 = vpop.f32.mrb[0].mxu0
        %v5533 = vadd.f32 %v2666, %v5532
        %v5534 = vpop.f32.mrb[0].mxu0
        %v5535 = vadd.f32 %v2670, %v5534
        %v5536 = vpop.f32.mrb[0].mxu0
        %v5537 = vadd.f32 %v2666, %v5536
        %v5538 = vpop.f32.mrb[0].mxu0
        %v5539 = vadd.f32 %v2670, %v5538
        %5540 = vmatprep.mubr.bf16.mxu0 0
        %5541 = vmatmul.mubr.bf16.gmra.mrb[0].mxu0 %v2558
        %v5542 = vpop.f32.mrb[0].mxu0
        %v5543 = vadd.f32 %v2666, %v5542
        %v5544 = vpop.f32.mrb[0].mxu0
        %v5545 = vadd.f32 %v2670, %v5544
        %v5546 = vpop.f32.mrb[0].mxu0
        %v5547 = vadd.f32 %v2666, %v5546
        %v5548 = vpop.f32.mrb[0].mxu0
        %v5549 = vadd.f32 %v2670, %v5548
        %5550 = vmatprep.mubr.bf16.mxu0 0
        %5551 = vmatmul.mubr.bf16.gmra.mrb[0].mxu0 %v2559
        %v5552 = vpop.f32.mrb[0].mxu0
        %v5553 = vadd.f32 %v2666, %v5552
        %v5554 = vpop.f32.mrb[0].mxu0
        %v5555 = vadd.f32 %v2670, %v5554
        %v5556 = vpop.f32.mrb[0].mxu0
        %v5557 = vadd.f32 %v2666, %v5556
        %v5558 = vpop.f32.mrb[0].mxu0
        %v5559 = vadd.f32 %v2670, %v5558
        %5560 = vmatprep.mubr.bf16.mxu0 0
        %5561 = vmatmul.mubr.bf16.gmra.mrb[0].mxu0 %v2560
        %v5562 = vpop.f32.mrb[0].mxu0
        %v5563 = vadd.f32 %v2666, %v5562
        %v5564 = vpop.f32.mrb[0].mxu0
        %v5565 = vadd.f32 %v2670, %v5564
        %v5566 = vpop.f32.mrb[0].mxu0
        %v5567 = vadd.f32 %v2666, %v5566
        %v5568 = vpop.f32.mrb[0].mxu0
        %v5569 = vadd.f32 %v2670, %v5568
        %5570 = vmatprep.mubr.bf16.mxu0 0
        %5571 = vmatmul.mubr.bf16.gmra.mrb[0].mxu0 %v2561
        %v5572 = vpop.f32.mrb[0].mxu0
        %v5573 = vadd.f32 %v2666, %v5572
        %v5574 = vpop.f32.mrb[0].mxu0
        %v5575 = vadd.f32 %v2670, %v5574
        %v5576 = vpop.f32.mrb[0].mxu0
        %v5577 = vadd.f32 %v2666, %v5576
        %v5578 = vpop.f32.mrb[0].mxu0
        %v5579 = vadd.f32 %v2670, %v5578
        %5580 = vmatprep.mubr.bf16.mxu0 0
        %5581 = vmatmul.mubr.bf16.gmra.mrb[0].mxu0 %v2562
        %v5582 = vpop.f32.mrb[0].mxu0
        %v5583 = vadd.f32 %v2666, %v5582
        %v5584 = vpop.f32.mrb[0].mxu0
        %v5585 = vadd.f32 %v2670, %v5584
        %v5586 = vpop.f32.mrb[0].mxu0
        %v5587 = vadd.f32 %v2666, %v5586
        %v5588 = vpop.f32.mrb[0].mxu0
        %v5589 = vadd.f32 %v2670, %v5588
        %5590 = vmatprep.mubr.bf16.mxu0 0
        %5591 = vmatmul.mubr.bf16.gmra.mrb[0].mxu0 %v2563
        %v5592 = vpop.f32.mrb[0].mxu0
        %v5593 = vadd.f32 %v2666, %v5592
        %v5594 = vpop.f32.mrb[0].mxu0
        %v5595 = vadd.f32 %v2670, %v5594
        %v5596 = vpop.f32.mrb[0].mxu0
        %v5597 = vadd.f32 %v2666, %v5596
        %v5598 = vpop.f32.mrb[0].mxu0
        %v5599 = vadd.f32 %v2670, %v5598
        %5600 = vmatprep.mubr.bf16.mxu0 0
        %5601 = vmatmul.mubr.bf16.gmra.mrb[0].mxu0 %v2564
        %v5602 = vpop.f32.mrb[0].mxu0
        %v5603 = vadd.f32 %v2666, %v5602
        %v5604 = vpop.f32.mrb[0].mxu0
        %v5605 = vadd.f32 %v2670, %v5604
        %v5606 = vpop.f32.mrb[0].mxu0
        %v5607 = vadd.f32 %v2666, %v5606
        %v5608 = vpop.f32.mrb[0].mxu0
        %v5609 = vadd.f32 %v2670, %v5608
        %5610 = vmatprep.mubr.bf16.mxu0 0
        %5611 = vmatmul.mubr.bf16.gmra.mrb[0].mxu0 %v2565
        %v5612 = vpop.f32.mrb[0].mxu0
        %v5613 = vadd.f32 %v2666, %v5612
        %v5614 = vpop.f32.mrb[0].mxu0
        %v5615 = vadd.f32 %v2670, %v5614
        %v5616 = vpop.f32.mrb[0].mxu0
        %v5617 = vadd.f32 %v2666, %v5616
        %v5618 = vpop.f32.mrb[0].mxu0
        %v5619 = vadd.f32 %v2670, %v5618
        %5620 = vmatprep.mubr.bf16.mxu0 0
        %5621 = vmatmul.mubr.bf16.gmra.mrb[0].mxu0 %v2566
        %v5622 = vpop.f32.mrb[0].mxu0
        %v5623 = vadd.f32 %v2666, %v5622
        %v5624 = vpop.f32.mrb[0].mxu0
        %v5625 = vadd.f32 %v2670, %v5624
        %v5626 = vpop.f32.mrb[0].mxu0
        %v5627 = vadd.f32 %v2666, %v5626
        %v5628 = vpop.f32.mrb[0].mxu0
        %v5629 = vadd.f32 %v2670, %v5628
        %5630 = vmatprep.mubr.bf16.mxu0 0
        %5631 = vmatmul.mubr.bf16.gmra.mrb[0].mxu0 %v2567
        %v5632 = vpop.f32.mrb[0].mxu0
        %v5633 = vadd.f32 %v2666, %v5632
        %v5634 = vpop.f32.mrb[0].mxu0
        %v5635 = vadd.f32 %v2670, %v5634
        %v5636 = vpop.f32.mrb[0].mxu0
        %v5637 = vadd.f32 %v2666, %v5636
        %v5638 = vpop.f32.mrb[0].mxu0
        %v5639 = vadd.f32 %v2670, %v5638
        %5640 = vmatprep.mubr.bf16.mxu0 0
        %5641 = vmatmul.mubr.bf16.gmra.mrb[0].mxu0 %v2568
        %v5642 = vpop.f32.mrb[0].mxu0
        %v5643 = vadd.f32 %v2666, %v5642
        %v5644 = vpop.f32.mrb[0].mxu0
        %v5645 = vadd.f32 %v2670, %v5644
        %v5646 = vpop.f32.mrb[0].mxu0
        %v5647 = vadd.f32 %v2666, %v5646
        %v5648 = vpop.f32.mrb[0].mxu0
        %v5649 = vadd.f32 %v2670, %v5648
        %5650 = vmatprep.mubr.bf16.mxu0 0
        %5651 = vmatmul.mubr.bf16.gmra.mrb[0].mxu0 %v2569
        %v5652 = vpop.f32.mrb[0].mxu0
        %v5653 = vadd.f32 %v2666, %v5652
        %v5654 = vpop.f32.mrb[0].mxu0
        %v5655 = vadd.f32 %v2670, %v5654
        %v5656 = vpop.f32.mrb[0].mxu0
        %v5657 = vadd.f32 %v2666, %v5656
        %v5658 = vpop.f32.mrb[0].mxu0
        %v5659 = vadd.f32 %v2670, %v5658
        %5660 = vmatprep.mubr.bf16.mxu0 0
        %5661 = vmatmul.mubr.bf16.gmra.mrb[0].mxu0 %v2570
        %v5662 = vpop.f32.mrb[0].mxu0
        %v5663 = vadd.f32 %v2666, %v5662
        %v5664 = vpop.f32.mrb[0].mxu0
        %v5665 = vadd.f32 %v2670, %v5664
        %v5666 = vpop.f32.mrb[0].mxu0
        %v5667 = vadd.f32 %v2666, %v5666
        %v5668 = vpop.f32.mrb[0].mxu0
        %v5669 = vadd.f32 %v2670, %v5668
        %5670 = vmatprep.mubr.bf16.mxu0 0
        %5671 = vmatmul.mubr.bf16.gmra.mrb[0].mxu0 %v2571
        %v5672 = vpop.f32.mrb[0].mxu0
        %v5673 = vadd.f32 %v2666, %v5672
        %v5674 = vpop.f32.mrb[0].mxu0
        %v5675 = vadd.f32 %v2670, %v5674
        %v5676 = vpop.f32.mrb[0].mxu0
        %v5677 = vadd.f32 %v2666, %v5676
        %v5678 = vpop.f32.mrb[0].mxu0
        %v5679 = vadd.f32 %v2670, %v5678
        %5680 = vmatprep.mubr.bf16.mxu0 0
        %5681 = vmatmul.mubr.bf16.gmra.mrb[0].mxu0 %v2572
        %v5682 = vpop.f32.mrb[0].mxu0
        %v5683 = vadd.f32 %v2666, %v5682
        %v5684 = vpop.f32.mrb[0].mxu0
        %v5685 = vadd.f32 %v2670, %v5684
        %v5686 = vpop.f32.mrb[0].mxu0
        %v5687 = vadd.f32 %v2666, %v5686
        %v5688 = vpop.f32.mrb[0].mxu0
        %v5689 = vadd.f32 %v2670, %v5688
        %5690 = vdwg.mxu0
        %v5691 = vmax.f32 %v3034, 0.0
        %v5692 = vmax.f32 %v3036, 0.0
        %v5693 = vmax.f32 %v3707, 0.0
        %v5694 = vmax.f32 %v3709, 0.0
        %v5695 = vmax.f32 %v4380, 0.0
        %v5696 = vmax.f32 %v4382, 0.0
        %v5697 = vmax.f32 %v5053, 0.0
        %v5698 = vmax.f32 %v5055, 0.0
        %v5699 = vmax.f32 %v3038, 0.0
        %v5700 = vmax.f32 %v3040, 0.0
        %v5701 = vmax.f32 %v3711, 0.0
        %v5702 = vmax.f32 %v3713, 0.0
        %v5703 = vmax.f32 %v4384, 0.0
        %v5704 = vmax.f32 %v4386, 0.0
        %v5705 = vmax.f32 %v5057, 0.0
        %v5706 = vmax.f32 %v5059, 0.0
        %v5707 = vmax.f32 %v3044, 0.0
        %v5708 = vmax.f32 %v3046, 0.0
        %v5709 = vmax.f32 %v3717, 0.0
        %v5710 = vmax.f32 %v3719, 0.0
        %v5711 = vmax.f32 %v4390, 0.0
        %v5712 = vmax.f32 %v4392, 0.0
        %v5713 = vmax.f32 %v5063, 0.0
        %v5714 = vmax.f32 %v5065, 0.0
        %v5715 = vmax.f32 %v3048, 0.0
        %v5716 = vmax.f32 %v3050, 0.0
        %v5717 = vmax.f32 %v3721, 0.0
        %v5718 = vmax.f32 %v3723, 0.0
        %v5719 = vmax.f32 %v4394, 0.0
        %v5720 = vmax.f32 %v4396, 0.0
        %v5721 = vmax.f32 %v5067, 0.0
        %v5722 = vmax.f32 %v5069, 0.0
        %v5723 = vmax.f32 %v3054, 0.0
        %v5724 = vmax.f32 %v3056, 0.0
        %v5725 = vmax.f32 %v3727, 0.0
        %v5726 = vmax.f32 %v3729, 0.0
        %v5727 = vmax.f32 %v4400, 0.0
        %v5728 = vmax.f32 %v4402, 0.0
        %v5729 = vmax.f32 %v5073, 0.0
        %v5730 = vmax.f32 %v5075, 0.0
        %v5731 = vmax.f32 %v3058, 0.0
        %v5732 = vmax.f32 %v3060, 0.0
        %v5733 = vmax.f32 %v3731, 0.0
        %v5734 = vmax.f32 %v3733, 0.0
        %v5735 = vmax.f32 %v4404, 0.0
        %v5736 = vmax.f32 %v4406, 0.0
        %v5737 = vmax.f32 %v5077, 0.0
        %v5738 = vmax.f32 %v5079, 0.0
        %v5739 = vmax.f32 %v3064, 0.0
        %v5740 = vmax.f32 %v3066, 0.0
        %v5741 = vmax.f32 %v3737, 0.0
        %v5742 = vmax.f32 %v3739, 0.0
        %v5743 = vmax.f32 %v4410, 0.0
        %v5744 = vmax.f32 %v4412, 0.0
        %v5745 = vmax.f32 %v5083, 0.0
        %v5746 = vmax.f32 %v5085, 0.0
        %v5747 = vmax.f32 %v3068, 0.0
        %v5748 = vmax.f32 %v3070, 0.0
        %v5749 = vmax.f32 %v3741, 0.0
        %v5750 = vmax.f32 %v3743, 0.0
        %v5751 = vmax.f32 %v4414, 0.0
        %v5752 = vmax.f32 %v4416, 0.0
        %v5753 = vmax.f32 %v5087, 0.0
        %v5754 = vmax.f32 %v5089, 0.0
        %v5755 = vmax.f32 %v3074, 0.0
        %v5756 = vmax.f32 %v3076, 0.0
        %v5757 = vmax.f32 %v3747, 0.0
        %v5758 = vmax.f32 %v3749, 0.0
        %v5759 = vmax.f32 %v4420, 0.0
        %v5760 = vmax.f32 %v4422, 0.0
        %v5761 = vmax.f32 %v5093, 0.0
        %v5762 = vmax.f32 %v5095, 0.0
        %v5763 = vmax.f32 %v3078, 0.0
        %v5764 = vmax.f32 %v3080, 0.0
        %v5765 = vmax.f32 %v3751, 0.0
        %v5766 = vmax.f32 %v3753, 0.0
        %v5767 = vmax.f32 %v4424, 0.0
        %v5768 = vmax.f32 %v4426, 0.0
        %v5769 = vmax.f32 %v5097, 0.0
        %v5770 = vmax.f32 %v5099, 0.0
        %v5771 = vmax.f32 %v3084, 0.0
        %v5772 = vmax.f32 %v3086, 0.0
        %v5773 = vmax.f32 %v3757, 0.0
        %v5774 = vmax.f32 %v3759, 0.0
        %v5775 = vmax.f32 %v4430, 0.0
        %v5776 = vmax.f32 %v4432, 0.0
        %v5777 = vmax.f32 %v5103, 0.0
        %v5778 = vmax.f32 %v5105, 0.0
        %v5779 = vmax.f32 %v3088, 0.0
        %v5780 = vmax.f32 %v3090, 0.0
        %v5781 = vmax.f32 %v3761, 0.0
        %v5782 = vmax.f32 %v3763, 0.0
        %v5783 = vmax.f32 %v4434, 0.0
        %v5784 = vmax.f32 %v4436, 0.0
        %v5785 = vmax.f32 %v5107, 0.0
        %v5786 = vmax.f32 %v5109, 0.0
        %v5787 = vmax.f32 %v3094, 0.0
        %v5788 = vmax.f32 %v3096, 0.0
        %v5789 = vmax.f32 %v3767, 0.0
        %v5790 = vmax.f32 %v3769, 0.0
        %v5791 = vmax.f32 %v4440, 0.0
        %v5792 = vmax.f32 %v4442, 0.0
        %v5793 = vmax.f32 %v5113, 0.0
        %v5794 = vmax.f32 %v5115, 0.0
        %v5795 = vmax.f32 %v3098, 0.0
        %v5796 = vmax.f32 %v3100, 0.0
        %v5797 = vmax.f32 %v3771, 0.0
        %v5798 = vmax.f32 %v3773, 0.0
        %v5799 = vmax.f32 %v4444, 0.0
        %v5800 = vmax.f32 %v4446, 0.0
        %v5801 = vmax.f32 %v5117, 0.0
        %v5802 = vmax.f32 %v5119, 0.0
        %v5803 = vmax.f32 %v3104, 0.0
        %v5804 = vmax.f32 %v3106, 0.0
        %v5805 = vmax.f32 %v3777, 0.0
        %v5806 = vmax.f32 %v3779, 0.0
        %v5807 = vmax.f32 %v4450, 0.0
        %v5808 = vmax.f32 %v4452, 0.0
        %v5809 = vmax.f32 %v5123, 0.0
        %v5810 = vmax.f32 %v5125, 0.0
        %v5811 = vmax.f32 %v3108, 0.0
        %v5812 = vmax.f32 %v3110, 0.0
        %v5813 = vmax.f32 %v3781, 0.0
        %v5814 = vmax.f32 %v3783, 0.0
        %v5815 = vmax.f32 %v4454, 0.0
        %v5816 = vmax.f32 %v4456, 0.0
        %v5817 = vmax.f32 %v5127, 0.0
        %v5818 = vmax.f32 %v5129, 0.0
        %v5819 = vmax.f32 %v3114, 0.0
        %v5820 = vmax.f32 %v3116, 0.0
        %v5821 = vmax.f32 %v3787, 0.0
        %v5822 = vmax.f32 %v3789, 0.0
        %v5823 = vmax.f32 %v4460, 0.0
        %v5824 = vmax.f32 %v4462, 0.0
        %v5825 = vmax.f32 %v5133, 0.0
        %v5826 = vmax.f32 %v5135, 0.0
        %v5827 = vmax.f32 %v3118, 0.0
        %v5828 = vmax.f32 %v3120, 0.0
        %v5829 = vmax.f32 %v3791, 0.0
        %v5830 = vmax.f32 %v3793, 0.0
        %v5831 = vmax.f32 %v4464, 0.0
        %v5832 = vmax.f32 %v4466, 0.0
        %v5833 = vmax.f32 %v5137, 0.0
        %v5834 = vmax.f32 %v5139, 0.0
        %v5835 = vmax.f32 %v3124, 0.0
        %v5836 = vmax.f32 %v3126, 0.0
        %v5837 = vmax.f32 %v3797, 0.0
        %v5838 = vmax.f32 %v3799, 0.0
        %v5839 = vmax.f32 %v4470, 0.0
        %v5840 = vmax.f32 %v4472, 0.0
        %v5841 = vmax.f32 %v5143, 0.0
        %v5842 = vmax.f32 %v5145, 0.0
        %v5843 = vmax.f32 %v3128, 0.0
        %v5844 = vmax.f32 %v3130, 0.0
        %v5845 = vmax.f32 %v3801, 0.0
        %v5846 = vmax.f32 %v3803, 0.0
        %v5847 = vmax.f32 %v4474, 0.0
        %v5848 = vmax.f32 %v4476, 0.0
        %v5849 = vmax.f32 %v5147, 0.0
        %v5850 = vmax.f32 %v5149, 0.0
        %v5851 = vmax.f32 %v3134, 0.0
        %v5852 = vmax.f32 %v3136, 0.0
        %v5853 = vmax.f32 %v3807, 0.0
        %v5854 = vmax.f32 %v3809, 0.0
        %v5855 = vmax.f32 %v4480, 0.0
        %v5856 = vmax.f32 %v4482, 0.0
        %v5857 = vmax.f32 %v5153, 0.0
        %v5858 = vmax.f32 %v5155, 0.0
        %v5859 = vmax.f32 %v3138, 0.0
        %v5860 = vmax.f32 %v3140, 0.0
        %v5861 = vmax.f32 %v3811, 0.0
        %v5862 = vmax.f32 %v3813, 0.0
        %v5863 = vmax.f32 %v4484, 0.0
        %v5864 = vmax.f32 %v4486, 0.0
        %v5865 = vmax.f32 %v5157, 0.0
        %v5866 = vmax.f32 %v5159, 0.0
        %v5867 = vmax.f32 %v3144, 0.0
        %v5868 = vmax.f32 %v3146, 0.0
        %v5869 = vmax.f32 %v3817, 0.0
        %v5870 = vmax.f32 %v3819, 0.0
        %v5871 = vmax.f32 %v4490, 0.0
        %v5872 = vmax.f32 %v4492, 0.0
        %v5873 = vmax.f32 %v5163, 0.0
        %v5874 = vmax.f32 %v5165, 0.0
        %v5875 = vmax.f32 %v3148, 0.0
        %v5876 = vmax.f32 %v3150, 0.0
        %v5877 = vmax.f32 %v3821, 0.0
        %v5878 = vmax.f32 %v3823, 0.0
        %v5879 = vmax.f32 %v4494, 0.0
        %v5880 = vmax.f32 %v4496, 0.0
        %v5881 = vmax.f32 %v5167, 0.0
        %v5882 = vmax.f32 %v5169, 0.0
        %v5883 = vmax.f32 %v3154, 0.0
        %v5884 = vmax.f32 %v3156, 0.0
        %v5885 = vmax.f32 %v3827, 0.0
        %v5886 = vmax.f32 %v3829, 0.0
        %v5887 = vmax.f32 %v4500, 0.0
        %v5888 = vmax.f32 %v4502, 0.0
        %v5889 = vmax.f32 %v5173, 0.0
        %v5890 = vmax.f32 %v5175, 0.0
        %v5891 = vmax.f32 %v3158, 0.0
        %v5892 = vmax.f32 %v3160, 0.0
        %v5893 = vmax.f32 %v3831, 0.0
        %v5894 = vmax.f32 %v3833, 0.0
        %v5895 = vmax.f32 %v4504, 0.0
        %v5896 = vmax.f32 %v4506, 0.0
        %v5897 = vmax.f32 %v5177, 0.0
        %v5898 = vmax.f32 %v5179, 0.0
        %v5899 = vmax.f32 %v3164, 0.0
        %v5900 = vmax.f32 %v3166, 0.0
        %v5901 = vmax.f32 %v3837, 0.0
        %v5902 = vmax.f32 %v3839, 0.0
        %v5903 = vmax.f32 %v4510, 0.0
        %v5904 = vmax.f32 %v4512, 0.0
        %v5905 = vmax.f32 %v5183, 0.0
        %v5906 = vmax.f32 %v5185, 0.0
        %v5907 = vmax.f32 %v3168, 0.0
        %v5908 = vmax.f32 %v3170, 0.0
        %v5909 = vmax.f32 %v3841, 0.0
        %v5910 = vmax.f32 %v3843, 0.0
        %v5911 = vmax.f32 %v4514, 0.0
        %v5912 = vmax.f32 %v4516, 0.0
        %v5913 = vmax.f32 %v5187, 0.0
        %v5914 = vmax.f32 %v5189, 0.0
        %v5915 = vmax.f32 %v3174, 0.0
        %v5916 = vmax.f32 %v3176, 0.0
        %v5917 = vmax.f32 %v3847, 0.0
        %v5918 = vmax.f32 %v3849, 0.0
        %v5919 = vmax.f32 %v4520, 0.0
        %v5920 = vmax.f32 %v4522, 0.0
        %v5921 = vmax.f32 %v5193, 0.0
        %v5922 = vmax.f32 %v5195, 0.0
        %v5923 = vmax.f32 %v3178, 0.0
        %v5924 = vmax.f32 %v3180, 0.0
        %v5925 = vmax.f32 %v3851, 0.0
        %v5926 = vmax.f32 %v3853, 0.0
        %v5927 = vmax.f32 %v4524, 0.0
        %v5928 = vmax.f32 %v4526, 0.0
        %v5929 = vmax.f32 %v5197, 0.0
        %v5930 = vmax.f32 %v5199, 0.0
        %v5931 = vmax.f32 %v3184, 0.0
        %v5932 = vmax.f32 %v3186, 0.0
        %v5933 = vmax.f32 %v3857, 0.0
        %v5934 = vmax.f32 %v3859, 0.0
        %v5935 = vmax.f32 %v4530, 0.0
        %v5936 = vmax.f32 %v4532, 0.0
        %v5937 = vmax.f32 %v5203, 0.0
        %v5938 = vmax.f32 %v5205, 0.0
        %v5939 = vmax.f32 %v3188, 0.0
        %v5940 = vmax.f32 %v3190, 0.0
        %v5941 = vmax.f32 %v3861, 0.0
        %v5942 = vmax.f32 %v3863, 0.0
        %v5943 = vmax.f32 %v4534, 0.0
        %v5944 = vmax.f32 %v4536, 0.0
        %v5945 = vmax.f32 %v5207, 0.0
        %v5946 = vmax.f32 %v5209, 0.0
        %v5947 = vmax.f32 %v3194, 0.0
        %v5948 = vmax.f32 %v3196, 0.0
        %v5949 = vmax.f32 %v3867, 0.0
        %v5950 = vmax.f32 %v3869, 0.0
        %v5951 = vmax.f32 %v4540, 0.0
        %v5952 = vmax.f32 %v4542, 0.0
        %v5953 = vmax.f32 %v5213, 0.0
        %v5954 = vmax.f32 %v5215, 0.0
        %v5955 = vmax.f32 %v3198, 0.0
        %v5956 = vmax.f32 %v3200, 0.0
        %v5957 = vmax.f32 %v3871, 0.0
        %v5958 = vmax.f32 %v3873, 0.0
        %v5959 = vmax.f32 %v4544, 0.0
        %v5960 = vmax.f32 %v4546, 0.0
        %v5961 = vmax.f32 %v5217, 0.0
        %v5962 = vmax.f32 %v5219, 0.0
        %v5963 = vmax.f32 %v3204, 0.0
        %v5964 = vmax.f32 %v3206, 0.0
        %v5965 = vmax.f32 %v3877, 0.0
        %v5966 = vmax.f32 %v3879, 0.0
        %v5967 = vmax.f32 %v4550, 0.0
        %v5968 = vmax.f32 %v4552, 0.0
        %v5969 = vmax.f32 %v5223, 0.0
        %v5970 = vmax.f32 %v5225, 0.0
        %v5971 = vmax.f32 %v3208, 0.0
        %v5972 = vmax.f32 %v3210, 0.0
        %v5973 = vmax.f32 %v3881, 0.0
        %v5974 = vmax.f32 %v3883, 0.0
        %v5975 = vmax.f32 %v4554, 0.0
        %v5976 = vmax.f32 %v4556, 0.0
        %v5977 = vmax.f32 %v5227, 0.0
        %v5978 = vmax.f32 %v5229, 0.0
        %v5979 = vmax.f32 %v3214, 0.0
        %v5980 = vmax.f32 %v3216, 0.0
        %v5981 = vmax.f32 %v3887, 0.0
        %v5982 = vmax.f32 %v3889, 0.0
        %v5983 = vmax.f32 %v4560, 0.0
        %v5984 = vmax.f32 %v4562, 0.0
        %v5985 = vmax.f32 %v5233, 0.0
        %v5986 = vmax.f32 %v5235, 0.0
        %v5987 = vmax.f32 %v3218, 0.0
        %v5988 = vmax.f32 %v3220, 0.0
        %v5989 = vmax.f32 %v3891, 0.0
        %v5990 = vmax.f32 %v3893, 0.0
        %v5991 = vmax.f32 %v4564, 0.0
        %v5992 = vmax.f32 %v4566, 0.0
        %v5993 = vmax.f32 %v5237, 0.0
        %v5994 = vmax.f32 %v5239, 0.0
        %v5995 = vmax.f32 %v3224, 0.0
        %v5996 = vmax.f32 %v3226, 0.0
        %v5997 = vmax.f32 %v3897, 0.0
        %v5998 = vmax.f32 %v3899, 0.0
        %v5999 = vmax.f32 %v4570, 0.0
        %v6000 = vmax.f32 %v4572, 0.0
        %v6001 = vmax.f32 %v5243, 0.0
        %v6002 = vmax.f32 %v5245, 0.0
        %v6003 = vmax.f32 %v3228, 0.0
        %v6004 = vmax.f32 %v3230, 0.0
        %v6005 = vmax.f32 %v3901, 0.0
        %v6006 = vmax.f32 %v3903, 0.0
        %v6007 = vmax.f32 %v4574, 0.0
        %v6008 = vmax.f32 %v4576, 0.0
        %v6009 = vmax.f32 %v5247, 0.0
        %v6010 = vmax.f32 %v5249, 0.0
        %v6011 = vmax.f32 %v3234, 0.0
        %v6012 = vmax.f32 %v3236, 0.0
        %v6013 = vmax.f32 %v3907, 0.0
        %v6014 = vmax.f32 %v3909, 0.0
        %v6015 = vmax.f32 %v4580, 0.0
        %v6016 = vmax.f32 %v4582, 0.0
        %v6017 = vmax.f32 %v5253, 0.0
        %v6018 = vmax.f32 %v5255, 0.0
        %v6019 = vmax.f32 %v3238, 0.0
        %v6020 = vmax.f32 %v3240, 0.0
        %v6021 = vmax.f32 %v3911, 0.0
        %v6022 = vmax.f32 %v3913, 0.0
        %v6023 = vmax.f32 %v4584, 0.0
        %v6024 = vmax.f32 %v4586, 0.0
        %v6025 = vmax.f32 %v5257, 0.0
        %v6026 = vmax.f32 %v5259, 0.0
        %v6027 = vmax.f32 %v3244, 0.0
        %v6028 = vmax.f32 %v3246, 0.0
        %v6029 = vmax.f32 %v3917, 0.0
        %v6030 = vmax.f32 %v3919, 0.0
        %v6031 = vmax.f32 %v4590, 0.0
        %v6032 = vmax.f32 %v4592, 0.0
        %v6033 = vmax.f32 %v5263, 0.0
        %v6034 = vmax.f32 %v5265, 0.0
        %v6035 = vmax.f32 %v3248, 0.0
        %v6036 = vmax.f32 %v3250, 0.0
        %v6037 = vmax.f32 %v3921, 0.0
        %v6038 = vmax.f32 %v3923, 0.0
        %v6039 = vmax.f32 %v4594, 0.0
        %v6040 = vmax.f32 %v4596, 0.0
        %v6041 = vmax.f32 %v5267, 0.0
        %v6042 = vmax.f32 %v5269, 0.0
        %v6043 = vmax.f32 %v3254, 0.0
        %v6044 = vmax.f32 %v3256, 0.0
        %v6045 = vmax.f32 %v3927, 0.0
        %v6046 = vmax.f32 %v3929, 0.0
        %v6047 = vmax.f32 %v4600, 0.0
        %v6048 = vmax.f32 %v4602, 0.0
        %v6049 = vmax.f32 %v5273, 0.0
        %v6050 = vmax.f32 %v5275, 0.0
        %v6051 = vmax.f32 %v3258, 0.0
        %v6052 = vmax.f32 %v3260, 0.0
        %v6053 = vmax.f32 %v3931, 0.0
        %v6054 = vmax.f32 %v3933, 0.0
        %v6055 = vmax.f32 %v4604, 0.0
        %v6056 = vmax.f32 %v4606, 0.0
        %v6057 = vmax.f32 %v5277, 0.0
        %v6058 = vmax.f32 %v5279, 0.0
        %v6059 = vmax.f32 %v3264, 0.0
        %v6060 = vmax.f32 %v3266, 0.0
        %v6061 = vmax.f32 %v3937, 0.0
        %v6062 = vmax.f32 %v3939, 0.0
        %v6063 = vmax.f32 %v4610, 0.0
        %v6064 = vmax.f32 %v4612, 0.0
        %v6065 = vmax.f32 %v5283, 0.0
        %v6066 = vmax.f32 %v5285, 0.0
        %v6067 = vmax.f32 %v3268, 0.0
        %v6068 = vmax.f32 %v3270, 0.0
        %v6069 = vmax.f32 %v3941, 0.0
        %v6070 = vmax.f32 %v3943, 0.0
        %v6071 = vmax.f32 %v4614, 0.0
        %v6072 = vmax.f32 %v4616, 0.0
        %v6073 = vmax.f32 %v5287, 0.0
        %v6074 = vmax.f32 %v5289, 0.0
        %v6075 = vmax.f32 %v3274, 0.0
        %v6076 = vmax.f32 %v3276, 0.0
        %v6077 = vmax.f32 %v3947, 0.0
        %v6078 = vmax.f32 %v3949, 0.0
        %v6079 = vmax.f32 %v4620, 0.0
        %v6080 = vmax.f32 %v4622, 0.0
        %v6081 = vmax.f32 %v5293, 0.0
        %v6082 = vmax.f32 %v5295, 0.0
        %v6083 = vmax.f32 %v3278, 0.0
        %v6084 = vmax.f32 %v3280, 0.0
        %v6085 = vmax.f32 %v3951, 0.0
        %v6086 = vmax.f32 %v3953, 0.0
        %v6087 = vmax.f32 %v4624, 0.0
        %v6088 = vmax.f32 %v4626, 0.0
        %v6089 = vmax.f32 %v5297, 0.0
        %v6090 = vmax.f32 %v5299, 0.0
        %v6091 = vmax.f32 %v3284, 0.0
        %v6092 = vmax.f32 %v3286, 0.0
        %v6093 = vmax.f32 %v3957, 0.0
        %v6094 = vmax.f32 %v3959, 0.0
        %v6095 = vmax.f32 %v4630, 0.0
        %v6096 = vmax.f32 %v4632, 0.0
        %v6097 = vmax.f32 %v5303, 0.0
        %v6098 = vmax.f32 %v5305, 0.0
        %v6099 = vmax.f32 %v3288, 0.0
        %v6100 = vmax.f32 %v3290, 0.0
        %v6101 = vmax.f32 %v3961, 0.0
        %v6102 = vmax.f32 %v3963, 0.0
        %v6103 = vmax.f32 %v4634, 0.0
        %v6104 = vmax.f32 %v4636, 0.0
        %v6105 = vmax.f32 %v5307, 0.0
        %v6106 = vmax.f32 %v5309, 0.0
        %v6107 = vmax.f32 %v3294, 0.0
        %v6108 = vmax.f32 %v3296, 0.0
        %v6109 = vmax.f32 %v3967, 0.0
        %v6110 = vmax.f32 %v3969, 0.0
        %v6111 = vmax.f32 %v4640, 0.0
        %v6112 = vmax.f32 %v4642, 0.0
        %v6113 = vmax.f32 %v5313, 0.0
        %v6114 = vmax.f32 %v5315, 0.0
        %v6115 = vmax.f32 %v3298, 0.0
        %v6116 = vmax.f32 %v3300, 0.0
        %v6117 = vmax.f32 %v3971, 0.0
        %v6118 = vmax.f32 %v3973, 0.0
        %v6119 = vmax.f32 %v4644, 0.0
        %v6120 = vmax.f32 %v4646, 0.0
        %v6121 = vmax.f32 %v5317, 0.0
        %v6122 = vmax.f32 %v5319, 0.0
        %v6123 = vmax.f32 %v3304, 0.0
        %v6124 = vmax.f32 %v3306, 0.0
        %v6125 = vmax.f32 %v3977, 0.0
        %v6126 = vmax.f32 %v3979, 0.0
        %v6127 = vmax.f32 %v4650, 0.0
        %v6128 = vmax.f32 %v4652, 0.0
        %v6129 = vmax.f32 %v5323, 0.0
        %v6130 = vmax.f32 %v5325, 0.0
        %v6131 = vmax.f32 %v3308, 0.0
        %v6132 = vmax.f32 %v3310, 0.0
        %v6133 = vmax.f32 %v3981, 0.0
        %v6134 = vmax.f32 %v3983, 0.0
        %v6135 = vmax.f32 %v4654, 0.0
        %v6136 = vmax.f32 %v4656, 0.0
        %v6137 = vmax.f32 %v5327, 0.0
        %v6138 = vmax.f32 %v5329, 0.0
        %v6139 = vmax.f32 %v3314, 0.0
        %v6140 = vmax.f32 %v3316, 0.0
        %v6141 = vmax.f32 %v3987, 0.0
        %v6142 = vmax.f32 %v3989, 0.0
        %v6143 = vmax.f32 %v4660, 0.0
        %v6144 = vmax.f32 %v4662, 0.0
        %v6145 = vmax.f32 %v5333, 0.0
        %v6146 = vmax.f32 %v5335, 0.0
        %v6147 = vmax.f32 %v3318, 0.0
        %v6148 = vmax.f32 %v3320, 0.0
        %v6149 = vmax.f32 %v3991, 0.0
        %v6150 = vmax.f32 %v3993, 0.0
        %v6151 = vmax.f32 %v4664, 0.0
        %v6152 = vmax.f32 %v4666, 0.0
        %v6153 = vmax.f32 %v5337, 0.0
        %v6154 = vmax.f32 %v5339, 0.0
        %v6155 = vmax.f32 %v3324, 0.0
        %v6156 = vmax.f32 %v3326, 0.0
        %v6157 = vmax.f32 %v3997, 0.0
        %v6158 = vmax.f32 %v3999, 0.0
        %v6159 = vmax.f32 %v4670, 0.0
        %v6160 = vmax.f32 %v4672, 0.0
        %v6161 = vmax.f32 %v5343, 0.0
        %v6162 = vmax.f32 %v5345, 0.0
        %v6163 = vmax.f32 %v3328, 0.0
        %v6164 = vmax.f32 %v3330, 0.0
        %v6165 = vmax.f32 %v4001, 0.0
        %v6166 = vmax.f32 %v4003, 0.0
        %v6167 = vmax.f32 %v4674, 0.0
        %v6168 = vmax.f32 %v4676, 0.0
        %v6169 = vmax.f32 %v5347, 0.0
        %v6170 = vmax.f32 %v5349, 0.0
        %v6171 = vmax.f32 %v3334, 0.0
        %v6172 = vmax.f32 %v3336, 0.0
        %v6173 = vmax.f32 %v4007, 0.0
        %v6174 = vmax.f32 %v4009, 0.0
        %v6175 = vmax.f32 %v4680, 0.0
        %v6176 = vmax.f32 %v4682, 0.0
        %v6177 = vmax.f32 %v5353, 0.0
        %v6178 = vmax.f32 %v5355, 0.0
        %v6179 = vmax.f32 %v3338, 0.0
        %v6180 = vmax.f32 %v3340, 0.0
        %v6181 = vmax.f32 %v4011, 0.0
        %v6182 = vmax.f32 %v4013, 0.0
        %v6183 = vmax.f32 %v4684, 0.0
        %v6184 = vmax.f32 %v4686, 0.0
        %v6185 = vmax.f32 %v5357, 0.0
        %v6186 = vmax.f32 %v5359, 0.0
        %v6187 = vmax.f32 %v3344, 0.0
        %v6188 = vmax.f32 %v3346, 0.0
        %v6189 = vmax.f32 %v4017, 0.0
        %v6190 = vmax.f32 %v4019, 0.0
        %v6191 = vmax.f32 %v4690, 0.0
        %v6192 = vmax.f32 %v4692, 0.0
        %v6193 = vmax.f32 %v5363, 0.0
        %v6194 = vmax.f32 %v5365, 0.0
        %v6195 = vmax.f32 %v3348, 0.0
        %v6196 = vmax.f32 %v3350, 0.0
        %v6197 = vmax.f32 %v4021, 0.0
        %v6198 = vmax.f32 %v4023, 0.0
        %v6199 = vmax.f32 %v4694, 0.0
        %v6200 = vmax.f32 %v4696, 0.0
        %v6201 = vmax.f32 %v5367, 0.0
        %v6202 = vmax.f32 %v5369, 0.0
        %v6203 = vmax.f32 %v3354, 0.0
        %v6204 = vmax.f32 %v3356, 0.0
        %v6205 = vmax.f32 %v4027, 0.0
        %v6206 = vmax.f32 %v4029, 0.0
        %v6207 = vmax.f32 %v4700, 0.0
        %v6208 = vmax.f32 %v4702, 0.0
        %v6209 = vmax.f32 %v5373, 0.0
        %v6210 = vmax.f32 %v5375, 0.0
        %v6211 = vmax.f32 %v3358, 0.0
        %v6212 = vmax.f32 %v3360, 0.0
        %v6213 = vmax.f32 %v4031, 0.0
        %v6214 = vmax.f32 %v4033, 0.0
        %v6215 = vmax.f32 %v4704, 0.0
        %v6216 = vmax.f32 %v4706, 0.0
        %v6217 = vmax.f32 %v5377, 0.0
        %v6218 = vmax.f32 %v5379, 0.0
        %v6219 = vmax.f32 %v3364, 0.0
        %v6220 = vmax.f32 %v3366, 0.0
        %v6221 = vmax.f32 %v4037, 0.0
        %v6222 = vmax.f32 %v4039, 0.0
        %v6223 = vmax.f32 %v4710, 0.0
        %v6224 = vmax.f32 %v4712, 0.0
        %v6225 = vmax.f32 %v5383, 0.0
        %v6226 = vmax.f32 %v5385, 0.0
        %v6227 = vmax.f32 %v3368, 0.0
        %v6228 = vmax.f32 %v3370, 0.0
        %v6229 = vmax.f32 %v4041, 0.0
        %v6230 = vmax.f32 %v4043, 0.0
        %v6231 = vmax.f32 %v4714, 0.0
        %v6232 = vmax.f32 %v4716, 0.0
        %v6233 = vmax.f32 %v5387, 0.0
        %v6234 = vmax.f32 %v5389, 0.0
        %v6235 = vmax.f32 %v3374, 0.0
        %v6236 = vmax.f32 %v3376, 0.0
        %v6237 = vmax.f32 %v4047, 0.0
        %v6238 = vmax.f32 %v4049, 0.0
        %v6239 = vmax.f32 %v4720, 0.0
        %v6240 = vmax.f32 %v4722, 0.0
        %v6241 = vmax.f32 %v5393, 0.0
        %v6242 = vmax.f32 %v5395, 0.0
        %v6243 = vmax.f32 %v3378, 0.0
        %v6244 = vmax.f32 %v3380, 0.0
        %v6245 = vmax.f32 %v4051, 0.0
        %v6246 = vmax.f32 %v4053, 0.0
        %v6247 = vmax.f32 %v4724, 0.0
        %v6248 = vmax.f32 %v4726, 0.0
        %v6249 = vmax.f32 %v5397, 0.0
        %v6250 = vmax.f32 %v5399, 0.0
        %v6251 = vmax.f32 %v3384, 0.0
        %v6252 = vmax.f32 %v3386, 0.0
        %v6253 = vmax.f32 %v4057, 0.0
        %v6254 = vmax.f32 %v4059, 0.0
        %v6255 = vmax.f32 %v4730, 0.0
        %v6256 = vmax.f32 %v4732, 0.0
        %v6257 = vmax.f32 %v5403, 0.0
        %v6258 = vmax.f32 %v5405, 0.0
        %v6259 = vmax.f32 %v3388, 0.0
        %v6260 = vmax.f32 %v3390, 0.0
        %v6261 = vmax.f32 %v4061, 0.0
        %v6262 = vmax.f32 %v4063, 0.0
        %v6263 = vmax.f32 %v4734, 0.0
        %v6264 = vmax.f32 %v4736, 0.0
        %v6265 = vmax.f32 %v5407, 0.0
        %v6266 = vmax.f32 %v5409, 0.0
        %v6267 = vmax.f32 %v3394, 0.0
        %v6268 = vmax.f32 %v3396, 0.0
        %v6269 = vmax.f32 %v4067, 0.0
        %v6270 = vmax.f32 %v4069, 0.0
        %v6271 = vmax.f32 %v4740, 0.0
        %v6272 = vmax.f32 %v4742, 0.0
        %v6273 = vmax.f32 %v5413, 0.0
        %v6274 = vmax.f32 %v5415, 0.0
        %v6275 = vmax.f32 %v3398, 0.0
        %v6276 = vmax.f32 %v3400, 0.0
        %v6277 = vmax.f32 %v4071, 0.0
        %v6278 = vmax.f32 %v4073, 0.0
        %v6279 = vmax.f32 %v4744, 0.0
        %v6280 = vmax.f32 %v4746, 0.0
        %v6281 = vmax.f32 %v5417, 0.0
        %v6282 = vmax.f32 %v5419, 0.0
        %v6283 = vmax.f32 %v3404, 0.0
        %v6284 = vmax.f32 %v3406, 0.0
        %v6285 = vmax.f32 %v4077, 0.0
        %v6286 = vmax.f32 %v4079, 0.0
        %v6287 = vmax.f32 %v4750, 0.0
        %v6288 = vmax.f32 %v4752, 0.0
        %v6289 = vmax.f32 %v5423, 0.0
        %v6290 = vmax.f32 %v5425, 0.0
        %v6291 = vmax.f32 %v3408, 0.0
        %v6292 = vmax.f32 %v3410, 0.0
        %v6293 = vmax.f32 %v4081, 0.0
        %v6294 = vmax.f32 %v4083, 0.0
        %v6295 = vmax.f32 %v4754, 0.0
        %v6296 = vmax.f32 %v4756, 0.0
        %v6297 = vmax.f32 %v5427, 0.0
        %v6298 = vmax.f32 %v5429, 0.0
        %v6299 = vmax.f32 %v3414, 0.0
        %v6300 = vmax.f32 %v3416, 0.0
        %v6301 = vmax.f32 %v4087, 0.0
        %v6302 = vmax.f32 %v4089, 0.0
        %v6303 = vmax.f32 %v4760, 0.0
        %v6304 = vmax.f32 %v4762, 0.0
        %v6305 = vmax.f32 %v5433, 0.0
        %v6306 = vmax.f32 %v5435, 0.0
        %v6307 = vmax.f32 %v3418, 0.0
        %v6308 = vmax.f32 %v3420, 0.0
        %v6309 = vmax.f32 %v4091, 0.0
        %v6310 = vmax.f32 %v4093, 0.0
        %v6311 = vmax.f32 %v4764, 0.0
        %v6312 = vmax.f32 %v4766, 0.0
        %v6313 = vmax.f32 %v5437, 0.0
        %v6314 = vmax.f32 %v5439, 0.0
        %v6315 = vmax.f32 %v3424, 0.0
        %v6316 = vmax.f32 %v3426, 0.0
        %v6317 = vmax.f32 %v4097, 0.0
        %v6318 = vmax.f32 %v4099, 0.0
        %v6319 = vmax.f32 %v4770, 0.0
        %v6320 = vmax.f32 %v4772, 0.0
        %v6321 = vmax.f32 %v5443, 0.0
        %v6322 = vmax.f32 %v5445, 0.0
        %v6323 = vmax.f32 %v3428, 0.0
        %v6324 = vmax.f32 %v3430, 0.0
        %v6325 = vmax.f32 %v4101, 0.0
        %v6326 = vmax.f32 %v4103, 0.0
        %v6327 = vmax.f32 %v4774, 0.0
        %v6328 = vmax.f32 %v4776, 0.0
        %v6329 = vmax.f32 %v5447, 0.0
        %v6330 = vmax.f32 %v5449, 0.0
        %v6331 = vmax.f32 %v3434, 0.0
        %v6332 = vmax.f32 %v3436, 0.0
        %v6333 = vmax.f32 %v4107, 0.0
        %v6334 = vmax.f32 %v4109, 0.0
        %v6335 = vmax.f32 %v4780, 0.0
        %v6336 = vmax.f32 %v4782, 0.0
        %v6337 = vmax.f32 %v5453, 0.0
        %v6338 = vmax.f32 %v5455, 0.0
        %v6339 = vmax.f32 %v3438, 0.0
        %v6340 = vmax.f32 %v3440, 0.0
        %v6341 = vmax.f32 %v4111, 0.0
        %v6342 = vmax.f32 %v4113, 0.0
        %v6343 = vmax.f32 %v4784, 0.0
        %v6344 = vmax.f32 %v4786, 0.0
        %v6345 = vmax.f32 %v5457, 0.0
        %v6346 = vmax.f32 %v5459, 0.0
        %v6347 = vmax.f32 %v3444, 0.0
        %v6348 = vmax.f32 %v3446, 0.0
        %v6349 = vmax.f32 %v4117, 0.0
        %v6350 = vmax.f32 %v4119, 0.0
        %v6351 = vmax.f32 %v4790, 0.0
        %v6352 = vmax.f32 %v4792, 0.0
        %v6353 = vmax.f32 %v5463, 0.0
        %v6354 = vmax.f32 %v5465, 0.0
        %v6355 = vmax.f32 %v3448, 0.0
        %v6356 = vmax.f32 %v3450, 0.0
        %v6357 = vmax.f32 %v4121, 0.0
        %v6358 = vmax.f32 %v4123, 0.0
        %v6359 = vmax.f32 %v4794, 0.0
        %v6360 = vmax.f32 %v4796, 0.0
        %v6361 = vmax.f32 %v5467, 0.0
        %v6362 = vmax.f32 %v5469, 0.0
        %v6363 = vmax.f32 %v3454, 0.0
        %v6364 = vmax.f32 %v3456, 0.0
        %v6365 = vmax.f32 %v4127, 0.0
        %v6366 = vmax.f32 %v4129, 0.0
        %v6367 = vmax.f32 %v4800, 0.0
        %v6368 = vmax.f32 %v4802, 0.0
        %v6369 = vmax.f32 %v5473, 0.0
        %v6370 = vmax.f32 %v5475, 0.0
        %v6371 = vmax.f32 %v3458, 0.0
        %v6372 = vmax.f32 %v3460, 0.0
        %v6373 = vmax.f32 %v4131, 0.0
        %v6374 = vmax.f32 %v4133, 0.0
        %v6375 = vmax.f32 %v4804, 0.0
        %v6376 = vmax.f32 %v4806, 0.0
        %v6377 = vmax.f32 %v5477, 0.0
        %v6378 = vmax.f32 %v5479, 0.0
        %v6379 = vmax.f32 %v3464, 0.0
        %v6380 = vmax.f32 %v3466, 0.0
        %v6381 = vmax.f32 %v4137, 0.0
        %v6382 = vmax.f32 %v4139, 0.0
        %v6383 = vmax.f32 %v4810, 0.0
        %v6384 = vmax.f32 %v4812, 0.0
        %v6385 = vmax.f32 %v5483, 0.0
        %v6386 = vmax.f32 %v5485, 0.0
        %v6387 = vmax.f32 %v3468, 0.0
        %v6388 = vmax.f32 %v3470, 0.0
        %v6389 = vmax.f32 %v4141, 0.0
        %v6390 = vmax.f32 %v4143, 0.0
        %v6391 = vmax.f32 %v4814, 0.0
        %v6392 = vmax.f32 %v4816, 0.0
        %v6393 = vmax.f32 %v5487, 0.0
        %v6394 = vmax.f32 %v5489, 0.0
        %v6395 = vmax.f32 %v3474, 0.0
        %v6396 = vmax.f32 %v3476, 0.0
        %v6397 = vmax.f32 %v4147, 0.0
        %v6398 = vmax.f32 %v4149, 0.0
        %v6399 = vmax.f32 %v4820, 0.0
        %v6400 = vmax.f32 %v4822, 0.0
        %v6401 = vmax.f32 %v5493, 0.0
        %v6402 = vmax.f32 %v5495, 0.0
        %v6403 = vmax.f32 %v3478, 0.0
        %v6404 = vmax.f32 %v3480, 0.0
        %v6405 = vmax.f32 %v4151, 0.0
        %v6406 = vmax.f32 %v4153, 0.0
        %v6407 = vmax.f32 %v4824, 0.0
        %v6408 = vmax.f32 %v4826, 0.0
        %v6409 = vmax.f32 %v5497, 0.0
        %v6410 = vmax.f32 %v5499, 0.0
        %v6411 = vmax.f32 %v3484, 0.0
        %v6412 = vmax.f32 %v3486, 0.0
        %v6413 = vmax.f32 %v4157, 0.0
        %v6414 = vmax.f32 %v4159, 0.0
        %v6415 = vmax.f32 %v4830, 0.0
        %v6416 = vmax.f32 %v4832, 0.0
        %v6417 = vmax.f32 %v5503, 0.0
        %v6418 = vmax.f32 %v5505, 0.0
        %v6419 = vmax.f32 %v3488, 0.0
        %v6420 = vmax.f32 %v3490, 0.0
        %v6421 = vmax.f32 %v4161, 0.0
        %v6422 = vmax.f32 %v4163, 0.0
        %v6423 = vmax.f32 %v4834, 0.0
        %v6424 = vmax.f32 %v4836, 0.0
        %v6425 = vmax.f32 %v5507, 0.0
        %v6426 = vmax.f32 %v5509, 0.0
        %v6427 = vmax.f32 %v3494, 0.0
        %v6428 = vmax.f32 %v3496, 0.0
        %v6429 = vmax.f32 %v4167, 0.0
        %v6430 = vmax.f32 %v4169, 0.0
        %v6431 = vmax.f32 %v4840, 0.0
        %v6432 = vmax.f32 %v4842, 0.0
        %v6433 = vmax.f32 %v5513, 0.0
        %v6434 = vmax.f32 %v5515, 0.0
        %v6435 = vmax.f32 %v3498, 0.0
        %v6436 = vmax.f32 %v3500, 0.0
        %v6437 = vmax.f32 %v4171, 0.0
        %v6438 = vmax.f32 %v4173, 0.0
        %v6439 = vmax.f32 %v4844, 0.0
        %v6440 = vmax.f32 %v4846, 0.0
        %v6441 = vmax.f32 %v5517, 0.0
        %v6442 = vmax.f32 %v5519, 0.0
        %v6443 = vmax.f32 %v3504, 0.0
        %v6444 = vmax.f32 %v3506, 0.0
        %v6445 = vmax.f32 %v4177, 0.0
        %v6446 = vmax.f32 %v4179, 0.0
        %v6447 = vmax.f32 %v4850, 0.0
        %v6448 = vmax.f32 %v4852, 0.0
        %v6449 = vmax.f32 %v5523, 0.0
        %v6450 = vmax.f32 %v5525, 0.0
        %v6451 = vmax.f32 %v3508, 0.0
        %v6452 = vmax.f32 %v3510, 0.0
        %v6453 = vmax.f32 %v4181, 0.0
        %v6454 = vmax.f32 %v4183, 0.0
        %v6455 = vmax.f32 %v4854, 0.0
        %v6456 = vmax.f32 %v4856, 0.0
        %v6457 = vmax.f32 %v5527, 0.0
        %v6458 = vmax.f32 %v5529, 0.0
        %v6459 = vmax.f32 %v3514, 0.0
        %v6460 = vmax.f32 %v3516, 0.0
        %v6461 = vmax.f32 %v4187, 0.0
        %v6462 = vmax.f32 %v4189, 0.0
        %v6463 = vmax.f32 %v4860, 0.0
        %v6464 = vmax.f32 %v4862, 0.0
        %v6465 = vmax.f32 %v5533, 0.0
        %v6466 = vmax.f32 %v5535, 0.0
        %v6467 = vmax.f32 %v3518, 0.0
        %v6468 = vmax.f32 %v3520, 0.0
        %v6469 = vmax.f32 %v4191, 0.0
        %v6470 = vmax.f32 %v4193, 0.0
        %v6471 = vmax.f32 %v4864, 0.0
        %v6472 = vmax.f32 %v4866, 0.0
        %v6473 = vmax.f32 %v5537, 0.0
        %v6474 = vmax.f32 %v5539, 0.0
        %v6475 = vmax.f32 %v3524, 0.0
        %v6476 = vmax.f32 %v3526, 0.0
        %v6477 = vmax.f32 %v4197, 0.0
        %v6478 = vmax.f32 %v4199, 0.0
        %v6479 = vmax.f32 %v4870, 0.0
        %v6480 = vmax.f32 %v4872, 0.0
        %v6481 = vmax.f32 %v5543, 0.0
        %v6482 = vmax.f32 %v5545, 0.0
        %v6483 = vmax.f32 %v3528, 0.0
        %v6484 = vmax.f32 %v3530, 0.0
        %v6485 = vmax.f32 %v4201, 0.0
        %v6486 = vmax.f32 %v4203, 0.0
        %v6487 = vmax.f32 %v4874, 0.0
        %v6488 = vmax.f32 %v4876, 0.0
        %v6489 = vmax.f32 %v5547, 0.0
        %v6490 = vmax.f32 %v5549, 0.0
        %v6491 = vmax.f32 %v3534, 0.0
        %v6492 = vmax.f32 %v3536, 0.0
        %v6493 = vmax.f32 %v4207, 0.0
        %v6494 = vmax.f32 %v4209, 0.0
        %v6495 = vmax.f32 %v4880, 0.0
        %v6496 = vmax.f32 %v4882, 0.0
        %v6497 = vmax.f32 %v5553, 0.0
        %v6498 = vmax.f32 %v5555, 0.0
        %v6499 = vmax.f32 %v3538, 0.0
        %v6500 = vmax.f32 %v3540, 0.0
        %v6501 = vmax.f32 %v4211, 0.0
        %v6502 = vmax.f32 %v4213, 0.0
        %v6503 = vmax.f32 %v4884, 0.0
        %v6504 = vmax.f32 %v4886, 0.0
        %v6505 = vmax.f32 %v5557, 0.0
        %v6506 = vmax.f32 %v5559, 0.0
        %v6507 = vmax.f32 %v3544, 0.0
        %v6508 = vmax.f32 %v3546, 0.0
        %v6509 = vmax.f32 %v4217, 0.0
        %v6510 = vmax.f32 %v4219, 0.0
        %v6511 = vmax.f32 %v4890, 0.0
        %v6512 = vmax.f32 %v4892, 0.0
        %v6513 = vmax.f32 %v5563, 0.0
        %v6514 = vmax.f32 %v5565, 0.0
        %v6515 = vmax.f32 %v3548, 0.0
        %v6516 = vmax.f32 %v3550, 0.0
        %v6517 = vmax.f32 %v4221, 0.0
        %v6518 = vmax.f32 %v4223, 0.0
        %v6519 = vmax.f32 %v4894, 0.0
        %v6520 = vmax.f32 %v4896, 0.0
        %v6521 = vmax.f32 %v5567, 0.0
        %v6522 = vmax.f32 %v5569, 0.0
        %v6523 = vmax.f32 %v3554, 0.0
        %v6524 = vmax.f32 %v3556, 0.0
        %v6525 = vmax.f32 %v4227, 0.0
        %v6526 = vmax.f32 %v4229, 0.0
        %v6527 = vmax.f32 %v4900, 0.0
        %v6528 = vmax.f32 %v4902, 0.0
        %v6529 = vmax.f32 %v5573, 0.0
        %v6530 = vmax.f32 %v5575, 0.0
        %v6531 = vmax.f32 %v3558, 0.0
        %v6532 = vmax.f32 %v3560, 0.0
        %v6533 = vmax.f32 %v4231, 0.0
        %v6534 = vmax.f32 %v4233, 0.0
        %v6535 = vmax.f32 %v4904, 0.0
        %v6536 = vmax.f32 %v4906, 0.0
        %v6537 = vmax.f32 %v5577, 0.0
        %v6538 = vmax.f32 %v5579, 0.0
        %v6539 = vmax.f32 %v3564, 0.0
        %v6540 = vmax.f32 %v3566, 0.0
        %v6541 = vmax.f32 %v4237, 0.0
        %v6542 = vmax.f32 %v4239, 0.0
        %v6543 = vmax.f32 %v4910, 0.0
        %v6544 = vmax.f32 %v4912, 0.0
        %v6545 = vmax.f32 %v5583, 0.0
        %v6546 = vmax.f32 %v5585, 0.0
        %v6547 = vmax.f32 %v3568, 0.0
        %v6548 = vmax.f32 %v3570, 0.0
        %v6549 = vmax.f32 %v4241, 0.0
        %v6550 = vmax.f32 %v4243, 0.0
        %v6551 = vmax.f32 %v4914, 0.0
        %v6552 = vmax.f32 %v4916, 0.0
        %v6553 = vmax.f32 %v5587, 0.0
        %v6554 = vmax.f32 %v5589, 0.0
        %v6555 = vmax.f32 %v3574, 0.0
        %v6556 = vmax.f32 %v3576, 0.0
        %v6557 = vmax.f32 %v4247, 0.0
        %v6558 = vmax.f32 %v4249, 0.0
        %v6559 = vmax.f32 %v4920, 0.0
        %v6560 = vmax.f32 %v4922, 0.0
        %v6561 = vmax.f32 %v5593, 0.0
        %v6562 = vmax.f32 %v5595, 0.0
        %v6563 = vmax.f32 %v3578, 0.0
        %v6564 = vmax.f32 %v3580, 0.0
        %v6565 = vmax.f32 %v4251, 0.0
        %v6566 = vmax.f32 %v4253, 0.0
        %v6567 = vmax.f32 %v4924, 0.0
        %v6568 = vmax.f32 %v4926, 0.0
        %v6569 = vmax.f32 %v5597, 0.0
        %v6570 = vmax.f32 %v5599, 0.0
        %v6571 = vmax.f32 %v3584, 0.0
        %v6572 = vmax.f32 %v3586, 0.0
        %v6573 = vmax.f32 %v4257, 0.0
        %v6574 = vmax.f32 %v4259, 0.0
        %v6575 = vmax.f32 %v4930, 0.0
        %v6576 = vmax.f32 %v4932, 0.0
        %v6577 = vmax.f32 %v5603, 0.0
        %v6578 = vmax.f32 %v5605, 0.0
        %v6579 = vmax.f32 %v3588, 0.0
        %v6580 = vmax.f32 %v3590, 0.0
        %v6581 = vmax.f32 %v4261, 0.0
        %v6582 = vmax.f32 %v4263, 0.0
        %v6583 = vmax.f32 %v4934, 0.0
        %v6584 = vmax.f32 %v4936, 0.0
        %v6585 = vmax.f32 %v5607, 0.0
        %v6586 = vmax.f32 %v5609, 0.0
        %v6587 = vmax.f32 %v3594, 0.0
        %v6588 = vmax.f32 %v3596, 0.0
        %v6589 = vmax.f32 %v4267, 0.0
        %v6590 = vmax.f32 %v4269, 0.0
        %v6591 = vmax.f32 %v4940, 0.0
        %v6592 = vmax.f32 %v4942, 0.0
        %v6593 = vmax.f32 %v5613, 0.0
        %v6594 = vmax.f32 %v5615, 0.0
        %v6595 = vmax.f32 %v3598, 0.0
        %v6596 = vmax.f32 %v3600, 0.0
        %v6597 = vmax.f32 %v4271, 0.0
        %v6598 = vmax.f32 %v4273, 0.0
        %v6599 = vmax.f32 %v4944, 0.0
        %v6600 = vmax.f32 %v4946, 0.0
        %v6601 = vmax.f32 %v5617, 0.0
        %v6602 = vmax.f32 %v5619, 0.0
        %v6603 = vmax.f32 %v3604, 0.0
        %v6604 = vmax.f32 %v3606, 0.0
        %v6605 = vmax.f32 %v4277, 0.0
        %v6606 = vmax.f32 %v4279, 0.0
        %v6607 = vmax.f32 %v4950, 0.0
        %v6608 = vmax.f32 %v4952, 0.0
        %v6609 = vmax.f32 %v5623, 0.0
        %v6610 = vmax.f32 %v5625, 0.0
        %v6611 = vmax.f32 %v3608, 0.0
        %v6612 = vmax.f32 %v3610, 0.0
        %v6613 = vmax.f32 %v4281, 0.0
        %v6614 = vmax.f32 %v4283, 0.0
        %v6615 = vmax.f32 %v4954, 0.0
        %v6616 = vmax.f32 %v4956, 0.0
        %v6617 = vmax.f32 %v5627, 0.0
        %v6618 = vmax.f32 %v5629, 0.0
        %v6619 = vmax.f32 %v3614, 0.0
        %v6620 = vmax.f32 %v3616, 0.0
        %v6621 = vmax.f32 %v4287, 0.0
        %v6622 = vmax.f32 %v4289, 0.0
        %v6623 = vmax.f32 %v4960, 0.0
        %v6624 = vmax.f32 %v4962, 0.0
        %v6625 = vmax.f32 %v5633, 0.0
        %v6626 = vmax.f32 %v5635, 0.0
        %v6627 = vmax.f32 %v3618, 0.0
        %v6628 = vmax.f32 %v3620, 0.0
        %v6629 = vmax.f32 %v4291, 0.0
        %v6630 = vmax.f32 %v4293, 0.0
        %v6631 = vmax.f32 %v4964, 0.0
        %v6632 = vmax.f32 %v4966, 0.0
        %v6633 = vmax.f32 %v5637, 0.0
        %v6634 = vmax.f32 %v5639, 0.0
        %v6635 = vmax.f32 %v3624, 0.0
        %v6636 = vmax.f32 %v3626, 0.0
        %v6637 = vmax.f32 %v4297, 0.0
        %v6638 = vmax.f32 %v4299, 0.0
        %v6639 = vmax.f32 %v4970, 0.0
        %v6640 = vmax.f32 %v4972, 0.0
        %v6641 = vmax.f32 %v5643, 0.0
        %v6642 = vmax.f32 %v5645, 0.0
        %v6643 = vmax.f32 %v3628, 0.0
        %v6644 = vmax.f32 %v3630, 0.0
        %v6645 = vmax.f32 %v4301, 0.0
        %v6646 = vmax.f32 %v4303, 0.0
        %v6647 = vmax.f32 %v4974, 0.0
        %v6648 = vmax.f32 %v4976, 0.0
        %v6649 = vmax.f32 %v5647, 0.0
        %v6650 = vmax.f32 %v5649, 0.0
        %v6651 = vmax.f32 %v3634, 0.0
        %v6652 = vmax.f32 %v3636, 0.0
        %v6653 = vmax.f32 %v4307, 0.0
        %v6654 = vmax.f32 %v4309, 0.0
        %v6655 = vmax.f32 %v4980, 0.0
        %v6656 = vmax.f32 %v4982, 0.0
        %v6657 = vmax.f32 %v5653, 0.0
        %v6658 = vmax.f32 %v5655, 0.0
        %v6659 = vmax.f32 %v3638, 0.0
        %v6660 = vmax.f32 %v3640, 0.0
        %v6661 = vmax.f32 %v4311, 0.0
        %v6662 = vmax.f32 %v4313, 0.0
        %v6663 = vmax.f32 %v4984, 0.0
        %v6664 = vmax.f32 %v4986, 0.0
        %v6665 = vmax.f32 %v5657, 0.0
        %v6666 = vmax.f32 %v5659, 0.0
        %v6667 = vmax.f32 %v3644, 0.0
        %v6668 = vmax.f32 %v3646, 0.0
        %v6669 = vmax.f32 %v4317, 0.0
        %v6670 = vmax.f32 %v4319, 0.0
        %v6671 = vmax.f32 %v4990, 0.0
        %v6672 = vmax.f32 %v4992, 0.0
        %v6673 = vmax.f32 %v5663, 0.0
        %v6674 = vmax.f32 %v5665, 0.0
        %v6675 = vmax.f32 %v3648, 0.0
        %v6676 = vmax.f32 %v3650, 0.0
        %v6677 = vmax.f32 %v4321, 0.0
        %v6678 = vmax.f32 %v4323, 0.0
        %v6679 = vmax.f32 %v4994, 0.0
        %v6680 = vmax.f32 %v4996, 0.0
        %v6681 = vmax.f32 %v5667, 0.0
        %v6682 = vmax.f32 %v5669, 0.0
        %v6683 = vmax.f32 %v3654, 0.0
        %v6684 = vmax.f32 %v3656, 0.0
        %v6685 = vmax.f32 %v4327, 0.0
        %v6686 = vmax.f32 %v4329, 0.0
        %v6687 = vmax.f32 %v5000, 0.0
        %v6688 = vmax.f32 %v5002, 0.0
        %v6689 = vmax.f32 %v5673, 0.0
        %v6690 = vmax.f32 %v5675, 0.0
        %v6691 = vmax.f32 %v3658, 0.0
        %v6692 = vmax.f32 %v3660, 0.0
        %v6693 = vmax.f32 %v4331, 0.0
        %v6694 = vmax.f32 %v4333, 0.0
        %v6695 = vmax.f32 %v5004, 0.0
        %v6696 = vmax.f32 %v5006, 0.0
        %v6697 = vmax.f32 %v5677, 0.0
        %v6698 = vmax.f32 %v5679, 0.0
        %v6699 = vmax.f32 %v3664, 0.0
        %v6700 = vmax.f32 %v3666, 0.0
        %v6701 = vmax.f32 %v4337, 0.0
        %v6702 = vmax.f32 %v4339, 0.0
        %v6703 = vmax.f32 %v5010, 0.0
        %v6704 = vmax.f32 %v5012, 0.0
        %v6705 = vmax.f32 %v5683, 0.0
        %v6706 = vmax.f32 %v5685, 0.0
        %v6707 = vmax.f32 %v3668, 0.0
        %v6708 = vmax.f32 %v3670, 0.0
        %v6709 = vmax.f32 %v4341, 0.0
        %v6710 = vmax.f32 %v4343, 0.0
        %v6711 = vmax.f32 %v5014, 0.0
        %v6712 = vmax.f32 %v5016, 0.0
        %v6713 = vmax.f32 %v5687, 0.0
        %v6714 = vmax.f32 %v5689, 0.0
        %p6715 = scmp.eq.s32.totalorder %s32, 0
        // Predicated region
        $region73: #{tpu_custom_call.1} parent=71 // pred_check
          %p6716 = pneg %p6715
        $region74: #{tpu_custom_call.1} parent=71 // pred_check_branch
          %6718 = sbr.rel (%p6716) target = $region76
        $region75: #{tpu_custom_call.1} parent=71 // pred_region
          %6719 = vst [vmem:[#allocation2] sm:$0xff] -inf
        $region76: #{tpu_custom_call.1} parent=71 // pred_fallthru
          _
        %v6720 = vld [vmem:[#allocation2] sm:$0xff]
        %v6721 = vmax.f32 %v5691, %v5699
        %v6722 = vmax.f32 %v6721, %v5707
        %v6723 = vmax.f32 %v6722, %v5715
        %v6724 = vmax.f32 %v6723, %v5723
        %v6725 = vmax.f32 %v6724, %v5731
        %v6726 = vmax.f32 %v6725, %v5739
        %v6727 = vmax.f32 %v6726, %v5747
        %v6728 = vmax.f32 %v6727, %v5755
        %v6729 = vmax.f32 %v6728, %v5763
        %v6730 = vmax.f32 %v6729, %v5771
        %v6731 = vmax.f32 %v6730, %v5779
        %v6732 = vmax.f32 %v6731, %v5787
        %v6733 = vmax.f32 %v6732, %v5795
        %v6734 = vmax.f32 %v6733, %v5803
        %v6735 = vmax.f32 %v6734, %v5811
        %v6736 = vmax.f32 %v6735, %v5819
        %v6737 = vmax.f32 %v6736, %v5827
        %v6738 = vmax.f32 %v6737, %v5835
        %v6739 = vmax.f32 %v6738, %v5843
        %v6740 = vmax.f32 %v6739, %v5851
        %v6741 = vmax.f32 %v6740, %v5859
        %v6742 = vmax.f32 %v6741, %v5867
        %v6743 = vmax.f32 %v6742, %v5875
        %v6744 = vmax.f32 %v6743, %v5883
        %v6745 = vmax.f32 %v6744, %v5891
        %v6746 = vmax.f32 %v6745, %v5899
        %v6747 = vmax.f32 %v6746, %v5907
        %v6748 = vmax.f32 %v6747, %v5915
        %v6749 = vmax.f32 %v6748, %v5923
        %v6750 = vmax.f32 %v6749, %v5931
        %v6751 = vmax.f32 %v6750, %v5939
        %v6752 = vmax.f32 %v6751, %v5947
        %v6753 = vmax.f32 %v6752, %v5955
        %v6754 = vmax.f32 %v6753, %v5963
        %v6755 = vmax.f32 %v6754, %v5971
        %v6756 = vmax.f32 %v6755, %v5979
        %v6757 = vmax.f32 %v6756, %v5987
        %v6758 = vmax.f32 %v6757, %v5995
        %v6759 = vmax.f32 %v6758, %v6003
        %v6760 = vmax.f32 %v6759, %v6011
        %v6761 = vmax.f32 %v6760, %v6019
        %v6762 = vmax.f32 %v6761, %v6027
        %v6763 = vmax.f32 %v6762, %v6035
        %v6764 = vmax.f32 %v6763, %v6043
        %v6765 = vmax.f32 %v6764, %v6051
        %v6766 = vmax.f32 %v6765, %v6059
        %v6767 = vmax.f32 %v6766, %v6067
        %v6768 = vmax.f32 %v6767, %v6075
        %v6769 = vmax.f32 %v6768, %v6083
        %v6770 = vmax.f32 %v6769, %v6091
        %v6771 = vmax.f32 %v6770, %v6099
        %v6772 = vmax.f32 %v6771, %v6107
        %v6773 = vmax.f32 %v6772, %v6115
        %v6774 = vmax.f32 %v6773, %v6123
        %v6775 = vmax.f32 %v6774, %v6131
        %v6776 = vmax.f32 %v6775, %v6139
        %v6777 = vmax.f32 %v6776, %v6147
        %v6778 = vmax.f32 %v6777, %v6155
        %v6779 = vmax.f32 %v6778, %v6163
        %v6780 = vmax.f32 %v6779, %v6171
        %v6781 = vmax.f32 %v6780, %v6179
        %v6782 = vmax.f32 %v6781, %v6187
        %v6783 = vmax.f32 %v6782, %v6195
        %v6784 = vmax.f32 %v6783, %v6203
        %v6785 = vmax.f32 %v6784, %v6211
        %v6786 = vmax.f32 %v6785, %v6219
        %v6787 = vmax.f32 %v6786, %v6227
        %v6788 = vmax.f32 %v6787, %v6235
        %v6789 = vmax.f32 %v6788, %v6243
        %v6790 = vmax.f32 %v6789, %v6251
        %v6791 = vmax.f32 %v6790, %v6259
        %v6792 = vmax.f32 %v6791, %v6267
        %v6793 = vmax.f32 %v6792, %v6275
        %v6794 = vmax.f32 %v6793, %v6283
        %v6795 = vmax.f32 %v6794, %v6291
        %v6796 = vmax.f32 %v6795, %v6299
        %v6797 = vmax.f32 %v6796, %v6307
        %v6798 = vmax.f32 %v6797, %v6315
        %v6799 = vmax.f32 %v6798, %v6323
        %v6800 = vmax.f32 %v6799, %v6331
        %v6801 = vmax.f32 %v6800, %v6339
        %v6802 = vmax.f32 %v6801, %v6347
        %v6803 = vmax.f32 %v6802, %v6355
        %v6804 = vmax.f32 %v6803, %v6363
        %v6805 = vmax.f32 %v6804, %v6371
        %v6806 = vmax.f32 %v6805, %v6379
        %v6807 = vmax.f32 %v6806, %v6387
        %v6808 = vmax.f32 %v6807, %v6395
        %v6809 = vmax.f32 %v6808, %v6403
        %v6810 = vmax.f32 %v6809, %v6411
        %v6811 = vmax.f32 %v6810, %v6419
        %v6812 = vmax.f32 %v6811, %v6427
        %v6813 = vmax.f32 %v6812, %v6435
        %v6814 = vmax.f32 %v6813, %v6443
        %v6815 = vmax.f32 %v6814, %v6451
        %v6816 = vmax.f32 %v6815, %v6459
        %v6817 = vmax.f32 %v6816, %v6467
        %v6818 = vmax.f32 %v6817, %v6475
        %v6819 = vmax.f32 %v6818, %v6483
        %v6820 = vmax.f32 %v6819, %v6491
        %v6821 = vmax.f32 %v6820, %v6499
        %v6822 = vmax.f32 %v6821, %v6507
        %v6823 = vmax.f32 %v6822, %v6515
        %v6824 = vmax.f32 %v6823, %v6523
        %v6825 = vmax.f32 %v6824, %v6531
        %v6826 = vmax.f32 %v6825, %v6539
        %v6827 = vmax.f32 %v6826, %v6547
        %v6828 = vmax.f32 %v6827, %v6555
        %v6829 = vmax.f32 %v6828, %v6563
        %v6830 = vmax.f32 %v6829, %v6571
        %v6831 = vmax.f32 %v6830, %v6579
        %v6832 = vmax.f32 %v6831, %v6587
        %v6833 = vmax.f32 %v6832, %v6595
        %v6834 = vmax.f32 %v6833, %v6603
        %v6835 = vmax.f32 %v6834, %v6611
        %v6836 = vmax.f32 %v6835, %v6619
        %v6837 = vmax.f32 %v6836, %v6627
        %v6838 = vmax.f32 %v6837, %v6635
        %v6839 = vmax.f32 %v6838, %v6643
        %v6840 = vmax.f32 %v6839, %v6651
        %v6841 = vmax.f32 %v6840, %v6659
        %v6842 = vmax.f32 %v6841, %v6667
        %v6843 = vmax.f32 %v6842, %v6675
        %v6844 = vmax.f32 %v6843, %v6683
        %v6845 = vmax.f32 %v6844, %v6691
        %v6846 = vmax.f32 %v6845, %v6699
        %v6847 = vmax.f32 %v6846, %v6707
        %v6848 = vrot.slane %v6847, 4
        %v6849 = vmax.f32 %v6847, %v6848
        %v6850 = vrot.slane %v6849, 2
        %v6851 = vmax.f32 %v6849, %v6850
        %v6852 = vrot.slane %v6851, 1
        %v6853 = vmax.f32 %v6851, %v6852
        %v6854 = vmax.f32 %v5692, %v5700
        %v6855 = vmax.f32 %v6854, %v5708
        %v6856 = vmax.f32 %v6855, %v5716
        %v6857 = vmax.f32 %v6856, %v5724
        %v6858 = vmax.f32 %v6857, %v5732
        %v6859 = vmax.f32 %v6858, %v5740
        %v6860 = vmax.f32 %v6859, %v5748
        %v6861 = vmax.f32 %v6860, %v5756
        %v6862 = vmax.f32 %v6861, %v5764
        %v6863 = vmax.f32 %v6862, %v5772
        %v6864 = vmax.f32 %v6863, %v5780
        %v6865 = vmax.f32 %v6864, %v5788
        %v6866 = vmax.f32 %v6865, %v5796
        %v6867 = vmax.f32 %v6866, %v5804
        %v6868 = vmax.f32 %v6867, %v5812
        %v6869 = vmax.f32 %v6868, %v5820
        %v6870 = vmax.f32 %v6869, %v5828
        %v6871 = vmax.f32 %v6870, %v5836
        %v6872 = vmax.f32 %v6871, %v5844
        %v6873 = vmax.f32 %v6872, %v5852
        %v6874 = vmax.f32 %v6873, %v5860
        %v6875 = vmax.f32 %v6874, %v5868
        %v6876 = vmax.f32 %v6875, %v5876
        %v6877 = vmax.f32 %v6876, %v5884
        %v6878 = vmax.f32 %v6877, %v5892
        %v6879 = vmax.f32 %v6878, %v5900
        %v6880 = vmax.f32 %v6879, %v5908
        %v6881 = vmax.f32 %v6880, %v5916
        %v6882 = vmax.f32 %v6881, %v5924
        %v6883 = vmax.f32 %v6882, %v5932
        %v6884 = vmax.f32 %v6883, %v5940
        %v6885 = vmax.f32 %v6884, %v5948
        %v6886 = vmax.f32 %v6885, %v5956
        %v6887 = vmax.f32 %v6886, %v5964
        %v6888 = vmax.f32 %v6887, %v5972
        %v6889 = vmax.f32 %v6888, %v5980
        %v6890 = vmax.f32 %v6889, %v5988
        %v6891 = vmax.f32 %v6890, %v5996
        %v6892 = vmax.f32 %v6891, %v6004
        %v6893 = vmax.f32 %v6892, %v6012
        %v6894 = vmax.f32 %v6893, %v6020
        %v6895 = vmax.f32 %v6894, %v6028
        %v6896 = vmax.f32 %v6895, %v6036
        %v6897 = vmax.f32 %v6896, %v6044
        %v6898 = vmax.f32 %v6897, %v6052
        %v6899 = vmax.f32 %v6898, %v6060
        %v6900 = vmax.f32 %v6899, %v6068
        %v6901 = vmax.f32 %v6900, %v6076
        %v6902 = vmax.f32 %v6901, %v6084
        %v6903 = vmax.f32 %v6902, %v6092
        %v6904 = vmax.f32 %v6903, %v6100
        %v6905 = vmax.f32 %v6904, %v6108
        %v6906 = vmax.f32 %v6905, %v6116
        %v6907 = vmax.f32 %v6906, %v6124
        %v6908 = vmax.f32 %v6907, %v6132
        %v6909 = vmax.f32 %v6908, %v6140
        %v6910 = vmax.f32 %v6909, %v6148
        %v6911 = vmax.f32 %v6910, %v6156
        %v6912 = vmax.f32 %v6911, %v6164
        %v6913 = vmax.f32 %v6912, %v6172
        %v6914 = vmax.f32 %v6913, %v6180
        %v6915 = vmax.f32 %v6914, %v6188
        %v6916 = vmax.f32 %v6915, %v6196
        %v6917 = vmax.f32 %v6916, %v6204
        %v6918 = vmax.f32 %v6917, %v6212
        %v6919 = vmax.f32 %v6918, %v6220
        %v6920 = vmax.f32 %v6919, %v6228
        %v6921 = vmax.f32 %v6920, %v6236
        %v6922 = vmax.f32 %v6921, %v6244
        %v6923 = vmax.f32 %v6922, %v6252
        %v6924 = vmax.f32 %v6923, %v6260
        %v6925 = vmax.f32 %v6924, %v6268
        %v6926 = vmax.f32 %v6925, %v6276
        %v6927 = vmax.f32 %v6926, %v6284
        %v6928 = vmax.f32 %v6927, %v6292
        %v6929 = vmax.f32 %v6928, %v6300
        %v6930 = vmax.f32 %v6929, %v6308
        %v6931 = vmax.f32 %v6930, %v6316
        %v6932 = vmax.f32 %v6931, %v6324
        %v6933 = vmax.f32 %v6932, %v6332
        %v6934 = vmax.f32 %v6933, %v6340
        %v6935 = vmax.f32 %v6934, %v6348
        %v6936 = vmax.f32 %v6935, %v6356
        %v6937 = vmax.f32 %v6936, %v6364
        %v6938 = vmax.f32 %v6937, %v6372
        %v6939 = vmax.f32 %v6938, %v6380
        %v6940 = vmax.f32 %v6939, %v6388
        %v6941 = vmax.f32 %v6940, %v6396
        %v6942 = vmax.f32 %v6941, %v6404
        %v6943 = vmax.f32 %v6942, %v6412
        %v6944 = vmax.f32 %v6943, %v6420
        %v6945 = vmax.f32 %v6944, %v6428
        %v6946 = vmax.f32 %v6945, %v6436
        %v6947 = vmax.f32 %v6946, %v6444
        %v6948 = vmax.f32 %v6947, %v6452
        %v6949 = vmax.f32 %v6948, %v6460
        %v6950 = vmax.f32 %v6949, %v6468
        %v6951 = vmax.f32 %v6950, %v6476
        %v6952 = vmax.f32 %v6951, %v6484
        %v6953 = vmax.f32 %v6952, %v6492
        %v6954 = vmax.f32 %v6953, %v6500
        %v6955 = vmax.f32 %v6954, %v6508
        %v6956 = vmax.f32 %v6955, %v6516
        %v6957 = vmax.f32 %v6956, %v6524
        %v6958 = vmax.f32 %v6957, %v6532
        %v6959 = vmax.f32 %v6958, %v6540
        %v6960 = vmax.f32 %v6959, %v6548
        %v6961 = vmax.f32 %v6960, %v6556
        %v6962 = vmax.f32 %v6961, %v6564
        %v6963 = vmax.f32 %v6962, %v6572
        %v6964 = vmax.f32 %v6963, %v6580
        %v6965 = vmax.f32 %v6964, %v6588
        %v6966 = vmax.f32 %v6965, %v6596
        %v6967 = vmax.f32 %v6966, %v6604
        %v6968 = vmax.f32 %v6967, %v6612
        %v6969 = vmax.f32 %v6968, %v6620
        %v6970 = vmax.f32 %v6969, %v6628
        %v6971 = vmax.f32 %v6970, %v6636
        %v6972 = vmax.f32 %v6971, %v6644
        %v6973 = vmax.f32 %v6972, %v6652
        %v6974 = vmax.f32 %v6973, %v6660
        %v6975 = vmax.f32 %v6974, %v6668
        %v6976 = vmax.f32 %v6975, %v6676
        %v6977 = vmax.f32 %v6976, %v6684
        %v6978 = vmax.f32 %v6977, %v6692
        %v6979 = vmax.f32 %v6978, %v6700
        %v6980 = vmax.f32 %v6979, %v6708
        %v6981 = vrot.slane %v6980, 4
        %v6982 = vmax.f32 %v6980, %v6981
        %v6983 = vrot.slane %v6982, 2
        %v6984 = vmax.f32 %v6982, %v6983
        %v6985 = vrot.slane %v6984, 1
        %v6986 = vmax.f32 %v6984, %v6985
        %v6987 = vmax.f32 %v5693, %v5701
        %v6988 = vmax.f32 %v6987, %v5709
        %v6989 = vmax.f32 %v6988, %v5717
        %v6990 = vmax.f32 %v6989, %v5725
        %v6991 = vmax.f32 %v6990, %v5733
        %v6992 = vmax.f32 %v6991, %v5741
        %v6993 = vmax.f32 %v6992, %v5749
        %v6994 = vmax.f32 %v6993, %v5757
        %v6995 = vmax.f32 %v6994, %v5765
        %v6996 = vmax.f32 %v6995, %v5773
        %v6997 = vmax.f32 %v6996, %v5781
        %v6998 = vmax.f32 %v6997, %v5789
        %v6999 = vmax.f32 %v6998, %v5797
        %v7000 = vmax.f32 %v6999, %v5805
        %v7001 = vmax.f32 %v7000, %v5813
        %v7002 = vmax.f32 %v7001, %v5821
        %v7003 = vmax.f32 %v7002, %v5829
        %v7004 = vmax.f32 %v7003, %v5837
        %v7005 = vmax.f32 %v7004, %v5845
        %v7006 = vmax.f32 %v7005, %v5853
        %v7007 = vmax.f32 %v7006, %v5861
        %v7008 = vmax.f32 %v7007, %v5869
        %v7009 = vmax.f32 %v7008, %v5877
        %v7010 = vmax.f32 %v7009, %v5885
        %v7011 = vmax.f32 %v7010, %v5893
        %v7012 = vmax.f32 %v7011, %v5901
        %v7013 = vmax.f32 %v7012, %v5909
        %v7014 = vmax.f32 %v7013, %v5917
        %v7015 = vmax.f32 %v7014, %v5925
        %v7016 = vmax.f32 %v7015, %v5933
        %v7017 = vmax.f32 %v7016, %v5941
        %v7018 = vmax.f32 %v7017, %v5949
        %v7019 = vmax.f32 %v7018, %v5957
        %v7020 = vmax.f32 %v7019, %v5965
        %v7021 = vmax.f32 %v7020, %v5973
        %v7022 = vmax.f32 %v7021, %v5981
        %v7023 = vmax.f32 %v7022, %v5989
        %v7024 = vmax.f32 %v7023, %v5997
        %v7025 = vmax.f32 %v7024, %v6005
        %v7026 = vmax.f32 %v7025, %v6013
        %v7027 = vmax.f32 %v7026, %v6021
        %v7028 = vmax.f32 %v7027, %v6029
        %v7029 = vmax.f32 %v7028, %v6037
        %v7030 = vmax.f32 %v7029, %v6045
        %v7031 = vmax.f32 %v7030, %v6053
        %v7032 = vmax.f32 %v7031, %v6061
        %v7033 = vmax.f32 %v7032, %v6069
        %v7034 = vmax.f32 %v7033, %v6077
        %v7035 = vmax.f32 %v7034, %v6085
        %v7036 = vmax.f32 %v7035, %v6093
        %v7037 = vmax.f32 %v7036, %v6101
        %v7038 = vmax.f32 %v7037, %v6109
        %v7039 = vmax.f32 %v7038, %v6117
        %v7040 = vmax.f32 %v7039, %v6125
        %v7041 = vmax.f32 %v7040, %v6133
        %v7042 = vmax.f32 %v7041, %v6141
        %v7043 = vmax.f32 %v7042, %v6149
        %v7044 = vmax.f32 %v7043, %v6157
        %v7045 = vmax.f32 %v7044, %v6165
        %v7046 = vmax.f32 %v7045, %v6173
        %v7047 = vmax.f32 %v7046, %v6181
        %v7048 = vmax.f32 %v7047, %v6189
        %v7049 = vmax.f32 %v7048, %v6197
        %v7050 = vmax.f32 %v7049, %v6205
        %v7051 = vmax.f32 %v7050, %v6213
        %v7052 = vmax.f32 %v7051, %v6221
        %v7053 = vmax.f32 %v7052, %v6229
        %v7054 = vmax.f32 %v7053, %v6237
        %v7055 = vmax.f32 %v7054, %v6245
        %v7056 = vmax.f32 %v7055, %v6253
        %v7057 = vmax.f32 %v7056, %v6261
        %v7058 = vmax.f32 %v7057, %v6269
        %v7059 = vmax.f32 %v7058, %v6277
        %v7060 = vmax.f32 %v7059, %v6285
        %v7061 = vmax.f32 %v7060, %v6293
        %v7062 = vmax.f32 %v7061, %v6301
        %v7063 = vmax.f32 %v7062, %v6309
        %v7064 = vmax.f32 %v7063, %v6317
        %v7065 = vmax.f32 %v7064, %v6325
        %v7066 = vmax.f32 %v7065, %v6333
        %v7067 = vmax.f32 %v7066, %v6341
        %v7068 = vmax.f32 %v7067, %v6349
        %v7069 = vmax.f32 %v7068, %v6357
        %v7070 = vmax.f32 %v7069, %v6365
        %v7071 = vmax.f32 %v7070, %v6373
        %v7072 = vmax.f32 %v7071, %v6381
        %v7073 = vmax.f32 %v7072, %v6389
        %v7074 = vmax.f32 %v7073, %v6397
        %v7075 = vmax.f32 %v7074, %v6405
        %v7076 = vmax.f32 %v7075, %v6413
        %v7077 = vmax.f32 %v7076, %v6421
        %v7078 = vmax.f32 %v7077, %v6429
        %v7079 = vmax.f32 %v7078, %v6437
        %v7080 = vmax.f32 %v7079, %v6445
        %v7081 = vmax.f32 %v7080, %v6453
        %v7082 = vmax.f32 %v7081, %v6461
        %v7083 = vmax.f32 %v7082, %v6469
        %v7084 = vmax.f32 %v7083, %v6477
        %v7085 = vmax.f32 %v7084, %v6485
        %v7086 = vmax.f32 %v7085, %v6493
        %v7087 = vmax.f32 %v7086, %v6501
        %v7088 = vmax.f32 %v7087, %v6509
        %v7089 = vmax.f32 %v7088, %v6517
        %v7090 = vmax.f32 %v7089, %v6525
        %v7091 = vmax.f32 %v7090, %v6533
        %v7092 = vmax.f32 %v7091, %v6541
        %v7093 = vmax.f32 %v7092, %v6549
        %v7094 = vmax.f32 %v7093, %v6557
        %v7095 = vmax.f32 %v7094, %v6565
        %v7096 = vmax.f32 %v7095, %v6573
        %v7097 = vmax.f32 %v7096, %v6581
        %v7098 = vmax.f32 %v7097, %v6589
        %v7099 = vmax.f32 %v7098, %v6597
        %v7100 = vmax.f32 %v7099, %v6605
        %v7101 = vmax.f32 %v7100, %v6613
        %v7102 = vmax.f32 %v7101, %v6621
        %v7103 = vmax.f32 %v7102, %v6629
        %v7104 = vmax.f32 %v7103, %v6637
        %v7105 = vmax.f32 %v7104, %v6645
        %v7106 = vmax.f32 %v7105, %v6653
        %v7107 = vmax.f32 %v7106, %v6661
        %v7108 = vmax.f32 %v7107, %v6669
        %v7109 = vmax.f32 %v7108, %v6677
        %v7110 = vmax.f32 %v7109, %v6685
        %v7111 = vmax.f32 %v7110, %v6693
        %v7112 = vmax.f32 %v7111, %v6701
        %v7113 = vmax.f32 %v7112, %v6709
        %v7114 = vrot.slane %v7113, 4
        %v7115 = vmax.f32 %v7113, %v7114
        %v7116 = vrot.slane %v7115, 2
        %v7117 = vmax.f32 %v7115, %v7116
        %v7118 = vrot.slane %v7117, 1
        %v7119 = vmax.f32 %v7117, %v7118
        %v7120 = vmax.f32 %v5694, %v5702
        %v7121 = vmax.f32 %v7120, %v5710
        %v7122 = vmax.f32 %v7121, %v5718
        %v7123 = vmax.f32 %v7122, %v5726
        %v7124 = vmax.f32 %v7123, %v5734
        %v7125 = vmax.f32 %v7124, %v5742
        %v7126 = vmax.f32 %v7125, %v5750
        %v7127 = vmax.f32 %v7126, %v5758
        %v7128 = vmax.f32 %v7127, %v5766
        %v7129 = vmax.f32 %v7128, %v5774
        %v7130 = vmax.f32 %v7129, %v5782
        %v7131 = vmax.f32 %v7130, %v5790
        %v7132 = vmax.f32 %v7131, %v5798
        %v7133 = vmax.f32 %v7132, %v5806
        %v7134 = vmax.f32 %v7133, %v5814
        %v7135 = vmax.f32 %v7134, %v5822
        %v7136 = vmax.f32 %v7135, %v5830
        %v7137 = vmax.f32 %v7136, %v5838
        %v7138 = vmax.f32 %v7137, %v5846
        %v7139 = vmax.f32 %v7138, %v5854
        %v7140 = vmax.f32 %v7139, %v5862
        %v7141 = vmax.f32 %v7140, %v5870
        %v7142 = vmax.f32 %v7141, %v5878
        %v7143 = vmax.f32 %v7142, %v5886
        %v7144 = vmax.f32 %v7143, %v5894
        %v7145 = vmax.f32 %v7144, %v5902
        %v7146 = vmax.f32 %v7145, %v5910
        %v7147 = vmax.f32 %v7146, %v5918
        %v7148 = vmax.f32 %v7147, %v5926
        %v7149 = vmax.f32 %v7148, %v5934
        %v7150 = vmax.f32 %v7149, %v5942
        %v7151 = vmax.f32 %v7150, %v5950
        %v7152 = vmax.f32 %v7151, %v5958
        %v7153 = vmax.f32 %v7152, %v5966
        %v7154 = vmax.f32 %v7153, %v5974
        %v7155 = vmax.f32 %v7154, %v5982
        %v7156 = vmax.f32 %v7155, %v5990
        %v7157 = vmax.f32 %v7156, %v5998
        %v7158 = vmax.f32 %v7157, %v6006
        %v7159 = vmax.f32 %v7158, %v6014
        %v7160 = vmax.f32 %v7159, %v6022
        %v7161 = vmax.f32 %v7160, %v6030
        %v7162 = vmax.f32 %v7161, %v6038
        %v7163 = vmax.f32 %v7162, %v6046
        %v7164 = vmax.f32 %v7163, %v6054
        %v7165 = vmax.f32 %v7164, %v6062
        %v7166 = vmax.f32 %v7165, %v6070
        %v7167 = vmax.f32 %v7166, %v6078
        %v7168 = vmax.f32 %v7167, %v6086
        %v7169 = vmax.f32 %v7168, %v6094
        %v7170 = vmax.f32 %v7169, %v6102
        %v7171 = vmax.f32 %v7170, %v6110
        %v7172 = vmax.f32 %v7171, %v6118
        %v7173 = vmax.f32 %v7172, %v6126
        %v7174 = vmax.f32 %v7173, %v6134
        %v7175 = vmax.f32 %v7174, %v6142
        %v7176 = vmax.f32 %v7175, %v6150
        %v7177 = vmax.f32 %v7176, %v6158
        %v7178 = vmax.f32 %v7177, %v6166
        %v7179 = vmax.f32 %v7178, %v6174
        %v7180 = vmax.f32 %v7179, %v6182
        %v7181 = vmax.f32 %v7180, %v6190
        %v7182 = vmax.f32 %v7181, %v6198
        %v7183 = vmax.f32 %v7182, %v6206
        %v7184 = vmax.f32 %v7183, %v6214
        %v7185 = vmax.f32 %v7184, %v6222
        %v7186 = vmax.f32 %v7185, %v6230
        %v7187 = vmax.f32 %v7186, %v6238
        %v7188 = vmax.f32 %v7187, %v6246
        %v7189 = vmax.f32 %v7188, %v6254
        %v7190 = vmax.f32 %v7189, %v6262
        %v7191 = vmax.f32 %v7190, %v6270
        %v7192 = vmax.f32 %v7191, %v6278
        %v7193 = vmax.f32 %v7192, %v6286
        %v7194 = vmax.f32 %v7193, %v6294
        %v7195 = vmax.f32 %v7194, %v6302
        %v7196 = vmax.f32 %v7195, %v6310
        %v7197 = vmax.f32 %v7196, %v6318
        %v7198 = vmax.f32 %v7197, %v6326
        %v7199 = vmax.f32 %v7198, %v6334
        %v7200 = vmax.f32 %v7199, %v6342
        %v7201 = vmax.f32 %v7200, %v6350
        %v7202 = vmax.f32 %v7201, %v6358
        %v7203 = vmax.f32 %v7202, %v6366
        %v7204 = vmax.f32 %v7203, %v6374
        %v7205 = vmax.f32 %v7204, %v6382
        %v7206 = vmax.f32 %v7205, %v6390
        %v7207 = vmax.f32 %v7206, %v6398
        %v7208 = vmax.f32 %v7207, %v6406
        %v7209 = vmax.f32 %v7208, %v6414
        %v7210 = vmax.f32 %v7209, %v6422
        %v7211 = vmax.f32 %v7210, %v6430
        %v7212 = vmax.f32 %v7211, %v6438
        %v7213 = vmax.f32 %v7212, %v6446
        %v7214 = vmax.f32 %v7213, %v6454
        %v7215 = vmax.f32 %v7214, %v6462
        %v7216 = vmax.f32 %v7215, %v6470
        %v7217 = vmax.f32 %v7216, %v6478
        %v7218 = vmax.f32 %v7217, %v6486
        %v7219 = vmax.f32 %v7218, %v6494
        %v7220 = vmax.f32 %v7219, %v6502
        %v7221 = vmax.f32 %v7220, %v6510
        %v7222 = vmax.f32 %v7221, %v6518
        %v7223 = vmax.f32 %v7222, %v6526
        %v7224 = vmax.f32 %v7223, %v6534
        %v7225 = vmax.f32 %v7224, %v6542
        %v7226 = vmax.f32 %v7225, %v6550
        %v7227 = vmax.f32 %v7226, %v6558
        %v7228 = vmax.f32 %v7227, %v6566
        %v7229 = vmax.f32 %v7228, %v6574
        %v7230 = vmax.f32 %v7229, %v6582
        %v7231 = vmax.f32 %v7230, %v6590
        %v7232 = vmax.f32 %v7231, %v6598
        %v7233 = vmax.f32 %v7232, %v6606
        %v7234 = vmax.f32 %v7233, %v6614
        %v7235 = vmax.f32 %v7234, %v6622
        %v7236 = vmax.f32 %v7235, %v6630
        %v7237 = vmax.f32 %v7236, %v6638
        %v7238 = vmax.f32 %v7237, %v6646
        %v7239 = vmax.f32 %v7238, %v6654
        %v7240 = vmax.f32 %v7239, %v6662
        %v7241 = vmax.f32 %v7240, %v6670
        %v7242 = vmax.f32 %v7241, %v6678
        %v7243 = vmax.f32 %v7242, %v6686
        %v7244 = vmax.f32 %v7243, %v6694
        %v7245 = vmax.f32 %v7244, %v6702
        %v7246 = vmax.f32 %v7245, %v6710
        %v7247 = vrot.slane %v7246, 4
        %v7248 = vmax.f32 %v7246, %v7247
        %v7249 = vrot.slane %v7248, 2
        %v7250 = vmax.f32 %v7248, %v7249
        %v7251 = vrot.slane %v7250, 1
        %v7252 = vmax.f32 %v7250, %v7251
        %v7253 = vmax.f32 %v5695, %v5703
        %v7254 = vmax.f32 %v7253, %v5711
        %v7255 = vmax.f32 %v7254, %v5719
        %v7256 = vmax.f32 %v7255, %v5727
        %v7257 = vmax.f32 %v7256, %v5735
        %v7258 = vmax.f32 %v7257, %v5743
        %v7259 = vmax.f32 %v7258, %v5751
        %v7260 = vmax.f32 %v7259, %v5759
        %v7261 = vmax.f32 %v7260, %v5767
        %v7262 = vmax.f32 %v7261, %v5775
        %v7263 = vmax.f32 %v7262, %v5783
        %v7264 = vmax.f32 %v7263, %v5791
        %v7265 = vmax.f32 %v7264, %v5799
        %v7266 = vmax.f32 %v7265, %v5807
        %v7267 = vmax.f32 %v7266, %v5815
        %v7268 = vmax.f32 %v7267, %v5823
        %v7269 = vmax.f32 %v7268, %v5831
        %v7270 = vmax.f32 %v7269, %v5839
        %v7271 = vmax.f32 %v7270, %v5847
        %v7272 = vmax.f32 %v7271, %v5855
        %v7273 = vmax.f32 %v7272, %v5863
        %v7274 = vmax.f32 %v7273, %v5871
        %v7275 = vmax.f32 %v7274, %v5879
        %v7276 = vmax.f32 %v7275, %v5887
        %v7277 = vmax.f32 %v7276, %v5895
        %v7278 = vmax.f32 %v7277, %v5903
        %v7279 = vmax.f32 %v7278, %v5911
        %v7280 = vmax.f32 %v7279, %v5919
        %v7281 = vmax.f32 %v7280, %v5927
        %v7282 = vmax.f32 %v7281, %v5935
        %v7283 = vmax.f32 %v7282, %v5943
        %v7284 = vmax.f32 %v7283, %v5951
        %v7285 = vmax.f32 %v7284, %v5959
        %v7286 = vmax.f32 %v7285, %v5967
        %v7287 = vmax.f32 %v7286, %v5975
        %v7288 = vmax.f32 %v7287, %v5983
        %v7289 = vmax.f32 %v7288, %v5991
        %v7290 = vmax.f32 %v7289, %v5999
        %v7291 = vmax.f32 %v7290, %v6007
        %v7292 = vmax.f32 %v7291, %v6015
        %v7293 = vmax.f32 %v7292, %v6023
        %v7294 = vmax.f32 %v7293, %v6031
        %v7295 = vmax.f32 %v7294, %v6039
        %v7296 = vmax.f32 %v7295, %v6047
        %v7297 = vmax.f32 %v7296, %v6055
        %v7298 = vmax.f32 %v7297, %v6063
        %v7299 = vmax.f32 %v7298, %v6071
        %v7300 = vmax.f32 %v7299, %v6079
        %v7301 = vmax.f32 %v7300, %v6087
        %v7302 = vmax.f32 %v7301, %v6095
        %v7303 = vmax.f32 %v7302, %v6103
        %v7304 = vmax.f32 %v7303, %v6111
        %v7305 = vmax.f32 %v7304, %v6119
        %v7306 = vmax.f32 %v7305, %v6127
        %v7307 = vmax.f32 %v7306, %v6135
        %v7308 = vmax.f32 %v7307, %v6143
        %v7309 = vmax.f32 %v7308, %v6151
        %v7310 = vmax.f32 %v7309, %v6159
        %v7311 = vmax.f32 %v7310, %v6167
        %v7312 = vmax.f32 %v7311, %v6175
        %v7313 = vmax.f32 %v7312, %v6183
        %v7314 = vmax.f32 %v7313, %v6191
        %v7315 = vmax.f32 %v7314, %v6199
        %v7316 = vmax.f32 %v7315, %v6207
        %v7317 = vmax.f32 %v7316, %v6215
        %v7318 = vmax.f32 %v7317, %v6223
        %v7319 = vmax.f32 %v7318, %v6231
        %v7320 = vmax.f32 %v7319, %v6239
        %v7321 = vmax.f32 %v7320, %v6247
        %v7322 = vmax.f32 %v7321, %v6255
        %v7323 = vmax.f32 %v7322, %v6263
        %v7324 = vmax.f32 %v7323, %v6271
        %v7325 = vmax.f32 %v7324, %v6279
        %v7326 = vmax.f32 %v7325, %v6287
        %v7327 = vmax.f32 %v7326, %v6295
        %v7328 = vmax.f32 %v7327, %v6303
        %v7329 = vmax.f32 %v7328, %v6311
        %v7330 = vmax.f32 %v7329, %v6319
        %v7331 = vmax.f32 %v7330, %v6327
        %v7332 = vmax.f32 %v7331, %v6335
        %v7333 = vmax.f32 %v7332, %v6343
        %v7334 = vmax.f32 %v7333, %v6351
        %v7335 = vmax.f32 %v7334, %v6359
        %v7336 = vmax.f32 %v7335, %v6367
        %v7337 = vmax.f32 %v7336, %v6375
        %v7338 = vmax.f32 %v7337, %v6383
        %v7339 = vmax.f32 %v7338, %v6391
        %v7340 = vmax.f32 %v7339, %v6399
        %v7341 = vmax.f32 %v7340, %v6407
        %v7342 = vmax.f32 %v7341, %v6415
        %v7343 = vmax.f32 %v7342, %v6423
        %v7344 = vmax.f32 %v7343, %v6431
        %v7345 = vmax.f32 %v7344, %v6439
        %v7346 = vmax.f32 %v7345, %v6447
        %v7347 = vmax.f32 %v7346, %v6455
        %v7348 = vmax.f32 %v7347, %v6463
        %v7349 = vmax.f32 %v7348, %v6471
        %v7350 = vmax.f32 %v7349, %v6479
        %v7351 = vmax.f32 %v7350, %v6487
        %v7352 = vmax.f32 %v7351, %v6495
        %v7353 = vmax.f32 %v7352, %v6503
        %v7354 = vmax.f32 %v7353, %v6511
        %v7355 = vmax.f32 %v7354, %v6519
        %v7356 = vmax.f32 %v7355, %v6527
        %v7357 = vmax.f32 %v7356, %v6535
        %v7358 = vmax.f32 %v7357, %v6543
        %v7359 = vmax.f32 %v7358, %v6551
        %v7360 = vmax.f32 %v7359, %v6559
        %v7361 = vmax.f32 %v7360, %v6567
        %v7362 = vmax.f32 %v7361, %v6575
        %v7363 = vmax.f32 %v7362, %v6583
        %v7364 = vmax.f32 %v7363, %v6591
        %v7365 = vmax.f32 %v7364, %v6599
        %v7366 = vmax.f32 %v7365, %v6607
        %v7367 = vmax.f32 %v7366, %v6615
        %v7368 = vmax.f32 %v7367, %v6623
        %v7369 = vmax.f32 %v7368, %v6631
        %v7370 = vmax.f32 %v7369, %v6639
        %v7371 = vmax.f32 %v7370, %v6647
        %v7372 = vmax.f32 %v7371, %v6655
        %v7373 = vmax.f32 %v7372, %v6663
        %v7374 = vmax.f32 %v7373, %v6671
        %v7375 = vmax.f32 %v7374, %v6679
        %v7376 = vmax.f32 %v7375, %v6687
        %v7377 = vmax.f32 %v7376, %v6695
        %v7378 = vmax.f32 %v7377, %v6703
        %v7379 = vmax.f32 %v7378, %v6711
        %v7380 = vrot.slane %v7379, 4
        %v7381 = vmax.f32 %v7379, %v7380
        %v7382 = vrot.slane %v7381, 2
        %v7383 = vmax.f32 %v7381, %v7382
        %v7384 = vrot.slane %v7383, 1
        %v7385 = vmax.f32 %v7383, %v7384
        %v7386 = vmax.f32 %v5696, %v5704
        %v7387 = vmax.f32 %v7386, %v5712
        %v7388 = vmax.f32 %v7387, %v5720
        %v7389 = vmax.f32 %v7388, %v5728
        %v7390 = vmax.f32 %v7389, %v5736
        %v7391 = vmax.f32 %v7390, %v5744
        %v7392 = vmax.f32 %v7391, %v5752
        %v7393 = vmax.f32 %v7392, %v5760
        %v7394 = vmax.f32 %v7393, %v5768
        %v7395 = vmax.f32 %v7394, %v5776
        %v7396 = vmax.f32 %v7395, %v5784
        %v7397 = vmax.f32 %v7396, %v5792
        %v7398 = vmax.f32 %v7397, %v5800
        %v7399 = vmax.f32 %v7398, %v5808
        %v7400 = vmax.f32 %v7399, %v5816
        %v7401 = vmax.f32 %v7400, %v5824
        %v7402 = vmax.f32 %v7401, %v5832
        %v7403 = vmax.f32 %v7402, %v5840
        %v7404 = vmax.f32 %v7403, %v5848
        %v7405 = vmax.f32 %v7404, %v5856
        %v7406 = vmax.f32 %v7405, %v5864
        %v7407 = vmax.f32 %v7406, %v5872
        %v7408 = vmax.f32 %v7407, %v5880
        %v7409 = vmax.f32 %v7408, %v5888
        %v7410 = vmax.f32 %v7409, %v5896
        %v7411 = vmax.f32 %v7410, %v5904
        %v7412 = vmax.f32 %v7411, %v5912
        %v7413 = vmax.f32 %v7412, %v5920
        %v7414 = vmax.f32 %v7413, %v5928
        %v7415 = vmax.f32 %v7414, %v5936
        %v7416 = vmax.f32 %v7415, %v5944
        %v7417 = vmax.f32 %v7416, %v5952
        %v7418 = vmax.f32 %v7417, %v5960
        %v7419 = vmax.f32 %v7418, %v5968
        %v7420 = vmax.f32 %v7419, %v5976
        %v7421 = vmax.f32 %v7420, %v5984
        %v7422 = vmax.f32 %v7421, %v5992
        %v7423 = vmax.f32 %v7422, %v6000
        %v7424 = vmax.f32 %v7423, %v6008
        %v7425 = vmax.f32 %v7424, %v6016
        %v7426 = vmax.f32 %v7425, %v6024
        %v7427 = vmax.f32 %v7426, %v6032
        %v7428 = vmax.f32 %v7427, %v6040
        %v7429 = vmax.f32 %v7428, %v6048
        %v7430 = vmax.f32 %v7429, %v6056
        %v7431 = vmax.f32 %v7430, %v6064
        %v7432 = vmax.f32 %v7431, %v6072
        %v7433 = vmax.f32 %v7432, %v6080
        %v7434 = vmax.f32 %v7433, %v6088
        %v7435 = vmax.f32 %v7434, %v6096
        %v7436 = vmax.f32 %v7435, %v6104
        %v7437 = vmax.f32 %v7436, %v6112
        %v7438 = vmax.f32 %v7437, %v6120
        %v7439 = vmax.f32 %v7438, %v6128
        %v7440 = vmax.f32 %v7439, %v6136
        %v7441 = vmax.f32 %v7440, %v6144
        %v7442 = vmax.f32 %v7441, %v6152
        %v7443 = vmax.f32 %v7442, %v6160
        %v7444 = vmax.f32 %v7443, %v6168
        %v7445 = vmax.f32 %v7444, %v6176
        %v7446 = vmax.f32 %v7445, %v6184
        %v7447 = vmax.f32 %v7446, %v6192
        %v7448 = vmax.f32 %v7447, %v6200
        %v7449 = vmax.f32 %v7448, %v6208
        %v7450 = vmax.f32 %v7449, %v6216
        %v7451 = vmax.f32 %v7450, %v6224
        %v7452 = vmax.f32 %v7451, %v6232
        %v7453 = vmax.f32 %v7452, %v6240
        %v7454 = vmax.f32 %v7453, %v6248
        %v7455 = vmax.f32 %v7454, %v6256
        %v7456 = vmax.f32 %v7455, %v6264
        %v7457 = vmax.f32 %v7456, %v6272
        %v7458 = vmax.f32 %v7457, %v6280
        %v7459 = vmax.f32 %v7458, %v6288
        %v7460 = vmax.f32 %v7459, %v6296
        %v7461 = vmax.f32 %v7460, %v6304
        %v7462 = vmax.f32 %v7461, %v6312
        %v7463 = vmax.f32 %v7462, %v6320
        %v7464 = vmax.f32 %v7463, %v6328
        %v7465 = vmax.f32 %v7464, %v6336
        %v7466 = vmax.f32 %v7465, %v6344
        %v7467 = vmax.f32 %v7466, %v6352
        %v7468 = vmax.f32 %v7467, %v6360
        %v7469 = vmax.f32 %v7468, %v6368
        %v7470 = vmax.f32 %v7469, %v6376
        %v7471 = vmax.f32 %v7470, %v6384
        %v7472 = vmax.f32 %v7471, %v6392
        %v7473 = vmax.f32 %v7472, %v6400
        %v7474 = vmax.f32 %v7473, %v6408
        %v7475 = vmax.f32 %v7474, %v6416
        %v7476 = vmax.f32 %v7475, %v6424
        %v7477 = vmax.f32 %v7476, %v6432
        %v7478 = vmax.f32 %v7477, %v6440
        %v7479 = vmax.f32 %v7478, %v6448
        %v7480 = vmax.f32 %v7479, %v6456
        %v7481 = vmax.f32 %v7480, %v6464
        %v7482 = vmax.f32 %v7481, %v6472
        %v7483 = vmax.f32 %v7482, %v6480
        %v7484 = vmax.f32 %v7483, %v6488
        %v7485 = vmax.f32 %v7484, %v6496
        %v7486 = vmax.f32 %v7485, %v6504
        %v7487 = vmax.f32 %v7486, %v6512
        %v7488 = vmax.f32 %v7487, %v6520
        %v7489 = vmax.f32 %v7488, %v6528
        %v7490 = vmax.f32 %v7489, %v6536
        %v7491 = vmax.f32 %v7490, %v6544
        %v7492 = vmax.f32 %v7491, %v6552
        %v7493 = vmax.f32 %v7492, %v6560
        %v7494 = vmax.f32 %v7493, %v6568
        %v7495 = vmax.f32 %v7494, %v6576
        %v7496 = vmax.f32 %v7495, %v6584
        %v7497 = vmax.f32 %v7496, %v6592
        %v7498 = vmax.f32 %v7497, %v6600
        %v7499 = vmax.f32 %v7498, %v6608
        %v7500 = vmax.f32 %v7499, %v6616
        %v7501 = vmax.f32 %v7500, %v6624
        %v7502 = vmax.f32 %v7501, %v6632
        %v7503 = vmax.f32 %v7502, %v6640
        %v7504 = vmax.f32 %v7503, %v6648
        %v7505 = vmax.f32 %v7504, %v6656
        %v7506 = vmax.f32 %v7505, %v6664
        %v7507 = vmax.f32 %v7506, %v6672
        %v7508 = vmax.f32 %v7507, %v6680
        %v7509 = vmax.f32 %v7508, %v6688
        %v7510 = vmax.f32 %v7509, %v6696
        %v7511 = vmax.f32 %v7510, %v6704
        %v7512 = vmax.f32 %v7511, %v6712
        %v7513 = vrot.slane %v7512, 4
        %v7514 = vmax.f32 %v7512, %v7513
        %v7515 = vrot.slane %v7514, 2
        %v7516 = vmax.f32 %v7514, %v7515
        %v7517 = vrot.slane %v7516, 1
        %v7518 = vmax.f32 %v7516, %v7517
        %v7519 = vmax.f32 %v5697, %v5705
        %v7520 = vmax.f32 %v7519, %v5713
        %v7521 = vmax.f32 %v7520, %v5721
        %v7522 = vmax.f32 %v7521, %v5729
        %v7523 = vmax.f32 %v7522, %v5737
        %v7524 = vmax.f32 %v7523, %v5745
        %v7525 = vmax.f32 %v7524, %v5753
        %v7526 = vmax.f32 %v7525, %v5761
        %v7527 = vmax.f32 %v7526, %v5769
        %v7528 = vmax.f32 %v7527, %v5777
        %v7529 = vmax.f32 %v7528, %v5785
        %v7530 = vmax.f32 %v7529, %v5793
        %v7531 = vmax.f32 %v7530, %v5801
        %v7532 = vmax.f32 %v7531, %v5809
        %v7533 = vmax.f32 %v7532, %v5817
        %v7534 = vmax.f32 %v7533, %v5825
        %v7535 = vmax.f32 %v7534, %v5833
        %v7536 = vmax.f32 %v7535, %v5841
        %v7537 = vmax.f32 %v7536, %v5849
        %v7538 = vmax.f32 %v7537, %v5857
        %v7539 = vmax.f32 %v7538, %v5865
        %v7540 = vmax.f32 %v7539, %v5873
        %v7541 = vmax.f32 %v7540, %v5881
        %v7542 = vmax.f32 %v7541, %v5889
        %v7543 = vmax.f32 %v7542, %v5897
        %v7544 = vmax.f32 %v7543, %v5905
        %v7545 = vmax.f32 %v7544, %v5913
        %v7546 = vmax.f32 %v7545, %v5921
        %v7547 = vmax.f32 %v7546, %v5929
        %v7548 = vmax.f32 %v7547, %v5937
        %v7549 = vmax.f32 %v7548, %v5945
        %v7550 = vmax.f32 %v7549, %v5953
        %v7551 = vmax.f32 %v7550, %v5961
        %v7552 = vmax.f32 %v7551, %v5969
        %v7553 = vmax.f32 %v7552, %v5977
        %v7554 = vmax.f32 %v7553, %v5985
        %v7555 = vmax.f32 %v7554, %v5993
        %v7556 = vmax.f32 %v7555, %v6001
        %v7557 = vmax.f32 %v7556, %v6009
        %v7558 = vmax.f32 %v7557, %v6017
        %v7559 = vmax.f32 %v7558, %v6025
        %v7560 = vmax.f32 %v7559, %v6033
        %v7561 = vmax.f32 %v7560, %v6041
        %v7562 = vmax.f32 %v7561, %v6049
        %v7563 = vmax.f32 %v7562, %v6057
        %v7564 = vmax.f32 %v7563, %v6065
        %v7565 = vmax.f32 %v7564, %v6073
        %v7566 = vmax.f32 %v7565, %v6081
        %v7567 = vmax.f32 %v7566, %v6089
        %v7568 = vmax.f32 %v7567, %v6097
        %v7569 = vmax.f32 %v7568, %v6105
        %v7570 = vmax.f32 %v7569, %v6113
        %v7571 = vmax.f32 %v7570, %v6121
        %v7572 = vmax.f32 %v7571, %v6129
        %v7573 = vmax.f32 %v7572, %v6137
        %v7574 = vmax.f32 %v7573, %v6145
        %v7575 = vmax.f32 %v7574, %v6153
        %v7576 = vmax.f32 %v7575, %v6161
        %v7577 = vmax.f32 %v7576, %v6169
        %v7578 = vmax.f32 %v7577, %v6177
        %v7579 = vmax.f32 %v7578, %v6185
        %v7580 = vmax.f32 %v7579, %v6193
        %v7581 = vmax.f32 %v7580, %v6201
        %v7582 = vmax.f32 %v7581, %v6209
        %v7583 = vmax.f32 %v7582, %v6217
        %v7584 = vmax.f32 %v7583, %v6225
        %v7585 = vmax.f32 %v7584, %v6233
        %v7586 = vmax.f32 %v7585, %v6241
        %v7587 = vmax.f32 %v7586, %v6249
        %v7588 = vmax.f32 %v7587, %v6257
        %v7589 = vmax.f32 %v7588, %v6265
        %v7590 = vmax.f32 %v7589, %v6273
        %v7591 = vmax.f32 %v7590, %v6281
        %v7592 = vmax.f32 %v7591, %v6289
        %v7593 = vmax.f32 %v7592, %v6297
        %v7594 = vmax.f32 %v7593, %v6305
        %v7595 = vmax.f32 %v7594, %v6313
        %v7596 = vmax.f32 %v7595, %v6321
        %v7597 = vmax.f32 %v7596, %v6329
        %v7598 = vmax.f32 %v7597, %v6337
        %v7599 = vmax.f32 %v7598, %v6345
        %v7600 = vmax.f32 %v7599, %v6353
        %v7601 = vmax.f32 %v7600, %v6361
        %v7602 = vmax.f32 %v7601, %v6369
        %v7603 = vmax.f32 %v7602, %v6377
        %v7604 = vmax.f32 %v7603, %v6385
        %v7605 = vmax.f32 %v7604, %v6393
        %v7606 = vmax.f32 %v7605, %v6401
        %v7607 = vmax.f32 %v7606, %v6409
        %v7608 = vmax.f32 %v7607, %v6417
        %v7609 = vmax.f32 %v7608, %v6425
        %v7610 = vmax.f32 %v7609, %v6433
        %v7611 = vmax.f32 %v7610, %v6441
        %v7612 = vmax.f32 %v7611, %v6449
        %v7613 = vmax.f32 %v7612, %v6457
        %v7614 = vmax.f32 %v7613, %v6465
        %v7615 = vmax.f32 %v7614, %v6473
        %v7616 = vmax.f32 %v7615, %v6481
        %v7617 = vmax.f32 %v7616, %v6489
        %v7618 = vmax.f32 %v7617, %v6497
        %v7619 = vmax.f32 %v7618, %v6505
        %v7620 = vmax.f32 %v7619, %v6513
        %v7621 = vmax.f32 %v7620, %v6521
        %v7622 = vmax.f32 %v7621, %v6529
        %v7623 = vmax.f32 %v7622, %v6537
        %v7624 = vmax.f32 %v7623, %v6545
        %v7625 = vmax.f32 %v7624, %v6553
        %v7626 = vmax.f32 %v7625, %v6561
        %v7627 = vmax.f32 %v7626, %v6569
        %v7628 = vmax.f32 %v7627, %v6577
        %v7629 = vmax.f32 %v7628, %v6585
        %v7630 = vmax.f32 %v7629, %v6593
        %v7631 = vmax.f32 %v7630, %v6601
        %v7632 = vmax.f32 %v7631, %v6609
        %v7633 = vmax.f32 %v7632, %v6617
        %v7634 = vmax.f32 %v7633, %v6625
        %v7635 = vmax.f32 %v7634, %v6633
        %v7636 = vmax.f32 %v7635, %v6641
        %v7637 = vmax.f32 %v7636, %v6649
        %v7638 = vmax.f32 %v7637, %v6657
        %v7639 = vmax.f32 %v7638, %v6665
        %v7640 = vmax.f32 %v7639, %v6673
        %v7641 = vmax.f32 %v7640, %v6681
        %v7642 = vmax.f32 %v7641, %v6689
        %v7643 = vmax.f32 %v7642, %v6697
        %v7644 = vmax.f32 %v7643, %v6705
        %v7645 = vmax.f32 %v7644, %v6713
        %v7646 = vrot.slane %v7645, 4
        %v7647 = vmax.f32 %v7645, %v7646
        %v7648 = vrot.slane %v7647, 2
        %v7649 = vmax.f32 %v7647, %v7648
        %v7650 = vrot.slane %v7649, 1
        %v7651 = vmax.f32 %v7649, %v7650
        %v7652 = vmax.f32 %v5698, %v5706
        %v7653 = vmax.f32 %v7652, %v5714
        %v7654 = vmax.f32 %v7653, %v5722
        %v7655 = vmax.f32 %v7654, %v5730
        %v7656 = vmax.f32 %v7655, %v5738
        %v7657 = vmax.f32 %v7656, %v5746
        %v7658 = vmax.f32 %v7657, %v5754
        %v7659 = vmax.f32 %v7658, %v5762
        %v7660 = vmax.f32 %v7659, %v5770
        %v7661 = vmax.f32 %v7660, %v5778
        %v7662 = vmax.f32 %v7661, %v5786
        %v7663 = vmax.f32 %v7662, %v5794
        %v7664 = vmax.f32 %v7663, %v5802
        %v7665 = vmax.f32 %v7664, %v5810
        %v7666 = vmax.f32 %v7665, %v5818
        %v7667 = vmax.f32 %v7666, %v5826
        %v7668 = vmax.f32 %v7667, %v5834
        %v7669 = vmax.f32 %v7668, %v5842
        %v7670 = vmax.f32 %v7669, %v5850
        %v7671 = vmax.f32 %v7670, %v5858
        %v7672 = vmax.f32 %v7671, %v5866
        %v7673 = vmax.f32 %v7672, %v5874
        %v7674 = vmax.f32 %v7673, %v5882
        %v7675 = vmax.f32 %v7674, %v5890
        %v7676 = vmax.f32 %v7675, %v5898
        %v7677 = vmax.f32 %v7676, %v5906
        %v7678 = vmax.f32 %v7677, %v5914
        %v7679 = vmax.f32 %v7678, %v5922
        %v7680 = vmax.f32 %v7679, %v5930
        %v7681 = vmax.f32 %v7680, %v5938
        %v7682 = vmax.f32 %v7681, %v5946
        %v7683 = vmax.f32 %v7682, %v5954
        %v7684 = vmax.f32 %v7683, %v5962
        %v7685 = vmax.f32 %v7684, %v5970
        %v7686 = vmax.f32 %v7685, %v5978
        %v7687 = vmax.f32 %v7686, %v5986
        %v7688 = vmax.f32 %v7687, %v5994
        %v7689 = vmax.f32 %v7688, %v6002
        %v7690 = vmax.f32 %v7689, %v6010
        %v7691 = vmax.f32 %v7690, %v6018
        %v7692 = vmax.f32 %v7691, %v6026
        %v7693 = vmax.f32 %v7692, %v6034
        %v7694 = vmax.f32 %v7693, %v6042
        %v7695 = vmax.f32 %v7694, %v6050
        %v7696 = vmax.f32 %v7695, %v6058
        %v7697 = vmax.f32 %v7696, %v6066
        %v7698 = vmax.f32 %v7697, %v6074
        %v7699 = vmax.f32 %v7698, %v6082
        %v7700 = vmax.f32 %v7699, %v6090
        %v7701 = vmax.f32 %v7700, %v6098
        %v7702 = vmax.f32 %v7701, %v6106
        %v7703 = vmax.f32 %v7702, %v6114
        %v7704 = vmax.f32 %v7703, %v6122
        %v7705 = vmax.f32 %v7704, %v6130
        %v7706 = vmax.f32 %v7705, %v6138
        %v7707 = vmax.f32 %v7706, %v6146
        %v7708 = vmax.f32 %v7707, %v6154
        %v7709 = vmax.f32 %v7708, %v6162
        %v7710 = vmax.f32 %v7709, %v6170
        %v7711 = vmax.f32 %v7710, %v6178
        %v7712 = vmax.f32 %v7711, %v6186
        %v7713 = vmax.f32 %v7712, %v6194
        %v7714 = vmax.f32 %v7713, %v6202
        %v7715 = vmax.f32 %v7714, %v6210
        %v7716 = vmax.f32 %v7715, %v6218
        %v7717 = vmax.f32 %v7716, %v6226
        %v7718 = vmax.f32 %v7717, %v6234
        %v7719 = vmax.f32 %v7718, %v6242
        %v7720 = vmax.f32 %v7719, %v6250
        %v7721 = vmax.f32 %v7720, %v6258
        %v7722 = vmax.f32 %v7721, %v6266
        %v7723 = vmax.f32 %v7722, %v6274
        %v7724 = vmax.f32 %v7723, %v6282
        %v7725 = vmax.f32 %v7724, %v6290
        %v7726 = vmax.f32 %v7725, %v6298
        %v7727 = vmax.f32 %v7726, %v6306
        %v7728 = vmax.f32 %v7727, %v6314
        %v7729 = vmax.f32 %v7728, %v6322
        %v7730 = vmax.f32 %v7729, %v6330
        %v7731 = vmax.f32 %v7730, %v6338
        %v7732 = vmax.f32 %v7731, %v6346
        %v7733 = vmax.f32 %v7732, %v6354
        %v7734 = vmax.f32 %v7733, %v6362
        %v7735 = vmax.f32 %v7734, %v6370
        %v7736 = vmax.f32 %v7735, %v6378
        %v7737 = vmax.f32 %v7736, %v6386
        %v7738 = vmax.f32 %v7737, %v6394
        %v7739 = vmax.f32 %v7738, %v6402
        %v7740 = vmax.f32 %v7739, %v6410
        %v7741 = vmax.f32 %v7740, %v6418
        %v7742 = vmax.f32 %v7741, %v6426
        %v7743 = vmax.f32 %v7742, %v6434
        %v7744 = vmax.f32 %v7743, %v6442
        %v7745 = vmax.f32 %v7744, %v6450
        %v7746 = vmax.f32 %v7745, %v6458
        %v7747 = vmax.f32 %v7746, %v6466
        %v7748 = vmax.f32 %v7747, %v6474
        %v7749 = vmax.f32 %v7748, %v6482
        %v7750 = vmax.f32 %v7749, %v6490
        %v7751 = vmax.f32 %v7750, %v6498
        %v7752 = vmax.f32 %v7751, %v6506
        %v7753 = vmax.f32 %v7752, %v6514
        %v7754 = vmax.f32 %v7753, %v6522
        %v7755 = vmax.f32 %v7754, %v6530
        %v7756 = vmax.f32 %v7755, %v6538
        %v7757 = vmax.f32 %v7756, %v6546
        %v7758 = vmax.f32 %v7757, %v6554
        %v7759 = vmax.f32 %v7758, %v6562
        %v7760 = vmax.f32 %v7759, %v6570
        %v7761 = vmax.f32 %v7760, %v6578
        %v7762 = vmax.f32 %v7761, %v6586
        %v7763 = vmax.f32 %v7762, %v6594
        %v7764 = vmax.f32 %v7763, %v6602
        %v7765 = vmax.f32 %v7764, %v6610
        %v7766 = vmax.f32 %v7765, %v6618
        %v7767 = vmax.f32 %v7766, %v6626
        %v7768 = vmax.f32 %v7767, %v6634
        %v7769 = vmax.f32 %v7768, %v6642
        %v7770 = vmax.f32 %v7769, %v6650
        %v7771 = vmax.f32 %v7770, %v6658
        %v7772 = vmax.f32 %v7771, %v6666
        %v7773 = vmax.f32 %v7772, %v6674
        %v7774 = vmax.f32 %v7773, %v6682
        %v7775 = vmax.f32 %v7774, %v6690
        %v7776 = vmax.f32 %v7775, %v6698
        %v7777 = vmax.f32 %v7776, %v6706
        %v7778 = vmax.f32 %v7777, %v6714
        %v7779 = vrot.slane %v7778, 4
        %v7780 = vmax.f32 %v7778, %v7779
        %v7781 = vrot.slane %v7780, 2
        %v7782 = vmax.f32 %v7780, %v7781
        %v7783 = vrot.slane %v7782, 1
        %v7784 = vmax.f32 %v7782, %v7783
        %v7793 = vcombine.low %v6853, %v6986
        %v7794 = vcombine.low %v7119, %v7252
        %v7795 = vcombine.low %v7385, %v7518
        %v7796 = vcombine.low %v7651, %v7784
        %v7798 = vunpack.c.l.s4 1966171168
        %v7799 = vunpack.c.0.s8 %v7798
        %v7800 = vlaneseq
        %v7801 = vshrl.u32 %v7800, 7
        %v7802 = vsub.s32 %v7799, %v7801
        %v7803 = vrot.slane %v7793, %v7802
        %v7805 = vunpack.c.l.s4 1966171168
        %v7806 = vunpack.c.0.s8 %v7805
        %v7807 = vlaneseq
        %v7808 = vshrl.u32 %v7807, 7
        %v7809 = vsub.s32 %v7806, %v7808
        %v7810 = vrot.slane %v7794, %v7809
        %v7812 = vunpack.c.l.s4 1966171168
        %v7813 = vunpack.c.0.s8 %v7812
        %v7814 = vlaneseq
        %v7815 = vshrl.u32 %v7814, 7
        %v7816 = vsub.s32 %v7813, %v7815
        %v7817 = vrot.slane %v7795, %v7816
        %v7819 = vunpack.c.l.s4 1966171168
        %v7820 = vunpack.c.0.s8 %v7819
        %v7821 = vlaneseq
        %v7822 = vshrl.u32 %v7821, 7
        %v7823 = vsub.s32 %v7820, %v7822
        %v7824 = vrot.slane %v7796, %v7823
        %v7825 = vcombine.low %v7803, %v7810
        %v7826 = vcombine.low %v7817, %v7824
        %v7828 = vunpack.c.l.s4 1966171168
        %v7829 = vunpack.c.0.s8 %v7828
        %v7830 = vlaneseq
        %v7831 = vshrl.u32 %v7830, 7
        %v7832 = vsub.s32 %v7829, %v7831
        %v7833 = vrot.slane %v7825, %v7832
        %v7835 = vunpack.c.l.s4 1966171168
        %v7836 = vunpack.c.0.s8 %v7835
        %v7837 = vlaneseq
        %v7838 = vshrl.u32 %v7837, 7
        %v7839 = vsub.s32 %v7836, %v7838
        %v7840 = vrot.slane %v7826, %v7839
        %v7841 = vcombine.low %v7833, %v7840
        %v7843 = vmax.f32 %v6720, %v7841
        %7844 = vst [vmem:[#allocation2] sm:$0xff] %v7843
        %p7845 = scmp.eq.s32.totalorder %s32, 1
        // Predicated region
        $region77: #{tpu_custom_call.1} parent=71 // pred_check
          %p7846 = pneg %p7845
        $region78: #{tpu_custom_call.1} parent=71 // pred_check_branch
          %7848 = sbr.rel (%p7846) target = $region80
        $region79: #{tpu_custom_call.1} parent=71 // pred_region
          %v7849 = vld [vmem:[#allocation2] sm:$0xff]
          %v7851 = vlaneseq
          %v7852 = vshrl.u32 %v7851, 7
          %v7853 = vsub.s32 0, %v7852
          %v7854 = vrot.slane %v7849, %v7853
          %v7855 = vlaneseq
          %v7856 = vshrl.u32 %v7855, 7
          %v7857 = vsub.s32 1, %v7856
          %v7858 = vrot.slane %v7849, %v7857
          %v7859 = vlaneseq
          %v7860 = vshrl.u32 %v7859, 7
          %v7861 = vsub.s32 2, %v7860
          %v7862 = vrot.slane %v7849, %v7861
          %v7863 = vlaneseq
          %v7864 = vshrl.u32 %v7863, 7
          %v7865 = vsub.s32 3, %v7864
          %v7866 = vrot.slane %v7849, %v7865
          %v7867 = vlaneseq
          %v7868 = vshrl.u32 %v7867, 7
          %v7869 = vsub.s32 4, %v7868
          %v7870 = vrot.slane %v7849, %v7869
          %v7871 = vlaneseq
          %v7872 = vshrl.u32 %v7871, 7
          %v7873 = vsub.s32 5, %v7872
          %v7874 = vrot.slane %v7849, %v7873
          %v7875 = vlaneseq
          %v7876 = vshrl.u32 %v7875, 7
          %v7877 = vsub.s32 6, %v7876
          %v7878 = vrot.slane %v7849, %v7877
          %v7879 = vlaneseq
          %v7880 = vshrl.u32 %v7879, 7
          %v7881 = vsub.s32 7, %v7880
          %v7882 = vrot.slane %v7849, %v7881
          %v7891 = vpack.c.bf16 %v7854, %v7854
          %v7892 = vpack.c.bf16 %v7858, %v7858
          %v7893 = vpack.c.bf16 %v7862, %v7862
          %v7894 = vpack.c.bf16 %v7866, %v7866
          %v7895 = vpack.c.bf16 %v7870, %v7870
          %v7896 = vpack.c.bf16 %v7874, %v7874
          %v7897 = vpack.c.bf16 %v7878, %v7878
          %v7898 = vpack.c.bf16 %v7882, %v7882
          %v7899 = vld [vmem:[%s7] sm:$0xff]
          %v7900 = vld [vmem:[%s7 + $0x8] sm:$0xff]
          %v7901 = vld [vmem:[%s7 + $0x10] sm:$0xff]
          %v7902 = vld [vmem:[%s7 + $0x18] sm:$0xff]
          %v7903 = vld [vmem:[%s7 + $0x20] sm:$0xff]
          %v7904 = vld [vmem:[%s7 + $0x28] sm:$0xff]
          %v7905 = vld [vmem:[%s7 + $0x30] sm:$0xff]
          %v7906 = vld [vmem:[%s7 + $0x38] sm:$0xff]
          %v7907 = vld [vmem:[%s7 + $0x40] sm:$0xff]
          %v7908 = vld [vmem:[%s7 + $0x48] sm:$0xff]
          %v7909 = vld [vmem:[%s7 + $0x50] sm:$0xff]
          %v7910 = vld [vmem:[%s7 + $0x58] sm:$0xff]
          %v7911 = vld [vmem:[%s7 + $0x60] sm:$0xff]
          %v7912 = vld [vmem:[%s7 + $0x68] sm:$0xff]
          %v7913 = vld [vmem:[%s7 + $0x70] sm:$0xff]
          %v7914 = vld [vmem:[%s7 + $0x78] sm:$0xff]
          %v7915 = vld [vmem:[%s7 + $0x80] sm:$0xff]
          %v7916 = vld [vmem:[%s7 + $0x88] sm:$0xff]
          %v7917 = vld [vmem:[%s7 + $0x90] sm:$0xff]
          %v7918 = vld [vmem:[%s7 + $0x98] sm:$0xff]
          %v7919 = vld [vmem:[%s7 + $0xa0] sm:$0xff]
          %v7920 = vld [vmem:[%s7 + $0xa8] sm:$0xff]
          %v7921 = vld [vmem:[%s7 + $0xb0] sm:$0xff]
          %v7922 = vld [vmem:[%s7 + $0xb8] sm:$0xff]
          %v7923 = vld [vmem:[%s7 + $0xc0] sm:$0xff]
          %v7924 = vld [vmem:[%s7 + $0xc8] sm:$0xff]
          %v7925 = vld [vmem:[%s7 + $0xd0] sm:$0xff]
          %v7926 = vld [vmem:[%s7 + $0xd8] sm:$0xff]
          %v7927 = vld [vmem:[%s7 + $0xe0] sm:$0xff]
          %v7928 = vld [vmem:[%s7 + $0xe8] sm:$0xff]
          %v7929 = vld [vmem:[%s7 + $0xf0] sm:$0xff]
          %v7930 = vld [vmem:[%s7 + $0xf8] sm:$0xff]
          %v7931 = vld [vmem:[%s7 + $0x100] sm:$0xff]
          %v7932 = vld [vmem:[%s7 + $0x108] sm:$0xff]
          %v7933 = vld [vmem:[%s7 + $0x110] sm:$0xff]
          %v7934 = vld [vmem:[%s7 + $0x118] sm:$0xff]
          %v7935 = vld [vmem:[%s7 + $0x120] sm:$0xff]
          %v7936 = vld [vmem:[%s7 + $0x128] sm:$0xff]
          %v7937 = vld [vmem:[%s7 + $0x130] sm:$0xff]
          %v7938 = vld [vmem:[%s7 + $0x138] sm:$0xff]
          %v7939 = vld [vmem:[%s7 + $0x140] sm:$0xff]
          %v7940 = vld [vmem:[%s7 + $0x148] sm:$0xff]
          %v7941 = vld [vmem:[%s7 + $0x150] sm:$0xff]
          %v7942 = vld [vmem:[%s7 + $0x158] sm:$0xff]
          %v7943 = vld [vmem:[%s7 + $0x160] sm:$0xff]
          %v7944 = vld [vmem:[%s7 + $0x168] sm:$0xff]
          %v7945 = vld [vmem:[%s7 + $0x170] sm:$0xff]
          %v7946 = vld [vmem:[%s7 + $0x178] sm:$0xff]
          %v7947 = vld [vmem:[%s7 + $0x180] sm:$0xff]
          %v7948 = vld [vmem:[%s7 + $0x188] sm:$0xff]
          %v7949 = vld [vmem:[%s7 + $0x190] sm:$0xff]
          %v7950 = vld [vmem:[%s7 + $0x198] sm:$0xff]
          %v7951 = vld [vmem:[%s7 + $0x1a0] sm:$0xff]
          %v7952 = vld [vmem:[%s7 + $0x1a8] sm:$0xff]
          %v7953 = vld [vmem:[%s7 + $0x1b0] sm:$0xff]
          %v7954 = vld [vmem:[%s7 + $0x1b8] sm:$0xff]
          %v7955 = vld [vmem:[%s7 + $0x1c0] sm:$0xff]
          %v7956 = vld [vmem:[%s7 + $0x1c8] sm:$0xff]
          %v7957 = vld [vmem:[%s7 + $0x1d0] sm:$0xff]
          %v7958 = vld [vmem:[%s7 + $0x1d8] sm:$0xff]
          %v7959 = vld [vmem:[%s7 + $0x1e0] sm:$0xff]
          %v7960 = vld [vmem:[%s7 + $0x1e8] sm:$0xff]
          %v7961 = vld [vmem:[%s7 + $0x1f0] sm:$0xff]
          %v7962 = vld [vmem:[%s7 + $0x1f8] sm:$0xff]
          %v7963 = vld [vmem:[%s7 + $0x200] sm:$0xff]
          %v7964 = vld [vmem:[%s7 + $0x208] sm:$0xff]
          %v7965 = vld [vmem:[%s7 + $0x210] sm:$0xff]
          %v7966 = vld [vmem:[%s7 + $0x218] sm:$0xff]
          %v7967 = vld [vmem:[%s7 + $0x220] sm:$0xff]
          %v7968 = vld [vmem:[%s7 + $0x228] sm:$0xff]
          %v7969 = vld [vmem:[%s7 + $0x230] sm:$0xff]
          %v7970 = vld [vmem:[%s7 + $0x238] sm:$0xff]
          %v7971 = vld [vmem:[%s7 + $0x240] sm:$0xff]
          %v7972 = vld [vmem:[%s7 + $0x248] sm:$0xff]
          %v7973 = vld [vmem:[%s7 + $0x250] sm:$0xff]
          %v7974 = vld [vmem:[%s7 + $0x258] sm:$0xff]
          %v7975 = vld [vmem:[%s7 + $0x260] sm:$0xff]
          %v7976 = vld [vmem:[%s7 + $0x268] sm:$0xff]
          %v7977 = vld [vmem:[%s7 + $0x270] sm:$0xff]
          %v7978 = vld [vmem:[%s7 + $0x278] sm:$0xff]
          %v7979 = vld [vmem:[%s7 + $0x280] sm:$0xff]
          %v7980 = vld [vmem:[%s7 + $0x288] sm:$0xff]
          %v7981 = vld [vmem:[%s7 + $0x290] sm:$0xff]
          %v7982 = vld [vmem:[%s7 + $0x298] sm:$0xff]
          %v7983 = vld [vmem:[%s7 + $0x2a0] sm:$0xff]
          %v7984 = vld [vmem:[%s7 + $0x2a8] sm:$0xff]
          %v7985 = vld [vmem:[%s7 + $0x2b0] sm:$0xff]
          %v7986 = vld [vmem:[%s7 + $0x2b8] sm:$0xff]
          %v7987 = vld [vmem:[%s7 + $0x2c0] sm:$0xff]
          %v7988 = vld [vmem:[%s7 + $0x2c8] sm:$0xff]
          %v7989 = vld [vmem:[%s7 + $0x2d0] sm:$0xff]
          %v7990 = vld [vmem:[%s7 + $0x2d8] sm:$0xff]
          %v7991 = vld [vmem:[%s7 + $0x2e0] sm:$0xff]
          %v7992 = vld [vmem:[%s7 + $0x2e8] sm:$0xff]
          %v7993 = vld [vmem:[%s7 + $0x2f0] sm:$0xff]
          %v7994 = vld [vmem:[%s7 + $0x2f8] sm:$0xff]
          %v7995 = vld [vmem:[%s7 + $0x300] sm:$0xff]
          %v7996 = vld [vmem:[%s7 + $0x308] sm:$0xff]
          %v7997 = vld [vmem:[%s7 + $0x310] sm:$0xff]
          %v7998 = vld [vmem:[%s7 + $0x318] sm:$0xff]
          %v7999 = vld [vmem:[%s7 + $0x320] sm:$0xff]
          %v8000 = vld [vmem:[%s7 + $0x328] sm:$0xff]
          %v8001 = vld [vmem:[%s7 + $0x330] sm:$0xff]
          %v8002 = vld [vmem:[%s7 + $0x338] sm:$0xff]
          %v8003 = vld [vmem:[%s7 + $0x340] sm:$0xff]
          %v8004 = vld [vmem:[%s7 + $0x348] sm:$0xff]
          %v8005 = vld [vmem:[%s7 + $0x350] sm:$0xff]
          %v8006 = vld [vmem:[%s7 + $0x358] sm:$0xff]
          %v8007 = vld [vmem:[%s7 + $0x360] sm:$0xff]
          %v8008 = vld [vmem:[%s7 + $0x368] sm:$0xff]
          %v8009 = vld [vmem:[%s7 + $0x370] sm:$0xff]
          %v8010 = vld [vmem:[%s7 + $0x378] sm:$0xff]
          %v8011 = vld [vmem:[%s7 + $0x380] sm:$0xff]
          %v8012 = vld [vmem:[%s7 + $0x388] sm:$0xff]
          %v8013 = vld [vmem:[%s7 + $0x390] sm:$0xff]
          %v8014 = vld [vmem:[%s7 + $0x398] sm:$0xff]
          %v8015 = vld [vmem:[%s7 + $0x3a0] sm:$0xff]
          %v8016 = vld [vmem:[%s7 + $0x3a8] sm:$0xff]
          %v8017 = vld [vmem:[%s7 + $0x3b0] sm:$0xff]
          %v8018 = vld [vmem:[%s7 + $0x3b8] sm:$0xff]
          %v8019 = vld [vmem:[%s7 + $0x3c0] sm:$0xff]
          %v8020 = vld [vmem:[%s7 + $0x3c8] sm:$0xff]
          %v8021 = vld [vmem:[%s7 + $0x3d0] sm:$0xff]
          %v8022 = vld [vmem:[%s7 + $0x3d8] sm:$0xff]
          %v8023 = vld [vmem:[%s7 + $0x3e0] sm:$0xff]
          %v8024 = vld [vmem:[%s7 + $0x3e8] sm:$0xff]
          %v8025 = vld [vmem:[%s7 + $0x3f0] sm:$0xff]
          %v8026 = vld [vmem:[%s7 + $0x3f8] sm:$0xff]
          %v8027 = vld [vmem:[%s7 + $0x400] sm:$0xff]
          %v8028 = vld [vmem:[%s7 + $0x408] sm:$0xff]
          %v8029 = vld [vmem:[%s7 + $0x410] sm:$0xff]
          %v8030 = vld [vmem:[%s7 + $0x418] sm:$0xff]
          %v8031 = vld [vmem:[%s7 + $0x420] sm:$0xff]
          %v8032 = vld [vmem:[%s7 + $0x428] sm:$0xff]
          %v8033 = vld [vmem:[%s7 + $0x430] sm:$0xff]
          %v8034 = vld [vmem:[%s7 + $0x438] sm:$0xff]
          %v8035 = vld [vmem:[%s7 + $0x440] sm:$0xff]
          %v8036 = vld [vmem:[%s7 + $0x448] sm:$0xff]
          %v8037 = vld [vmem:[%s7 + $0x450] sm:$0xff]
          %v8038 = vld [vmem:[%s7 + $0x458] sm:$0xff]
          %v8039 = vld [vmem:[%s7 + $0x460] sm:$0xff]
          %v8040 = vld [vmem:[%s7 + $0x468] sm:$0xff]
          %v8041 = vld [vmem:[%s7 + $0x470] sm:$0xff]
          %v8042 = vld [vmem:[%s7 + $0x478] sm:$0xff]
          %v8043 = vld [vmem:[%s7 + $0x480] sm:$0xff]
          %v8044 = vld [vmem:[%s7 + $0x488] sm:$0xff]
          %v8045 = vld [vmem:[%s7 + $0x490] sm:$0xff]
          %v8046 = vld [vmem:[%s7 + $0x498] sm:$0xff]
          %v8047 = vld [vmem:[%s7 + $0x4a0] sm:$0xff]
          %v8048 = vld [vmem:[%s7 + $0x4a8] sm:$0xff]
          %v8049 = vld [vmem:[%s7 + $0x4b0] sm:$0xff]
          %v8050 = vld [vmem:[%s7 + $0x4b8] sm:$0xff]
          %v8051 = vld [vmem:[%s7 + $0x4c0] sm:$0xff]
          %v8052 = vld [vmem:[%s7 + $0x4c8] sm:$0xff]
          %v8053 = vld [vmem:[%s7 + $0x4d0] sm:$0xff]
          %v8054 = vld [vmem:[%s7 + $0x4d8] sm:$0xff]
          %v8055 = vld [vmem:[%s7 + $0x4e0] sm:$0xff]
          %v8056 = vld [vmem:[%s7 + $0x4e8] sm:$0xff]
          %v8057 = vld [vmem:[%s7 + $0x4f0] sm:$0xff]
          %v8058 = vld [vmem:[%s7 + $0x4f8] sm:$0xff]
          %v8059 = vld [vmem:[%s7 + $0x500] sm:$0xff]
          %v8060 = vld [vmem:[%s7 + $0x508] sm:$0xff]
          %v8061 = vld [vmem:[%s7 + $0x510] sm:$0xff]
          %v8062 = vld [vmem:[%s7 + $0x518] sm:$0xff]
          %v8063 = vld [vmem:[%s7 + $0x520] sm:$0xff]
          %v8064 = vld [vmem:[%s7 + $0x528] sm:$0xff]
          %v8065 = vld [vmem:[%s7 + $0x530] sm:$0xff]
          %v8066 = vld [vmem:[%s7 + $0x538] sm:$0xff]
          %v8067 = vld [vmem:[%s7 + $0x540] sm:$0xff]
          %v8068 = vld [vmem:[%s7 + $0x548] sm:$0xff]
          %v8069 = vld [vmem:[%s7 + $0x550] sm:$0xff]
          %v8070 = vld [vmem:[%s7 + $0x558] sm:$0xff]
          %v8071 = vld [vmem:[%s7 + $0x560] sm:$0xff]
          %v8072 = vld [vmem:[%s7 + $0x568] sm:$0xff]
          %v8073 = vld [vmem:[%s7 + $0x570] sm:$0xff]
          %v8074 = vld [vmem:[%s7 + $0x578] sm:$0xff]
          %v8075 = vld [vmem:[%s7 + $0x580] sm:$0xff]
          %v8076 = vld [vmem:[%s7 + $0x588] sm:$0xff]
          %v8077 = vld [vmem:[%s7 + $0x590] sm:$0xff]
          %v8078 = vld [vmem:[%s7 + $0x598] sm:$0xff]
          %v8079 = vld [vmem:[%s7 + $0x5a0] sm:$0xff]
          %v8080 = vld [vmem:[%s7 + $0x5a8] sm:$0xff]
          %v8081 = vld [vmem:[%s7 + $0x5b0] sm:$0xff]
          %v8082 = vld [vmem:[%s7 + $0x5b8] sm:$0xff]
          %v8083 = vld [vmem:[%s7 + $0x5c0] sm:$0xff]
          %v8084 = vld [vmem:[%s7 + $0x5c8] sm:$0xff]
          %v8085 = vld [vmem:[%s7 + $0x5d0] sm:$0xff]
          %v8086 = vld [vmem:[%s7 + $0x5d8] sm:$0xff]
          %v8087 = vld [vmem:[%s7 + $0x5e0] sm:$0xff]
          %v8088 = vld [vmem:[%s7 + $0x5e8] sm:$0xff]
          %v8089 = vld [vmem:[%s7 + $0x5f0] sm:$0xff]
          %v8090 = vld [vmem:[%s7 + $0x5f8] sm:$0xff]
          %v8091 = vld [vmem:[%s7 + $0x600] sm:$0xff]
          %v8092 = vld [vmem:[%s7 + $0x608] sm:$0xff]
          %v8093 = vld [vmem:[%s7 + $0x610] sm:$0xff]
          %v8094 = vld [vmem:[%s7 + $0x618] sm:$0xff]
          %v8095 = vld [vmem:[%s7 + $0x620] sm:$0xff]
          %v8096 = vld [vmem:[%s7 + $0x628] sm:$0xff]
          %v8097 = vld [vmem:[%s7 + $0x630] sm:$0xff]
          %v8098 = vld [vmem:[%s7 + $0x638] sm:$0xff]
          %v8099 = vld [vmem:[%s7 + $0x640] sm:$0xff]
          %v8100 = vld [vmem:[%s7 + $0x648] sm:$0xff]
          %v8101 = vld [vmem:[%s7 + $0x650] sm:$0xff]
          %v8102 = vld [vmem:[%s7 + $0x658] sm:$0xff]
          %v8103 = vld [vmem:[%s7 + $0x660] sm:$0xff]
          %v8104 = vld [vmem:[%s7 + $0x668] sm:$0xff]
          %v8105 = vld [vmem:[%s7 + $0x670] sm:$0xff]
          %v8106 = vld [vmem:[%s7 + $0x678] sm:$0xff]
          %v8107 = vld [vmem:[%s7 + $0x680] sm:$0xff]
          %v8108 = vld [vmem:[%s7 + $0x688] sm:$0xff]
          %v8109 = vld [vmem:[%s7 + $0x690] sm:$0xff]
          %v8110 = vld [vmem:[%s7 + $0x698] sm:$0xff]
          %v8111 = vld [vmem:[%s7 + $0x6a0] sm:$0xff]
          %v8112 = vld [vmem:[%s7 + $0x6a8] sm:$0xff]
          %v8113 = vld [vmem:[%s7 + $0x6b0] sm:$0xff]
          %v8114 = vld [vmem:[%s7 + $0x6b8] sm:$0xff]
          %v8115 = vld [vmem:[%s7 + $0x6c0] sm:$0xff]
          %v8116 = vld [vmem:[%s7 + $0x6c8] sm:$0xff]
          %v8117 = vld [vmem:[%s7 + $0x6d0] sm:$0xff]
          %v8118 = vld [vmem:[%s7 + $0x6d8] sm:$0xff]
          %v8119 = vld [vmem:[%s7 + $0x6e0] sm:$0xff]
          %v8120 = vld [vmem:[%s7 + $0x6e8] sm:$0xff]
          %v8121 = vld [vmem:[%s7 + $0x6f0] sm:$0xff]
          %v8122 = vld [vmem:[%s7 + $0x6f8] sm:$0xff]
          %v8123 = vld [vmem:[%s7 + $0x700] sm:$0xff]
          %v8124 = vld [vmem:[%s7 + $0x708] sm:$0xff]
          %v8125 = vld [vmem:[%s7 + $0x710] sm:$0xff]
          %v8126 = vld [vmem:[%s7 + $0x718] sm:$0xff]
          %v8127 = vld [vmem:[%s7 + $0x720] sm:$0xff]
          %v8128 = vld [vmem:[%s7 + $0x728] sm:$0xff]
          %v8129 = vld [vmem:[%s7 + $0x730] sm:$0xff]
          %v8130 = vld [vmem:[%s7 + $0x738] sm:$0xff]
          %v8131 = vld [vmem:[%s7 + $0x740] sm:$0xff]
          %v8132 = vld [vmem:[%s7 + $0x748] sm:$0xff]
          %v8133 = vld [vmem:[%s7 + $0x750] sm:$0xff]
          %v8134 = vld [vmem:[%s7 + $0x758] sm:$0xff]
          %v8135 = vld [vmem:[%s7 + $0x760] sm:$0xff]
          %v8136 = vld [vmem:[%s7 + $0x768] sm:$0xff]
          %v8137 = vld [vmem:[%s7 + $0x770] sm:$0xff]
          %v8138 = vld [vmem:[%s7 + $0x778] sm:$0xff]
          %v8139 = vld [vmem:[%s7 + $0x780] sm:$0xff]
          %v8140 = vld [vmem:[%s7 + $0x788] sm:$0xff]
          %v8141 = vld [vmem:[%s7 + $0x790] sm:$0xff]
          %v8142 = vld [vmem:[%s7 + $0x798] sm:$0xff]
          %v8143 = vld [vmem:[%s7 + $0x7a0] sm:$0xff]
          %v8144 = vld [vmem:[%s7 + $0x7a8] sm:$0xff]
          %v8145 = vld [vmem:[%s7 + $0x7b0] sm:$0xff]
          %v8146 = vld [vmem:[%s7 + $0x7b8] sm:$0xff]
          %v8147 = vld [vmem:[%s7 + $0x7c0] sm:$0xff]
          %v8148 = vld [vmem:[%s7 + $0x7c8] sm:$0xff]
          %v8149 = vld [vmem:[%s7 + $0x7d0] sm:$0xff]
          %v8150 = vld [vmem:[%s7 + $0x7d8] sm:$0xff]
          %v8151 = vld [vmem:[%s7 + $0x7e0] sm:$0xff]
          %v8152 = vld [vmem:[%s7 + $0x7e8] sm:$0xff]
          %v8153 = vld [vmem:[%s7 + $0x7f0] sm:$0xff]
          %v8154 = vld [vmem:[%s7 + $0x7f8] sm:$0xff]
          %v8155 = vld [vmem:[%s8] sm:$0xf]
          %v8412 = vunpack.c.l.b16 %v7899
          %v8413 = vunpack.c.h.b16 %v7899
          %v8414 = vunpack.c.l.b16 %v7900
          %v8415 = vunpack.c.h.b16 %v7900
          %v8416 = vunpack.c.l.b16 %v7901
          %v8417 = vunpack.c.h.b16 %v7901
          %v8418 = vunpack.c.l.b16 %v7902
          %v8419 = vunpack.c.h.b16 %v7902
          %v8420 = vunpack.c.l.b16 %v7903
          %v8421 = vunpack.c.h.b16 %v7903
          %v8422 = vunpack.c.l.b16 %v7904
          %v8423 = vunpack.c.h.b16 %v7904
          %v8424 = vunpack.c.l.b16 %v7905
          %v8425 = vunpack.c.h.b16 %v7905
          %v8426 = vunpack.c.l.b16 %v7906
          %v8427 = vunpack.c.h.b16 %v7906
          %v8428 = vunpack.c.l.b16 %v7907
          %v8429 = vunpack.c.h.b16 %v7907
          %v8430 = vunpack.c.l.b16 %v7908
          %v8431 = vunpack.c.h.b16 %v7908
          %v8432 = vunpack.c.l.b16 %v7909
          %v8433 = vunpack.c.h.b16 %v7909
          %v8434 = vunpack.c.l.b16 %v7910
          %v8435 = vunpack.c.h.b16 %v7910
          %v8436 = vunpack.c.l.b16 %v7911
          %v8437 = vunpack.c.h.b16 %v7911
          %v8438 = vunpack.c.l.b16 %v7912
          %v8439 = vunpack.c.h.b16 %v7912
          %v8440 = vunpack.c.l.b16 %v7913
          %v8441 = vunpack.c.h.b16 %v7913
          %v8442 = vunpack.c.l.b16 %v7914
          %v8443 = vunpack.c.h.b16 %v7914
          %v8444 = vunpack.c.l.b16 %v7915
          %v8445 = vunpack.c.h.b16 %v7915
          %v8446 = vunpack.c.l.b16 %v7916
          %v8447 = vunpack.c.h.b16 %v7916
          %v8448 = vunpack.c.l.b16 %v7917
          %v8449 = vunpack.c.h.b16 %v7917
          %v8450 = vunpack.c.l.b16 %v7918
          %v8451 = vunpack.c.h.b16 %v7918
          %v8452 = vunpack.c.l.b16 %v7919
          %v8453 = vunpack.c.h.b16 %v7919
          %v8454 = vunpack.c.l.b16 %v7920
          %v8455 = vunpack.c.h.b16 %v7920
          %v8456 = vunpack.c.l.b16 %v7921
          %v8457 = vunpack.c.h.b16 %v7921
          %v8458 = vunpack.c.l.b16 %v7922
          %v8459 = vunpack.c.h.b16 %v7922
          %v8460 = vunpack.c.l.b16 %v7923
          %v8461 = vunpack.c.h.b16 %v7923
          %v8462 = vunpack.c.l.b16 %v7924
          %v8463 = vunpack.c.h.b16 %v7924
          %v8464 = vunpack.c.l.b16 %v7925
          %v8465 = vunpack.c.h.b16 %v7925
          %v8466 = vunpack.c.l.b16 %v7926
          %v8467 = vunpack.c.h.b16 %v7926
          %v8468 = vunpack.c.l.b16 %v7927
          %v8469 = vunpack.c.h.b16 %v7927
          %v8470 = vunpack.c.l.b16 %v7928
          %v8471 = vunpack.c.h.b16 %v7928
          %v8472 = vunpack.c.l.b16 %v7929
          %v8473 = vunpack.c.h.b16 %v7929
          %v8474 = vunpack.c.l.b16 %v7930
          %v8475 = vunpack.c.h.b16 %v7930
          %v8476 = vunpack.c.l.b16 %v7931
          %v8477 = vunpack.c.h.b16 %v7931
          %v8478 = vunpack.c.l.b16 %v7932
          %v8479 = vunpack.c.h.b16 %v7932
          %v8480 = vunpack.c.l.b16 %v7933
          %v8481 = vunpack.c.h.b16 %v7933
          %v8482 = vunpack.c.l.b16 %v7934
          %v8483 = vunpack.c.h.b16 %v7934
          %v8484 = vunpack.c.l.b16 %v7935
          %v8485 = vunpack.c.h.b16 %v7935
          %v8486 = vunpack.c.l.b16 %v7936
          %v8487 = vunpack.c.h.b16 %v7936
          %v8488 = vunpack.c.l.b16 %v7937
          %v8489 = vunpack.c.h.b16 %v7937
          %v8490 = vunpack.c.l.b16 %v7938
          %v8491 = vunpack.c.h.b16 %v7938
          %v8492 = vunpack.c.l.b16 %v7939
          %v8493 = vunpack.c.h.b16 %v7939
          %v8494 = vunpack.c.l.b16 %v7940
          %v8495 = vunpack.c.h.b16 %v7940
          %v8496 = vunpack.c.l.b16 %v7941
          %v8497 = vunpack.c.h.b16 %v7941
          %v8498 = vunpack.c.l.b16 %v7942
          %v8499 = vunpack.c.h.b16 %v7942
          %v8500 = vunpack.c.l.b16 %v7943
          %v8501 = vunpack.c.h.b16 %v7943
          %v8502 = vunpack.c.l.b16 %v7944
          %v8503 = vunpack.c.h.b16 %v7944
          %v8504 = vunpack.c.l.b16 %v7945
          %v8505 = vunpack.c.h.b16 %v7945
          %v8506 = vunpack.c.l.b16 %v7946
          %v8507 = vunpack.c.h.b16 %v7946
          %v8508 = vunpack.c.l.b16 %v7947
          %v8509 = vunpack.c.h.b16 %v7947
          %v8510 = vunpack.c.l.b16 %v7948
          %v8511 = vunpack.c.h.b16 %v7948
          %v8512 = vunpack.c.l.b16 %v7949
          %v8513 = vunpack.c.h.b16 %v7949
          %v8514 = vunpack.c.l.b16 %v7950
          %v8515 = vunpack.c.h.b16 %v7950
          %v8516 = vunpack.c.l.b16 %v7951
          %v8517 = vunpack.c.h.b16 %v7951
          %v8518 = vunpack.c.l.b16 %v7952
          %v8519 = vunpack.c.h.b16 %v7952
          %v8520 = vunpack.c.l.b16 %v7953
          %v8521 = vunpack.c.h.b16 %v7953
          %v8522 = vunpack.c.l.b16 %v7954
          %v8523 = vunpack.c.h.b16 %v7954
          %v8524 = vunpack.c.l.b16 %v7955
          %v8525 = vunpack.c.h.b16 %v7955
          %v8526 = vunpack.c.l.b16 %v7956
          %v8527 = vunpack.c.h.b16 %v7956
          %v8528 = vunpack.c.l.b16 %v7957
          %v8529 = vunpack.c.h.b16 %v7957
          %v8530 = vunpack.c.l.b16 %v7958
          %v8531 = vunpack.c.h.b16 %v7958
          %v8532 = vunpack.c.l.b16 %v7959
          %v8533 = vunpack.c.h.b16 %v7959
          %v8534 = vunpack.c.l.b16 %v7960
          %v8535 = vunpack.c.h.b16 %v7960
          %v8536 = vunpack.c.l.b16 %v7961
          %v8537 = vunpack.c.h.b16 %v7961
          %v8538 = vunpack.c.l.b16 %v7962
          %v8539 = vunpack.c.h.b16 %v7962
          %v8540 = vunpack.c.l.b16 %v7963
          %v8541 = vunpack.c.h.b16 %v7963
          %v8542 = vunpack.c.l.b16 %v7964
          %v8543 = vunpack.c.h.b16 %v7964
          %v8544 = vunpack.c.l.b16 %v7965
          %v8545 = vunpack.c.h.b16 %v7965
          %v8546 = vunpack.c.l.b16 %v7966
          %v8547 = vunpack.c.h.b16 %v7966
          %v8548 = vunpack.c.l.b16 %v7967
          %v8549 = vunpack.c.h.b16 %v7967
          %v8550 = vunpack.c.l.b16 %v7968
          %v8551 = vunpack.c.h.b16 %v7968
          %v8552 = vunpack.c.l.b16 %v7969
          %v8553 = vunpack.c.h.b16 %v7969
          %v8554 = vunpack.c.l.b16 %v7970
          %v8555 = vunpack.c.h.b16 %v7970
          %v8556 = vunpack.c.l.b16 %v7971
          %v8557 = vunpack.c.h.b16 %v7971
          %v8558 = vunpack.c.l.b16 %v7972
          %v8559 = vunpack.c.h.b16 %v7972
          %v8560 = vunpack.c.l.b16 %v7973
          %v8561 = vunpack.c.h.b16 %v7973
          %v8562 = vunpack.c.l.b16 %v7974
          %v8563 = vunpack.c.h.b16 %v7974
          %v8564 = vunpack.c.l.b16 %v7975
          %v8565 = vunpack.c.h.b16 %v7975
          %v8566 = vunpack.c.l.b16 %v7976
          %v8567 = vunpack.c.h.b16 %v7976
          %v8568 = vunpack.c.l.b16 %v7977
          %v8569 = vunpack.c.h.b16 %v7977
          %v8570 = vunpack.c.l.b16 %v7978
          %v8571 = vunpack.c.h.b16 %v7978
          %v8572 = vunpack.c.l.b16 %v7979
          %v8573 = vunpack.c.h.b16 %v7979
          %v8574 = vunpack.c.l.b16 %v7980
          %v8575 = vunpack.c.h.b16 %v7980
          %v8576 = vunpack.c.l.b16 %v7981
          %v8577 = vunpack.c.h.b16 %v7981
          %v8578 = vunpack.c.l.b16 %v7982
          %v8579 = vunpack.c.h.b16 %v7982
          %v8580 = vunpack.c.l.b16 %v7983
          %v8581 = vunpack.c.h.b16 %v7983
          %v8582 = vunpack.c.l.b16 %v7984
          %v8583 = vunpack.c.h.b16 %v7984
          %v8584 = vunpack.c.l.b16 %v7985
          %v8585 = vunpack.c.h.b16 %v7985
          %v8586 = vunpack.c.l.b16 %v7986
          %v8587 = vunpack.c.h.b16 %v7986
          %v8588 = vunpack.c.l.b16 %v7987
          %v8589 = vunpack.c.h.b16 %v7987
          %v8590 = vunpack.c.l.b16 %v7988
          %v8591 = vunpack.c.h.b16 %v7988
          %v8592 = vunpack.c.l.b16 %v7989
          %v8593 = vunpack.c.h.b16 %v7989
          %v8594 = vunpack.c.l.b16 %v7990
          %v8595 = vunpack.c.h.b16 %v7990
          %v8596 = vunpack.c.l.b16 %v7991
          %v8597 = vunpack.c.h.b16 %v7991
          %v8598 = vunpack.c.l.b16 %v7992
          %v8599 = vunpack.c.h.b16 %v7992
          %v8600 = vunpack.c.l.b16 %v7993
          %v8601 = vunpack.c.h.b16 %v7993
          %v8602 = vunpack.c.l.b16 %v7994
          %v8603 = vunpack.c.h.b16 %v7994
          %v8604 = vunpack.c.l.b16 %v7995
          %v8605 = vunpack.c.h.b16 %v7995
          %v8606 = vunpack.c.l.b16 %v7996
          %v8607 = vunpack.c.h.b16 %v7996
          %v8608 = vunpack.c.l.b16 %v7997
          %v8609 = vunpack.c.h.b16 %v7997
          %v8610 = vunpack.c.l.b16 %v7998
          %v8611 = vunpack.c.h.b16 %v7998
          %v8612 = vunpack.c.l.b16 %v7999
          %v8613 = vunpack.c.h.b16 %v7999
          %v8614 = vunpack.c.l.b16 %v8000
          %v8615 = vunpack.c.h.b16 %v8000
          %v8616 = vunpack.c.l.b16 %v8001
          %v8617 = vunpack.c.h.b16 %v8001
          %v8618 = vunpack.c.l.b16 %v8002
          %v8619 = vunpack.c.h.b16 %v8002
          %v8620 = vunpack.c.l.b16 %v8003
          %v8621 = vunpack.c.h.b16 %v8003
          %v8622 = vunpack.c.l.b16 %v8004
          %v8623 = vunpack.c.h.b16 %v8004
          %v8624 = vunpack.c.l.b16 %v8005
          %v8625 = vunpack.c.h.b16 %v8005
          %v8626 = vunpack.c.l.b16 %v8006
          %v8627 = vunpack.c.h.b16 %v8006
          %v8628 = vunpack.c.l.b16 %v8007
          %v8629 = vunpack.c.h.b16 %v8007
          %v8630 = vunpack.c.l.b16 %v8008
          %v8631 = vunpack.c.h.b16 %v8008
          %v8632 = vunpack.c.l.b16 %v8009
          %v8633 = vunpack.c.h.b16 %v8009
          %v8634 = vunpack.c.l.b16 %v8010
          %v8635 = vunpack.c.h.b16 %v8010
          %v8636 = vunpack.c.l.b16 %v8011
          %v8637 = vunpack.c.h.b16 %v8011
          %v8638 = vunpack.c.l.b16 %v8012
          %v8639 = vunpack.c.h.b16 %v8012
          %v8640 = vunpack.c.l.b16 %v8013
          %v8641 = vunpack.c.h.b16 %v8013
          %v8642 = vunpack.c.l.b16 %v8014
          %v8643 = vunpack.c.h.b16 %v8014
          %v8644 = vunpack.c.l.b16 %v8015
          %v8645 = vunpack.c.h.b16 %v8015
          %v8646 = vunpack.c.l.b16 %v8016
          %v8647 = vunpack.c.h.b16 %v8016
          %v8648 = vunpack.c.l.b16 %v8017
          %v8649 = vunpack.c.h.b16 %v8017
          %v8650 = vunpack.c.l.b16 %v8018
          %v8651 = vunpack.c.h.b16 %v8018
          %v8652 = vunpack.c.l.b16 %v8019
          %v8653 = vunpack.c.h.b16 %v8019
          %v8654 = vunpack.c.l.b16 %v8020
          %v8655 = vunpack.c.h.b16 %v8020
          %v8656 = vunpack.c.l.b16 %v8021
          %v8657 = vunpack.c.h.b16 %v8021
          %v8658 = vunpack.c.l.b16 %v8022
          %v8659 = vunpack.c.h.b16 %v8022
          %v8660 = vunpack.c.l.b16 %v8023
          %v8661 = vunpack.c.h.b16 %v8023
          %v8662 = vunpack.c.l.b16 %v8024
          %v8663 = vunpack.c.h.b16 %v8024
          %v8664 = vunpack.c.l.b16 %v8025
          %v8665 = vunpack.c.h.b16 %v8025
          %v8666 = vunpack.c.l.b16 %v8026
          %v8667 = vunpack.c.h.b16 %v8026
          %v8668 = vunpack.c.l.b16 %v8027
          %v8669 = vunpack.c.h.b16 %v8027
          %v8670 = vunpack.c.l.b16 %v8028
          %v8671 = vunpack.c.h.b16 %v8028
          %v8672 = vunpack.c.l.b16 %v8029
          %v8673 = vunpack.c.h.b16 %v8029
          %v8674 = vunpack.c.l.b16 %v8030
          %v8675 = vunpack.c.h.b16 %v8030
          %v8676 = vunpack.c.l.b16 %v8031
          %v8677 = vunpack.c.h.b16 %v8031
          %v8678 = vunpack.c.l.b16 %v8032
          %v8679 = vunpack.c.h.b16 %v8032
          %v8680 = vunpack.c.l.b16 %v8033
          %v8681 = vunpack.c.h.b16 %v8033
          %v8682 = vunpack.c.l.b16 %v8034
          %v8683 = vunpack.c.h.b16 %v8034
          %v8684 = vunpack.c.l.b16 %v8035
          %v8685 = vunpack.c.h.b16 %v8035
          %v8686 = vunpack.c.l.b16 %v8036
          %v8687 = vunpack.c.h.b16 %v8036
          %v8688 = vunpack.c.l.b16 %v8037
          %v8689 = vunpack.c.h.b16 %v8037
          %v8690 = vunpack.c.l.b16 %v8038
          %v8691 = vunpack.c.h.b16 %v8038
          %v8692 = vunpack.c.l.b16 %v8039
          %v8693 = vunpack.c.h.b16 %v8039
          %v8694 = vunpack.c.l.b16 %v8040
          %v8695 = vunpack.c.h.b16 %v8040
          %v8696 = vunpack.c.l.b16 %v8041
          %v8697 = vunpack.c.h.b16 %v8041
          %v8698 = vunpack.c.l.b16 %v8042
          %v8699 = vunpack.c.h.b16 %v8042
          %v8700 = vunpack.c.l.b16 %v8043
          %v8701 = vunpack.c.h.b16 %v8043
          %v8702 = vunpack.c.l.b16 %v8044
          %v8703 = vunpack.c.h.b16 %v8044
          %v8704 = vunpack.c.l.b16 %v8045
          %v8705 = vunpack.c.h.b16 %v8045
          %v8706 = vunpack.c.l.b16 %v8046
          %v8707 = vunpack.c.h.b16 %v8046
          %v8708 = vunpack.c.l.b16 %v8047
          %v8709 = vunpack.c.h.b16 %v8047
          %v8710 = vunpack.c.l.b16 %v8048
          %v8711 = vunpack.c.h.b16 %v8048
          %v8712 = vunpack.c.l.b16 %v8049
          %v8713 = vunpack.c.h.b16 %v8049
          %v8714 = vunpack.c.l.b16 %v8050
          %v8715 = vunpack.c.h.b16 %v8050
          %v8716 = vunpack.c.l.b16 %v8051
          %v8717 = vunpack.c.h.b16 %v8051
          %v8718 = vunpack.c.l.b16 %v8052
          %v8719 = vunpack.c.h.b16 %v8052
          %v8720 = vunpack.c.l.b16 %v8053
          %v8721 = vunpack.c.h.b16 %v8053
          %v8722 = vunpack.c.l.b16 %v8054
          %v8723 = vunpack.c.h.b16 %v8054
          %v8724 = vunpack.c.l.b16 %v8055
          %v8725 = vunpack.c.h.b16 %v8055
          %v8726 = vunpack.c.l.b16 %v8056
          %v8727 = vunpack.c.h.b16 %v8056
          %v8728 = vunpack.c.l.b16 %v8057
          %v8729 = vunpack.c.h.b16 %v8057
          %v8730 = vunpack.c.l.b16 %v8058
          %v8731 = vunpack.c.h.b16 %v8058
          %v8732 = vunpack.c.l.b16 %v8059
          %v8733 = vunpack.c.h.b16 %v8059
          %v8734 = vunpack.c.l.b16 %v8060
          %v8735 = vunpack.c.h.b16 %v8060
          %v8736 = vunpack.c.l.b16 %v8061
          %v8737 = vunpack.c.h.b16 %v8061
          %v8738 = vunpack.c.l.b16 %v8062
          %v8739 = vunpack.c.h.b16 %v8062
          %v8740 = vunpack.c.l.b16 %v8063
          %v8741 = vunpack.c.h.b16 %v8063
          %v8742 = vunpack.c.l.b16 %v8064
          %v8743 = vunpack.c.h.b16 %v8064
          %v8744 = vunpack.c.l.b16 %v8065
          %v8745 = vunpack.c.h.b16 %v8065
          %v8746 = vunpack.c.l.b16 %v8066
          %v8747 = vunpack.c.h.b16 %v8066
          %v8748 = vunpack.c.l.b16 %v8067
          %v8749 = vunpack.c.h.b16 %v8067
          %v8750 = vunpack.c.l.b16 %v8068
          %v8751 = vunpack.c.h.b16 %v8068
          %v8752 = vunpack.c.l.b16 %v8069
          %v8753 = vunpack.c.h.b16 %v8069
          %v8754 = vunpack.c.l.b16 %v8070
          %v8755 = vunpack.c.h.b16 %v8070
          %v8756 = vunpack.c.l.b16 %v8071
          %v8757 = vunpack.c.h.b16 %v8071
          %v8758 = vunpack.c.l.b16 %v8072
          %v8759 = vunpack.c.h.b16 %v8072
          %v8760 = vunpack.c.l.b16 %v8073
          %v8761 = vunpack.c.h.b16 %v8073
          %v8762 = vunpack.c.l.b16 %v8074
          %v8763 = vunpack.c.h.b16 %v8074
          %v8764 = vunpack.c.l.b16 %v8075
          %v8765 = vunpack.c.h.b16 %v8075
          %v8766 = vunpack.c.l.b16 %v8076
          %v8767 = vunpack.c.h.b16 %v8076
          %v8768 = vunpack.c.l.b16 %v8077
          %v8769 = vunpack.c.h.b16 %v8077
          %v8770 = vunpack.c.l.b16 %v8078
          %v8771 = vunpack.c.h.b16 %v8078
          %v8772 = vunpack.c.l.b16 %v8079
          %v8773 = vunpack.c.h.b16 %v8079
          %v8774 = vunpack.c.l.b16 %v8080
          %v8775 = vunpack.c.h.b16 %v8080
          %v8776 = vunpack.c.l.b16 %v8081
          %v8777 = vunpack.c.h.b16 %v8081
          %v8778 = vunpack.c.l.b16 %v8082
          %v8779 = vunpack.c.h.b16 %v8082
          %v8780 = vunpack.c.l.b16 %v8083
          %v8781 = vunpack.c.h.b16 %v8083
          %v8782 = vunpack.c.l.b16 %v8084
          %v8783 = vunpack.c.h.b16 %v8084
          %v8784 = vunpack.c.l.b16 %v8085
          %v8785 = vunpack.c.h.b16 %v8085
          %v8786 = vunpack.c.l.b16 %v8086
          %v8787 = vunpack.c.h.b16 %v8086
          %v8788 = vunpack.c.l.b16 %v8087
          %v8789 = vunpack.c.h.b16 %v8087
          %v8790 = vunpack.c.l.b16 %v8088
          %v8791 = vunpack.c.h.b16 %v8088
          %v8792 = vunpack.c.l.b16 %v8089
          %v8793 = vunpack.c.h.b16 %v8089
          %v8794 = vunpack.c.l.b16 %v8090
          %v8795 = vunpack.c.h.b16 %v8090
          %v8796 = vunpack.c.l.b16 %v8091
          %v8797 = vunpack.c.h.b16 %v8091
          %v8798 = vunpack.c.l.b16 %v8092
          %v8799 = vunpack.c.h.b16 %v8092
          %v8800 = vunpack.c.l.b16 %v8093
          %v8801 = vunpack.c.h.b16 %v8093
          %v8802 = vunpack.c.l.b16 %v8094
          %v8803 = vunpack.c.h.b16 %v8094
          %v8804 = vunpack.c.l.b16 %v8095
          %v8805 = vunpack.c.h.b16 %v8095
          %v8806 = vunpack.c.l.b16 %v8096
          %v8807 = vunpack.c.h.b16 %v8096
          %v8808 = vunpack.c.l.b16 %v8097
          %v8809 = vunpack.c.h.b16 %v8097
          %v8810 = vunpack.c.l.b16 %v8098
          %v8811 = vunpack.c.h.b16 %v8098
          %v8812 = vunpack.c.l.b16 %v8099
          %v8813 = vunpack.c.h.b16 %v8099
          %v8814 = vunpack.c.l.b16 %v8100
          %v8815 = vunpack.c.h.b16 %v8100
          %v8816 = vunpack.c.l.b16 %v8101
          %v8817 = vunpack.c.h.b16 %v8101
          %v8818 = vunpack.c.l.b16 %v8102
          %v8819 = vunpack.c.h.b16 %v8102
          %v8820 = vunpack.c.l.b16 %v8103
          %v8821 = vunpack.c.h.b16 %v8103
          %v8822 = vunpack.c.l.b16 %v8104
          %v8823 = vunpack.c.h.b16 %v8104
          %v8824 = vunpack.c.l.b16 %v8105
          %v8825 = vunpack.c.h.b16 %v8105
          %v8826 = vunpack.c.l.b16 %v8106
          %v8827 = vunpack.c.h.b16 %v8106
          %v8828 = vunpack.c.l.b16 %v8107
          %v8829 = vunpack.c.h.b16 %v8107
          %v8830 = vunpack.c.l.b16 %v8108
          %v8831 = vunpack.c.h.b16 %v8108
          %v8832 = vunpack.c.l.b16 %v8109
          %v8833 = vunpack.c.h.b16 %v8109
          %v8834 = vunpack.c.l.b16 %v8110
          %v8835 = vunpack.c.h.b16 %v8110
          %v8836 = vunpack.c.l.b16 %v8111
          %v8837 = vunpack.c.h.b16 %v8111
          %v8838 = vunpack.c.l.b16 %v8112
          %v8839 = vunpack.c.h.b16 %v8112
          %v8840 = vunpack.c.l.b16 %v8113
          %v8841 = vunpack.c.h.b16 %v8113
          %v8842 = vunpack.c.l.b16 %v8114
          %v8843 = vunpack.c.h.b16 %v8114
          %v8844 = vunpack.c.l.b16 %v8115
          %v8845 = vunpack.c.h.b16 %v8115
          %v8846 = vunpack.c.l.b16 %v8116
          %v8847 = vunpack.c.h.b16 %v8116
          %v8848 = vunpack.c.l.b16 %v8117
          %v8849 = vunpack.c.h.b16 %v8117
          %v8850 = vunpack.c.l.b16 %v8118
          %v8851 = vunpack.c.h.b16 %v8118
          %v8852 = vunpack.c.l.b16 %v8119
          %v8853 = vunpack.c.h.b16 %v8119
          %v8854 = vunpack.c.l.b16 %v8120
          %v8855 = vunpack.c.h.b16 %v8120
          %v8856 = vunpack.c.l.b16 %v8121
          %v8857 = vunpack.c.h.b16 %v8121
          %v8858 = vunpack.c.l.b16 %v8122
          %v8859 = vunpack.c.h.b16 %v8122
          %v8860 = vunpack.c.l.b16 %v8123
          %v8861 = vunpack.c.h.b16 %v8123
          %v8862 = vunpack.c.l.b16 %v8124
          %v8863 = vunpack.c.h.b16 %v8124
          %v8864 = vunpack.c.l.b16 %v8125
          %v8865 = vunpack.c.h.b16 %v8125
          %v8866 = vunpack.c.l.b16 %v8126
          %v8867 = vunpack.c.h.b16 %v8126
          %v8868 = vunpack.c.l.b16 %v8127
          %v8869 = vunpack.c.h.b16 %v8127
          %v8870 = vunpack.c.l.b16 %v8128
          %v8871 = vunpack.c.h.b16 %v8128
          %v8872 = vunpack.c.l.b16 %v8129
          %v8873 = vunpack.c.h.b16 %v8129
          %v8874 = vunpack.c.l.b16 %v8130
          %v8875 = vunpack.c.h.b16 %v8130
          %v8876 = vunpack.c.l.b16 %v8131
          %v8877 = vunpack.c.h.b16 %v8131
          %v8878 = vunpack.c.l.b16 %v8132
          %v8879 = vunpack.c.h.b16 %v8132
          %v8880 = vunpack.c.l.b16 %v8133
          %v8881 = vunpack.c.h.b16 %v8133
          %v8882 = vunpack.c.l.b16 %v8134
          %v8883 = vunpack.c.h.b16 %v8134
          %v8884 = vunpack.c.l.b16 %v8135
          %v8885 = vunpack.c.h.b16 %v8135
          %v8886 = vunpack.c.l.b16 %v8136
          %v8887 = vunpack.c.h.b16 %v8136
          %v8888 = vunpack.c.l.b16 %v8137
          %v8889 = vunpack.c.h.b16 %v8137
          %v8890 = vunpack.c.l.b16 %v8138
          %v8891 = vunpack.c.h.b16 %v8138
          %v8892 = vunpack.c.l.b16 %v8139
          %v8893 = vunpack.c.h.b16 %v8139
          %v8894 = vunpack.c.l.b16 %v8140
          %v8895 = vunpack.c.h.b16 %v8140
          %v8896 = vunpack.c.l.b16 %v8141
          %v8897 = vunpack.c.h.b16 %v8141
          %v8898 = vunpack.c.l.b16 %v8142
          %v8899 = vunpack.c.h.b16 %v8142
          %v8900 = vunpack.c.l.b16 %v8143
          %v8901 = vunpack.c.h.b16 %v8143
          %v8902 = vunpack.c.l.b16 %v8144
          %v8903 = vunpack.c.h.b16 %v8144
          %v8904 = vunpack.c.l.b16 %v8145
          %v8905 = vunpack.c.h.b16 %v8145
          %v8906 = vunpack.c.l.b16 %v8146
          %v8907 = vunpack.c.h.b16 %v8146
          %v8908 = vunpack.c.l.b16 %v8147
          %v8909 = vunpack.c.h.b16 %v8147
          %v8910 = vunpack.c.l.b16 %v8148
          %v8911 = vunpack.c.h.b16 %v8148
          %v8912 = vunpack.c.l.b16 %v8149
          %v8913 = vunpack.c.h.b16 %v8149
          %v8914 = vunpack.c.l.b16 %v8150
          %v8915 = vunpack.c.h.b16 %v8150
          %v8916 = vunpack.c.l.b16 %v8151
          %v8917 = vunpack.c.h.b16 %v8151
          %v8918 = vunpack.c.l.b16 %v8152
          %v8919 = vunpack.c.h.b16 %v8152
          %v8920 = vunpack.c.l.b16 %v8153
          %v8921 = vunpack.c.h.b16 %v8153
          %v8922 = vunpack.c.l.b16 %v8154
          %v8923 = vunpack.c.h.b16 %v8154
          %v8924 = vpack.c.b16 %v8416, %v8412
          %v8925 = vpack.c.b16 %v8417, %v8413
          %v8926 = vpack.c.b16 %v8418, %v8414
          %v8927 = vpack.c.b16 %v8419, %v8415
          %v8928 = vpack.c.b16 %v8424, %v8420
          %v8929 = vpack.c.b16 %v8425, %v8421
          %v8930 = vpack.c.b16 %v8426, %v8422
          %v8931 = vpack.c.b16 %v8427, %v8423
          %v8932 = vpack.c.b16 %v8432, %v8428
          %v8933 = vpack.c.b16 %v8433, %v8429
          %v8934 = vpack.c.b16 %v8434, %v8430
          %v8935 = vpack.c.b16 %v8435, %v8431
          %v8936 = vpack.c.b16 %v8440, %v8436
          %v8937 = vpack.c.b16 %v8441, %v8437
          %v8938 = vpack.c.b16 %v8442, %v8438
          %v8939 = vpack.c.b16 %v8443, %v8439
          %v8940 = vpack.c.b16 %v8448, %v8444
          %v8941 = vpack.c.b16 %v8449, %v8445
          %v8942 = vpack.c.b16 %v8450, %v8446
          %v8943 = vpack.c.b16 %v8451, %v8447
          %v8944 = vpack.c.b16 %v8456, %v8452
          %v8945 = vpack.c.b16 %v8457, %v8453
          %v8946 = vpack.c.b16 %v8458, %v8454
          %v8947 = vpack.c.b16 %v8459, %v8455
          %v8948 = vpack.c.b16 %v8464, %v8460
          %v8949 = vpack.c.b16 %v8465, %v8461
          %v8950 = vpack.c.b16 %v8466, %v8462
          %v8951 = vpack.c.b16 %v8467, %v8463
          %v8952 = vpack.c.b16 %v8472, %v8468
          %v8953 = vpack.c.b16 %v8473, %v8469
          %v8954 = vpack.c.b16 %v8474, %v8470
          %v8955 = vpack.c.b16 %v8475, %v8471
          %v8956 = vpack.c.b16 %v8480, %v8476
          %v8957 = vpack.c.b16 %v8481, %v8477
          %v8958 = vpack.c.b16 %v8482, %v8478
          %v8959 = vpack.c.b16 %v8483, %v8479
          %v8960 = vpack.c.b16 %v8488, %v8484
          %v8961 = vpack.c.b16 %v8489, %v8485
          %v8962 = vpack.c.b16 %v8490, %v8486
          %v8963 = vpack.c.b16 %v8491, %v8487
          %v8964 = vpack.c.b16 %v8496, %v8492
          %v8965 = vpack.c.b16 %v8497, %v8493
          %v8966 = vpack.c.b16 %v8498, %v8494
          %v8967 = vpack.c.b16 %v8499, %v8495
          %v8968 = vpack.c.b16 %v8504, %v8500
          %v8969 = vpack.c.b16 %v8505, %v8501
          %v8970 = vpack.c.b16 %v8506, %v8502
          %v8971 = vpack.c.b16 %v8507, %v8503
          %v8972 = vpack.c.b16 %v8512, %v8508
          %v8973 = vpack.c.b16 %v8513, %v8509
          %v8974 = vpack.c.b16 %v8514, %v8510
          %v8975 = vpack.c.b16 %v8515, %v8511
          %v8976 = vpack.c.b16 %v8520, %v8516
          %v8977 = vpack.c.b16 %v8521, %v8517
          %v8978 = vpack.c.b16 %v8522, %v8518
          %v8979 = vpack.c.b16 %v8523, %v8519
          %v8980 = vpack.c.b16 %v8528, %v8524
          %v8981 = vpack.c.b16 %v8529, %v8525
          %v8982 = vpack.c.b16 %v8530, %v8526
          %v8983 = vpack.c.b16 %v8531, %v8527
          %v8984 = vpack.c.b16 %v8536, %v8532
          %v8985 = vpack.c.b16 %v8537, %v8533
          %v8986 = vpack.c.b16 %v8538, %v8534
          %v8987 = vpack.c.b16 %v8539, %v8535
          %v8988 = vpack.c.b16 %v8544, %v8540
          %v8989 = vpack.c.b16 %v8545, %v8541
          %v8990 = vpack.c.b16 %v8546, %v8542
          %v8991 = vpack.c.b16 %v8547, %v8543
          %v8992 = vpack.c.b16 %v8552, %v8548
          %v8993 = vpack.c.b16 %v8553, %v8549
          %v8994 = vpack.c.b16 %v8554, %v8550
          %v8995 = vpack.c.b16 %v8555, %v8551
          %v8996 = vpack.c.b16 %v8560, %v8556
          %v8997 = vpack.c.b16 %v8561, %v8557
          %v8998 = vpack.c.b16 %v8562, %v8558
          %v8999 = vpack.c.b16 %v8563, %v8559
          %v9000 = vpack.c.b16 %v8568, %v8564
          %v9001 = vpack.c.b16 %v8569, %v8565
          %v9002 = vpack.c.b16 %v8570, %v8566
          %v9003 = vpack.c.b16 %v8571, %v8567
          %v9004 = vpack.c.b16 %v8576, %v8572
          %v9005 = vpack.c.b16 %v8577, %v8573
          %v9006 = vpack.c.b16 %v8578, %v8574
          %v9007 = vpack.c.b16 %v8579, %v8575
          %v9008 = vpack.c.b16 %v8584, %v8580
          %v9009 = vpack.c.b16 %v8585, %v8581
          %v9010 = vpack.c.b16 %v8586, %v8582
          %v9011 = vpack.c.b16 %v8587, %v8583
          %v9012 = vpack.c.b16 %v8592, %v8588
          %v9013 = vpack.c.b16 %v8593, %v8589
          %v9014 = vpack.c.b16 %v8594, %v8590
          %v9015 = vpack.c.b16 %v8595, %v8591
          %v9016 = vpack.c.b16 %v8600, %v8596
          %v9017 = vpack.c.b16 %v8601, %v8597
          %v9018 = vpack.c.b16 %v8602, %v8598
          %v9019 = vpack.c.b16 %v8603, %v8599
          %v9020 = vpack.c.b16 %v8608, %v8604
          %v9021 = vpack.c.b16 %v8609, %v8605
          %v9022 = vpack.c.b16 %v8610, %v8606
          %v9023 = vpack.c.b16 %v8611, %v8607
          %v9024 = vpack.c.b16 %v8616, %v8612
          %v9025 = vpack.c.b16 %v8617, %v8613
          %v9026 = vpack.c.b16 %v8618, %v8614
          %v9027 = vpack.c.b16 %v8619, %v8615
          %v9028 = vpack.c.b16 %v8624, %v8620
          %v9029 = vpack.c.b16 %v8625, %v8621
          %v9030 = vpack.c.b16 %v8626, %v8622
          %v9031 = vpack.c.b16 %v8627, %v8623
          %v9032 = vpack.c.b16 %v8632, %v8628
          %v9033 = vpack.c.b16 %v8633, %v8629
          %v9034 = vpack.c.b16 %v8634, %v8630
          %v9035 = vpack.c.b16 %v8635, %v8631
          %v9036 = vpack.c.b16 %v8640, %v8636
          %v9037 = vpack.c.b16 %v8641, %v8637
          %v9038 = vpack.c.b16 %v8642, %v8638
          %v9039 = vpack.c.b16 %v8643, %v8639
          %v9040 = vpack.c.b16 %v8648, %v8644
          %v9041 = vpack.c.b16 %v8649, %v8645
          %v9042 = vpack.c.b16 %v8650, %v8646
          %v9043 = vpack.c.b16 %v8651, %v8647
          %v9044 = vpack.c.b16 %v8656, %v8652
          %v9045 = vpack.c.b16 %v8657, %v8653
          %v9046 = vpack.c.b16 %v8658, %v8654
          %v9047 = vpack.c.b16 %v8659, %v8655
          %v9048 = vpack.c.b16 %v8664, %v8660
          %v9049 = vpack.c.b16 %v8665, %v8661
          %v9050 = vpack.c.b16 %v8666, %v8662
          %v9051 = vpack.c.b16 %v8667, %v8663
          %v9052 = vpack.c.b16 %v8672, %v8668
          %v9053 = vpack.c.b16 %v8673, %v8669
          %v9054 = vpack.c.b16 %v8674, %v8670
          %v9055 = vpack.c.b16 %v8675, %v8671
          %v9056 = vpack.c.b16 %v8680, %v8676
          %v9057 = vpack.c.b16 %v8681, %v8677
          %v9058 = vpack.c.b16 %v8682, %v8678
          %v9059 = vpack.c.b16 %v8683, %v8679
          %v9060 = vpack.c.b16 %v8688, %v8684
          %v9061 = vpack.c.b16 %v8689, %v8685
          %v9062 = vpack.c.b16 %v8690, %v8686
          %v9063 = vpack.c.b16 %v8691, %v8687
          %v9064 = vpack.c.b16 %v8696, %v8692
          %v9065 = vpack.c.b16 %v8697, %v8693
          %v9066 = vpack.c.b16 %v8698, %v8694
          %v9067 = vpack.c.b16 %v8699, %v8695
          %v9068 = vpack.c.b16 %v8704, %v8700
          %v9069 = vpack.c.b16 %v8705, %v8701
          %v9070 = vpack.c.b16 %v8706, %v8702
          %v9071 = vpack.c.b16 %v8707, %v8703
          %v9072 = vpack.c.b16 %v8712, %v8708
          %v9073 = vpack.c.b16 %v8713, %v8709
          %v9074 = vpack.c.b16 %v8714, %v8710
          %v9075 = vpack.c.b16 %v8715, %v8711
          %v9076 = vpack.c.b16 %v8720, %v8716
          %v9077 = vpack.c.b16 %v8721, %v8717
          %v9078 = vpack.c.b16 %v8722, %v8718
          %v9079 = vpack.c.b16 %v8723, %v8719
          %v9080 = vpack.c.b16 %v8728, %v8724
          %v9081 = vpack.c.b16 %v8729, %v8725
          %v9082 = vpack.c.b16 %v8730, %v8726
          %v9083 = vpack.c.b16 %v8731, %v8727
          %v9084 = vpack.c.b16 %v8736, %v8732
          %v9085 = vpack.c.b16 %v8737, %v8733
          %v9086 = vpack.c.b16 %v8738, %v8734
          %v9087 = vpack.c.b16 %v8739, %v8735
          %v9088 = vpack.c.b16 %v8744, %v8740
          %v9089 = vpack.c.b16 %v8745, %v8741
          %v9090 = vpack.c.b16 %v8746, %v8742
          %v9091 = vpack.c.b16 %v8747, %v8743
          %v9092 = vpack.c.b16 %v8752, %v8748
          %v9093 = vpack.c.b16 %v8753, %v8749
          %v9094 = vpack.c.b16 %v8754, %v8750
          %v9095 = vpack.c.b16 %v8755, %v8751
          %v9096 = vpack.c.b16 %v8760, %v8756
          %v9097 = vpack.c.b16 %v8761, %v8757
          %v9098 = vpack.c.b16 %v8762, %v8758
          %v9099 = vpack.c.b16 %v8763, %v8759
          %v9100 = vpack.c.b16 %v8768, %v8764
          %v9101 = vpack.c.b16 %v8769, %v8765
          %v9102 = vpack.c.b16 %v8770, %v8766
          %v9103 = vpack.c.b16 %v8771, %v8767
          %v9104 = vpack.c.b16 %v8776, %v8772
          %v9105 = vpack.c.b16 %v8777, %v8773
          %v9106 = vpack.c.b16 %v8778, %v8774
          %v9107 = vpack.c.b16 %v8779, %v8775
          %v9108 = vpack.c.b16 %v8784, %v8780
          %v9109 = vpack.c.b16 %v8785, %v8781
          %v9110 = vpack.c.b16 %v8786, %v8782
          %v9111 = vpack.c.b16 %v8787, %v8783
          %v9112 = vpack.c.b16 %v8792, %v8788
          %v9113 = vpack.c.b16 %v8793, %v8789
          %v9114 = vpack.c.b16 %v8794, %v8790
          %v9115 = vpack.c.b16 %v8795, %v8791
          %v9116 = vpack.c.b16 %v8800, %v8796
          %v9117 = vpack.c.b16 %v8801, %v8797
          %v9118 = vpack.c.b16 %v8802, %v8798
          %v9119 = vpack.c.b16 %v8803, %v8799
          %v9120 = vpack.c.b16 %v8808, %v8804
          %v9121 = vpack.c.b16 %v8809, %v8805
          %v9122 = vpack.c.b16 %v8810, %v8806
          %v9123 = vpack.c.b16 %v8811, %v8807
          %v9124 = vpack.c.b16 %v8816, %v8812
          %v9125 = vpack.c.b16 %v8817, %v8813
          %v9126 = vpack.c.b16 %v8818, %v8814
          %v9127 = vpack.c.b16 %v8819, %v8815
          %v9128 = vpack.c.b16 %v8824, %v8820
          %v9129 = vpack.c.b16 %v8825, %v8821
          %v9130 = vpack.c.b16 %v8826, %v8822
          %v9131 = vpack.c.b16 %v8827, %v8823
          %v9132 = vpack.c.b16 %v8832, %v8828
          %v9133 = vpack.c.b16 %v8833, %v8829
          %v9134 = vpack.c.b16 %v8834, %v8830
          %v9135 = vpack.c.b16 %v8835, %v8831
          %v9136 = vpack.c.b16 %v8840, %v8836
          %v9137 = vpack.c.b16 %v8841, %v8837
          %v9138 = vpack.c.b16 %v8842, %v8838
          %v9139 = vpack.c.b16 %v8843, %v8839
          %v9140 = vpack.c.b16 %v8848, %v8844
          %v9141 = vpack.c.b16 %v8849, %v8845
          %v9142 = vpack.c.b16 %v8850, %v8846
          %v9143 = vpack.c.b16 %v8851, %v8847
          %v9144 = vpack.c.b16 %v8856, %v8852
          %v9145 = vpack.c.b16 %v8857, %v8853
          %v9146 = vpack.c.b16 %v8858, %v8854
          %v9147 = vpack.c.b16 %v8859, %v8855
          %v9148 = vpack.c.b16 %v8864, %v8860
          %v9149 = vpack.c.b16 %v8865, %v8861
          %v9150 = vpack.c.b16 %v8866, %v8862
          %v9151 = vpack.c.b16 %v8867, %v8863
          %v9152 = vpack.c.b16 %v8872, %v8868
          %v9153 = vpack.c.b16 %v8873, %v8869
          %v9154 = vpack.c.b16 %v8874, %v8870
          %v9155 = vpack.c.b16 %v8875, %v8871
          %v9156 = vpack.c.b16 %v8880, %v8876
          %v9157 = vpack.c.b16 %v8881, %v8877
          %v9158 = vpack.c.b16 %v8882, %v8878
          %v9159 = vpack.c.b16 %v8883, %v8879
          %v9160 = vpack.c.b16 %v8888, %v8884
          %v9161 = vpack.c.b16 %v8889, %v8885
          %v9162 = vpack.c.b16 %v8890, %v8886
          %v9163 = vpack.c.b16 %v8891, %v8887
          %v9164 = vpack.c.b16 %v8896, %v8892
          %v9165 = vpack.c.b16 %v8897, %v8893
          %v9166 = vpack.c.b16 %v8898, %v8894
          %v9167 = vpack.c.b16 %v8899, %v8895
          %v9168 = vpack.c.b16 %v8904, %v8900
          %v9169 = vpack.c.b16 %v8905, %v8901
          %v9170 = vpack.c.b16 %v8906, %v8902
          %v9171 = vpack.c.b16 %v8907, %v8903
          %v9172 = vpack.c.b16 %v8912, %v8908
          %v9173 = vpack.c.b16 %v8913, %v8909
          %v9174 = vpack.c.b16 %v8914, %v8910
          %v9175 = vpack.c.b16 %v8915, %v8911
          %v9176 = vpack.c.b16 %v8920, %v8916
          %v9177 = vpack.c.b16 %v8921, %v8917
          %v9178 = vpack.c.b16 %v8922, %v8918
          %v9179 = vpack.c.b16 %v8923, %v8919
          %v9437 = vlaneseq
          %v9438 = vshrl.u32 %v9437, 7
          %v9439 = vsub.s32 0, %v9438
          %v9440 = vrot.slane %v8155, %v9439
          %v9441 = vlaneseq
          %v9442 = vshrl.u32 %v9441, 7
          %v9443 = vsub.s32 1, %v9442
          %v9444 = vrot.slane %v8155, %v9443
          %v9445 = vlaneseq
          %v9446 = vshrl.u32 %v9445, 7
          %v9447 = vsub.s32 2, %v9446
          %v9448 = vrot.slane %v8155, %v9447
          %v9449 = vlaneseq
          %v9450 = vshrl.u32 %v9449, 7
          %v9451 = vsub.s32 3, %v9450
          %v9452 = vrot.slane %v8155, %v9451
          %9457 = vmatprep.subr.bf16.mxu0 %v8925
          %9458 = vmatpush1.bf16.msra.mxu0 %v8924
          %9459 = vmatprep.subr.bf16.mxu0 %v8929
          %9460 = vmatpush1.bf16.msra.mxu0 %v8928
          %9461 = vmatprep.subr.bf16.mxu0 %v8933
          %9462 = vmatpush1.bf16.msra.mxu0 %v8932
          %9463 = vmatprep.subr.bf16.mxu0 %v8937
          %9464 = vmatpush1.bf16.msra.mxu0 %v8936
          %9465 = vmatprep.subr.bf16.mxu0 %v8941
          %9466 = vmatpush1.bf16.msra.mxu0 %v8940
          %9467 = vmatprep.subr.bf16.mxu0 %v8945
          %9468 = vmatpush1.bf16.msra.mxu0 %v8944
          %9469 = vmatprep.subr.bf16.mxu0 %v8949
          %9470 = vmatpush1.bf16.msra.mxu0 %v8948
          %9471 = vmatprep.subr.bf16.mxu0 %v8953
          %9472 = vmatpush1.bf16.msra.mxu0 %v8952
          %9473 = vmatprep.subr.bf16.mxu0 %v8957
          %9474 = vmatpush1.bf16.msra.mxu0 %v8956
          %9475 = vmatprep.subr.bf16.mxu0 %v8961
          %9476 = vmatpush1.bf16.msra.mxu0 %v8960
          %9477 = vmatprep.subr.bf16.mxu0 %v8965
          %9478 = vmatpush1.bf16.msra.mxu0 %v8964
          %9479 = vmatprep.subr.bf16.mxu0 %v8969
          %9480 = vmatpush1.bf16.msra.mxu0 %v8968
          %9481 = vmatprep.subr.bf16.mxu0 %v8973
          %9482 = vmatpush1.bf16.msra.mxu0 %v8972
          %9483 = vmatprep.subr.bf16.mxu0 %v8977
          %9484 = vmatpush1.bf16.msra.mxu0 %v8976
          %9485 = vmatprep.subr.bf16.mxu0 %v8981
          %9486 = vmatpush1.bf16.msra.mxu0 %v8980
          %9487 = vmatprep.subr.bf16.mxu0 %v8985
          %9488 = vmatpush1.bf16.msra.mxu0 %v8984
          %9489 = vmatprep.mubr.bf16.mxu0 %v7892
          %9490 = vmatmul.mubr.bf16.gmra.mrb[0].mxu0 %v7891
          %v9491 = vpop.f32.mrb[0].mxu0
          %v9492 = vadd.f32 %v9440, %v9491
          %v9493 = vpop.f32.mrb[0].mxu0
          %v9494 = vadd.f32 %v9444, %v9493
          %v9495 = vpop.f32.mrb[0].mxu0
          %v9496 = vpop.f32.mrb[0].mxu0
          %9497 = vdwg.mxu0
          %9498 = vmatprep.subr.bf16.mxu0 %v8989
          %9499 = vmatpush1.bf16.msra.mxu0 %v8988
          %9500 = vmatprep.subr.bf16.mxu0 %v8993
          %9501 = vmatpush1.bf16.msra.mxu0 %v8992
          %9502 = vmatprep.subr.bf16.mxu0 %v8997
          %9503 = vmatpush1.bf16.msra.mxu0 %v8996
          %9504 = vmatprep.subr.bf16.mxu0 %v9001
          %9505 = vmatpush1.bf16.msra.mxu0 %v9000
          %9506 = vmatprep.subr.bf16.mxu0 %v9005
          %9507 = vmatpush1.bf16.msra.mxu0 %v9004
          %9508 = vmatprep.subr.bf16.mxu0 %v9009
          %9509 = vmatpush1.bf16.msra.mxu0 %v9008
          %9510 = vmatprep.subr.bf16.mxu0 %v9013
          %9511 = vmatpush1.bf16.msra.mxu0 %v9012
          %9512 = vmatprep.subr.bf16.mxu0 %v9017
          %9513 = vmatpush1.bf16.msra.mxu0 %v9016
          %9514 = vmatprep.subr.bf16.mxu0 %v9021
          %9515 = vmatpush1.bf16.msra.mxu0 %v9020
          %9516 = vmatprep.subr.bf16.mxu0 %v9025
          %9517 = vmatpush1.bf16.msra.mxu0 %v9024
          %9518 = vmatprep.subr.bf16.mxu0 %v9029
          %9519 = vmatpush1.bf16.msra.mxu0 %v9028
          %9520 = vmatprep.subr.bf16.mxu0 %v9033
          %9521 = vmatpush1.bf16.msra.mxu0 %v9032
          %9522 = vmatprep.subr.bf16.mxu0 %v9037
          %9523 = vmatpush1.bf16.msra.mxu0 %v9036
          %9524 = vmatprep.subr.bf16.mxu0 %v9041
          %9525 = vmatpush1.bf16.msra.mxu0 %v9040
          %9526 = vmatprep.subr.bf16.mxu0 %v9045
          %9527 = vmatpush1.bf16.msra.mxu0 %v9044
          %9528 = vmatprep.subr.bf16.mxu0 %v9049
          %9529 = vmatpush1.bf16.msra.mxu0 %v9048
          %9530 = vmatprep.mubr.bf16.mxu0 %v7894
          %9531 = vmatmul.mubr.bf16.gmra.mrb[0].mxu0 %v7893
          %v9532 = vpop.f32.mrb[0].mxu0
          %v9533 = vadd.f32 %v9492, %v9532
          %v9534 = vpop.f32.mrb[0].mxu0
          %v9535 = vadd.f32 %v9494, %v9534
          %v9536 = vpop.f32.mrb[0].mxu0
          %v9537 = vpop.f32.mrb[0].mxu0
          %9538 = vdwg.mxu0
          %9539 = vmatprep.subr.bf16.mxu0 %v9053
          %9540 = vmatpush1.bf16.msra.mxu0 %v9052
          %9541 = vmatprep.subr.bf16.mxu0 %v9057
          %9542 = vmatpush1.bf16.msra.mxu0 %v9056
          %9543 = vmatprep.subr.bf16.mxu0 %v9061
          %9544 = vmatpush1.bf16.msra.mxu0 %v9060
          %9545 = vmatprep.subr.bf16.mxu0 %v9065
          %9546 = vmatpush1.bf16.msra.mxu0 %v9064
          %9547 = vmatprep.subr.bf16.mxu0 %v9069
          %9548 = vmatpush1.bf16.msra.mxu0 %v9068
          %9549 = vmatprep.subr.bf16.mxu0 %v9073
          %9550 = vmatpush1.bf16.msra.mxu0 %v9072
          %9551 = vmatprep.subr.bf16.mxu0 %v9077
          %9552 = vmatpush1.bf16.msra.mxu0 %v9076
          %9553 = vmatprep.subr.bf16.mxu0 %v9081
          %9554 = vmatpush1.bf16.msra.mxu0 %v9080
          %9555 = vmatprep.subr.bf16.mxu0 %v9085
          %9556 = vmatpush1.bf16.msra.mxu0 %v9084
          %9557 = vmatprep.subr.bf16.mxu0 %v9089
          %9558 = vmatpush1.bf16.msra.mxu0 %v9088
          %9559 = vmatprep.subr.bf16.mxu0 %v9093
          %9560 = vmatpush1.bf16.msra.mxu0 %v9092
          %9561 = vmatprep.subr.bf16.mxu0 %v9097
          %9562 = vmatpush1.bf16.msra.mxu0 %v9096
          %9563 = vmatprep.subr.bf16.mxu0 %v9101
          %9564 = vmatpush1.bf16.msra.mxu0 %v9100
          %9565 = vmatprep.subr.bf16.mxu0 %v9105
          %9566 = vmatpush1.bf16.msra.mxu0 %v9104
          %9567 = vmatprep.subr.bf16.mxu0 %v9109
          %9568 = vmatpush1.bf16.msra.mxu0 %v9108
          %9569 = vmatprep.subr.bf16.mxu0 %v9113
          %9570 = vmatpush1.bf16.msra.mxu0 %v9112
          %9571 = vmatprep.mubr.bf16.mxu0 %v7896
          %9572 = vmatmul.mubr.bf16.gmra.mrb[0].mxu0 %v7895
          %v9573 = vpop.f32.mrb[0].mxu0
          %v9574 = vadd.f32 %v9533, %v9573
          %v9575 = vpop.f32.mrb[0].mxu0
          %v9576 = vadd.f32 %v9535, %v9575
          %v9577 = vpop.f32.mrb[0].mxu0
          %v9578 = vpop.f32.mrb[0].mxu0
          %9579 = vdwg.mxu0
          %9580 = vmatprep.subr.bf16.mxu0 %v9117
          %9581 = vmatpush1.bf16.msra.mxu0 %v9116
          %9582 = vmatprep.subr.bf16.mxu0 %v9121
          %9583 = vmatpush1.bf16.msra.mxu0 %v9120
          %9584 = vmatprep.subr.bf16.mxu0 %v9125
          %9585 = vmatpush1.bf16.msra.mxu0 %v9124
          %9586 = vmatprep.subr.bf16.mxu0 %v9129
          %9587 = vmatpush1.bf16.msra.mxu0 %v9128
          %9588 = vmatprep.subr.bf16.mxu0 %v9133
          %9589 = vmatpush1.bf16.msra.mxu0 %v9132
          %9590 = vmatprep.subr.bf16.mxu0 %v9137
          %9591 = vmatpush1.bf16.msra.mxu0 %v9136
          %9592 = vmatprep.subr.bf16.mxu0 %v9141
          %9593 = vmatpush1.bf16.msra.mxu0 %v9140
          %9594 = vmatprep.subr.bf16.mxu0 %v9145
          %9595 = vmatpush1.bf16.msra.mxu0 %v9144
          %9596 = vmatprep.subr.bf16.mxu0 %v9149
          %9597 = vmatpush1.bf16.msra.mxu0 %v9148
          %9598 = vmatprep.subr.bf16.mxu0 %v9153
          %9599 = vmatpush1.bf16.msra.mxu0 %v9152
          %9600 = vmatprep.subr.bf16.mxu0 %v9157
          %9601 = vmatpush1.bf16.msra.mxu0 %v9156
          %9602 = vmatprep.subr.bf16.mxu0 %v9161
          %9603 = vmatpush1.bf16.msra.mxu0 %v9160
          %9604 = vmatprep.subr.bf16.mxu0 %v9165
          %9605 = vmatpush1.bf16.msra.mxu0 %v9164
          %9606 = vmatprep.subr.bf16.mxu0 %v9169
          %9607 = vmatpush1.bf16.msra.mxu0 %v9168
          %9608 = vmatprep.subr.bf16.mxu0 %v9173
          %9609 = vmatpush1.bf16.msra.mxu0 %v9172
          %9610 = vmatprep.subr.bf16.mxu0 %v9177
          %9611 = vmatpush1.bf16.msra.mxu0 %v9176
          %9612 = vmatprep.mubr.bf16.mxu0 %v7898
          %9613 = vmatmul.mubr.bf16.gmra.mrb[0].mxu0 %v7897
          %v9614 = vpop.f32.mrb[0].mxu0
          %v9615 = vadd.f32 %v9574, %v9614
          %v9616 = vpop.f32.mrb[0].mxu0
          %v9617 = vadd.f32 %v9576, %v9616
          %v9618 = vpop.f32.mrb[0].mxu0
          %v9619 = vpop.f32.mrb[0].mxu0
          %9620 = vdwg.mxu0
          %9621 = vmatprep.subr.bf16.mxu0 %v8927
          %9622 = vmatpush1.bf16.msra.mxu0 %v8926
          %9623 = vmatprep.subr.bf16.mxu0 %v8931
          %9624 = vmatpush1.bf16.msra.mxu0 %v8930
          %9625 = vmatprep.subr.bf16.mxu0 %v8935
          %9626 = vmatpush1.bf16.msra.mxu0 %v8934
          %9627 = vmatprep.subr.bf16.mxu0 %v8939
          %9628 = vmatpush1.bf16.msra.mxu0 %v8938
          %9629 = vmatprep.subr.bf16.mxu0 %v8943
          %9630 = vmatpush1.bf16.msra.mxu0 %v8942
          %9631 = vmatprep.subr.bf16.mxu0 %v8947
          %9632 = vmatpush1.bf16.msra.mxu0 %v8946
          %9633 = vmatprep.subr.bf16.mxu0 %v8951
          %9634 = vmatpush1.bf16.msra.mxu0 %v8950
          %9635 = vmatprep.subr.bf16.mxu0 %v8955
          %9636 = vmatpush1.bf16.msra.mxu0 %v8954
          %9637 = vmatprep.subr.bf16.mxu0 %v8959
          %9638 = vmatpush1.bf16.msra.mxu0 %v8958
          %9639 = vmatprep.subr.bf16.mxu0 %v8963
          %9640 = vmatpush1.bf16.msra.mxu0 %v8962
          %9641 = vmatprep.subr.bf16.mxu0 %v8967
          %9642 = vmatpush1.bf16.msra.mxu0 %v8966
          %9643 = vmatprep.subr.bf16.mxu0 %v8971
          %9644 = vmatpush1.bf16.msra.mxu0 %v8970
          %9645 = vmatprep.subr.bf16.mxu0 %v8975
          %9646 = vmatpush1.bf16.msra.mxu0 %v8974
          %9647 = vmatprep.subr.bf16.mxu0 %v8979
          %9648 = vmatpush1.bf16.msra.mxu0 %v8978
          %9649 = vmatprep.subr.bf16.mxu0 %v8983
          %9650 = vmatpush1.bf16.msra.mxu0 %v8982
          %9651 = vmatprep.subr.bf16.mxu0 %v8987
          %9652 = vmatpush1.bf16.msra.mxu0 %v8986
          %9653 = vmatprep.mubr.bf16.mxu0 %v7892
          %9654 = vmatmul.mubr.bf16.gmra.mrb[0].mxu0 %v7891
          %v9655 = vpop.f32.mrb[0].mxu0
          %v9656 = vadd.f32 %v9448, %v9655
          %v9657 = vpop.f32.mrb[0].mxu0
          %v9658 = vadd.f32 %v9452, %v9657
          %v9659 = vpop.f32.mrb[0].mxu0
          %v9660 = vpop.f32.mrb[0].mxu0
          %9661 = vdwg.mxu0
          %9662 = vmatprep.subr.bf16.mxu0 %v8991
          %9663 = vmatpush1.bf16.msra.mxu0 %v8990
          %9664 = vmatprep.subr.bf16.mxu0 %v8995
          %9665 = vmatpush1.bf16.msra.mxu0 %v8994
          %9666 = vmatprep.subr.bf16.mxu0 %v8999
          %9667 = vmatpush1.bf16.msra.mxu0 %v8998
          %9668 = vmatprep.subr.bf16.mxu0 %v9003
          %9669 = vmatpush1.bf16.msra.mxu0 %v9002
          %9670 = vmatprep.subr.bf16.mxu0 %v9007
          %9671 = vmatpush1.bf16.msra.mxu0 %v9006
          %9672 = vmatprep.subr.bf16.mxu0 %v9011
          %9673 = vmatpush1.bf16.msra.mxu0 %v9010
          %9674 = vmatprep.subr.bf16.mxu0 %v9015
          %9675 = vmatpush1.bf16.msra.mxu0 %v9014
          %9676 = vmatprep.subr.bf16.mxu0 %v9019
          %9677 = vmatpush1.bf16.msra.mxu0 %v9018
          %9678 = vmatprep.subr.bf16.mxu0 %v9023
          %9679 = vmatpush1.bf16.msra.mxu0 %v9022
          %9680 = vmatprep.subr.bf16.mxu0 %v9027
          %9681 = vmatpush1.bf16.msra.mxu0 %v9026
          %9682 = vmatprep.subr.bf16.mxu0 %v9031
          %9683 = vmatpush1.bf16.msra.mxu0 %v9030
          %9684 = vmatprep.subr.bf16.mxu0 %v9035
          %9685 = vmatpush1.bf16.msra.mxu0 %v9034
          %9686 = vmatprep.subr.bf16.mxu0 %v9039
          %9687 = vmatpush1.bf16.msra.mxu0 %v9038
          %9688 = vmatprep.subr.bf16.mxu0 %v9043
          %9689 = vmatpush1.bf16.msra.mxu0 %v9042
          %9690 = vmatprep.subr.bf16.mxu0 %v9047
          %9691 = vmatpush1.bf16.msra.mxu0 %v9046
          %9692 = vmatprep.subr.bf16.mxu0 %v9051
          %9693 = vmatpush1.bf16.msra.mxu0 %v9050
          %9694 = vmatprep.mubr.bf16.mxu0 %v7894
          %9695 = vmatmul.mubr.bf16.gmra.mrb[0].mxu0 %v7893
          %v9696 = vpop.f32.mrb[0].mxu0
          %v9697 = vadd.f32 %v9656, %v9696
          %v9698 = vpop.f32.mrb[0].mxu0
          %v9699 = vadd.f32 %v9658, %v9698
          %v9700 = vpop.f32.mrb[0].mxu0
          %v9701 = vpop.f32.mrb[0].mxu0
          %9702 = vdwg.mxu0
          %9703 = vmatprep.subr.bf16.mxu0 %v9055
          %9704 = vmatpush1.bf16.msra.mxu0 %v9054
          %9705 = vmatprep.subr.bf16.mxu0 %v9059
          %9706 = vmatpush1.bf16.msra.mxu0 %v9058
          %9707 = vmatprep.subr.bf16.mxu0 %v9063
          %9708 = vmatpush1.bf16.msra.mxu0 %v9062
          %9709 = vmatprep.subr.bf16.mxu0 %v9067
          %9710 = vmatpush1.bf16.msra.mxu0 %v9066
          %9711 = vmatprep.subr.bf16.mxu0 %v9071
          %9712 = vmatpush1.bf16.msra.mxu0 %v9070
          %9713 = vmatprep.subr.bf16.mxu0 %v9075
          %9714 = vmatpush1.bf16.msra.mxu0 %v9074
          %9715 = vmatprep.subr.bf16.mxu0 %v9079
          %9716 = vmatpush1.bf16.msra.mxu0 %v9078
          %9717 = vmatprep.subr.bf16.mxu0 %v9083
          %9718 = vmatpush1.bf16.msra.mxu0 %v9082
          %9719 = vmatprep.subr.bf16.mxu0 %v9087
          %9720 = vmatpush1.bf16.msra.mxu0 %v9086
          %9721 = vmatprep.subr.bf16.mxu0 %v9091
          %9722 = vmatpush1.bf16.msra.mxu0 %v9090
          %9723 = vmatprep.subr.bf16.mxu0 %v9095
          %9724 = vmatpush1.bf16.msra.mxu0 %v9094
          %9725 = vmatprep.subr.bf16.mxu0 %v9099
          %9726 = vmatpush1.bf16.msra.mxu0 %v9098
          %9727 = vmatprep.subr.bf16.mxu0 %v9103
          %9728 = vmatpush1.bf16.msra.mxu0 %v9102
          %9729 = vmatprep.subr.bf16.mxu0 %v9107
          %9730 = vmatpush1.bf16.msra.mxu0 %v9106
          %9731 = vmatprep.subr.bf16.mxu0 %v9111
          %9732 = vmatpush1.bf16.msra.mxu0 %v9110
          %9733 = vmatprep.subr.bf16.mxu0 %v9115
          %9734 = vmatpush1.bf16.msra.mxu0 %v9114
          %9735 = vmatprep.mubr.bf16.mxu0 %v7896
          %9736 = vmatmul.mubr.bf16.gmra.mrb[0].mxu0 %v7895
          %v9737 = vpop.f32.mrb[0].mxu0
          %v9738 = vadd.f32 %v9697, %v9737
          %v9739 = vpop.f32.mrb[0].mxu0
          %v9740 = vadd.f32 %v9699, %v9739
          %v9741 = vpop.f32.mrb[0].mxu0
          %v9742 = vpop.f32.mrb[0].mxu0
          %9743 = vdwg.mxu0
          %9744 = vmatprep.subr.bf16.mxu0 %v9119
          %9745 = vmatpush1.bf16.msra.mxu0 %v9118
          %9746 = vmatprep.subr.bf16.mxu0 %v9123
          %9747 = vmatpush1.bf16.msra.mxu0 %v9122
          %9748 = vmatprep.subr.bf16.mxu0 %v9127
          %9749 = vmatpush1.bf16.msra.mxu0 %v9126
          %9750 = vmatprep.subr.bf16.mxu0 %v9131
          %9751 = vmatpush1.bf16.msra.mxu0 %v9130
          %9752 = vmatprep.subr.bf16.mxu0 %v9135
          %9753 = vmatpush1.bf16.msra.mxu0 %v9134
          %9754 = vmatprep.subr.bf16.mxu0 %v9139
          %9755 = vmatpush1.bf16.msra.mxu0 %v9138
          %9756 = vmatprep.subr.bf16.mxu0 %v9143
          %9757 = vmatpush1.bf16.msra.mxu0 %v9142
          %9758 = vmatprep.subr.bf16.mxu0 %v9147
          %9759 = vmatpush1.bf16.msra.mxu0 %v9146
          %9760 = vmatprep.subr.bf16.mxu0 %v9151
          %9761 = vmatpush1.bf16.msra.mxu0 %v9150
          %9762 = vmatprep.subr.bf16.mxu0 %v9155
          %9763 = vmatpush1.bf16.msra.mxu0 %v9154
          %9764 = vmatprep.subr.bf16.mxu0 %v9159
          %9765 = vmatpush1.bf16.msra.mxu0 %v9158
          %9766 = vmatprep.subr.bf16.mxu0 %v9163
          %9767 = vmatpush1.bf16.msra.mxu0 %v9162
          %9768 = vmatprep.subr.bf16.mxu0 %v9167
          %9769 = vmatpush1.bf16.msra.mxu0 %v9166
          %9770 = vmatprep.subr.bf16.mxu0 %v9171
          %9771 = vmatpush1.bf16.msra.mxu0 %v9170
          %9772 = vmatprep.subr.bf16.mxu0 %v9175
          %9773 = vmatpush1.bf16.msra.mxu0 %v9174
          %9774 = vmatprep.subr.bf16.mxu0 %v9179
          %9775 = vmatpush1.bf16.msra.mxu0 %v9178
          %9776 = vmatprep.mubr.bf16.mxu0 %v7898
          %9777 = vmatmul.mubr.bf16.gmra.mrb[0].mxu0 %v7897
          %v9778 = vpop.f32.mrb[0].mxu0
          %v9779 = vadd.f32 %v9738, %v9778
          %v9780 = vpop.f32.mrb[0].mxu0
          %v9781 = vadd.f32 %v9740, %v9780
          %v9782 = vpop.f32.mrb[0].mxu0
          %v9783 = vpop.f32.mrb[0].mxu0
          %9784 = vdwg.mxu0
          %v9785 = vmax.f32 %v9615, 0.0
          %v9786 = vmax.f32 %v9617, 0.0
          %v9787 = vmax.f32 %v9779, 0.0
          %v9788 = vmax.f32 %v9781, 0.0
          %v9789 = vpack.c.bf16 %v9785, %v9785
          %v9790 = vpack.c.bf16 %v9786, %v9786
          %v9791 = vpack.c.bf16 %v9787, %v9787
          %v9792 = vpack.c.bf16 %v9788, %v9788
          %v9793 = vld [vmem:[%s9] sm:$0xff]
          %v9794 = vld [vmem:[%s9 + $0x8] sm:$0xff]
          %v9795 = vld [vmem:[%s9 + $0x10] sm:$0xff]
          %v9796 = vld [vmem:[%s9 + $0x18] sm:$0xff]
          %v9797 = vld [vmem:[%s9 + $0x20] sm:$0xff]
          %v9798 = vld [vmem:[%s9 + $0x28] sm:$0xff]
          %v9799 = vld [vmem:[%s9 + $0x30] sm:$0xff]
          %v9800 = vld [vmem:[%s9 + $0x38] sm:$0xff]
          %v9801 = vld [vmem:[%s9 + $0x40] sm:$0xff]
          %v9802 = vld [vmem:[%s9 + $0x48] sm:$0xff]
          %v9803 = vld [vmem:[%s9 + $0x50] sm:$0xff]
          %v9804 = vld [vmem:[%s9 + $0x58] sm:$0xff]
          %v9805 = vld [vmem:[%s9 + $0x60] sm:$0xff]
          %v9806 = vld [vmem:[%s9 + $0x68] sm:$0xff]
          %v9807 = vld [vmem:[%s9 + $0x70] sm:$0xff]
          %v9808 = vld [vmem:[%s9 + $0x78] sm:$0xff]
          %v9809 = vld [vmem:[%s9 + $0x80] sm:$0xff]
          %v9810 = vld [vmem:[%s9 + $0x88] sm:$0xff]
          %v9811 = vld [vmem:[%s9 + $0x90] sm:$0xff]
          %v9812 = vld [vmem:[%s9 + $0x98] sm:$0xff]
          %v9813 = vld [vmem:[%s9 + $0xa0] sm:$0xff]
          %v9814 = vld [vmem:[%s9 + $0xa8] sm:$0xff]
          %v9815 = vld [vmem:[%s9 + $0xb0] sm:$0xff]
          %v9816 = vld [vmem:[%s9 + $0xb8] sm:$0xff]
          %v9817 = vld [vmem:[%s9 + $0xc0] sm:$0xff]
          %v9818 = vld [vmem:[%s9 + $0xc8] sm:$0xff]
          %v9819 = vld [vmem:[%s9 + $0xd0] sm:$0xff]
          %v9820 = vld [vmem:[%s9 + $0xd8] sm:$0xff]
          %v9821 = vld [vmem:[%s9 + $0xe0] sm:$0xff]
          %v9822 = vld [vmem:[%s9 + $0xe8] sm:$0xff]
          %v9823 = vld [vmem:[%s9 + $0xf0] sm:$0xff]
          %v9824 = vld [vmem:[%s9 + $0xf8] sm:$0xff]
          %v9825 = vld [vmem:[%s9 + $0x100] sm:$0xff]
          %v9826 = vld [vmem:[%s9 + $0x108] sm:$0xff]
          %v9827 = vld [vmem:[%s9 + $0x110] sm:$0xff]
          %v9828 = vld [vmem:[%s9 + $0x118] sm:$0xff]
          %v9829 = vld [vmem:[%s9 + $0x120] sm:$0xff]
          %v9830 = vld [vmem:[%s9 + $0x128] sm:$0xff]
          %v9831 = vld [vmem:[%s9 + $0x130] sm:$0xff]
          %v9832 = vld [vmem:[%s9 + $0x138] sm:$0xff]
          %v9833 = vld [vmem:[%s9 + $0x140] sm:$0xff]
          %v9834 = vld [vmem:[%s9 + $0x148] sm:$0xff]
          %v9835 = vld [vmem:[%s9 + $0x150] sm:$0xff]
          %v9836 = vld [vmem:[%s9 + $0x158] sm:$0xff]
          %v9837 = vld [vmem:[%s9 + $0x160] sm:$0xff]
          %v9838 = vld [vmem:[%s9 + $0x168] sm:$0xff]
          %v9839 = vld [vmem:[%s9 + $0x170] sm:$0xff]
          %v9840 = vld [vmem:[%s9 + $0x178] sm:$0xff]
          %v9841 = vld [vmem:[%s9 + $0x180] sm:$0xff]
          %v9842 = vld [vmem:[%s9 + $0x188] sm:$0xff]
          %v9843 = vld [vmem:[%s9 + $0x190] sm:$0xff]
          %v9844 = vld [vmem:[%s9 + $0x198] sm:$0xff]
          %v9845 = vld [vmem:[%s9 + $0x1a0] sm:$0xff]
          %v9846 = vld [vmem:[%s9 + $0x1a8] sm:$0xff]
          %v9847 = vld [vmem:[%s9 + $0x1b0] sm:$0xff]
          %v9848 = vld [vmem:[%s9 + $0x1b8] sm:$0xff]
          %v9849 = vld [vmem:[%s9 + $0x1c0] sm:$0xff]
          %v9850 = vld [vmem:[%s9 + $0x1c8] sm:$0xff]
          %v9851 = vld [vmem:[%s9 + $0x1d0] sm:$0xff]
          %v9852 = vld [vmem:[%s9 + $0x1d8] sm:$0xff]
          %v9853 = vld [vmem:[%s9 + $0x1e0] sm:$0xff]
          %v9854 = vld [vmem:[%s9 + $0x1e8] sm:$0xff]
          %v9855 = vld [vmem:[%s9 + $0x1f0] sm:$0xff]
          %v9856 = vld [vmem:[%s9 + $0x1f8] sm:$0xff]
          %v9857 = vld [vmem:[%s10] sm:$0x3]
          %v9922 = vunpack.c.l.b16 %v9793
          %v9923 = vunpack.c.h.b16 %v9793
          %v9924 = vunpack.c.l.b16 %v9794
          %v9925 = vunpack.c.h.b16 %v9794
          %v9926 = vunpack.c.l.b16 %v9795
          %v9927 = vunpack.c.h.b16 %v9795
          %v9928 = vunpack.c.l.b16 %v9796
          %v9929 = vunpack.c.h.b16 %v9796
          %v9930 = vunpack.c.l.b16 %v9797
          %v9931 = vunpack.c.h.b16 %v9797
          %v9932 = vunpack.c.l.b16 %v9798
          %v9933 = vunpack.c.h.b16 %v9798
          %v9934 = vunpack.c.l.b16 %v9799
          %v9935 = vunpack.c.h.b16 %v9799
          %v9936 = vunpack.c.l.b16 %v9800
          %v9937 = vunpack.c.h.b16 %v9800
          %v9938 = vunpack.c.l.b16 %v9801
          %v9939 = vunpack.c.h.b16 %v9801
          %v9940 = vunpack.c.l.b16 %v9802
          %v9941 = vunpack.c.h.b16 %v9802
          %v9942 = vunpack.c.l.b16 %v9803
          %v9943 = vunpack.c.h.b16 %v9803
          %v9944 = vunpack.c.l.b16 %v9804
          %v9945 = vunpack.c.h.b16 %v9804
          %v9946 = vunpack.c.l.b16 %v9805
          %v9947 = vunpack.c.h.b16 %v9805
          %v9948 = vunpack.c.l.b16 %v9806
          %v9949 = vunpack.c.h.b16 %v9806
          %v9950 = vunpack.c.l.b16 %v9807
          %v9951 = vunpack.c.h.b16 %v9807
          %v9952 = vunpack.c.l.b16 %v9808
          %v9953 = vunpack.c.h.b16 %v9808
          %v9954 = vunpack.c.l.b16 %v9809
          %v9955 = vunpack.c.h.b16 %v9809
          %v9956 = vunpack.c.l.b16 %v9810
          %v9957 = vunpack.c.h.b16 %v9810
          %v9958 = vunpack.c.l.b16 %v9811
          %v9959 = vunpack.c.h.b16 %v9811
          %v9960 = vunpack.c.l.b16 %v9812
          %v9961 = vunpack.c.h.b16 %v9812
          %v9962 = vunpack.c.l.b16 %v9813
          %v9963 = vunpack.c.h.b16 %v9813
          %v9964 = vunpack.c.l.b16 %v9814
          %v9965 = vunpack.c.h.b16 %v9814
          %v9966 = vunpack.c.l.b16 %v9815
          %v9967 = vunpack.c.h.b16 %v9815
          %v9968 = vunpack.c.l.b16 %v9816
          %v9969 = vunpack.c.h.b16 %v9816
          %v9970 = vunpack.c.l.b16 %v9817
          %v9971 = vunpack.c.h.b16 %v9817
          %v9972 = vunpack.c.l.b16 %v9818
          %v9973 = vunpack.c.h.b16 %v9818
          %v9974 = vunpack.c.l.b16 %v9819
          %v9975 = vunpack.c.h.b16 %v9819
          %v9976 = vunpack.c.l.b16 %v9820
          %v9977 = vunpack.c.h.b16 %v9820
          %v9978 = vunpack.c.l.b16 %v9821
          %v9979 = vunpack.c.h.b16 %v9821
          %v9980 = vunpack.c.l.b16 %v9822
          %v9981 = vunpack.c.h.b16 %v9822
          %v9982 = vunpack.c.l.b16 %v9823
          %v9983 = vunpack.c.h.b16 %v9823
          %v9984 = vunpack.c.l.b16 %v9824
          %v9985 = vunpack.c.h.b16 %v9824
          %v9986 = vunpack.c.l.b16 %v9825
          %v9987 = vunpack.c.h.b16 %v9825
          %v9988 = vunpack.c.l.b16 %v9826
          %v9989 = vunpack.c.h.b16 %v9826
          %v9990 = vunpack.c.l.b16 %v9827
          %v9991 = vunpack.c.h.b16 %v9827
          %v9992 = vunpack.c.l.b16 %v9828
          %v9993 = vunpack.c.h.b16 %v9828
          %v9994 = vunpack.c.l.b16 %v9829
          %v9995 = vunpack.c.h.b16 %v9829
          %v9996 = vunpack.c.l.b16 %v9830
          %v9997 = vunpack.c.h.b16 %v9830
          %v9998 = vunpack.c.l.b16 %v9831
          %v9999 = vunpack.c.h.b16 %v9831
          %v10000 = vunpack.c.l.b16 %v9832
          %v10001 = vunpack.c.h.b16 %v9832
          %v10002 = vunpack.c.l.b16 %v9833
          %v10003 = vunpack.c.h.b16 %v9833
          %v10004 = vunpack.c.l.b16 %v9834
          %v10005 = vunpack.c.h.b16 %v9834
          %v10006 = vunpack.c.l.b16 %v9835
          %v10007 = vunpack.c.h.b16 %v9835
          %v10008 = vunpack.c.l.b16 %v9836
          %v10009 = vunpack.c.h.b16 %v9836
          %v10010 = vunpack.c.l.b16 %v9837
          %v10011 = vunpack.c.h.b16 %v9837
          %v10012 = vunpack.c.l.b16 %v9838
          %v10013 = vunpack.c.h.b16 %v9838
          %v10014 = vunpack.c.l.b16 %v9839
          %v10015 = vunpack.c.h.b16 %v9839
          %v10016 = vunpack.c.l.b16 %v9840
          %v10017 = vunpack.c.h.b16 %v9840
          %v10018 = vunpack.c.l.b16 %v9841
          %v10019 = vunpack.c.h.b16 %v9841
          %v10020 = vunpack.c.l.b16 %v9842
          %v10021 = vunpack.c.h.b16 %v9842
          %v10022 = vunpack.c.l.b16 %v9843
          %v10023 = vunpack.c.h.b16 %v9843
          %v10024 = vunpack.c.l.b16 %v9844
          %v10025 = vunpack.c.h.b16 %v9844
          %v10026 = vunpack.c.l.b16 %v9845
          %v10027 = vunpack.c.h.b16 %v9845
          %v10028 = vunpack.c.l.b16 %v9846
          %v10029 = vunpack.c.h.b16 %v9846
          %v10030 = vunpack.c.l.b16 %v9847
          %v10031 = vunpack.c.h.b16 %v9847
          %v10032 = vunpack.c.l.b16 %v9848
          %v10033 = vunpack.c.h.b16 %v9848
          %v10034 = vunpack.c.l.b16 %v9849
          %v10035 = vunpack.c.h.b16 %v9849
          %v10036 = vunpack.c.l.b16 %v9850
          %v10037 = vunpack.c.h.b16 %v9850
          %v10038 = vunpack.c.l.b16 %v9851
          %v10039 = vunpack.c.h.b16 %v9851
          %v10040 = vunpack.c.l.b16 %v9852
          %v10041 = vunpack.c.h.b16 %v9852
          %v10042 = vunpack.c.l.b16 %v9853
          %v10043 = vunpack.c.h.b16 %v9853
          %v10044 = vunpack.c.l.b16 %v9854
          %v10045 = vunpack.c.h.b16 %v9854
          %v10046 = vunpack.c.l.b16 %v9855
          %v10047 = vunpack.c.h.b16 %v9855
          %v10048 = vunpack.c.l.b16 %v9856
          %v10049 = vunpack.c.h.b16 %v9856
          %v10050 = vpack.c.b16 %v9924, %v9922
          %v10051 = vpack.c.b16 %v9925, %v9923
          %v10052 = vpack.c.b16 %v9928, %v9926
          %v10053 = vpack.c.b16 %v9929, %v9927
          %v10054 = vpack.c.b16 %v9932, %v9930
          %v10055 = vpack.c.b16 %v9933, %v9931
          %v10056 = vpack.c.b16 %v9936, %v9934
          %v10057 = vpack.c.b16 %v9937, %v9935
          %v10058 = vpack.c.b16 %v9940, %v9938
          %v10059 = vpack.c.b16 %v9941, %v9939
          %v10060 = vpack.c.b16 %v9944, %v9942
          %v10061 = vpack.c.b16 %v9945, %v9943
          %v10062 = vpack.c.b16 %v9948, %v9946
          %v10063 = vpack.c.b16 %v9949, %v9947
          %v10064 = vpack.c.b16 %v9952, %v9950
          %v10065 = vpack.c.b16 %v9953, %v9951
          %v10066 = vpack.c.b16 %v9956, %v9954
          %v10067 = vpack.c.b16 %v9957, %v9955
          %v10068 = vpack.c.b16 %v9960, %v9958
          %v10069 = vpack.c.b16 %v9961, %v9959
          %v10070 = vpack.c.b16 %v9964, %v9962
          %v10071 = vpack.c.b16 %v9965, %v9963
          %v10072 = vpack.c.b16 %v9968, %v9966
          %v10073 = vpack.c.b16 %v9969, %v9967
          %v10074 = vpack.c.b16 %v9972, %v9970
          %v10075 = vpack.c.b16 %v9973, %v9971
          %v10076 = vpack.c.b16 %v9976, %v9974
          %v10077 = vpack.c.b16 %v9977, %v9975
          %v10078 = vpack.c.b16 %v9980, %v9978
          %v10079 = vpack.c.b16 %v9981, %v9979
          %v10080 = vpack.c.b16 %v9984, %v9982
          %v10081 = vpack.c.b16 %v9985, %v9983
          %v10082 = vpack.c.b16 %v9988, %v9986
          %v10083 = vpack.c.b16 %v9989, %v9987
          %v10084 = vpack.c.b16 %v9992, %v9990
          %v10085 = vpack.c.b16 %v9993, %v9991
          %v10086 = vpack.c.b16 %v9996, %v9994
          %v10087 = vpack.c.b16 %v9997, %v9995
          %v10088 = vpack.c.b16 %v10000, %v9998
          %v10089 = vpack.c.b16 %v10001, %v9999
          %v10090 = vpack.c.b16 %v10004, %v10002
          %v10091 = vpack.c.b16 %v10005, %v10003
          %v10092 = vpack.c.b16 %v10008, %v10006
          %v10093 = vpack.c.b16 %v10009, %v10007
          %v10094 = vpack.c.b16 %v10012, %v10010
          %v10095 = vpack.c.b16 %v10013, %v10011
          %v10096 = vpack.c.b16 %v10016, %v10014
          %v10097 = vpack.c.b16 %v10017, %v10015
          %v10098 = vpack.c.b16 %v10020, %v10018
          %v10099 = vpack.c.b16 %v10021, %v10019
          %v10100 = vpack.c.b16 %v10024, %v10022
          %v10101 = vpack.c.b16 %v10025, %v10023
          %v10102 = vpack.c.b16 %v10028, %v10026
          %v10103 = vpack.c.b16 %v10029, %v10027
          %v10104 = vpack.c.b16 %v10032, %v10030
          %v10105 = vpack.c.b16 %v10033, %v10031
          %v10106 = vpack.c.b16 %v10036, %v10034
          %v10107 = vpack.c.b16 %v10037, %v10035
          %v10108 = vpack.c.b16 %v10040, %v10038
          %v10109 = vpack.c.b16 %v10041, %v10039
          %v10110 = vpack.c.b16 %v10044, %v10042
          %v10111 = vpack.c.b16 %v10045, %v10043
          %v10112 = vpack.c.b16 %v10048, %v10046
          %v10113 = vpack.c.b16 %v10049, %v10047
          %v10179 = vlaneseq
          %v10180 = vshrl.u32 %v10179, 7
          %v10181 = vsub.s32 0, %v10180
          %v10182 = vrot.slane %v9857, %v10181
          %v10183 = vlaneseq
          %v10184 = vshrl.u32 %v10183, 7
          %v10185 = vsub.s32 1, %v10184
          %v10186 = vrot.slane %v9857, %v10185
          %10189 = vmatprep.subr.bf16.mxu0 %v10051
          %10190 = vmatpush1.bf16.msra.mxu0 %v10050
          %10191 = vmatprep.subr.bf16.mxu0 %v10053
          %10192 = vmatpush1.bf16.msra.mxu0 %v10052
          %10193 = vmatprep.subr.bf16.mxu0 %v10055
          %10194 = vmatpush1.bf16.msra.mxu0 %v10054
          %10195 = vmatprep.subr.bf16.mxu0 %v10057
          %10196 = vmatpush1.bf16.msra.mxu0 %v10056
          %10197 = vmatprep.subr.bf16.mxu0 %v10059
          %10198 = vmatpush1.bf16.msra.mxu0 %v10058
          %10199 = vmatprep.subr.bf16.mxu0 %v10061
          %10200 = vmatpush1.bf16.msra.mxu0 %v10060
          %10201 = vmatprep.subr.bf16.mxu0 %v10063
          %10202 = vmatpush1.bf16.msra.mxu0 %v10062
          %10203 = vmatprep.subr.bf16.mxu0 %v10065
          %10204 = vmatpush1.bf16.msra.mxu0 %v10064
          %10205 = vmatprep.subr.bf16.mxu0 %v10067
          %10206 = vmatpush1.bf16.msra.mxu0 %v10066
          %10207 = vmatprep.subr.bf16.mxu0 %v10069
          %10208 = vmatpush1.bf16.msra.mxu0 %v10068
          %10209 = vmatprep.subr.bf16.mxu0 %v10071
          %10210 = vmatpush1.bf16.msra.mxu0 %v10070
          %10211 = vmatprep.subr.bf16.mxu0 %v10073
          %10212 = vmatpush1.bf16.msra.mxu0 %v10072
          %10213 = vmatprep.subr.bf16.mxu0 %v10075
          %10214 = vmatpush1.bf16.msra.mxu0 %v10074
          %10215 = vmatprep.subr.bf16.mxu0 %v10077
          %10216 = vmatpush1.bf16.msra.mxu0 %v10076
          %10217 = vmatprep.subr.bf16.mxu0 %v10079
          %10218 = vmatpush1.bf16.msra.mxu0 %v10078
          %10219 = vmatprep.subr.bf16.mxu0 %v10081
          %10220 = vmatpush1.bf16.msra.mxu0 %v10080
          %10221 = vmatprep.mubr.bf16.mxu0 %v9790
          %10222 = vmatmul.mubr.bf16.gmra.mrb[0].mxu0 %v9789
          %v10223 = vpop.f32.mrb[0].mxu0
          %v10224 = vadd.f32 %v10182, %v10223
          %v10225 = vpop.f32.mrb[0].mxu0
          %v10226 = vadd.f32 %v10186, %v10225
          %v10227 = vpop.f32.mrb[0].mxu0
          %v10228 = vpop.f32.mrb[0].mxu0
          %10229 = vdwg.mxu0
          %10230 = vmatprep.subr.bf16.mxu0 %v10083
          %10231 = vmatpush1.bf16.msra.mxu0 %v10082
          %10232 = vmatprep.subr.bf16.mxu0 %v10085
          %10233 = vmatpush1.bf16.msra.mxu0 %v10084
          %10234 = vmatprep.subr.bf16.mxu0 %v10087
          %10235 = vmatpush1.bf16.msra.mxu0 %v10086
          %10236 = vmatprep.subr.bf16.mxu0 %v10089
          %10237 = vmatpush1.bf16.msra.mxu0 %v10088
          %10238 = vmatprep.subr.bf16.mxu0 %v10091
          %10239 = vmatpush1.bf16.msra.mxu0 %v10090
          %10240 = vmatprep.subr.bf16.mxu0 %v10093
          %10241 = vmatpush1.bf16.msra.mxu0 %v10092
          %10242 = vmatprep.subr.bf16.mxu0 %v10095
          %10243 = vmatpush1.bf16.msra.mxu0 %v10094
          %10244 = vmatprep.subr.bf16.mxu0 %v10097
          %10245 = vmatpush1.bf16.msra.mxu0 %v10096
          %10246 = vmatprep.subr.bf16.mxu0 %v10099
          %10247 = vmatpush1.bf16.msra.mxu0 %v10098
          %10248 = vmatprep.subr.bf16.mxu0 %v10101
          %10249 = vmatpush1.bf16.msra.mxu0 %v10100
          %10250 = vmatprep.subr.bf16.mxu0 %v10103
          %10251 = vmatpush1.bf16.msra.mxu0 %v10102
          %10252 = vmatprep.subr.bf16.mxu0 %v10105
          %10253 = vmatpush1.bf16.msra.mxu0 %v10104
          %10254 = vmatprep.subr.bf16.mxu0 %v10107
          %10255 = vmatpush1.bf16.msra.mxu0 %v10106
          %10256 = vmatprep.subr.bf16.mxu0 %v10109
          %10257 = vmatpush1.bf16.msra.mxu0 %v10108
          %10258 = vmatprep.subr.bf16.mxu0 %v10111
          %10259 = vmatpush1.bf16.msra.mxu0 %v10110
          %10260 = vmatprep.subr.bf16.mxu0 %v10113
          %10261 = vmatpush1.bf16.msra.mxu0 %v10112
          %10262 = vmatprep.mubr.bf16.mxu0 %v9792
          %10263 = vmatmul.mubr.bf16.gmra.mrb[0].mxu0 %v9791
          %v10264 = vpop.f32.mrb[0].mxu0
          %v10265 = vadd.f32 %v10224, %v10264
          %v10266 = vpop.f32.mrb[0].mxu0
          %v10267 = vadd.f32 %v10226, %v10266
          %v10268 = vpop.f32.mrb[0].mxu0
          %v10269 = vpop.f32.mrb[0].mxu0
          %10270 = vdwg.mxu0
          %v10271 = vmax.f32 %v10265, 0.0
          %v10272 = vmax.f32 %v10267, 0.0
          %v10273 = vpack.c.bf16 %v10271, %v10271
          %v10274 = vpack.c.bf16 %v10272, %v10272
          %v10275 = vld [vmem:[%s11] sm:$0xf]
          %v10276 = vld [vmem:[%s11 + $0x4] sm:$0xf]
          %v10277 = vld [vmem:[%s11 + $0x8] sm:$0xf]
          %v10278 = vld [vmem:[%s11 + $0xc] sm:$0xf]
          %v10279 = vld [vmem:[%s11 + $0x10] sm:$0xf]
          %v10280 = vld [vmem:[%s11 + $0x14] sm:$0xf]
          %v10281 = vld [vmem:[%s11 + $0x18] sm:$0xf]
          %v10282 = vld [vmem:[%s11 + $0x1c] sm:$0xf]
          %v10283 = vld [vmem:[%s11 + $0x20] sm:$0xf]
          %v10284 = vld [vmem:[%s11 + $0x24] sm:$0xf]
          %v10285 = vld [vmem:[%s11 + $0x28] sm:$0xf]
          %v10286 = vld [vmem:[%s11 + $0x2c] sm:$0xf]
          %v10287 = vld [vmem:[%s11 + $0x30] sm:$0xf]
          %v10288 = vld [vmem:[%s11 + $0x34] sm:$0xf]
          %v10289 = vld [vmem:[%s11 + $0x38] sm:$0xf]
          %v10290 = vld [vmem:[%s11 + $0x3c] sm:$0xf]
          %v10291 = vld [vmem:[%s11 + $0x40] sm:$0xf]
          %v10292 = vld [vmem:[%s11 + $0x44] sm:$0xf]
          %v10293 = vld [vmem:[%s11 + $0x48] sm:$0xf]
          %v10294 = vld [vmem:[%s11 + $0x4c] sm:$0xf]
          %v10295 = vld [vmem:[%s11 + $0x50] sm:$0xf]
          %v10296 = vld [vmem:[%s11 + $0x54] sm:$0xf]
          %v10297 = vld [vmem:[%s11 + $0x58] sm:$0xf]
          %v10298 = vld [vmem:[%s11 + $0x5c] sm:$0xf]
          %v10299 = vld [vmem:[%s11 + $0x60] sm:$0xf]
          %v10300 = vld [vmem:[%s11 + $0x64] sm:$0xf]
          %v10301 = vld [vmem:[%s11 + $0x68] sm:$0xf]
          %v10302 = vld [vmem:[%s11 + $0x6c] sm:$0xf]
          %v10303 = vld [vmem:[%s11 + $0x70] sm:$0xf]
          %v10304 = vld [vmem:[%s11 + $0x74] sm:$0xf]
          %v10305 = vld [vmem:[%s11 + $0x78] sm:$0xf]
          %v10306 = vld [vmem:[%s11 + $0x7c] sm:$0xf]
          %v10307 = vld [vmem:[%s12] sm:$0x1]
          %v10340 = vunpack.c.l.b16 %v10275
          %v10341 = vunpack.c.l.b16 %v10276
          %v10342 = vunpack.c.l.b16 %v10277
          %v10343 = vunpack.c.l.b16 %v10278
          %v10344 = vunpack.c.l.b16 %v10279
          %v10345 = vunpack.c.l.b16 %v10280
          %v10346 = vunpack.c.l.b16 %v10281
          %v10347 = vunpack.c.l.b16 %v10282
          %v10348 = vunpack.c.l.b16 %v10283
          %v10349 = vunpack.c.l.b16 %v10284
          %v10350 = vunpack.c.l.b16 %v10285
          %v10351 = vunpack.c.l.b16 %v10286
          %v10352 = vunpack.c.l.b16 %v10287
          %v10353 = vunpack.c.l.b16 %v10288
          %v10354 = vunpack.c.l.b16 %v10289
          %v10355 = vunpack.c.l.b16 %v10290
          %v10356 = vunpack.c.l.b16 %v10291
          %v10357 = vunpack.c.l.b16 %v10292
          %v10358 = vunpack.c.l.b16 %v10293
          %v10359 = vunpack.c.l.b16 %v10294
          %v10360 = vunpack.c.l.b16 %v10295
          %v10361 = vunpack.c.l.b16 %v10296
          %v10362 = vunpack.c.l.b16 %v10297
          %v10363 = vunpack.c.l.b16 %v10298
          %v10364 = vunpack.c.l.b16 %v10299
          %v10365 = vunpack.c.l.b16 %v10300
          %v10366 = vunpack.c.l.b16 %v10301
          %v10367 = vunpack.c.l.b16 %v10302
          %v10368 = vunpack.c.l.b16 %v10303
          %v10369 = vunpack.c.l.b16 %v10304
          %v10370 = vunpack.c.l.b16 %v10305
          %v10371 = vunpack.c.l.b16 %v10306
          %v10372 = vpack.c.b16 %v10341, %v10340
          %v10373 = vpack.c.b16 %v10343, %v10342
          %v10374 = vpack.c.b16 %v10345, %v10344
          %v10375 = vpack.c.b16 %v10347, %v10346
          %v10376 = vpack.c.b16 %v10349, %v10348
          %v10377 = vpack.c.b16 %v10351, %v10350
          %v10378 = vpack.c.b16 %v10353, %v10352
          %v10379 = vpack.c.b16 %v10355, %v10354
          %v10380 = vpack.c.b16 %v10357, %v10356
          %v10381 = vpack.c.b16 %v10359, %v10358
          %v10382 = vpack.c.b16 %v10361, %v10360
          %v10383 = vpack.c.b16 %v10363, %v10362
          %v10384 = vpack.c.b16 %v10365, %v10364
          %v10385 = vpack.c.b16 %v10367, %v10366
          %v10386 = vpack.c.b16 %v10369, %v10368
          %v10387 = vpack.c.b16 %v10371, %v10370
          %10404 = vmatprep.subr.bf16.mxu0 0
          %10405 = vmatpush1.bf16.msra.mxu0 %v10372
          %10406 = vmatprep.subr.bf16.mxu0 0
          %10407 = vmatpush1.bf16.msra.mxu0 %v10373
          %10408 = vmatprep.subr.bf16.mxu0 0
          %10409 = vmatpush1.bf16.msra.mxu0 %v10374
          %10410 = vmatprep.subr.bf16.mxu0 0
          %10411 = vmatpush1.bf16.msra.mxu0 %v10375
          %10412 = vmatprep.subr.bf16.mxu0 0
          %10413 = vmatpush1.bf16.msra.mxu0 %v10376
          %10414 = vmatprep.subr.bf16.mxu0 0
          %10415 = vmatpush1.bf16.msra.mxu0 %v10377
          %10416 = vmatprep.subr.bf16.mxu0 0
          %10417 = vmatpush1.bf16.msra.mxu0 %v10378
          %10418 = vmatprep.subr.bf16.mxu0 0
          %10419 = vmatpush1.bf16.msra.mxu0 %v10379
          %10420 = vmatprep.subr.bf16.mxu0 0
          %10421 = vmatpush1.bf16.msra.mxu0 %v10380
          %10422 = vmatprep.subr.bf16.mxu0 0
          %10423 = vmatpush1.bf16.msra.mxu0 %v10381
          %10424 = vmatprep.subr.bf16.mxu0 0
          %10425 = vmatpush1.bf16.msra.mxu0 %v10382
          %10426 = vmatprep.subr.bf16.mxu0 0
          %10427 = vmatpush1.bf16.msra.mxu0 %v10383
          %10428 = vmatprep.subr.bf16.mxu0 0
          %10429 = vmatpush1.bf16.msra.mxu0 %v10384
          %10430 = vmatprep.subr.bf16.mxu0 0
          %10431 = vmatpush1.bf16.msra.mxu0 %v10385
          %10432 = vmatprep.subr.bf16.mxu0 0
          %10433 = vmatpush1.bf16.msra.mxu0 %v10386
          %10434 = vmatprep.subr.bf16.mxu0 0
          %10435 = vmatpush1.bf16.msra.mxu0 %v10387
          %10436 = vmatprep.mubr.bf16.mxu0 %v10274
          %10437 = vmatmul.mubr.bf16.gmra.mrb[0].mxu0 %v10273
          %v10438 = vpop.f32.mrb[0].mxu0
          %v10439 = vadd.f32 %v10307, %v10438
          %v10440 = vpop.f32.mrb[0].mxu0
          %v10441 = vpop.f32.mrb[0].mxu0
          %v10442 = vpop.f32.mrb[0].mxu0
          %10443 = vdwg.mxu0
          %vm10444 = vcmask 65536
          %10445 = vst.msk [vmem:[%s455] sm:$0x1] %vm10444, %v10439
        $region80: #{tpu_custom_call.1} parent=71 // pred_fallthru
          _
        %s10446 = sand.u32 %s327, 1
        %s10447 = scalar_lea.sflag [#allocation4], %s10446
        %s10448 = sand.u32 %s327, 1
        %s10449 = scalar_lea.vmem [#allocation3], %s10448
        // Predicated region
        $region81: #{tpu_custom_call.1} parent=71 // pred_check
          %p10450 = pneg %p337
        $region82: #{tpu_custom_call.1} parent=71 // pred_check_branch
          %10452 = sbr.rel (%p10450) target = $region84
        $region83: #{tpu_custom_call.1} parent=71 // pred_region
          %s10454 = ssub.s32 16, 16
          %10455 = vsyncadd %s10447, %s10454
          %s10456 = smul.addr %s31, 16
          %s10457 = scalar_lea.hbm %s13, %s10456
          %s10459 = sshll.u32 %s10449, 4
          %s10460 = int_to_ptr.vmem [resolvable:$true] %s10459
          %10462 = dma.vmem_to_hbm [thread:$0]  %s10460, 16, %s10457, %s10447
        $region84: #{tpu_custom_call.1} parent=71 // pred_fallthru
          _
      $region72: #{tpu_custom_call.1} parent=5 // pred_fallthru
        _
      %p10463 = scmp.le.s32.totalorder 2, %s22
      // Predicated region
      $region85: #{tpu_custom_call.1} parent=5 // pred_check
        %p10464 = pneg %p10463
      $region86: #{tpu_custom_call.1} parent=5 // pred_check_branch
        %10466 = sbr.rel (%p10464) target = $region88
      $region87: #{tpu_custom_call.1} parent=5 // pred_region
        %s10467 = ssub.s32 %s22, 2
        // Predicated region
        $region89: #{tpu_custom_call.1} parent=87 // pred_check
          %p10468 = pneg %p343
        $region90: #{tpu_custom_call.1} parent=87 // pred_check_branch
          %10470 = sbr.rel (%p10468) target = $region92
        $region91: #{tpu_custom_call.1} parent=87 // pred_region
          %s10471 = sand.u32 %s328, 1
          %s10472 = scalar_lea.sflag [#allocation4], %s10471
          %s10473 = sand.u32 %s328, 1
          %s10474 = scalar_lea.vmem [#allocation3], %s10473
          %10475 = dma.done %s10472, 16
        $region92: #{tpu_custom_call.1} parent=87 // pred_fallthru
          _
      $region88: #{tpu_custom_call.1} parent=5 // pred_fallthru
        _
    $region6: #{tpu_custom_call.1} parent=1 // loop_footer
      %s26 = sadd.s32 1, %s22
    $region7: #{tpu_custom_call.1} parent=1 // loop_footer_branch
      %21 = sbr.rel target = $region3
    $region8: #{tpu_custom_call.1} parent=1 // loop_exit
      _
    %10476 = vsyncpa [#allocation4], 1
    %s10477 = scalar_lea.sflag [#allocation4], 1
    %10478 = vsyncpa %s10477, 1

</llo_original>
